<compile_context>
chip_gen: v5e
topology: v5e:2x2
jax: 0.10.0
libtpu: 0.0.40
codegen_flags: <defaults>
</compile_context>

<pallas_src>
import functools
import math

import jax
import jax.numpy as jnp
from jax import lax
from jax.experimental import pallas as pl
from jax.experimental.pallas import tpu as pltpu


# ----------------------------------------------------------------------------- #
# Fused Pallas kernel: conv1(3x3, same) -> ReLU -> conv2(3x3, same)
# ----------------------------------------------------------------------------- #
def _flow_head_kernel(x_ref, w1_ref, b1_ref, w2_ref, b2_ref, m_ref, o_ref,
                      yp_ref, ct_ref,
                      *, H, W, Wp, C1, C2, CO, K, CH1, CH2, CH3):
    """One batch element per grid step.

    x_ref : (1, (H+K)*Wp, C1) bf16  zero-padded, row-flattened input (row stride Wp)
    w1_ref: (K*K, C1, C2)     bf16  conv1 weights, tap-major
    b1_ref: (1, C2)           f32   conv1 bias
    w2_ref: (C2, 128)         bf16  conv2 weights, taps folded into Cout (9*CO -> 128)
    b2_ref: (1, CO)           f32   conv2 bias
    m_ref : (H*Wp, 1)         f32   1.0 for real columns, 0.0 for halo over-compute
    o_ref : (1, H*Wp, CO)     f32   conv2 output in the (H, Wp) row layout
    yp_ref: VMEM ((H+K-1)*Wp, C2)  f32  zero-padded hidden activation (flattened)
    ct_ref: VMEM ((H+K-1)*Wp+8, 128) f32 per-tap conv2 contributions
    """
    HWp = H * Wp                 # rows of the conv1-output / combine layout
    HpWp = (H + K - 1) * Wp      # rows of the padded hidden buffer
    CT_ROWS = ct_ref.shape[0]
    COLS2 = w2_ref.shape[-1]

    # ---- zero only the halo strips (interior is fully overwritten every step) ----
    yp_ref[pl.ds(0, Wp + 1), :] = jnp.zeros((Wp + 1, C2), yp_ref.dtype)
    yp_ref[pl.ds(Wp + 1 + HWp, Wp - 1), :] = jnp.zeros((Wp - 1, C2), yp_ref.dtype)
    # overrun tail of the contribution buffer: read only by the dropped halo columns
    ct_ref[pl.ds(HpWp, CT_ROWS - HpWp), :] = jnp.zeros(
        (CT_ROWS - HpWp, COLS2), ct_ref.dtype)

    # ---- conv1: 9 contiguous tap windows, f32 value accumulation per row chunk ----
    for s in range(0, HWp, CH1):
        n = min(CH1, HWp - s)
        acc = None
        for kh in range(K):
            for kw in range(K):
                patch = x_ref[0, pl.ds(kh * Wp + kw + s, n), :]       # (n, C1) bf16
                d = jnp.dot(patch, w1_ref[kh * K + kw],
                            preferred_element_type=jnp.float32)
                acc = d if acc is None else acc + d
        y = jnp.maximum(acc + b1_ref[...], 0.0)                        # bias + ReLU
        y = jnp.where(m_ref[pl.ds(s, n), :] > 0.0, y, 0.0)             # kill halo cols
        yp_ref[pl.ds(Wp + 1 + s, n), :] = y.astype(yp_ref.dtype)

    # ---- conv2, folded: one (rows, C2) x (C2, 128) matmul over the padded hidden ----
    for s in range(0, HpWp, CH2):
        n = min(CH2, HpWp - s)
        hid = yp_ref[pl.ds(s, n), :].astype(w2_ref.dtype)              # (n, C2) bf16
        ct_ref[pl.ds(s, n), :] = jnp.dot(hid, w2_ref[...],
                                         preferred_element_type=jnp.float32)

    # ---- combine: 9 contiguous shift-adds over the per-tap contribution columns ----
    for s in range(0, HWp, CH3):
        n = min(CH3, HWp - s)
        out = None
        for kh in range(K):
            for kw in range(K):
                t = kh * K + kw
                term = ct_ref[pl.ds(kh * Wp + kw + s, n), t * CO:(t + 1) * CO]
                out = term if out is None else out + term
        o_ref[0, pl.ds(s, n), :] = out + b2_ref[...]


# ----------------------------------------------------------------------------- #
# Wrapper
# ----------------------------------------------------------------------------- #
def flow_head_pallas(kp, x, *, ch1=96, ch2=128, ch3=96):
    """x: (N, H, W, C1) float32 NHWC  ->  (N, H, W, 4) float32 NHWC."""
    N, H, W, C1 = x.shape
    w1, b1, w2p, b2, CO = kp["w1"], kp["b1"], kp["w2p"], kp["b2"], kp["cout"]
    KK = w1.shape[0]
    K = int(math.isqrt(KK))
    C2 = w1.shape[-1]
    P = K // 2
    Wp, Hp = W + 2 * P, H + 2 * P
    HWp, HpWp = H * Wp, Hp * Wp
    XP_ROWS = (Hp + 1) * Wp        # one extra zero row band keeps halo-column taps in-bounds
    CT_ROWS = HpWp + 8

    # Pad spatially with zeros in the wrapper and collapse (Hp, Wp) so every conv tap
    # inside the kernel is a contiguous row window (no strided-window relayouts).
    xb = jnp.pad(x.astype(jnp.bfloat16), ((0, 0), (P, P + 1), (P, P), (0, 0)))
    xb = xb.reshape(N, XP_ROWS, C1)

    # Validity mask for the (H, Wp) output layout: columns >= W are halo over-compute.
    mask = (lax.broadcasted_iota(jnp.int32, (HWp, 1), 0) % Wp < W).astype(jnp.float32)

    kernel = functools.partial(_flow_head_kernel, H=H, W=W, Wp=Wp, C1=C1, C2=C2,
                               CO=CO, K=K, CH1=ch1, CH2=ch2, CH3=ch3)

    out = pl.pallas_call(
        kernel,
        out_shape=jax.ShapeDtypeStruct((N, HWp, CO), jnp.float32),
        grid=(N,),
        in_specs=[
            pl.BlockSpec((1, XP_ROWS, C1), lambda n: (n, 0, 0)),
            pl.BlockSpec((KK, C1, C2), lambda n: (0, 0, 0)),
            pl.BlockSpec((1, C2), lambda n: (0, 0)),
            pl.BlockSpec(w2p.shape, lambda n: (0, 0)),
            pl.BlockSpec((1, CO), lambda n: (0, 0)),
            pl.BlockSpec((HWp, 1), lambda n: (0, 0)),
        ],
        out_specs=pl.BlockSpec((1, HWp, CO), lambda n: (n, 0, 0)),
        scratch_shapes=[
            pltpu.VMEM((HpWp, C2), jnp.float32),          # padded hidden activation
            pltpu.VMEM((CT_ROWS, w2p.shape[-1]), jnp.float32),  # conv2 tap contributions
        ],
        compiler_params=pltpu.CompilerParams(
            dimension_semantics=("parallel",)),
    )(xb, w1, b1, w2p, b2, mask)

    # Drop the two over-computed halo columns per row.
    return out.reshape(N, H, Wp, CO)[:, :, :W, :]


# ----------------------------------------------------------------------------- #
# Parameter construction (deterministic, in-script)
# ----------------------------------------------------------------------------- #
def init_quaternion_conv(key, cin, cout, k, *, bias_scale=0.1):
    """Quaternion conv weights: Hamilton-product block structure over channels."""
    assert cin % 4 == 0 and cout % 4 == 0, "quaternion conv needs channels % 4 == 0"
    kr, ki, kj, kk, kb = jax.random.split(key, 5)
    shape = (k, k, cin // 4, cout // 4)
    scale = 1.0 / math.sqrt(cin * k * k)
    r = jax.random.normal(kr, shape, jnp.float32) * scale
    i = jax.random.normal(ki, shape, jnp.float32) * scale
    j = jax.random.normal(kj, shape, jnp.float32) * scale
    q = jax.random.normal(kk, shape, jnp.float32) * scale
    row_r = jnp.concatenate([r, -i, -j, -q], axis=2)
    row_i = jnp.concatenate([i, r, -q, j], axis=2)
    row_j = jnp.concatenate([j, q, r, -i], axis=2)
    row_k = jnp.concatenate([q, -j, i, r], axis=2)
    w = jnp.concatenate([row_r, row_i, row_j, row_k], axis=3)  # (k,k,cin,cout) HWIO
    b = jax.random.normal(kb, (cout,), jnp.float32) * bias_scale
    return w, b


def init_flow_head_params(key, input_dim=128, hidden_dim=256, out_dim=4,
                          k=3, tap_pad=128):
    k1, k2 = jax.random.split(key)
    w1, b1 = init_quaternion_conv(k1, input_dim, hidden_dim, k)
    w2, b2 = init_quaternion_conv(k2, hidden_dim, out_dim, k)
    raw = {"w1": w1, "b1": b1, "w2": w2, "b2": b2}

    # Kernel-format params.
    kw1 = w1.reshape(k * k, input_dim, hidden_dim).astype(jnp.bfloat16)
    # conv2 taps folded into the output dim: w2p[ci, t*out_dim + co] = w2[kh, kw, ci, co]
    w2t = jnp.transpose(w2, (2, 0, 1, 3)).reshape(hidden_dim, k * k * out_dim)
    kw2 = jnp.pad(w2t, ((0, 0), (0, tap_pad - k * k * out_dim))).astype(jnp.bfloat16)
    kb1 = b1.reshape(1, hidden_dim).astype(jnp.float32)
    kb2 = b2.reshape(1, out_dim).astype(jnp.float32)
    kernel_params = {"w1": kw1, "b1": kb1, "w2p": kw2, "b2": kb2, "cout": out_dim}
    return raw, kernel_params


# ----------------------------------------------------------------------------- #
# Pure-JAX reference (f32, highest precision) for a correctness check
# ----------------------------------------------------------------------------- #
def flow_head_reference(raw, x):
    dn = ("NHWC", "HWIO", "NHWC")
    y = lax.conv_general_dilated(x, raw["w1"], (1, 1), "SAME",
                                 dimension_numbers=dn,
                                 precision=lax.Precision.HIGHEST)
    y = jnp.maximum(y + raw["b1"].reshape(1, 1, 1, -1), 0.0)
    out = lax.conv_general_dilated(y, raw["w2"], (1, 1), "SAME",
                                   dimension_numbers=dn,
                                   precision=lax.Precision.HIGHEST)
    return out + raw["b2"].reshape(1, 1, 1, -1)


# ----------------------------------------------------------------------------- #
if __name__ == "__main__":
    key = jax.random.PRNGKey(0)
    k_x, k_p = jax.random.split(key)

    N, H, W = 2, 16, 16
    input_dim, hidden_dim = 128, 256

    x = jax.random.normal(k_x, (N, H, W, input_dim), jnp.float32)
    raw_params, kernel_params = init_flow_head_params(k_p, input_dim, hidden_dim)

    flow_head = jax.jit(functools.partial(flow_head_pallas, kernel_params))
    delta_flow = flow_head(x)
    jax.block_until_ready(delta_flow)

    assert delta_flow.shape == (N, H, W, 4)
    assert bool(jnp.all(jnp.isfinite(delta_flow)))

    # Numerical check against the pure-JAX f32 reference (bf16 MXU inputs -> loose tol).
    ref = flow_head_reference(raw_params, x)
    max_err = float(jnp.max(jnp.abs(delta_flow - ref)))
    assert bool(jnp.allclose(delta_flow, ref, atol=5e-2, rtol=5e-2)), max_err

    print("KERNEL_OK")
</pallas_src>

<mosaic_0001>
module attributes {stable_mosaic.version = 11 : i64} {
  func.func @_flow_head_kernel(%arg0: i32, %arg1: memref<1x342x128xbf16, #tpu.memory_space<vmem>>, %arg2: memref<9x128x256xbf16, #tpu.memory_space<vmem>>, %arg3: memref<1x256xf32, #tpu.memory_space<vmem>>, %arg4: memref<256x128xbf16, #tpu.memory_space<vmem>>, %arg5: memref<1x4xf32, #tpu.memory_space<vmem>>, %arg6: memref<288x1xf32, #tpu.memory_space<vmem>>, %arg7: memref<1x288x4xf32, #tpu.memory_space<vmem>>, %arg8: memref<324x256xf32, #tpu.memory_space<vmem>>, %arg9: memref<332x128xf32, #tpu.memory_space<vmem>>) attributes {dimension_semantics = [#tpu.dimension_semantics<parallel>], iteration_bounds = array<i64: 2>, scalar_prefetch = 0 : i64, scratch_operands = 2 : i64, tpu.core_type = #tpu.core_type<tc>, window_params = [{transform_indices = @transform_0, window_bounds = array<i64: 1, 342, 128>}, {pipeline_mode = #tpu.pipeline_mode<synchronous>, transform_indices = @transform_1, window_bounds = array<i64: 9, 128, 256>}, {pipeline_mode = #tpu.pipeline_mode<synchronous>, transform_indices = @transform_2, window_bounds = array<i64: 1, 256>}, {pipeline_mode = #tpu.pipeline_mode<synchronous>, transform_indices = @transform_3, window_bounds = array<i64: 256, 128>}, {pipeline_mode = #tpu.pipeline_mode<synchronous>, transform_indices = @transform_4, window_bounds = array<i64: 1, 4>}, {pipeline_mode = #tpu.pipeline_mode<synchronous>, transform_indices = @transform_5, window_bounds = array<i64: 288, 1>}, {transform_indices = @transform_6, window_bounds = array<i64: 1, 288, 4>}]} {
    %cst = arith.constant 0.000000e+00 : f32
    %0 = vector.broadcast %cst : f32 to vector<19x256xf32>
    %c0 = arith.constant 0 : index
    %c0_0 = arith.constant 0 : index
    %1 = vector.load %arg8[%c0, %c0_0] : memref<324x256xf32, #tpu.memory_space<vmem>>, vector<19x256xf32>
    tpu.vector_store %arg8[%c0, %c0_0], %0 {strides = array<i32>} : memref<324x256xf32, #tpu.memory_space<vmem>>, vector<19x256xf32>,
    %cst_1 = arith.constant 0.000000e+00 : f32
    %2 = vector.broadcast %cst_1 : f32 to vector<17x256xf32>
    %c307 = arith.constant 307 : index
    %c0_2 = arith.constant 0 : index
    %3 = vector.load %arg8[%c307, %c0_2] : memref<324x256xf32, #tpu.memory_space<vmem>>, vector<17x256xf32>
    tpu.vector_store %arg8[%c307, %c0_2], %2 {strides = array<i32>} : memref<324x256xf32, #tpu.memory_space<vmem>>, vector<17x256xf32>,
    %cst_3 = arith.constant 0.000000e+00 : f32
    %4 = vector.broadcast %cst_3 : f32 to vector<8x128xf32>
    %c324 = arith.constant 324 : index
    %c0_4 = arith.constant 0 : index
    %5 = vector.load %arg9[%c324, %c0_4] : memref<332x128xf32, #tpu.memory_space<vmem>>, vector<8x128xf32>
    tpu.vector_store %arg9[%c324, %c0_4], %4 {strides = array<i32>} : memref<332x128xf32, #tpu.memory_space<vmem>>, vector<8x128xf32>,
    %c0_5 = arith.constant 0 : index
    %c0_6 = arith.constant 0 : index
    %c0_7 = arith.constant 0 : index
    %6 = vector.load %arg1[%c0_5, %c0_6, %c0_7] : memref<1x342x128xbf16, #tpu.memory_space<vmem>>, vector<1x96x128xbf16>
    %7 = vector.shape_cast %6 : vector<1x96x128xbf16> to vector<96x128xbf16>
    %c0_8 = arith.constant 0 : index
    %c0_9 = arith.constant 0 : index
    %c0_10 = arith.constant 0 : index
    %8 = vector.load %arg2[%c0_8, %c0_9, %c0_10] : memref<9x128x256xbf16, #tpu.memory_space<vmem>>, vector<1x128x256xbf16>
    %9 = vector.shape_cast %8 : vector<1x128x256xbf16> to vector<128x256xbf16>
    %cst_11 = arith.constant dense<0.000000e+00> : vector<96x256xf32>
    %10 = tpu.matmul %7, %9, %cst_11 {dimension_numbers = #tpu.dot_dimension_numbers<[1], [0], [0], [1], [0, 0, 1, 1], [], []>} : vector<96x128xbf16>, vector<128x256xbf16>, vector<96x256xf32> -> vector<96x256xf32>
    %c0_12 = arith.constant 0 : index
    %c1 = arith.constant 1 : index
    %c0_13 = arith.constant 0 : index
    %11 = vector.load %arg1[%c0_12, %c1, %c0_13] : memref<1x342x128xbf16, #tpu.memory_space<vmem>>, vector<1x96x128xbf16>
    %12 = vector.shape_cast %11 : vector<1x96x128xbf16> to vector<96x128xbf16>
    %c1_14 = arith.constant 1 : index
    %c0_15 = arith.constant 0 : index
    %c0_16 = arith.constant 0 : index
    %13 = vector.load %arg2[%c1_14, %c0_15, %c0_16] : memref<9x128x256xbf16, #tpu.memory_space<vmem>>, vector<1x128x256xbf16>
    %14 = vector.shape_cast %13 : vector<1x128x256xbf16> to vector<128x256xbf16>
    %cst_17 = arith.constant dense<0.000000e+00> : vector<96x256xf32>
    %15 = tpu.matmul %12, %14, %cst_17 {dimension_numbers = #tpu.dot_dimension_numbers<[1], [0], [0], [1], [0, 0, 1, 1], [], []>} : vector<96x128xbf16>, vector<128x256xbf16>, vector<96x256xf32> -> vector<96x256xf32>
    %16 = arith.addf %10, %15 : vector<96x256xf32>
    %c0_18 = arith.constant 0 : index
    %c2 = arith.constant 2 : index
    %c0_19 = arith.constant 0 : index
    %17 = vector.load %arg1[%c0_18, %c2, %c0_19] : memref<1x342x128xbf16, #tpu.memory_space<vmem>>, vector<1x96x128xbf16>
    %18 = vector.shape_cast %17 : vector<1x96x128xbf16> to vector<96x128xbf16>
    %c2_20 = arith.constant 2 : index
    %c0_21 = arith.constant 0 : index
    %c0_22 = arith.constant 0 : index
    %19 = vector.load %arg2[%c2_20, %c0_21, %c0_22] : memref<9x128x256xbf16, #tpu.memory_space<vmem>>, vector<1x128x256xbf16>
    %20 = vector.shape_cast %19 : vector<1x128x256xbf16> to vector<128x256xbf16>
    %cst_23 = arith.constant dense<0.000000e+00> : vector<96x256xf32>
    %21 = tpu.matmul %18, %20, %cst_23 {dimension_numbers = #tpu.dot_dimension_numbers<[1], [0], [0], [1], [0, 0, 1, 1], [], []>} : vector<96x128xbf16>, vector<128x256xbf16>, vector<96x256xf32> -> vector<96x256xf32>
    %22 = arith.addf %16, %21 : vector<96x256xf32>
    %c0_24 = arith.constant 0 : index
    %c18 = arith.constant 18 : index
    %c0_25 = arith.constant 0 : index
    %23 = vector.load %arg1[%c0_24, %c18, %c0_25] : memref<1x342x128xbf16, #tpu.memory_space<vmem>>, vector<1x96x128xbf16>
    %24 = vector.shape_cast %23 : vector<1x96x128xbf16> to vector<96x128xbf16>
    %c3 = arith.constant 3 : index
    %c0_26 = arith.constant 0 : index
    %c0_27 = arith.constant 0 : index
    %25 = vector.load %arg2[%c3, %c0_26, %c0_27] : memref<9x128x256xbf16, #tpu.memory_space<vmem>>, vector<1x128x256xbf16>
    %26 = vector.shape_cast %25 : vector<1x128x256xbf16> to vector<128x256xbf16>
    %cst_28 = arith.constant dense<0.000000e+00> : vector<96x256xf32>
    %27 = tpu.matmul %24, %26, %cst_28 {dimension_numbers = #tpu.dot_dimension_numbers<[1], [0], [0], [1], [0, 0, 1, 1], [], []>} : vector<96x128xbf16>, vector<128x256xbf16>, vector<96x256xf32> -> vector<96x256xf32>
    %28 = arith.addf %22, %27 : vector<96x256xf32>
    %c0_29 = arith.constant 0 : index
    %c19 = arith.constant 19 : index
    %c0_30 = arith.constant 0 : index
    %29 = vector.load %arg1[%c0_29, %c19, %c0_30] : memref<1x342x128xbf16, #tpu.memory_space<vmem>>, vector<1x96x128xbf16>
    %30 = vector.shape_cast %29 : vector<1x96x128xbf16> to vector<96x128xbf16>
    %c4 = arith.constant 4 : index
    %c0_31 = arith.constant 0 : index
    %c0_32 = arith.constant 0 : index
    %31 = vector.load %arg2[%c4, %c0_31, %c0_32] : memref<9x128x256xbf16, #tpu.memory_space<vmem>>, vector<1x128x256xbf16>
    %32 = vector.shape_cast %31 : vector<1x128x256xbf16> to vector<128x256xbf16>
    %cst_33 = arith.constant dense<0.000000e+00> : vector<96x256xf32>
    %33 = tpu.matmul %30, %32, %cst_33 {dimension_numbers = #tpu.dot_dimension_numbers<[1], [0], [0], [1], [0, 0, 1, 1], [], []>} : vector<96x128xbf16>, vector<128x256xbf16>, vector<96x256xf32> -> vector<96x256xf32>
    %34 = arith.addf %28, %33 : vector<96x256xf32>
    %c0_34 = arith.constant 0 : index
    %c20 = arith.constant 20 : index
    %c0_35 = arith.constant 0 : index
    %35 = vector.load %arg1[%c0_34, %c20, %c0_35] : memref<1x342x128xbf16, #tpu.memory_space<vmem>>, vector<1x96x128xbf16>
    %36 = vector.shape_cast %35 : vector<1x96x128xbf16> to vector<96x128xbf16>
    %c5 = arith.constant 5 : index
    %c0_36 = arith.constant 0 : index
    %c0_37 = arith.constant 0 : index
    %37 = vector.load %arg2[%c5, %c0_36, %c0_37] : memref<9x128x256xbf16, #tpu.memory_space<vmem>>, vector<1x128x256xbf16>
    %38 = vector.shape_cast %37 : vector<1x128x256xbf16> to vector<128x256xbf16>
    %cst_38 = arith.constant dense<0.000000e+00> : vector<96x256xf32>
    %39 = tpu.matmul %36, %38, %cst_38 {dimension_numbers = #tpu.dot_dimension_numbers<[1], [0], [0], [1], [0, 0, 1, 1], [], []>} : vector<96x128xbf16>, vector<128x256xbf16>, vector<96x256xf32> -> vector<96x256xf32>
    %40 = arith.addf %34, %39 : vector<96x256xf32>
    %c0_39 = arith.constant 0 : index
    %c36 = arith.constant 36 : index
    %c0_40 = arith.constant 0 : index
    %41 = vector.load %arg1[%c0_39, %c36, %c0_40] : memref<1x342x128xbf16, #tpu.memory_space<vmem>>, vector<1x96x128xbf16>
    %42 = vector.shape_cast %41 : vector<1x96x128xbf16> to vector<96x128xbf16>
    %c6 = arith.constant 6 : index
    %c0_41 = arith.constant 0 : index
    %c0_42 = arith.constant 0 : index
    %43 = vector.load %arg2[%c6, %c0_41, %c0_42] : memref<9x128x256xbf16, #tpu.memory_space<vmem>>, vector<1x128x256xbf16>
    %44 = vector.shape_cast %43 : vector<1x128x256xbf16> to vector<128x256xbf16>
    %cst_43 = arith.constant dense<0.000000e+00> : vector<96x256xf32>
    %45 = tpu.matmul %42, %44, %cst_43 {dimension_numbers = #tpu.dot_dimension_numbers<[1], [0], [0], [1], [0, 0, 1, 1], [], []>} : vector<96x128xbf16>, vector<128x256xbf16>, vector<96x256xf32> -> vector<96x256xf32>
    %46 = arith.addf %40, %45 : vector<96x256xf32>
    %c0_44 = arith.constant 0 : index
    %c37 = arith.constant 37 : index
    %c0_45 = arith.constant 0 : index
    %47 = vector.load %arg1[%c0_44, %c37, %c0_45] : memref<1x342x128xbf16, #tpu.memory_space<vmem>>, vector<1x96x128xbf16>
    %48 = vector.shape_cast %47 : vector<1x96x128xbf16> to vector<96x128xbf16>
    %c7 = arith.constant 7 : index
    %c0_46 = arith.constant 0 : index
    %c0_47 = arith.constant 0 : index
    %49 = vector.load %arg2[%c7, %c0_46, %c0_47] : memref<9x128x256xbf16, #tpu.memory_space<vmem>>, vector<1x128x256xbf16>
    %50 = vector.shape_cast %49 : vector<1x128x256xbf16> to vector<128x256xbf16>
    %cst_48 = arith.constant dense<0.000000e+00> : vector<96x256xf32>
    %51 = tpu.matmul %48, %50, %cst_48 {dimension_numbers = #tpu.dot_dimension_numbers<[1], [0], [0], [1], [0, 0, 1, 1], [], []>} : vector<96x128xbf16>, vector<128x256xbf16>, vector<96x256xf32> -> vector<96x256xf32>
    %52 = arith.addf %46, %51 : vector<96x256xf32>
    %c0_49 = arith.constant 0 : index
    %c38 = arith.constant 38 : index
    %c0_50 = arith.constant 0 : index
    %53 = vector.load %arg1[%c0_49, %c38, %c0_50] : memref<1x342x128xbf16, #tpu.memory_space<vmem>>, vector<1x96x128xbf16>
    %54 = vector.shape_cast %53 : vector<1x96x128xbf16> to vector<96x128xbf16>
    %c8 = arith.constant 8 : index
    %c0_51 = arith.constant 0 : index
    %c0_52 = arith.constant 0 : index
    %55 = vector.load %arg2[%c8, %c0_51, %c0_52] : memref<9x128x256xbf16, #tpu.memory_space<vmem>>, vector<1x128x256xbf16>
    %56 = vector.shape_cast %55 : vector<1x128x256xbf16> to vector<128x256xbf16>
    %cst_53 = arith.constant dense<0.000000e+00> : vector<96x256xf32>
    %57 = tpu.matmul %54, %56, %cst_53 {dimension_numbers = #tpu.dot_dimension_numbers<[1], [0], [0], [1], [0, 0, 1, 1], [], []>} : vector<96x128xbf16>, vector<128x256xbf16>, vector<96x256xf32> -> vector<96x256xf32>
    %58 = arith.addf %52, %57 : vector<96x256xf32>
    %c0_54 = arith.constant 0 : index
    %c0_55 = arith.constant 0 : index
    %59 = vector.load %arg3[%c0_54, %c0_55] : memref<1x256xf32, #tpu.memory_space<vmem>>, vector<1x256xf32>
    %60 = vector.broadcast %59 : vector<1x256xf32> to vector<96x256xf32>
    %61 = arith.addf %58, %60 : vector<96x256xf32>
    %cst_56 = arith.constant 0.000000e+00 : f32
    %62 = vector.broadcast %cst_56 : f32 to vector<96x256xf32>
    %63 = arith.maximumf %61, %62 : vector<96x256xf32>
    %c0_57 = arith.constant 0 : index
    %c0_58 = arith.constant 0 : index
    %64 = vector.load %arg6[%c0_57, %c0_58] : memref<288x1xf32, #tpu.memory_space<vmem>>, vector<96x1xf32>
    %cst_59 = arith.constant 0.000000e+00 : f32
    %65 = vector.broadcast %cst_59 : f32 to vector<96x1xf32>
    %66 = arith.cmpf ogt, %64, %65 : vector<96x1xf32>
    %cst_60 = arith.constant 0.000000e+00 : f32
    %67 = vector.shape_cast %66 : vector<96x1xi1> to vector<96x1xi1>
    %68 = vector.broadcast %67 : vector<96x1xi1> to vector<96x256xi1>
    %69 = vector.broadcast %cst_60 : f32 to vector<96x256xf32>
    %70 = arith.select %68, %63, %69 : vector<96x256xi1>, vector<96x256xf32>
    %c19_61 = arith.constant 19 : index
    %c0_62 = arith.constant 0 : index
    %71 = vector.load %arg8[%c19_61, %c0_62] : memref<324x256xf32, #tpu.memory_space<vmem>>, vector<96x256xf32>
    tpu.vector_store %arg8[%c19_61, %c0_62], %70 {strides = array<i32>} : memref<324x256xf32, #tpu.memory_space<vmem>>, vector<96x256xf32>,
    %c0_63 = arith.constant 0 : index
    %c96 = arith.constant 96 : index
    %c0_64 = arith.constant 0 : index
    %72 = vector.load %arg1[%c0_63, %c96, %c0_64] : memref<1x342x128xbf16, #tpu.memory_space<vmem>>, vector<1x96x128xbf16>
    %73 = vector.shape_cast %72 : vector<1x96x128xbf16> to vector<96x128xbf16>
    %c0_65 = arith.constant 0 : index
    %c0_66 = arith.constant 0 : index
    %c0_67 = arith.constant 0 : index
    %74 = vector.load %arg2[%c0_65, %c0_66, %c0_67] : memref<9x128x256xbf16, #tpu.memory_space<vmem>>, vector<1x128x256xbf16>
    %75 = vector.shape_cast %74 : vector<1x128x256xbf16> to vector<128x256xbf16>
    %cst_68 = arith.constant dense<0.000000e+00> : vector<96x256xf32>
    %76 = tpu.matmul %73, %75, %cst_68 {dimension_numbers = #tpu.dot_dimension_numbers<[1], [0], [0], [1], [0, 0, 1, 1], [], []>} : vector<96x128xbf16>, vector<128x256xbf16>, vector<96x256xf32> -> vector<96x256xf32>
    %c0_69 = arith.constant 0 : index
    %c97 = arith.constant 97 : index
    %c0_70 = arith.constant 0 : index
    %77 = vector.load %arg1[%c0_69, %c97, %c0_70] : memref<1x342x128xbf16, #tpu.memory_space<vmem>>, vector<1x96x128xbf16>
    %78 = vector.shape_cast %77 : vector<1x96x128xbf16> to vector<96x128xbf16>
    %c1_71 = arith.constant 1 : index
    %c0_72 = arith.constant 0 : index
    %c0_73 = arith.constant 0 : index
    %79 = vector.load %arg2[%c1_71, %c0_72, %c0_73] : memref<9x128x256xbf16, #tpu.memory_space<vmem>>, vector<1x128x256xbf16>
    %80 = vector.shape_cast %79 : vector<1x128x256xbf16> to vector<128x256xbf16>
    %cst_74 = arith.constant dense<0.000000e+00> : vector<96x256xf32>
    %81 = tpu.matmul %78, %80, %cst_74 {dimension_numbers = #tpu.dot_dimension_numbers<[1], [0], [0], [1], [0, 0, 1, 1], [], []>} : vector<96x128xbf16>, vector<128x256xbf16>, vector<96x256xf32> -> vector<96x256xf32>
    %82 = arith.addf %76, %81 : vector<96x256xf32>
    %c0_75 = arith.constant 0 : index
    %c98 = arith.constant 98 : index
    %c0_76 = arith.constant 0 : index
    %83 = vector.load %arg1[%c0_75, %c98, %c0_76] : memref<1x342x128xbf16, #tpu.memory_space<vmem>>, vector<1x96x128xbf16>
    %84 = vector.shape_cast %83 : vector<1x96x128xbf16> to vector<96x128xbf16>
    %c2_77 = arith.constant 2 : index
    %c0_78 = arith.constant 0 : index
    %c0_79 = arith.constant 0 : index
    %85 = vector.load %arg2[%c2_77, %c0_78, %c0_79] : memref<9x128x256xbf16, #tpu.memory_space<vmem>>, vector<1x128x256xbf16>
    %86 = vector.shape_cast %85 : vector<1x128x256xbf16> to vector<128x256xbf16>
    %cst_80 = arith.constant dense<0.000000e+00> : vector<96x256xf32>
    %87 = tpu.matmul %84, %86, %cst_80 {dimension_numbers = #tpu.dot_dimension_numbers<[1], [0], [0], [1], [0, 0, 1, 1], [], []>} : vector<96x128xbf16>, vector<128x256xbf16>, vector<96x256xf32> -> vector<96x256xf32>
    %88 = arith.addf %82, %87 : vector<96x256xf32>
    %c0_81 = arith.constant 0 : index
    %c114 = arith.constant 114 : index
    %c0_82 = arith.constant 0 : index
    %89 = vector.load %arg1[%c0_81, %c114, %c0_82] : memref<1x342x128xbf16, #tpu.memory_space<vmem>>, vector<1x96x128xbf16>
    %90 = vector.shape_cast %89 : vector<1x96x128xbf16> to vector<96x128xbf16>
    %c3_83 = arith.constant 3 : index
    %c0_84 = arith.constant 0 : index
    %c0_85 = arith.constant 0 : index
    %91 = vector.load %arg2[%c3_83, %c0_84, %c0_85] : memref<9x128x256xbf16, #tpu.memory_space<vmem>>, vector<1x128x256xbf16>
    %92 = vector.shape_cast %91 : vector<1x128x256xbf16> to vector<128x256xbf16>
    %cst_86 = arith.constant dense<0.000000e+00> : vector<96x256xf32>
    %93 = tpu.matmul %90, %92, %cst_86 {dimension_numbers = #tpu.dot_dimension_numbers<[1], [0], [0], [1], [0, 0, 1, 1], [], []>} : vector<96x128xbf16>, vector<128x256xbf16>, vector<96x256xf32> -> vector<96x256xf32>
    %94 = arith.addf %88, %93 : vector<96x256xf32>
    %c0_87 = arith.constant 0 : index
    %c115 = arith.constant 115 : index
    %c0_88 = arith.constant 0 : index
    %95 = vector.load %arg1[%c0_87, %c115, %c0_88] : memref<1x342x128xbf16, #tpu.memory_space<vmem>>, vector<1x96x128xbf16>
    %96 = vector.shape_cast %95 : vector<1x96x128xbf16> to vector<96x128xbf16>
    %c4_89 = arith.constant 4 : index
    %c0_90 = arith.constant 0 : index
    %c0_91 = arith.constant 0 : index
    %97 = vector.load %arg2[%c4_89, %c0_90, %c0_91] : memref<9x128x256xbf16, #tpu.memory_space<vmem>>, vector<1x128x256xbf16>
    %98 = vector.shape_cast %97 : vector<1x128x256xbf16> to vector<128x256xbf16>
    %cst_92 = arith.constant dense<0.000000e+00> : vector<96x256xf32>
    %99 = tpu.matmul %96, %98, %cst_92 {dimension_numbers = #tpu.dot_dimension_numbers<[1], [0], [0], [1], [0, 0, 1, 1], [], []>} : vector<96x128xbf16>, vector<128x256xbf16>, vector<96x256xf32> -> vector<96x256xf32>
    %100 = arith.addf %94, %99 : vector<96x256xf32>
    %c0_93 = arith.constant 0 : index
    %c116 = arith.constant 116 : index
    %c0_94 = arith.constant 0 : index
    %101 = vector.load %arg1[%c0_93, %c116, %c0_94] : memref<1x342x128xbf16, #tpu.memory_space<vmem>>, vector<1x96x128xbf16>
    %102 = vector.shape_cast %101 : vector<1x96x128xbf16> to vector<96x128xbf16>
    %c5_95 = arith.constant 5 : index
    %c0_96 = arith.constant 0 : index
    %c0_97 = arith.constant 0 : index
    %103 = vector.load %arg2[%c5_95, %c0_96, %c0_97] : memref<9x128x256xbf16, #tpu.memory_space<vmem>>, vector<1x128x256xbf16>
    %104 = vector.shape_cast %103 : vector<1x128x256xbf16> to vector<128x256xbf16>
    %cst_98 = arith.constant dense<0.000000e+00> : vector<96x256xf32>
    %105 = tpu.matmul %102, %104, %cst_98 {dimension_numbers = #tpu.dot_dimension_numbers<[1], [0], [0], [1], [0, 0, 1, 1], [], []>} : vector<96x128xbf16>, vector<128x256xbf16>, vector<96x256xf32> -> vector<96x256xf32>
    %106 = arith.addf %100, %105 : vector<96x256xf32>
    %c0_99 = arith.constant 0 : index
    %c132 = arith.constant 132 : index
    %c0_100 = arith.constant 0 : index
    %107 = vector.load %arg1[%c0_99, %c132, %c0_100] : memref<1x342x128xbf16, #tpu.memory_space<vmem>>, vector<1x96x128xbf16>
    %108 = vector.shape_cast %107 : vector<1x96x128xbf16> to vector<96x128xbf16>
    %c6_101 = arith.constant 6 : index
    %c0_102 = arith.constant 0 : index
    %c0_103 = arith.constant 0 : index
    %109 = vector.load %arg2[%c6_101, %c0_102, %c0_103] : memref<9x128x256xbf16, #tpu.memory_space<vmem>>, vector<1x128x256xbf16>
    %110 = vector.shape_cast %109 : vector<1x128x256xbf16> to vector<128x256xbf16>
    %cst_104 = arith.constant dense<0.000000e+00> : vector<96x256xf32>
    %111 = tpu.matmul %108, %110, %cst_104 {dimension_numbers = #tpu.dot_dimension_numbers<[1], [0], [0], [1], [0, 0, 1, 1], [], []>} : vector<96x128xbf16>, vector<128x256xbf16>, vector<96x256xf32> -> vector<96x256xf32>
    %112 = arith.addf %106, %111 : vector<96x256xf32>
    %c0_105 = arith.constant 0 : index
    %c133 = arith.constant 133 : index
    %c0_106 = arith.constant 0 : index
    %113 = vector.load %arg1[%c0_105, %c133, %c0_106] : memref<1x342x128xbf16, #tpu.memory_space<vmem>>, vector<1x96x128xbf16>
    %114 = vector.shape_cast %113 : vector<1x96x128xbf16> to vector<96x128xbf16>
    %c7_107 = arith.constant 7 : index
    %c0_108 = arith.constant 0 : index
    %c0_109 = arith.constant 0 : index
    %115 = vector.load %arg2[%c7_107, %c0_108, %c0_109] : memref<9x128x256xbf16, #tpu.memory_space<vmem>>, vector<1x128x256xbf16>
    %116 = vector.shape_cast %115 : vector<1x128x256xbf16> to vector<128x256xbf16>
    %cst_110 = arith.constant dense<0.000000e+00> : vector<96x256xf32>
    %117 = tpu.matmul %114, %116, %cst_110 {dimension_numbers = #tpu.dot_dimension_numbers<[1], [0], [0], [1], [0, 0, 1, 1], [], []>} : vector<96x128xbf16>, vector<128x256xbf16>, vector<96x256xf32> -> vector<96x256xf32>
    %118 = arith.addf %112, %117 : vector<96x256xf32>
    %c0_111 = arith.constant 0 : index
    %c134 = arith.constant 134 : index
    %c0_112 = arith.constant 0 : index
    %119 = vector.load %arg1[%c0_111, %c134, %c0_112] : memref<1x342x128xbf16, #tpu.memory_space<vmem>>, vector<1x96x128xbf16>
    %120 = vector.shape_cast %119 : vector<1x96x128xbf16> to vector<96x128xbf16>
    %c8_113 = arith.constant 8 : index
    %c0_114 = arith.constant 0 : index
    %c0_115 = arith.constant 0 : index
    %121 = vector.load %arg2[%c8_113, %c0_114, %c0_115] : memref<9x128x256xbf16, #tpu.memory_space<vmem>>, vector<1x128x256xbf16>
    %122 = vector.shape_cast %121 : vector<1x128x256xbf16> to vector<128x256xbf16>
    %cst_116 = arith.constant dense<0.000000e+00> : vector<96x256xf32>
    %123 = tpu.matmul %120, %122, %cst_116 {dimension_numbers = #tpu.dot_dimension_numbers<[1], [0], [0], [1], [0, 0, 1, 1], [], []>} : vector<96x128xbf16>, vector<128x256xbf16>, vector<96x256xf32> -> vector<96x256xf32>
    %124 = arith.addf %118, %123 : vector<96x256xf32>
    %c0_117 = arith.constant 0 : index
    %c0_118 = arith.constant 0 : index
    %125 = vector.load %arg3[%c0_117, %c0_118] : memref<1x256xf32, #tpu.memory_space<vmem>>, vector<1x256xf32>
    %126 = vector.broadcast %125 : vector<1x256xf32> to vector<96x256xf32>
    %127 = arith.addf %124, %126 : vector<96x256xf32>
    %cst_119 = arith.constant 0.000000e+00 : f32
    %128 = vector.broadcast %cst_119 : f32 to vector<96x256xf32>
    %129 = arith.maximumf %127, %128 : vector<96x256xf32>
    %c96_120 = arith.constant 96 : index
    %c0_121 = arith.constant 0 : index
    %130 = vector.load %arg6[%c96_120, %c0_121] : memref<288x1xf32, #tpu.memory_space<vmem>>, vector<96x1xf32>
    %cst_122 = arith.constant 0.000000e+00 : f32
    %131 = vector.broadcast %cst_122 : f32 to vector<96x1xf32>
    %132 = arith.cmpf ogt, %130, %131 : vector<96x1xf32>
    %cst_123 = arith.constant 0.000000e+00 : f32
    %133 = vector.shape_cast %132 : vector<96x1xi1> to vector<96x1xi1>
    %134 = vector.broadcast %133 : vector<96x1xi1> to vector<96x256xi1>
    %135 = vector.broadcast %cst_123 : f32 to vector<96x256xf32>
    %136 = arith.select %134, %129, %135 : vector<96x256xi1>, vector<96x256xf32>
    %c115_124 = arith.constant 115 : index
    %c0_125 = arith.constant 0 : index
    %137 = vector.load %arg8[%c115_124, %c0_125] : memref<324x256xf32, #tpu.memory_space<vmem>>, vector<96x256xf32>
    tpu.vector_store %arg8[%c115_124, %c0_125], %136 {strides = array<i32>} : memref<324x256xf32, #tpu.memory_space<vmem>>, vector<96x256xf32>,
    %c0_126 = arith.constant 0 : index
    %c192 = arith.constant 192 : index
    %c0_127 = arith.constant 0 : index
    %138 = vector.load %arg1[%c0_126, %c192, %c0_127] : memref<1x342x128xbf16, #tpu.memory_space<vmem>>, vector<1x96x128xbf16>
    %139 = vector.shape_cast %138 : vector<1x96x128xbf16> to vector<96x128xbf16>
    %c0_128 = arith.constant 0 : index
    %c0_129 = arith.constant 0 : index
    %c0_130 = arith.constant 0 : index
    %140 = vector.load %arg2[%c0_128, %c0_129, %c0_130] : memref<9x128x256xbf16, #tpu.memory_space<vmem>>, vector<1x128x256xbf16>
    %141 = vector.shape_cast %140 : vector<1x128x256xbf16> to vector<128x256xbf16>
    %cst_131 = arith.constant dense<0.000000e+00> : vector<96x256xf32>
    %142 = tpu.matmul %139, %141, %cst_131 {dimension_numbers = #tpu.dot_dimension_numbers<[1], [0], [0], [1], [0, 0, 1, 1], [], []>} : vector<96x128xbf16>, vector<128x256xbf16>, vector<96x256xf32> -> vector<96x256xf32>
    %c0_132 = arith.constant 0 : index
    %c193 = arith.constant 193 : index
    %c0_133 = arith.constant 0 : index
    %143 = vector.load %arg1[%c0_132, %c193, %c0_133] : memref<1x342x128xbf16, #tpu.memory_space<vmem>>, vector<1x96x128xbf16>
    %144 = vector.shape_cast %143 : vector<1x96x128xbf16> to vector<96x128xbf16>
    %c1_134 = arith.constant 1 : index
    %c0_135 = arith.constant 0 : index
    %c0_136 = arith.constant 0 : index
    %145 = vector.load %arg2[%c1_134, %c0_135, %c0_136] : memref<9x128x256xbf16, #tpu.memory_space<vmem>>, vector<1x128x256xbf16>
    %146 = vector.shape_cast %145 : vector<1x128x256xbf16> to vector<128x256xbf16>
    %cst_137 = arith.constant dense<0.000000e+00> : vector<96x256xf32>
    %147 = tpu.matmul %144, %146, %cst_137 {dimension_numbers = #tpu.dot_dimension_numbers<[1], [0], [0], [1], [0, 0, 1, 1], [], []>} : vector<96x128xbf16>, vector<128x256xbf16>, vector<96x256xf32> -> vector<96x256xf32>
    %148 = arith.addf %142, %147 : vector<96x256xf32>
    %c0_138 = arith.constant 0 : index
    %c194 = arith.constant 194 : index
    %c0_139 = arith.constant 0 : index
    %149 = vector.load %arg1[%c0_138, %c194, %c0_139] : memref<1x342x128xbf16, #tpu.memory_space<vmem>>, vector<1x96x128xbf16>
    %150 = vector.shape_cast %149 : vector<1x96x128xbf16> to vector<96x128xbf16>
    %c2_140 = arith.constant 2 : index
    %c0_141 = arith.constant 0 : index
    %c0_142 = arith.constant 0 : index
    %151 = vector.load %arg2[%c2_140, %c0_141, %c0_142] : memref<9x128x256xbf16, #tpu.memory_space<vmem>>, vector<1x128x256xbf16>
    %152 = vector.shape_cast %151 : vector<1x128x256xbf16> to vector<128x256xbf16>
    %cst_143 = arith.constant dense<0.000000e+00> : vector<96x256xf32>
    %153 = tpu.matmul %150, %152, %cst_143 {dimension_numbers = #tpu.dot_dimension_numbers<[1], [0], [0], [1], [0, 0, 1, 1], [], []>} : vector<96x128xbf16>, vector<128x256xbf16>, vector<96x256xf32> -> vector<96x256xf32>
    %154 = arith.addf %148, %153 : vector<96x256xf32>
    %c0_144 = arith.constant 0 : index
    %c210 = arith.constant 210 : index
    %c0_145 = arith.constant 0 : index
    %155 = vector.load %arg1[%c0_144, %c210, %c0_145] : memref<1x342x128xbf16, #tpu.memory_space<vmem>>, vector<1x96x128xbf16>
    %156 = vector.shape_cast %155 : vector<1x96x128xbf16> to vector<96x128xbf16>
    %c3_146 = arith.constant 3 : index
    %c0_147 = arith.constant 0 : index
    %c0_148 = arith.constant 0 : index
    %157 = vector.load %arg2[%c3_146, %c0_147, %c0_148] : memref<9x128x256xbf16, #tpu.memory_space<vmem>>, vector<1x128x256xbf16>
    %158 = vector.shape_cast %157 : vector<1x128x256xbf16> to vector<128x256xbf16>
    %cst_149 = arith.constant dense<0.000000e+00> : vector<96x256xf32>
    %159 = tpu.matmul %156, %158, %cst_149 {dimension_numbers = #tpu.dot_dimension_numbers<[1], [0], [0], [1], [0, 0, 1, 1], [], []>} : vector<96x128xbf16>, vector<128x256xbf16>, vector<96x256xf32> -> vector<96x256xf32>
    %160 = arith.addf %154, %159 : vector<96x256xf32>
    %c0_150 = arith.constant 0 : index
    %c211 = arith.constant 211 : index
    %c0_151 = arith.constant 0 : index
    %161 = vector.load %arg1[%c0_150, %c211, %c0_151] : memref<1x342x128xbf16, #tpu.memory_space<vmem>>, vector<1x96x128xbf16>
    %162 = vector.shape_cast %161 : vector<1x96x128xbf16> to vector<96x128xbf16>
    %c4_152 = arith.constant 4 : index
    %c0_153 = arith.constant 0 : index
    %c0_154 = arith.constant 0 : index
    %163 = vector.load %arg2[%c4_152, %c0_153, %c0_154] : memref<9x128x256xbf16, #tpu.memory_space<vmem>>, vector<1x128x256xbf16>
    %164 = vector.shape_cast %163 : vector<1x128x256xbf16> to vector<128x256xbf16>
    %cst_155 = arith.constant dense<0.000000e+00> : vector<96x256xf32>
    %165 = tpu.matmul %162, %164, %cst_155 {dimension_numbers = #tpu.dot_dimension_numbers<[1], [0], [0], [1], [0, 0, 1, 1], [], []>} : vector<96x128xbf16>, vector<128x256xbf16>, vector<96x256xf32> -> vector<96x256xf32>
    %166 = arith.addf %160, %165 : vector<96x256xf32>
    %c0_156 = arith.constant 0 : index
    %c212 = arith.constant 212 : index
    %c0_157 = arith.constant 0 : index
    %167 = vector.load %arg1[%c0_156, %c212, %c0_157] : memref<1x342x128xbf16, #tpu.memory_space<vmem>>, vector<1x96x128xbf16>
    %168 = vector.shape_cast %167 : vector<1x96x128xbf16> to vector<96x128xbf16>
    %c5_158 = arith.constant 5 : index
    %c0_159 = arith.constant 0 : index
    %c0_160 = arith.constant 0 : index
    %169 = vector.load %arg2[%c5_158, %c0_159, %c0_160] : memref<9x128x256xbf16, #tpu.memory_space<vmem>>, vector<1x128x256xbf16>
    %170 = vector.shape_cast %169 : vector<1x128x256xbf16> to vector<128x256xbf16>
    %cst_161 = arith.constant dense<0.000000e+00> : vector<96x256xf32>
    %171 = tpu.matmul %168, %170, %cst_161 {dimension_numbers = #tpu.dot_dimension_numbers<[1], [0], [0], [1], [0, 0, 1, 1], [], []>} : vector<96x128xbf16>, vector<128x256xbf16>, vector<96x256xf32> -> vector<96x256xf32>
    %172 = arith.addf %166, %171 : vector<96x256xf32>
    %c0_162 = arith.constant 0 : index
    %c228 = arith.constant 228 : index
    %c0_163 = arith.constant 0 : index
    %173 = vector.load %arg1[%c0_162, %c228, %c0_163] : memref<1x342x128xbf16, #tpu.memory_space<vmem>>, vector<1x96x128xbf16>
    %174 = vector.shape_cast %173 : vector<1x96x128xbf16> to vector<96x128xbf16>
    %c6_164 = arith.constant 6 : index
    %c0_165 = arith.constant 0 : index
    %c0_166 = arith.constant 0 : index
    %175 = vector.load %arg2[%c6_164, %c0_165, %c0_166] : memref<9x128x256xbf16, #tpu.memory_space<vmem>>, vector<1x128x256xbf16>
    %176 = vector.shape_cast %175 : vector<1x128x256xbf16> to vector<128x256xbf16>
    %cst_167 = arith.constant dense<0.000000e+00> : vector<96x256xf32>
    %177 = tpu.matmul %174, %176, %cst_167 {dimension_numbers = #tpu.dot_dimension_numbers<[1], [0], [0], [1], [0, 0, 1, 1], [], []>} : vector<96x128xbf16>, vector<128x256xbf16>, vector<96x256xf32> -> vector<96x256xf32>
    %178 = arith.addf %172, %177 : vector<96x256xf32>
    %c0_168 = arith.constant 0 : index
    %c229 = arith.constant 229 : index
    %c0_169 = arith.constant 0 : index
    %179 = vector.load %arg1[%c0_168, %c229, %c0_169] : memref<1x342x128xbf16, #tpu.memory_space<vmem>>, vector<1x96x128xbf16>
    %180 = vector.shape_cast %179 : vector<1x96x128xbf16> to vector<96x128xbf16>
    %c7_170 = arith.constant 7 : index
    %c0_171 = arith.constant 0 : index
    %c0_172 = arith.constant 0 : index
    %181 = vector.load %arg2[%c7_170, %c0_171, %c0_172] : memref<9x128x256xbf16, #tpu.memory_space<vmem>>, vector<1x128x256xbf16>
    %182 = vector.shape_cast %181 : vector<1x128x256xbf16> to vector<128x256xbf16>
    %cst_173 = arith.constant dense<0.000000e+00> : vector<96x256xf32>
    %183 = tpu.matmul %180, %182, %cst_173 {dimension_numbers = #tpu.dot_dimension_numbers<[1], [0], [0], [1], [0, 0, 1, 1], [], []>} : vector<96x128xbf16>, vector<128x256xbf16>, vector<96x256xf32> -> vector<96x256xf32>
    %184 = arith.addf %178, %183 : vector<96x256xf32>
    %c0_174 = arith.constant 0 : index
    %c230 = arith.constant 230 : index
    %c0_175 = arith.constant 0 : index
    %185 = vector.load %arg1[%c0_174, %c230, %c0_175] : memref<1x342x128xbf16, #tpu.memory_space<vmem>>, vector<1x96x128xbf16>
    %186 = vector.shape_cast %185 : vector<1x96x128xbf16> to vector<96x128xbf16>
    %c8_176 = arith.constant 8 : index
    %c0_177 = arith.constant 0 : index
    %c0_178 = arith.constant 0 : index
    %187 = vector.load %arg2[%c8_176, %c0_177, %c0_178] : memref<9x128x256xbf16, #tpu.memory_space<vmem>>, vector<1x128x256xbf16>
    %188 = vector.shape_cast %187 : vector<1x128x256xbf16> to vector<128x256xbf16>
    %cst_179 = arith.constant dense<0.000000e+00> : vector<96x256xf32>
    %189 = tpu.matmul %186, %188, %cst_179 {dimension_numbers = #tpu.dot_dimension_numbers<[1], [0], [0], [1], [0, 0, 1, 1], [], []>} : vector<96x128xbf16>, vector<128x256xbf16>, vector<96x256xf32> -> vector<96x256xf32>
    %190 = arith.addf %184, %189 : vector<96x256xf32>
    %c0_180 = arith.constant 0 : index
    %c0_181 = arith.constant 0 : index
    %191 = vector.load %arg3[%c0_180, %c0_181] : memref<1x256xf32, #tpu.memory_space<vmem>>, vector<1x256xf32>
    %192 = vector.broadcast %191 : vector<1x256xf32> to vector<96x256xf32>
    %193 = arith.addf %190, %192 : vector<96x256xf32>
    %cst_182 = arith.constant 0.000000e+00 : f32
    %194 = vector.broadcast %cst_182 : f32 to vector<96x256xf32>
    %195 = arith.maximumf %193, %194 : vector<96x256xf32>
    %c192_183 = arith.constant 192 : index
    %c0_184 = arith.constant 0 : index
    %196 = vector.load %arg6[%c192_183, %c0_184] : memref<288x1xf32, #tpu.memory_space<vmem>>, vector<96x1xf32>
    %cst_185 = arith.constant 0.000000e+00 : f32
    %197 = vector.broadcast %cst_185 : f32 to vector<96x1xf32>
    %198 = arith.cmpf ogt, %196, %197 : vector<96x1xf32>
    %cst_186 = arith.constant 0.000000e+00 : f32
    %199 = vector.shape_cast %198 : vector<96x1xi1> to vector<96x1xi1>
    %200 = vector.broadcast %199 : vector<96x1xi1> to vector<96x256xi1>
    %201 = vector.broadcast %cst_186 : f32 to vector<96x256xf32>
    %202 = arith.select %200, %195, %201 : vector<96x256xi1>, vector<96x256xf32>
    %c211_187 = arith.constant 211 : index
    %c0_188 = arith.constant 0 : index
    %203 = vector.load %arg8[%c211_187, %c0_188] : memref<324x256xf32, #tpu.memory_space<vmem>>, vector<96x256xf32>
    tpu.vector_store %arg8[%c211_187, %c0_188], %202 {strides = array<i32>} : memref<324x256xf32, #tpu.memory_space<vmem>>, vector<96x256xf32>,
    %c0_189 = arith.constant 0 : index
    %c0_190 = arith.constant 0 : index
    %204 = vector.load %arg8[%c0_189, %c0_190] : memref<324x256xf32, #tpu.memory_space<vmem>>, vector<128x256xf32>
    %205 = arith.truncf %204 : vector<128x256xf32> to vector<128x256xbf16>
    %c0_191 = arith.constant 0 : index
    %c0_192 = arith.constant 0 : index
    %206 = vector.load %arg4[%c0_191, %c0_192] : memref<256x128xbf16, #tpu.memory_space<vmem>>, vector<256x128xbf16>
    %cst_193 = arith.constant dense<0.000000e+00> : vector<128x128xf32>
    %207 = tpu.matmul %205, %206, %cst_193 {dimension_numbers = #tpu.dot_dimension_numbers<[1], [0], [0], [1], [0, 0, 1, 1], [], []>} : vector<128x256xbf16>, vector<256x128xbf16>, vector<128x128xf32> -> vector<128x128xf32>
    %c0_194 = arith.constant 0 : index
    %c0_195 = arith.constant 0 : index
    %208 = vector.load %arg9[%c0_194, %c0_195] : memref<332x128xf32, #tpu.memory_space<vmem>>, vector<128x128xf32>
    tpu.vector_store %arg9[%c0_194, %c0_195], %207 {strides = array<i32>} : memref<332x128xf32, #tpu.memory_space<vmem>>, vector<128x128xf32>,
    %c128 = arith.constant 128 : index
    %c0_196 = arith.constant 0 : index
    %209 = vector.load %arg8[%c128, %c0_196] : memref<324x256xf32, #tpu.memory_space<vmem>>, vector<128x256xf32>
    %210 = arith.truncf %209 : vector<128x256xf32> to vector<128x256xbf16>
    %c0_197 = arith.constant 0 : index
    %c0_198 = arith.constant 0 : index
    %211 = vector.load %arg4[%c0_197, %c0_198] : memref<256x128xbf16, #tpu.memory_space<vmem>>, vector<256x128xbf16>
    %cst_199 = arith.constant dense<0.000000e+00> : vector<128x128xf32>
    %212 = tpu.matmul %210, %211, %cst_199 {dimension_numbers = #tpu.dot_dimension_numbers<[1], [0], [0], [1], [0, 0, 1, 1], [], []>} : vector<128x256xbf16>, vector<256x128xbf16>, vector<128x128xf32> -> vector<128x128xf32>
    %c128_200 = arith.constant 128 : index
    %c0_201 = arith.constant 0 : index
    %213 = vector.load %arg9[%c128_200, %c0_201] : memref<332x128xf32, #tpu.memory_space<vmem>>, vector<128x128xf32>
    tpu.vector_store %arg9[%c128_200, %c0_201], %212 {strides = array<i32>} : memref<332x128xf32, #tpu.memory_space<vmem>>, vector<128x128xf32>,
    %c256 = arith.constant 256 : index
    %c0_202 = arith.constant 0 : index
    %214 = vector.load %arg8[%c256, %c0_202] : memref<324x256xf32, #tpu.memory_space<vmem>>, vector<68x256xf32>
    %215 = arith.truncf %214 : vector<68x256xf32> to vector<68x256xbf16>
    %c0_203 = arith.constant 0 : index
    %c0_204 = arith.constant 0 : index
    %216 = vector.load %arg4[%c0_203, %c0_204] : memref<256x128xbf16, #tpu.memory_space<vmem>>, vector<256x128xbf16>
    %cst_205 = arith.constant dense<0.000000e+00> : vector<68x128xf32>
    %217 = tpu.matmul %215, %216, %cst_205 {dimension_numbers = #tpu.dot_dimension_numbers<[1], [0], [0], [1], [0, 0, 1, 1], [], []>} : vector<68x256xbf16>, vector<256x128xbf16>, vector<68x128xf32> -> vector<68x128xf32>
    %c256_206 = arith.constant 256 : index
    %c0_207 = arith.constant 0 : index
    %218 = vector.load %arg9[%c256_206, %c0_207] : memref<332x128xf32, #tpu.memory_space<vmem>>, vector<68x128xf32>
    tpu.vector_store %arg9[%c256_206, %c0_207], %217 {strides = array<i32>} : memref<332x128xf32, #tpu.memory_space<vmem>>, vector<68x128xf32>,
    %c0_208 = arith.constant 0 : index
    %c0_209 = arith.constant 0 : index
    %219 = vector.load %arg9[%c0_208, %c0_209] : memref<332x128xf32, #tpu.memory_space<vmem>>, vector<96x4xf32>
    %c1_210 = arith.constant 1 : index
    %c4_211 = arith.constant 4 : index
    %220 = vector.load %arg9[%c1_210, %c4_211] : memref<332x128xf32, #tpu.memory_space<vmem>>, vector<96x4xf32>
    %221 = arith.addf %219, %220 : vector<96x4xf32>
    %c2_212 = arith.constant 2 : index
    %c8_213 = arith.constant 8 : index
    %222 = vector.load %arg9[%c2_212, %c8_213] : memref<332x128xf32, #tpu.memory_space<vmem>>, vector<96x4xf32>
    %223 = arith.addf %221, %222 : vector<96x4xf32>
    %c18_214 = arith.constant 18 : index
    %c12 = arith.constant 12 : index
    %224 = vector.load %arg9[%c18_214, %c12] : memref<332x128xf32, #tpu.memory_space<vmem>>, vector<96x4xf32>
    %225 = arith.addf %223, %224 : vector<96x4xf32>
    %c19_215 = arith.constant 19 : index
    %c16 = arith.constant 16 : index
    %226 = vector.load %arg9[%c19_215, %c16] : memref<332x128xf32, #tpu.memory_space<vmem>>, vector<96x4xf32>
    %227 = arith.addf %225, %226 : vector<96x4xf32>
    %c20_216 = arith.constant 20 : index
    %c20_217 = arith.constant 20 : index
    %228 = vector.load %arg9[%c20_216, %c20_217] : memref<332x128xf32, #tpu.memory_space<vmem>>, vector<96x4xf32>
    %229 = arith.addf %227, %228 : vector<96x4xf32>
    %c36_218 = arith.constant 36 : index
    %c24 = arith.constant 24 : index
    %230 = vector.load %arg9[%c36_218, %c24] : memref<332x128xf32, #tpu.memory_space<vmem>>, vector<96x4xf32>
    %231 = arith.addf %229, %230 : vector<96x4xf32>
    %c37_219 = arith.constant 37 : index
    %c28 = arith.constant 28 : index
    %232 = vector.load %arg9[%c37_219, %c28] : memref<332x128xf32, #tpu.memory_space<vmem>>, vector<96x4xf32>
    %233 = arith.addf %231, %232 : vector<96x4xf32>
    %c38_220 = arith.constant 38 : index
    %c32 = arith.constant 32 : index
    %234 = vector.load %arg9[%c38_220, %c32] : memref<332x128xf32, #tpu.memory_space<vmem>>, vector<96x4xf32>
    %235 = arith.addf %233, %234 : vector<96x4xf32>
    %c0_221 = arith.constant 0 : index
    %c0_222 = arith.constant 0 : index
    %236 = vector.load %arg5[%c0_221, %c0_222] : memref<1x4xf32, #tpu.memory_space<vmem>>, vector<1x4xf32>
    %237 = vector.broadcast %236 : vector<1x4xf32> to vector<96x4xf32>
    %238 = arith.addf %235, %237 : vector<96x4xf32>
    %c0_223 = arith.constant 0 : index
    %c0_224 = arith.constant 0 : index
    %c0_225 = arith.constant 0 : index
    %239 = vector.load %arg7[%c0_223, %c0_224, %c0_225] : memref<1x288x4xf32, #tpu.memory_space<vmem>>, vector<1x96x4xf32>
    %240 = vector.shape_cast %239 : vector<1x96x4xf32> to vector<96x4xf32>
    %241 = vector.shape_cast %238 : vector<96x4xf32> to vector<1x96x4xf32>
    tpu.vector_store %arg7[%c0_223, %c0_224, %c0_225], %241 {strides = array<i32>} : memref<1x288x4xf32, #tpu.memory_space<vmem>>, vector<1x96x4xf32>,
    %c96_226 = arith.constant 96 : index
    %c0_227 = arith.constant 0 : index
    %242 = vector.load %arg9[%c96_226, %c0_227] : memref<332x128xf32, #tpu.memory_space<vmem>>, vector<96x4xf32>
    %c97_228 = arith.constant 97 : index
    %c4_229 = arith.constant 4 : index
    %243 = vector.load %arg9[%c97_228, %c4_229] : memref<332x128xf32, #tpu.memory_space<vmem>>, vector<96x4xf32>
    %244 = arith.addf %242, %243 : vector<96x4xf32>
    %c98_230 = arith.constant 98 : index
    %c8_231 = arith.constant 8 : index
    %245 = vector.load %arg9[%c98_230, %c8_231] : memref<332x128xf32, #tpu.memory_space<vmem>>, vector<96x4xf32>
    %246 = arith.addf %244, %245 : vector<96x4xf32>
    %c114_232 = arith.constant 114 : index
    %c12_233 = arith.constant 12 : index
    %247 = vector.load %arg9[%c114_232, %c12_233] : memref<332x128xf32, #tpu.memory_space<vmem>>, vector<96x4xf32>
    %248 = arith.addf %246, %247 : vector<96x4xf32>
    %c115_234 = arith.constant 115 : index
    %c16_235 = arith.constant 16 : index
    %249 = vector.load %arg9[%c115_234, %c16_235] : memref<332x128xf32, #tpu.memory_space<vmem>>, vector<96x4xf32>
    %250 = arith.addf %248, %249 : vector<96x4xf32>
    %c116_236 = arith.constant 116 : index
    %c20_237 = arith.constant 20 : index
    %251 = vector.load %arg9[%c116_236, %c20_237] : memref<332x128xf32, #tpu.memory_space<vmem>>, vector<96x4xf32>
    %252 = arith.addf %250, %251 : vector<96x4xf32>
    %c132_238 = arith.constant 132 : index
    %c24_239 = arith.constant 24 : index
    %253 = vector.load %arg9[%c132_238, %c24_239] : memref<332x128xf32, #tpu.memory_space<vmem>>, vector<96x4xf32>
    %254 = arith.addf %252, %253 : vector<96x4xf32>
    %c133_240 = arith.constant 133 : index
    %c28_241 = arith.constant 28 : index
    %255 = vector.load %arg9[%c133_240, %c28_241] : memref<332x128xf32, #tpu.memory_space<vmem>>, vector<96x4xf32>
    %256 = arith.addf %254, %255 : vector<96x4xf32>
    %c134_242 = arith.constant 134 : index
    %c32_243 = arith.constant 32 : index
    %257 = vector.load %arg9[%c134_242, %c32_243] : memref<332x128xf32, #tpu.memory_space<vmem>>, vector<96x4xf32>
    %258 = arith.addf %256, %257 : vector<96x4xf32>
    %c0_244 = arith.constant 0 : index
    %c0_245 = arith.constant 0 : index
    %259 = vector.load %arg5[%c0_244, %c0_245] : memref<1x4xf32, #tpu.memory_space<vmem>>, vector<1x4xf32>
    %260 = vector.broadcast %259 : vector<1x4xf32> to vector<96x4xf32>
    %261 = arith.addf %258, %260 : vector<96x4xf32>
    %c0_246 = arith.constant 0 : index
    %c96_247 = arith.constant 96 : index
    %c0_248 = arith.constant 0 : index
    %262 = vector.load %arg7[%c0_246, %c96_247, %c0_248] : memref<1x288x4xf32, #tpu.memory_space<vmem>>, vector<1x96x4xf32>
    %263 = vector.shape_cast %262 : vector<1x96x4xf32> to vector<96x4xf32>
    %264 = vector.shape_cast %261 : vector<96x4xf32> to vector<1x96x4xf32>
    tpu.vector_store %arg7[%c0_246, %c96_247, %c0_248], %264 {strides = array<i32>} : memref<1x288x4xf32, #tpu.memory_space<vmem>>, vector<1x96x4xf32>,
    %c192_249 = arith.constant 192 : index
    %c0_250 = arith.constant 0 : index
    %265 = vector.load %arg9[%c192_249, %c0_250] : memref<332x128xf32, #tpu.memory_space<vmem>>, vector<96x4xf32>
    %c193_251 = arith.constant 193 : index
    %c4_252 = arith.constant 4 : index
    %266 = vector.load %arg9[%c193_251, %c4_252] : memref<332x128xf32, #tpu.memory_space<vmem>>, vector<96x4xf32>
    %267 = arith.addf %265, %266 : vector<96x4xf32>
    %c194_253 = arith.constant 194 : index
    %c8_254 = arith.constant 8 : index
    %268 = vector.load %arg9[%c194_253, %c8_254] : memref<332x128xf32, #tpu.memory_space<vmem>>, vector<96x4xf32>
    %269 = arith.addf %267, %268 : vector<96x4xf32>
    %c210_255 = arith.constant 210 : index
    %c12_256 = arith.constant 12 : index
    %270 = vector.load %arg9[%c210_255, %c12_256] : memref<332x128xf32, #tpu.memory_space<vmem>>, vector<96x4xf32>
    %271 = arith.addf %269, %270 : vector<96x4xf32>
    %c211_257 = arith.constant 211 : index
    %c16_258 = arith.constant 16 : index
    %272 = vector.load %arg9[%c211_257, %c16_258] : memref<332x128xf32, #tpu.memory_space<vmem>>, vector<96x4xf32>
    %273 = arith.addf %271, %272 : vector<96x4xf32>
    %c212_259 = arith.constant 212 : index
    %c20_260 = arith.constant 20 : index
    %274 = vector.load %arg9[%c212_259, %c20_260] : memref<332x128xf32, #tpu.memory_space<vmem>>, vector<96x4xf32>
    %275 = arith.addf %273, %274 : vector<96x4xf32>
    %c228_261 = arith.constant 228 : index
    %c24_262 = arith.constant 24 : index
    %276 = vector.load %arg9[%c228_261, %c24_262] : memref<332x128xf32, #tpu.memory_space<vmem>>, vector<96x4xf32>
    %277 = arith.addf %275, %276 : vector<96x4xf32>
    %c229_263 = arith.constant 229 : index
    %c28_264 = arith.constant 28 : index
    %278 = vector.load %arg9[%c229_263, %c28_264] : memref<332x128xf32, #tpu.memory_space<vmem>>, vector<96x4xf32>
    %279 = arith.addf %277, %278 : vector<96x4xf32>
    %c230_265 = arith.constant 230 : index
    %c32_266 = arith.constant 32 : index
    %280 = vector.load %arg9[%c230_265, %c32_266] : memref<332x128xf32, #tpu.memory_space<vmem>>, vector<96x4xf32>
    %281 = arith.addf %279, %280 : vector<96x4xf32>
    %c0_267 = arith.constant 0 : index
    %c0_268 = arith.constant 0 : index
    %282 = vector.load %arg5[%c0_267, %c0_268] : memref<1x4xf32, #tpu.memory_space<vmem>>, vector<1x4xf32>
    %283 = vector.broadcast %282 : vector<1x4xf32> to vector<96x4xf32>
    %284 = arith.addf %281, %283 : vector<96x4xf32>
    %c0_269 = arith.constant 0 : index
    %c192_270 = arith.constant 192 : index
    %c0_271 = arith.constant 0 : index
    %285 = vector.load %arg7[%c0_269, %c192_270, %c0_271] : memref<1x288x4xf32, #tpu.memory_space<vmem>>, vector<1x96x4xf32>
    %286 = vector.shape_cast %285 : vector<1x96x4xf32> to vector<96x4xf32>
    %287 = vector.shape_cast %284 : vector<96x4xf32> to vector<1x96x4xf32>
    tpu.vector_store %arg7[%c0_269, %c192_270, %c0_271], %287 {strides = array<i32>} : memref<1x288x4xf32, #tpu.memory_space<vmem>>, vector<1x96x4xf32>,
    return
  }
  func.func @transform_0(%arg0: i32) -> (i32, i32, i32) {
    %c0_i32 = arith.constant 0 : i32
    %c0_i32_0 = arith.constant 0 : i32
    %c0_i32_1 = arith.constant 0 : i32
    return %arg0, %c0_i32, %c0_i32_0 : i32, i32, i32
  }
  func.func @transform_1(%arg0: i32) -> (i32, i32, i32) {
    %c0_i32 = arith.constant 0 : i32
    %c0_i32_0 = arith.constant 0 : i32
    %c0_i32_1 = arith.constant 0 : i32
    %c0_i32_2 = arith.constant 0 : i32
    return %c0_i32, %c0_i32_0, %c0_i32_1 : i32, i32, i32
  }
  func.func @transform_2(%arg0: i32) -> (i32, i32) {
    %c0_i32 = arith.constant 0 : i32
    %c0_i32_0 = arith.constant 0 : i32
    %c0_i32_1 = arith.constant 0 : i32
    return %c0_i32, %c0_i32_0 : i32, i32
  }
  func.func @transform_3(%arg0: i32) -> (i32, i32) {
    %c0_i32 = arith.constant 0 : i32
    %c0_i32_0 = arith.constant 0 : i32
    %c0_i32_1 = arith.constant 0 : i32
    return %c0_i32, %c0_i32_0 : i32, i32
  }
  func.func @transform_4(%arg0: i32) -> (i32, i32) {
    %c0_i32 = arith.constant 0 : i32
    %c0_i32_0 = arith.constant 0 : i32
    %c0_i32_1 = arith.constant 0 : i32
    return %c0_i32, %c0_i32_0 : i32, i32
  }
  func.func @transform_5(%arg0: i32) -> (i32, i32) {
    %c0_i32 = arith.constant 0 : i32
    %c0_i32_0 = arith.constant 0 : i32
    %c0_i32_1 = arith.constant 0 : i32
    return %c0_i32, %c0_i32_0 : i32, i32
  }
  func.func @transform_6(%arg0: i32) -> (i32, i32, i32) {
    %c0_i32 = arith.constant 0 : i32
    %c0_i32_0 = arith.constant 0 : i32
    %c0_i32_1 = arith.constant 0 : i32
    return %arg0, %c0_i32, %c0_i32_0 : i32, i32, i32
  }
}

</mosaic_0001>

<llo_original>
// kernel: flow_head_pallas.1
$region0: #{flow_head_pallas.1}
  #allocation0 [shape = 'u32[]', space=smem, size = 0x4, offset = 0x4, fixed_abs, tag = 'smem constant byte address 0x4 - core index']
  #allocation1 [shape = 'u32[72,128]{1,0:T(1,128)}', space=vmem, size = 0x9000, scoped, tag = 'internal scratch']
  #allocation2 [shape = 'f32[324,256]{1,0:T(8,128)}', space=vmem, size = 0x52000, scoped, tag = 'scratch operand']
  #allocation3 [shape = 'f32[332,128]{1,0:T(8,128)}', space=vmem, size = 0x2a000, scoped, tag = 'scratch operand']
  %s0 = inlined_call_operand.vmem [shape: bf16[2,342,128], index: 0, kind: input, shape index: {}]
  %s1 = inlined_call_operand.vmem [shape: bf16[9,128,256], index: 1, kind: input, shape index: {}]
  %s2 = inlined_call_operand.vmem [shape: f32[1,256], index: 2, kind: input, shape index: {}]
  %s3 = inlined_call_operand.vmem [shape: bf16[256,128], index: 3, kind: input, shape index: {}]
  %s4 = inlined_call_operand.vmem [shape: f32[1,4], index: 4, kind: input, shape index: {}]
  %s5 = inlined_call_operand.vmem [shape: f32[288,1], index: 5, kind: input, shape index: {}]
  %s6 = inlined_call_operand.vmem [shape: f32[2,288,4], index: 6, kind: output, shape index: {}]
  %s7 = sld [smem:[#allocation0]]
  $region57: #{flow_head_pallas.1} parent=0
    _
  %s9 = ssub.s32 1, %s7
  %s10 = scalar_select 0, %s9, %s7
  loop: start=0, step=1, limit=4
  $region2: #{flow_head_pallas.1} parent=0 // loop_pre_header
    _
  $region3: #{flow_head_pallas.1} parent=0 // loop_header
    %s12 = sphi 0, %s16
    %p13 = scmp.ge.s32.totalorder %s12, 4
    %s22 = sphi 0, %s24
    %s25 = sphi 0, %s22
    %s26 = sphi 0, %s25
    %s42 = sphi 0, %s26
    %s46 = sphi 0, %s46
    %s48 = sphi 0, %s46
    %s49 = sphi 0, %s48
    %s63 = sphi 0, %s49
    %s67 = sphi 0, %s67
    %s69 = sphi 0, %s67
    %s70 = sphi 0, %s69
    %s84 = sphi 0, %s70
    %s88 = sphi 0, %s88
    %s90 = sphi 0, %s88
    %s91 = sphi 0, %s90
    %s105 = sphi 0, %s91
    %s109 = sphi 0, %s109
    %s111 = sphi 0, %s109
    %s112 = sphi 0, %s111
    %s126 = sphi 0, %s112
    %s130 = sphi 0, %s130
    %s132 = sphi 0, %s130
    %s133 = sphi 0, %s132
    %s147 = sphi 0, %s133
    %s153 = sphi 0, %s155
    %s156 = sphi 0, %s153
    %s157 = sphi 0, %s156
    %s173 = sphi 0, %s157
  $region4: #{flow_head_pallas.1} parent=0 // loop_header_branch
    %15 = sbr.rel (%p13) target = $region8
  $region5: #{flow_head_pallas.1} parent=0 // loop_body
    %s17 = ssub.s32 %s12, 1
    %s18 = ssub.s32 %s12, 2
    %s19 = sadd.s32 %s12, 1
    %s20 = ssub.s32 %s12, %s19
    %p21 = scmp.eq.s32.totalorder %s20, 0
    %s23 = sadd.s32 %s22, 1
    %s24 = scalar_select %p21, %s22, %s23
    %p27 = pneg %p21
    %p28 = scmp.eq.s32.totalorder %s12, 1
    %p29 = por %p27, %p28
    %p30 = scmp.ne.s32.totalorder %s22, %s25
    %p31 = scmp.eq.s32.totalorder %s12, 0
    %p32 = por %p30, %p31
    %p33 = scmp.ne.s32.totalorder %s22, %s25
    %p34 = scmp.eq.s32.totalorder %s17, 1
    %p35 = por %p33, %p34
    %p36 = scmp.ne.s32.totalorder %s25, %s26
    %p37 = scmp.eq.s32.totalorder %s17, 0
    %p38 = por %p36, %p37
    %p39 = scmp.ne.s32.totalorder %s25, %s26
    %p40 = scmp.eq.s32.totalorder %s18, 1
    %p41 = por %p39, %p40
    %p43 = scmp.ne.s32.totalorder %s26, %s42
    %p44 = scmp.eq.s32.totalorder %s18, 0
    %p45 = por %p43, %p44
    %s47 = sadd.s32 %s46, 1
    %p50 = scmp.eq.s32.totalorder %s12, 1
    %p51 = scmp.ne.s32.totalorder %s46, %s48
    %p52 = scmp.eq.s32.totalorder %s12, 0
    %p53 = por %p51, %p52
    %p54 = scmp.ne.s32.totalorder %s46, %s48
    %p55 = scmp.eq.s32.totalorder %s17, 1
    %p56 = por %p54, %p55
    %p57 = scmp.ne.s32.totalorder %s48, %s49
    %p58 = scmp.eq.s32.totalorder %s17, 0
    %p59 = por %p57, %p58
    %p60 = scmp.ne.s32.totalorder %s48, %s49
    %p61 = scmp.eq.s32.totalorder %s18, 1
    %p62 = por %p60, %p61
    %p64 = scmp.ne.s32.totalorder %s49, %s63
    %p65 = scmp.eq.s32.totalorder %s18, 0
    %p66 = por %p64, %p65
    %s68 = sadd.s32 %s67, 1
    %p71 = scmp.eq.s32.totalorder %s12, 1
    %p72 = scmp.ne.s32.totalorder %s67, %s69
    %p73 = scmp.eq.s32.totalorder %s12, 0
    %p74 = por %p72, %p73
    %p75 = scmp.ne.s32.totalorder %s67, %s69
    %p76 = scmp.eq.s32.totalorder %s17, 1
    %p77 = por %p75, %p76
    %p78 = scmp.ne.s32.totalorder %s69, %s70
    %p79 = scmp.eq.s32.totalorder %s17, 0
    %p80 = por %p78, %p79
    %p81 = scmp.ne.s32.totalorder %s69, %s70
    %p82 = scmp.eq.s32.totalorder %s18, 1
    %p83 = por %p81, %p82
    %p85 = scmp.ne.s32.totalorder %s70, %s84
    %p86 = scmp.eq.s32.totalorder %s18, 0
    %p87 = por %p85, %p86
    %s89 = sadd.s32 %s88, 1
    %p92 = scmp.eq.s32.totalorder %s12, 1
    %p93 = scmp.ne.s32.totalorder %s88, %s90
    %p94 = scmp.eq.s32.totalorder %s12, 0
    %p95 = por %p93, %p94
    %p96 = scmp.ne.s32.totalorder %s88, %s90
    %p97 = scmp.eq.s32.totalorder %s17, 1
    %p98 = por %p96, %p97
    %p99 = scmp.ne.s32.totalorder %s90, %s91
    %p100 = scmp.eq.s32.totalorder %s17, 0
    %p101 = por %p99, %p100
    %p102 = scmp.ne.s32.totalorder %s90, %s91
    %p103 = scmp.eq.s32.totalorder %s18, 1
    %p104 = por %p102, %p103
    %p106 = scmp.ne.s32.totalorder %s91, %s105
    %p107 = scmp.eq.s32.totalorder %s18, 0
    %p108 = por %p106, %p107
    %s110 = sadd.s32 %s109, 1
    %p113 = scmp.eq.s32.totalorder %s12, 1
    %p114 = scmp.ne.s32.totalorder %s109, %s111
    %p115 = scmp.eq.s32.totalorder %s12, 0
    %p116 = por %p114, %p115
    %p117 = scmp.ne.s32.totalorder %s109, %s111
    %p118 = scmp.eq.s32.totalorder %s17, 1
    %p119 = por %p117, %p118
    %p120 = scmp.ne.s32.totalorder %s111, %s112
    %p121 = scmp.eq.s32.totalorder %s17, 0
    %p122 = por %p120, %p121
    %p123 = scmp.ne.s32.totalorder %s111, %s112
    %p124 = scmp.eq.s32.totalorder %s18, 1
    %p125 = por %p123, %p124
    %p127 = scmp.ne.s32.totalorder %s112, %s126
    %p128 = scmp.eq.s32.totalorder %s18, 0
    %p129 = por %p127, %p128
    %s131 = sadd.s32 %s130, 1
    %p134 = scmp.eq.s32.totalorder %s12, 1
    %p135 = scmp.ne.s32.totalorder %s130, %s132
    %p136 = scmp.eq.s32.totalorder %s12, 0
    %p137 = por %p135, %p136
    %p138 = scmp.ne.s32.totalorder %s130, %s132
    %p139 = scmp.eq.s32.totalorder %s17, 1
    %p140 = por %p138, %p139
    %p141 = scmp.ne.s32.totalorder %s132, %s133
    %p142 = scmp.eq.s32.totalorder %s17, 0
    %p143 = por %p141, %p142
    %p144 = scmp.ne.s32.totalorder %s132, %s133
    %p145 = scmp.eq.s32.totalorder %s18, 1
    %p146 = por %p144, %p145
    %p148 = scmp.ne.s32.totalorder %s133, %s147
    %p149 = scmp.eq.s32.totalorder %s18, 0
    %p150 = por %p148, %p149
    %s151 = ssub.s32 %s12, %s19
    %p152 = scmp.eq.s32.totalorder %s151, 0
    %s154 = sadd.s32 %s153, 1
    %s155 = scalar_select %p152, %s153, %s154
    %p158 = pneg %p152
    %p159 = scmp.eq.s32.totalorder %s12, 1
    %p160 = por %p158, %p159
    %p161 = scmp.ne.s32.totalorder %s153, %s156
    %p162 = scmp.eq.s32.totalorder %s12, 0
    %p163 = por %p161, %p162
    %p164 = scmp.ne.s32.totalorder %s153, %s156
    %p165 = scmp.eq.s32.totalorder %s17, 1
    %p166 = por %p164, %p165
    %p167 = scmp.ne.s32.totalorder %s156, %s157
    %p168 = scmp.eq.s32.totalorder %s17, 0
    %p169 = por %p167, %p168
    %p170 = scmp.ne.s32.totalorder %s156, %s157
    %p171 = scmp.eq.s32.totalorder %s18, 1
    %p172 = por %p170, %p171
    %p174 = scmp.ne.s32.totalorder %s157, %s173
    %p175 = scmp.eq.s32.totalorder %s18, 0
    %p176 = por %p174, %p175
    %p177 = scmp.le.s32.totalorder 1, %s12
    %p178 = scmp.lt.s32.totalorder %s12, 3
    %p179 = pnand %p177, %p178
    %p180 = pneg %p179
    // Predicated region
    $region9: #{flow_head_pallas.1} parent=5 // pred_check
      _
    $region10: #{flow_head_pallas.1} parent=5 // pred_check_branch
      %182 = sbr.rel (%p179) target = $region12
    $region11: #{flow_head_pallas.1} parent=5 // pred_region
      %s183 = ssub.s32 %s12, 1
      // Predicated region
      $region13: #{flow_head_pallas.1} parent=11 // pred_check
        %p184 = pneg %p59
      $region14: #{flow_head_pallas.1} parent=11 // pred_check_branch
        %186 = sbr.rel (%p184) target = $region16
      $region15: #{flow_head_pallas.1} parent=11 // pred_region
        _
      $region16: #{flow_head_pallas.1} parent=11 // pred_fallthru
        _
      // Predicated region
      $region17: #{flow_head_pallas.1} parent=11 // pred_check
        %p187 = pneg %p80
      $region18: #{flow_head_pallas.1} parent=11 // pred_check_branch
        %189 = sbr.rel (%p187) target = $region20
      $region19: #{flow_head_pallas.1} parent=11 // pred_region
        _
      $region20: #{flow_head_pallas.1} parent=11 // pred_fallthru
        _
      // Predicated region
      $region21: #{flow_head_pallas.1} parent=11 // pred_check
        %p190 = pneg %p101
      $region22: #{flow_head_pallas.1} parent=11 // pred_check_branch
        %192 = sbr.rel (%p190) target = $region24
      $region23: #{flow_head_pallas.1} parent=11 // pred_region
        _
      $region24: #{flow_head_pallas.1} parent=11 // pred_fallthru
        _
      // Predicated region
      $region25: #{flow_head_pallas.1} parent=11 // pred_check
        %p193 = pneg %p122
      $region26: #{flow_head_pallas.1} parent=11 // pred_check_branch
        %195 = sbr.rel (%p193) target = $region28
      $region27: #{flow_head_pallas.1} parent=11 // pred_region
        _
      $region28: #{flow_head_pallas.1} parent=11 // pred_fallthru
        _
      // Predicated region
      $region29: #{flow_head_pallas.1} parent=11 // pred_check
        %p196 = pneg %p143
      $region30: #{flow_head_pallas.1} parent=11 // pred_check_branch
        %198 = sbr.rel (%p196) target = $region32
      $region31: #{flow_head_pallas.1} parent=11 // pred_region
        _
      $region32: #{flow_head_pallas.1} parent=11 // pred_fallthru
        _
    $region12: #{flow_head_pallas.1} parent=5 // pred_fallthru
      _
    %p199 = scmp.lt.s32.totalorder %s12, 2
    // Predicated region
    $region33: #{flow_head_pallas.1} parent=5 // pred_check
      %p200 = pneg %p199
    $region34: #{flow_head_pallas.1} parent=5 // pred_check_branch
      %202 = sbr.rel (%p200) target = $region36
    $region35: #{flow_head_pallas.1} parent=5 // pred_region
      // Predicated region
      $region37: #{flow_head_pallas.1} parent=35 // pred_check
        %p203 = pneg %p32
      $region38: #{flow_head_pallas.1} parent=35 // pred_check_branch
        %205 = sbr.rel (%p203) target = $region40
      $region39: #{flow_head_pallas.1} parent=35 // pred_region
        %p206 = scmp.lt.s32.totalorder %s12, 1
        %s207 = scalar_select %p206, %s12, 1
        %s208 = smul.addr %s207, 43
        %s209 = smul.addr %s208, 4
        %s210 = scalar_lea.vmem %s0, %s209
      $region40: #{flow_head_pallas.1} parent=35 // pred_fallthru
        _
    $region36: #{flow_head_pallas.1} parent=5 // pred_fallthru
      _
    %p211 = scmp.le.s32.totalorder 1, %s12
    %p212 = scmp.lt.s32.totalorder %s12, 3
    %p213 = pnand %p211, %p212
    %p214 = pneg %p213
    // Predicated region
    $region41: #{flow_head_pallas.1} parent=5 // pred_check
      _
    $region42: #{flow_head_pallas.1} parent=5 // pred_check_branch
      %216 = sbr.rel (%p213) target = $region44
    $region43: #{flow_head_pallas.1} parent=5 // pred_region
      %s217 = ssub.s32 %s12, 1
      %p218 = scmp.lt.s32.totalorder %s17, 1
      %s219 = scalar_select %p218, %s17, 1
      %s220 = smul.addr %s219, 43
      %s221 = smul.addr %s220, 4
      %s222 = scalar_lea.vmem %s0, %s221
      %p223 = pneg %p38
      %p224 = pneg %p35
      %p225 = pneg %p59
      %p226 = pneg %p56
      %p227 = pneg %p80
      %p228 = pneg %p77
      %p229 = pneg %p101
      %p230 = pneg %p98
      %p231 = pneg %p122
      %p232 = pneg %p119
      %p233 = pneg %p143
      %p234 = pneg %p140
      %p235 = pneg %p169
      %p236 = pneg %p166
      %p237 = scmp.lt.s32.totalorder %s17, 1
      %s238 = scalar_select %p237, %s17, 1
      %s239 = smul.addr %s238, 36
      %s240 = smul.addr %s239, 8
      %s241 = scalar_lea.vmem %s6, %s240
      %p242 = scmp.lt.s32.totalorder %s17, 1
      %s243 = scalar_select %p242, %s17, 1
      %s244 = smul.addr %s243, 43
      %s245 = smul.addr %s244, 4
      %s246 = scalar_lea.vmem %s0, %s245
      %p247 = scmp.lt.s32.totalorder %s17, 1
      %s248 = scalar_select %p247, %s17, 1
      %s249 = smul.addr %s248, 36
      %s250 = smul.addr %s249, 8
      %s251 = scalar_lea.vmem %s6, %s250
      %252 = vst [vmem:[#allocation2] sm:$0xff] 0.0
      %253 = vst [vmem:[#allocation2 + $0x8] sm:$0xff] 0.0
      %254 = vst [vmem:[#allocation2 + $0x10] sm:$0xff] 0.0
      %255 = vst [vmem:[#allocation2 + $0x18] sm:$0xff] 0.0
      %256 = vst [vmem:[#allocation2 + $0x20] sm:$0x7] 0.0
      %257 = vst [vmem:[#allocation2 + $0x28] sm:$0x7] 0.0
      %258 = vst [vmem:[#allocation2 + $0x260] sm:$0xf8] 0.0
      %259 = vst [vmem:[#allocation2 + $0x268] sm:$0xf8] 0.0
      %260 = vst [vmem:[#allocation2 + $0x270] sm:$0xff] 0.0
      %261 = vst [vmem:[#allocation2 + $0x278] sm:$0xff] 0.0
      %262 = vst [vmem:[#allocation2 + $0x280] sm:$0xf] 0.0
      %263 = vst [vmem:[#allocation2 + $0x288] sm:$0xf] 0.0
      %264 = vst [vmem:[#allocation3 + $0x144] sm:$0xff] 0.0
      %v265 = vld [vmem:[%s246] sm:$0xf]
      %v266 = vld [vmem:[%s246 + $0x4] sm:$0xf]
      %v267 = vld [vmem:[%s246 + $0x8] sm:$0xf]
      %v268 = vld [vmem:[%s246 + $0xc] sm:$0xf]
      %v269 = vld [vmem:[%s246 + $0x10] sm:$0xf]
      %v270 = vld [vmem:[%s246 + $0x14] sm:$0xf]
      %v271 = vld [vmem:[%s246 + $0x18] sm:$0xf]
      %v272 = vld [vmem:[%s246 + $0x1c] sm:$0xf]
      %v273 = vld [vmem:[%s246 + $0x20] sm:$0xf]
      %v274 = vld [vmem:[%s246 + $0x24] sm:$0xf]
      %v275 = vld [vmem:[%s246 + $0x28] sm:$0xf]
      %v276 = vld [vmem:[%s246 + $0x2c] sm:$0xf]
      %v277 = vld [vmem:[%s1] sm:$0xff]
      %v278 = vld [vmem:[%s1 + $0x8] sm:$0xff]
      %v279 = vld [vmem:[%s1 + $0x10] sm:$0xff]
      %v280 = vld [vmem:[%s1 + $0x18] sm:$0xff]
      %v281 = vld [vmem:[%s1 + $0x20] sm:$0xff]
      %v282 = vld [vmem:[%s1 + $0x28] sm:$0xff]
      %v283 = vld [vmem:[%s1 + $0x30] sm:$0xff]
      %v284 = vld [vmem:[%s1 + $0x38] sm:$0xff]
      %v285 = vld [vmem:[%s1 + $0x40] sm:$0xff]
      %v286 = vld [vmem:[%s1 + $0x48] sm:$0xff]
      %v287 = vld [vmem:[%s1 + $0x50] sm:$0xff]
      %v288 = vld [vmem:[%s1 + $0x58] sm:$0xff]
      %v289 = vld [vmem:[%s1 + $0x60] sm:$0xff]
      %v290 = vld [vmem:[%s1 + $0x68] sm:$0xff]
      %v291 = vld [vmem:[%s1 + $0x70] sm:$0xff]
      %v292 = vld [vmem:[%s1 + $0x78] sm:$0xff]
      %v293 = vld [vmem:[%s246 + $0x30] sm:$0x1]
      %s294 = scalar_lea.vmem %s1, 128
      %v295 = vld [vmem:[%s294] sm:$0xff]
      %v296 = vld [vmem:[%s294 + $0x8] sm:$0xff]
      %v297 = vld [vmem:[%s294 + $0x10] sm:$0xff]
      %v298 = vld [vmem:[%s294 + $0x18] sm:$0xff]
      %v299 = vld [vmem:[%s294 + $0x20] sm:$0xff]
      %v300 = vld [vmem:[%s294 + $0x28] sm:$0xff]
      %v301 = vld [vmem:[%s294 + $0x30] sm:$0xff]
      %v302 = vld [vmem:[%s294 + $0x38] sm:$0xff]
      %v303 = vld [vmem:[%s294 + $0x40] sm:$0xff]
      %v304 = vld [vmem:[%s294 + $0x48] sm:$0xff]
      %v305 = vld [vmem:[%s294 + $0x50] sm:$0xff]
      %v306 = vld [vmem:[%s294 + $0x58] sm:$0xff]
      %v307 = vld [vmem:[%s294 + $0x60] sm:$0xff]
      %v308 = vld [vmem:[%s294 + $0x68] sm:$0xff]
      %v309 = vld [vmem:[%s294 + $0x70] sm:$0xff]
      %v310 = vld [vmem:[%s294 + $0x78] sm:$0xff]
      %v324 = vunpack.c.l.b16 %v265
      %v325 = vunpack.c.l.b16 %v266
      %v326 = vunpack.c.l.b16 %v267
      %v327 = vunpack.c.l.b16 %v268
      %v328 = vunpack.c.l.b16 %v269
      %v329 = vunpack.c.l.b16 %v270
      %v330 = vunpack.c.l.b16 %v271
      %v331 = vunpack.c.l.b16 %v272
      %v332 = vunpack.c.l.b16 %v273
      %v333 = vunpack.c.l.b16 %v274
      %v334 = vunpack.c.l.b16 %v275
      %v335 = vunpack.c.l.b16 %v276
      %v336 = vunpack.c.l.b16 %v293
      %v337 = vpack.c.b16 %v325, %v324
      %v338 = vpack.c.b16 %v327, %v326
      %v339 = vpack.c.b16 %v329, %v328
      %v340 = vpack.c.b16 %v331, %v330
      %v341 = vpack.c.b16 %v333, %v332
      %v342 = vpack.c.b16 %v335, %v334
      %v343 = vpack.c.b16 %v336, %v336
      %vm344 = vsmask.f32 7424
      %v346 = vshrl.u32 %v337, 16
      %v348 = vshll.u32 %v337, 16
      %v350 = vrot.slane %v348, 1
      %v351 = vor.u32 %v346, %v350
      %v353 = vshll.u32 %v338, 16
      %v355 = vrot.slane %v353, 1
      %v356 = vsel %vm344, %v351, %v355
      %v357 = vshrl.u32 %v338, 16
      %v359 = vor.u32 %v357, %v355
      %v361 = vshll.u32 %v339, 16
      %v363 = vrot.slane %v361, 1
      %v364 = vsel %vm344, %v359, %v363
      %v365 = vshrl.u32 %v339, 16
      %v367 = vor.u32 %v365, %v363
      %v369 = vshll.u32 %v340, 16
      %v371 = vrot.slane %v369, 1
      %v372 = vsel %vm344, %v367, %v371
      %v373 = vshrl.u32 %v340, 16
      %v375 = vor.u32 %v373, %v371
      %v377 = vshll.u32 %v341, 16
      %v379 = vrot.slane %v377, 1
      %v380 = vsel %vm344, %v375, %v379
      %v381 = vshrl.u32 %v341, 16
      %v383 = vor.u32 %v381, %v379
      %v385 = vshll.u32 %v342, 16
      %v387 = vrot.slane %v385, 1
      %v388 = vsel %vm344, %v383, %v387
      %v389 = vshrl.u32 %v342, 16
      %v391 = vor.u32 %v389, %v387
      %v393 = vshll.u32 %v343, 16
      %v395 = vrot.slane %v393, 1
      %v396 = vsel %vm344, %v391, %v395
      %v419 = vunpack.c.l.b16 %v295
      %v420 = vunpack.c.h.b16 %v295
      %v421 = vunpack.c.l.b16 %v296
      %v422 = vunpack.c.h.b16 %v296
      %v423 = vunpack.c.l.b16 %v297
      %v424 = vunpack.c.h.b16 %v297
      %v425 = vunpack.c.l.b16 %v298
      %v426 = vunpack.c.h.b16 %v298
      %v427 = vunpack.c.l.b16 %v299
      %v428 = vunpack.c.h.b16 %v299
      %v429 = vunpack.c.l.b16 %v300
      %v430 = vunpack.c.h.b16 %v300
      %v431 = vunpack.c.l.b16 %v301
      %v432 = vunpack.c.h.b16 %v301
      %v433 = vunpack.c.l.b16 %v302
      %v434 = vunpack.c.h.b16 %v302
      %v435 = vunpack.c.l.b16 %v303
      %v436 = vunpack.c.h.b16 %v303
      %v437 = vunpack.c.l.b16 %v304
      %v438 = vunpack.c.h.b16 %v304
      %v439 = vunpack.c.l.b16 %v305
      %v440 = vunpack.c.h.b16 %v305
      %v441 = vunpack.c.l.b16 %v306
      %v442 = vunpack.c.h.b16 %v306
      %v443 = vunpack.c.l.b16 %v307
      %v444 = vunpack.c.h.b16 %v307
      %v445 = vunpack.c.l.b16 %v308
      %v446 = vunpack.c.h.b16 %v308
      %v447 = vunpack.c.l.b16 %v309
      %v448 = vunpack.c.h.b16 %v309
      %v449 = vunpack.c.l.b16 %v310
      %v450 = vunpack.c.h.b16 %v310
      %v451 = vpack.c.b16 %v421, %v419
      %v452 = vpack.c.b16 %v422, %v420
      %v453 = vpack.c.b16 %v425, %v423
      %v454 = vpack.c.b16 %v426, %v424
      %v455 = vpack.c.b16 %v429, %v427
      %v456 = vpack.c.b16 %v430, %v428
      %v457 = vpack.c.b16 %v433, %v431
      %v458 = vpack.c.b16 %v434, %v432
      %v459 = vpack.c.b16 %v437, %v435
      %v460 = vpack.c.b16 %v438, %v436
      %v461 = vpack.c.b16 %v441, %v439
      %v462 = vpack.c.b16 %v442, %v440
      %v463 = vpack.c.b16 %v445, %v443
      %v464 = vpack.c.b16 %v446, %v444
      %v465 = vpack.c.b16 %v449, %v447
      %v466 = vpack.c.b16 %v450, %v448
      %483 = vmatpush.bf16.msra.mxu0 %v465
      %484 = vmatpush.bf16.msra.mxu0 %v463
      %485 = vmatpush.bf16.msra.mxu0 %v461
      %486 = vmatpush.bf16.msra.mxu0 %v459
      %487 = vmatpush.bf16.msra.mxu0 %v457
      %488 = vmatpush.bf16.msra.mxu0 %v455
      %489 = vmatpush.bf16.msra.mxu0 %v453
      %490 = vmatpush.bf16.msra.mxu0 %v451
      %491 = vmatmul.bf16.gmra.mxu0 %v356
      %v492 = vpop.f32.mrf.mxu0
      %v493 = vadd.f32 0.0, %v492
      %v494 = vpop.f32.mrf.mxu0
      %v495 = vadd.f32 0.0, %v494
      %496 = vmatmul.bf16.gmra.mxu0 %v364
      %v497 = vpop.f32.mrf.mxu0
      %v498 = vadd.f32 0.0, %v497
      %v499 = vpop.f32.mrf.mxu0
      %v500 = vadd.f32 0.0, %v499
      %501 = vmatmul.bf16.gmra.mxu0 %v372
      %v502 = vpop.f32.mrf.mxu0
      %v503 = vadd.f32 0.0, %v502
      %v504 = vpop.f32.mrf.mxu0
      %v505 = vadd.f32 0.0, %v504
      %506 = vmatmul.bf16.gmra.mxu0 %v380
      %v507 = vpop.f32.mrf.mxu0
      %v508 = vadd.f32 0.0, %v507
      %v509 = vpop.f32.mrf.mxu0
      %v510 = vadd.f32 0.0, %v509
      %511 = vmatmul.bf16.gmra.mxu0 %v388
      %v512 = vpop.f32.mrf.mxu0
      %v513 = vadd.f32 0.0, %v512
      %v514 = vpop.f32.mrf.mxu0
      %v515 = vadd.f32 0.0, %v514
      %516 = vmatmul.bf16.gmra.mxu0 %v396
      %v517 = vpop.f32.mrf.mxu0
      %v518 = vadd.f32 0.0, %v517
      %v519 = vpop.f32.mrf.mxu0
      %v520 = vadd.f32 0.0, %v519
      %521 = vdwg.mxu0
      %522 = vmatpush.bf16.msra.mxu0 %v466
      %523 = vmatpush.bf16.msra.mxu0 %v464
      %524 = vmatpush.bf16.msra.mxu0 %v462
      %525 = vmatpush.bf16.msra.mxu0 %v460
      %526 = vmatpush.bf16.msra.mxu0 %v458
      %527 = vmatpush.bf16.msra.mxu0 %v456
      %528 = vmatpush.bf16.msra.mxu0 %v454
      %529 = vmatpush.bf16.msra.mxu0 %v452
      %530 = vmatmul.bf16.gmra.mxu0 %v356
      %v531 = vpop.f32.mrf.mxu0
      %v532 = vadd.f32 0.0, %v531
      %v533 = vpop.f32.mrf.mxu0
      %v534 = vadd.f32 0.0, %v533
      %535 = vmatmul.bf16.gmra.mxu0 %v364
      %v536 = vpop.f32.mrf.mxu0
      %v537 = vadd.f32 0.0, %v536
      %v538 = vpop.f32.mrf.mxu0
      %v539 = vadd.f32 0.0, %v538
      %540 = vmatmul.bf16.gmra.mxu0 %v372
      %v541 = vpop.f32.mrf.mxu0
      %v542 = vadd.f32 0.0, %v541
      %v543 = vpop.f32.mrf.mxu0
      %v544 = vadd.f32 0.0, %v543
      %545 = vmatmul.bf16.gmra.mxu0 %v380
      %v546 = vpop.f32.mrf.mxu0
      %v547 = vadd.f32 0.0, %v546
      %v548 = vpop.f32.mrf.mxu0
      %v549 = vadd.f32 0.0, %v548
      %550 = vmatmul.bf16.gmra.mxu0 %v388
      %v551 = vpop.f32.mrf.mxu0
      %v552 = vadd.f32 0.0, %v551
      %v553 = vpop.f32.mrf.mxu0
      %v554 = vadd.f32 0.0, %v553
      %555 = vmatmul.bf16.gmra.mxu0 %v396
      %v556 = vpop.f32.mrf.mxu0
      %v557 = vadd.f32 0.0, %v556
      %v558 = vpop.f32.mrf.mxu0
      %v559 = vadd.f32 0.0, %v558
      %560 = vdwg.mxu0
      %v583 = vunpack.c.l.b16 %v277
      %v584 = vunpack.c.h.b16 %v277
      %v585 = vunpack.c.l.b16 %v278
      %v586 = vunpack.c.h.b16 %v278
      %v587 = vunpack.c.l.b16 %v279
      %v588 = vunpack.c.h.b16 %v279
      %v589 = vunpack.c.l.b16 %v280
      %v590 = vunpack.c.h.b16 %v280
      %v591 = vunpack.c.l.b16 %v281
      %v592 = vunpack.c.h.b16 %v281
      %v593 = vunpack.c.l.b16 %v282
      %v594 = vunpack.c.h.b16 %v282
      %v595 = vunpack.c.l.b16 %v283
      %v596 = vunpack.c.h.b16 %v283
      %v597 = vunpack.c.l.b16 %v284
      %v598 = vunpack.c.h.b16 %v284
      %v599 = vunpack.c.l.b16 %v285
      %v600 = vunpack.c.h.b16 %v285
      %v601 = vunpack.c.l.b16 %v286
      %v602 = vunpack.c.h.b16 %v286
      %v603 = vunpack.c.l.b16 %v287
      %v604 = vunpack.c.h.b16 %v287
      %v605 = vunpack.c.l.b16 %v288
      %v606 = vunpack.c.h.b16 %v288
      %v607 = vunpack.c.l.b16 %v289
      %v608 = vunpack.c.h.b16 %v289
      %v609 = vunpack.c.l.b16 %v290
      %v610 = vunpack.c.h.b16 %v290
      %v611 = vunpack.c.l.b16 %v291
      %v612 = vunpack.c.h.b16 %v291
      %v613 = vunpack.c.l.b16 %v292
      %v614 = vunpack.c.h.b16 %v292
      %v615 = vpack.c.b16 %v585, %v583
      %v616 = vpack.c.b16 %v586, %v584
      %v617 = vpack.c.b16 %v589, %v587
      %v618 = vpack.c.b16 %v590, %v588
      %v619 = vpack.c.b16 %v593, %v591
      %v620 = vpack.c.b16 %v594, %v592
      %v621 = vpack.c.b16 %v597, %v595
      %v622 = vpack.c.b16 %v598, %v596
      %v623 = vpack.c.b16 %v601, %v599
      %v624 = vpack.c.b16 %v602, %v600
      %v625 = vpack.c.b16 %v605, %v603
      %v626 = vpack.c.b16 %v606, %v604
      %v627 = vpack.c.b16 %v609, %v607
      %v628 = vpack.c.b16 %v610, %v608
      %v629 = vpack.c.b16 %v613, %v611
      %v630 = vpack.c.b16 %v614, %v612
      %647 = vmatpush.bf16.msra.mxu0 %v629
      %648 = vmatpush.bf16.msra.mxu0 %v627
      %649 = vmatpush.bf16.msra.mxu0 %v625
      %650 = vmatpush.bf16.msra.mxu0 %v623
      %651 = vmatpush.bf16.msra.mxu0 %v621
      %652 = vmatpush.bf16.msra.mxu0 %v619
      %653 = vmatpush.bf16.msra.mxu0 %v617
      %654 = vmatpush.bf16.msra.mxu0 %v615
      %655 = vmatmul.bf16.gmra.mxu0 %v337
      %v656 = vpop.f32.mrf.mxu0
      %v657 = vadd.f32 %v493, %v656
      %v658 = vpop.f32.mrf.mxu0
      %v659 = vadd.f32 %v495, %v658
      %660 = vmatmul.bf16.gmra.mxu0 %v338
      %v661 = vpop.f32.mrf.mxu0
      %v662 = vadd.f32 %v498, %v661
      %v663 = vpop.f32.mrf.mxu0
      %v664 = vadd.f32 %v500, %v663
      %665 = vmatmul.bf16.gmra.mxu0 %v339
      %v666 = vpop.f32.mrf.mxu0
      %v667 = vadd.f32 %v503, %v666
      %v668 = vpop.f32.mrf.mxu0
      %v669 = vadd.f32 %v505, %v668
      %670 = vmatmul.bf16.gmra.mxu0 %v340
      %v671 = vpop.f32.mrf.mxu0
      %v672 = vadd.f32 %v508, %v671
      %v673 = vpop.f32.mrf.mxu0
      %v674 = vadd.f32 %v510, %v673
      %675 = vmatmul.bf16.gmra.mxu0 %v341
      %v676 = vpop.f32.mrf.mxu0
      %v677 = vadd.f32 %v513, %v676
      %v678 = vpop.f32.mrf.mxu0
      %v679 = vadd.f32 %v515, %v678
      %680 = vmatmul.bf16.gmra.mxu0 %v342
      %v681 = vpop.f32.mrf.mxu0
      %v682 = vadd.f32 %v518, %v681
      %v683 = vpop.f32.mrf.mxu0
      %v684 = vadd.f32 %v520, %v683
      %685 = vdwg.mxu0
      %686 = vmatpush.bf16.msra.mxu0 %v630
      %687 = vmatpush.bf16.msra.mxu0 %v628
      %688 = vmatpush.bf16.msra.mxu0 %v626
      %689 = vmatpush.bf16.msra.mxu0 %v624
      %690 = vmatpush.bf16.msra.mxu0 %v622
      %691 = vmatpush.bf16.msra.mxu0 %v620
      %692 = vmatpush.bf16.msra.mxu0 %v618
      %693 = vmatpush.bf16.msra.mxu0 %v616
      %694 = vmatmul.bf16.gmra.mxu0 %v337
      %v695 = vpop.f32.mrf.mxu0
      %v696 = vadd.f32 %v532, %v695
      %v697 = vpop.f32.mrf.mxu0
      %v698 = vadd.f32 %v534, %v697
      %699 = vmatmul.bf16.gmra.mxu0 %v338
      %v700 = vpop.f32.mrf.mxu0
      %v701 = vadd.f32 %v537, %v700
      %v702 = vpop.f32.mrf.mxu0
      %v703 = vadd.f32 %v539, %v702
      %704 = vmatmul.bf16.gmra.mxu0 %v339
      %v705 = vpop.f32.mrf.mxu0
      %v706 = vadd.f32 %v542, %v705
      %v707 = vpop.f32.mrf.mxu0
      %v708 = vadd.f32 %v544, %v707
      %709 = vmatmul.bf16.gmra.mxu0 %v340
      %v710 = vpop.f32.mrf.mxu0
      %v711 = vadd.f32 %v547, %v710
      %v712 = vpop.f32.mrf.mxu0
      %v713 = vadd.f32 %v549, %v712
      %714 = vmatmul.bf16.gmra.mxu0 %v341
      %v715 = vpop.f32.mrf.mxu0
      %v716 = vadd.f32 %v552, %v715
      %v717 = vpop.f32.mrf.mxu0
      %v718 = vadd.f32 %v554, %v717
      %719 = vmatmul.bf16.gmra.mxu0 %v342
      %v720 = vpop.f32.mrf.mxu0
      %v721 = vadd.f32 %v557, %v720
      %v722 = vpop.f32.mrf.mxu0
      %v723 = vadd.f32 %v559, %v722
      %724 = vdwg.mxu0
      %v725 = vld [vmem:[%s246] sm:$0xe]
      %s726 = scalar_lea.vmem %s1, 256
      %v727 = vld [vmem:[%s726] sm:$0xff]
      %v728 = vld [vmem:[%s726 + $0x8] sm:$0xff]
      %v729 = vld [vmem:[%s726 + $0x10] sm:$0xff]
      %v730 = vld [vmem:[%s726 + $0x18] sm:$0xff]
      %v731 = vld [vmem:[%s726 + $0x20] sm:$0xff]
      %v732 = vld [vmem:[%s726 + $0x28] sm:$0xff]
      %v733 = vld [vmem:[%s726 + $0x30] sm:$0xff]
      %v734 = vld [vmem:[%s726 + $0x38] sm:$0xff]
      %v735 = vld [vmem:[%s726 + $0x40] sm:$0xff]
      %v736 = vld [vmem:[%s726 + $0x48] sm:$0xff]
      %v737 = vld [vmem:[%s726 + $0x50] sm:$0xff]
      %v738 = vld [vmem:[%s726 + $0x58] sm:$0xff]
      %v739 = vld [vmem:[%s726 + $0x60] sm:$0xff]
      %v740 = vld [vmem:[%s726 + $0x68] sm:$0xff]
      %v741 = vld [vmem:[%s726 + $0x70] sm:$0xff]
      %v742 = vld [vmem:[%s726 + $0x78] sm:$0xff]
      %v744 = vunpack.c.l.b16 %v725
      %v745 = vpack.c.b16 %v325, %v744
      %vm746 = vcmask 1046528
      %v747 = vrot.slane %v745, 1
      %v748 = vrot.slane %v338, 1
      %v749 = vsel %vm746, %v747, %v748
      %v750 = vrot.slane %v339, 1
      %v751 = vsel %vm746, %v748, %v750
      %v752 = vrot.slane %v340, 1
      %v753 = vsel %vm746, %v750, %v752
      %v754 = vrot.slane %v341, 1
      %v755 = vsel %vm746, %v752, %v754
      %v756 = vrot.slane %v342, 1
      %v757 = vsel %vm746, %v754, %v756
      %v758 = vrot.slane %v343, 1
      %v759 = vsel %vm746, %v756, %v758
      %v782 = vunpack.c.l.b16 %v727
      %v783 = vunpack.c.h.b16 %v727
      %v784 = vunpack.c.l.b16 %v728
      %v785 = vunpack.c.h.b16 %v728
      %v786 = vunpack.c.l.b16 %v729
      %v787 = vunpack.c.h.b16 %v729
      %v788 = vunpack.c.l.b16 %v730
      %v789 = vunpack.c.h.b16 %v730
      %v790 = vunpack.c.l.b16 %v731
      %v791 = vunpack.c.h.b16 %v731
      %v792 = vunpack.c.l.b16 %v732
      %v793 = vunpack.c.h.b16 %v732
      %v794 = vunpack.c.l.b16 %v733
      %v795 = vunpack.c.h.b16 %v733
      %v796 = vunpack.c.l.b16 %v734
      %v797 = vunpack.c.h.b16 %v734
      %v798 = vunpack.c.l.b16 %v735
      %v799 = vunpack.c.h.b16 %v735
      %v800 = vunpack.c.l.b16 %v736
      %v801 = vunpack.c.h.b16 %v736
      %v802 = vunpack.c.l.b16 %v737
      %v803 = vunpack.c.h.b16 %v737
      %v804 = vunpack.c.l.b16 %v738
      %v805 = vunpack.c.h.b16 %v738
      %v806 = vunpack.c.l.b16 %v739
      %v807 = vunpack.c.h.b16 %v739
      %v808 = vunpack.c.l.b16 %v740
      %v809 = vunpack.c.h.b16 %v740
      %v810 = vunpack.c.l.b16 %v741
      %v811 = vunpack.c.h.b16 %v741
      %v812 = vunpack.c.l.b16 %v742
      %v813 = vunpack.c.h.b16 %v742
      %v814 = vpack.c.b16 %v784, %v782
      %v815 = vpack.c.b16 %v785, %v783
      %v816 = vpack.c.b16 %v788, %v786
      %v817 = vpack.c.b16 %v789, %v787
      %v818 = vpack.c.b16 %v792, %v790
      %v819 = vpack.c.b16 %v793, %v791
      %v820 = vpack.c.b16 %v796, %v794
      %v821 = vpack.c.b16 %v797, %v795
      %v822 = vpack.c.b16 %v800, %v798
      %v823 = vpack.c.b16 %v801, %v799
      %v824 = vpack.c.b16 %v804, %v802
      %v825 = vpack.c.b16 %v805, %v803
      %v826 = vpack.c.b16 %v808, %v806
      %v827 = vpack.c.b16 %v809, %v807
      %v828 = vpack.c.b16 %v812, %v810
      %v829 = vpack.c.b16 %v813, %v811
      %846 = vmatpush.bf16.msra.mxu0 %v828
      %847 = vmatpush.bf16.msra.mxu0 %v826
      %848 = vmatpush.bf16.msra.mxu0 %v824
      %849 = vmatpush.bf16.msra.mxu0 %v822
      %850 = vmatpush.bf16.msra.mxu0 %v820
      %851 = vmatpush.bf16.msra.mxu0 %v818
      %852 = vmatpush.bf16.msra.mxu0 %v816
      %853 = vmatpush.bf16.msra.mxu0 %v814
      %854 = vmatmul.bf16.gmra.mxu0 %v749
      %v855 = vpop.f32.mrf.mxu0
      %v856 = vadd.f32 0.0, %v855
      %v857 = vpop.f32.mrf.mxu0
      %v858 = vadd.f32 0.0, %v857
      %859 = vmatmul.bf16.gmra.mxu0 %v751
      %v860 = vpop.f32.mrf.mxu0
      %v861 = vadd.f32 0.0, %v860
      %v862 = vpop.f32.mrf.mxu0
      %v863 = vadd.f32 0.0, %v862
      %864 = vmatmul.bf16.gmra.mxu0 %v753
      %v865 = vpop.f32.mrf.mxu0
      %v866 = vadd.f32 0.0, %v865
      %v867 = vpop.f32.mrf.mxu0
      %v868 = vadd.f32 0.0, %v867
      %869 = vmatmul.bf16.gmra.mxu0 %v755
      %v870 = vpop.f32.mrf.mxu0
      %v871 = vadd.f32 0.0, %v870
      %v872 = vpop.f32.mrf.mxu0
      %v873 = vadd.f32 0.0, %v872
      %874 = vmatmul.bf16.gmra.mxu0 %v757
      %v875 = vpop.f32.mrf.mxu0
      %v876 = vadd.f32 0.0, %v875
      %v877 = vpop.f32.mrf.mxu0
      %v878 = vadd.f32 0.0, %v877
      %879 = vmatmul.bf16.gmra.mxu0 %v759
      %v880 = vpop.f32.mrf.mxu0
      %v881 = vadd.f32 0.0, %v880
      %v882 = vpop.f32.mrf.mxu0
      %v883 = vadd.f32 0.0, %v882
      %884 = vdwg.mxu0
      %885 = vmatpush.bf16.msra.mxu0 %v829
      %886 = vmatpush.bf16.msra.mxu0 %v827
      %887 = vmatpush.bf16.msra.mxu0 %v825
      %888 = vmatpush.bf16.msra.mxu0 %v823
      %889 = vmatpush.bf16.msra.mxu0 %v821
      %890 = vmatpush.bf16.msra.mxu0 %v819
      %891 = vmatpush.bf16.msra.mxu0 %v817
      %892 = vmatpush.bf16.msra.mxu0 %v815
      %893 = vmatmul.bf16.gmra.mxu0 %v749
      %v894 = vpop.f32.mrf.mxu0
      %v895 = vadd.f32 0.0, %v894
      %v896 = vpop.f32.mrf.mxu0
      %v897 = vadd.f32 0.0, %v896
      %898 = vmatmul.bf16.gmra.mxu0 %v751
      %v899 = vpop.f32.mrf.mxu0
      %v900 = vadd.f32 0.0, %v899
      %v901 = vpop.f32.mrf.mxu0
      %v902 = vadd.f32 0.0, %v901
      %903 = vmatmul.bf16.gmra.mxu0 %v753
      %v904 = vpop.f32.mrf.mxu0
      %v905 = vadd.f32 0.0, %v904
      %v906 = vpop.f32.mrf.mxu0
      %v907 = vadd.f32 0.0, %v906
      %908 = vmatmul.bf16.gmra.mxu0 %v755
      %v909 = vpop.f32.mrf.mxu0
      %v910 = vadd.f32 0.0, %v909
      %v911 = vpop.f32.mrf.mxu0
      %v912 = vadd.f32 0.0, %v911
      %913 = vmatmul.bf16.gmra.mxu0 %v757
      %v914 = vpop.f32.mrf.mxu0
      %v915 = vadd.f32 0.0, %v914
      %v916 = vpop.f32.mrf.mxu0
      %v917 = vadd.f32 0.0, %v916
      %918 = vmatmul.bf16.gmra.mxu0 %v759
      %v919 = vpop.f32.mrf.mxu0
      %v920 = vadd.f32 0.0, %v919
      %v921 = vpop.f32.mrf.mxu0
      %v922 = vadd.f32 0.0, %v921
      %923 = vdwg.mxu0
      %v924 = vadd.f32 %v657, %v856
      %v925 = vadd.f32 %v696, %v895
      %v926 = vadd.f32 %v659, %v858
      %v927 = vadd.f32 %v698, %v897
      %v928 = vadd.f32 %v662, %v861
      %v929 = vadd.f32 %v701, %v900
      %v930 = vadd.f32 %v664, %v863
      %v931 = vadd.f32 %v703, %v902
      %v932 = vadd.f32 %v667, %v866
      %v933 = vadd.f32 %v706, %v905
      %v934 = vadd.f32 %v669, %v868
      %v935 = vadd.f32 %v708, %v907
      %v936 = vadd.f32 %v672, %v871
      %v937 = vadd.f32 %v711, %v910
      %v938 = vadd.f32 %v674, %v873
      %v939 = vadd.f32 %v713, %v912
      %v940 = vadd.f32 %v677, %v876
      %v941 = vadd.f32 %v716, %v915
      %v942 = vadd.f32 %v679, %v878
      %v943 = vadd.f32 %v718, %v917
      %v944 = vadd.f32 %v682, %v881
      %v945 = vadd.f32 %v721, %v920
      %v946 = vadd.f32 %v684, %v883
      %v947 = vadd.f32 %v723, %v922
      %v948 = vld [vmem:[%s246 + $0x8] sm:$0xe]
      %v949 = vld [vmem:[%s246 + $0xc] sm:$0xf]
      %v950 = vld [vmem:[%s246 + $0x10] sm:$0xf]
      %v951 = vld [vmem:[%s246 + $0x14] sm:$0xf]
      %v952 = vld [vmem:[%s246 + $0x18] sm:$0xf]
      %v953 = vld [vmem:[%s246 + $0x1c] sm:$0xf]
      %v954 = vld [vmem:[%s246 + $0x20] sm:$0xf]
      %v955 = vld [vmem:[%s246 + $0x24] sm:$0xf]
      %v956 = vld [vmem:[%s246 + $0x28] sm:$0xf]
      %v957 = vld [vmem:[%s246 + $0x2c] sm:$0xf]
      %v958 = vld [vmem:[%s246 + $0x30] sm:$0xf]
      %v959 = vld [vmem:[%s246 + $0x34] sm:$0xf]
      %v960 = vld [vmem:[%s246 + $0x38] sm:$0x1]
      %s961 = scalar_lea.vmem %s1, 384
      %v962 = vld [vmem:[%s961] sm:$0xff]
      %v963 = vld [vmem:[%s961 + $0x8] sm:$0xff]
      %v964 = vld [vmem:[%s961 + $0x10] sm:$0xff]
      %v965 = vld [vmem:[%s961 + $0x18] sm:$0xff]
      %v966 = vld [vmem:[%s961 + $0x20] sm:$0xff]
      %v967 = vld [vmem:[%s961 + $0x28] sm:$0xff]
      %v968 = vld [vmem:[%s961 + $0x30] sm:$0xff]
      %v969 = vld [vmem:[%s961 + $0x38] sm:$0xff]
      %v970 = vld [vmem:[%s961 + $0x40] sm:$0xff]
      %v971 = vld [vmem:[%s961 + $0x48] sm:$0xff]
      %v972 = vld [vmem:[%s961 + $0x50] sm:$0xff]
      %v973 = vld [vmem:[%s961 + $0x58] sm:$0xff]
      %v974 = vld [vmem:[%s961 + $0x60] sm:$0xff]
      %v975 = vld [vmem:[%s961 + $0x68] sm:$0xff]
      %v976 = vld [vmem:[%s961 + $0x70] sm:$0xff]
      %v977 = vld [vmem:[%s961 + $0x78] sm:$0xff]
      %v991 = vunpack.c.l.b16 %v948
      %v992 = vunpack.c.l.b16 %v949
      %v993 = vunpack.c.l.b16 %v950
      %v994 = vunpack.c.l.b16 %v951
      %v995 = vunpack.c.l.b16 %v952
      %v996 = vunpack.c.l.b16 %v953
      %v997 = vunpack.c.l.b16 %v954
      %v998 = vunpack.c.l.b16 %v955
      %v999 = vunpack.c.l.b16 %v956
      %v1000 = vunpack.c.l.b16 %v957
      %v1001 = vunpack.c.l.b16 %v958
      %v1002 = vunpack.c.l.b16 %v959
      %v1003 = vunpack.c.l.b16 %v960
      %v1004 = vpack.c.b16 %v992, %v991
      %v1005 = vpack.c.b16 %v994, %v993
      %v1006 = vpack.c.b16 %v996, %v995
      %v1007 = vpack.c.b16 %v998, %v997
      %v1008 = vpack.c.b16 %v1000, %v999
      %v1009 = vpack.c.b16 %v1002, %v1001
      %v1010 = vpack.c.b16 %v1003, %v1003
      %v1011 = vrot.slane %v1004, 1
      %v1012 = vrot.slane %v1005, 1
      %v1013 = vsel %vm746, %v1011, %v1012
      %v1014 = vrot.slane %v1006, 1
      %v1015 = vsel %vm746, %v1012, %v1014
      %v1016 = vrot.slane %v1007, 1
      %v1017 = vsel %vm746, %v1014, %v1016
      %v1018 = vrot.slane %v1008, 1
      %v1019 = vsel %vm746, %v1016, %v1018
      %v1020 = vrot.slane %v1009, 1
      %v1021 = vsel %vm746, %v1018, %v1020
      %v1022 = vrot.slane %v1010, 1
      %v1023 = vsel %vm746, %v1020, %v1022
      %v1046 = vunpack.c.l.b16 %v962
      %v1047 = vunpack.c.h.b16 %v962
      %v1048 = vunpack.c.l.b16 %v963
      %v1049 = vunpack.c.h.b16 %v963
      %v1050 = vunpack.c.l.b16 %v964
      %v1051 = vunpack.c.h.b16 %v964
      %v1052 = vunpack.c.l.b16 %v965
      %v1053 = vunpack.c.h.b16 %v965
      %v1054 = vunpack.c.l.b16 %v966
      %v1055 = vunpack.c.h.b16 %v966
      %v1056 = vunpack.c.l.b16 %v967
      %v1057 = vunpack.c.h.b16 %v967
      %v1058 = vunpack.c.l.b16 %v968
      %v1059 = vunpack.c.h.b16 %v968
      %v1060 = vunpack.c.l.b16 %v969
      %v1061 = vunpack.c.h.b16 %v969
      %v1062 = vunpack.c.l.b16 %v970
      %v1063 = vunpack.c.h.b16 %v970
      %v1064 = vunpack.c.l.b16 %v971
      %v1065 = vunpack.c.h.b16 %v971
      %v1066 = vunpack.c.l.b16 %v972
      %v1067 = vunpack.c.h.b16 %v972
      %v1068 = vunpack.c.l.b16 %v973
      %v1069 = vunpack.c.h.b16 %v973
      %v1070 = vunpack.c.l.b16 %v974
      %v1071 = vunpack.c.h.b16 %v974
      %v1072 = vunpack.c.l.b16 %v975
      %v1073 = vunpack.c.h.b16 %v975
      %v1074 = vunpack.c.l.b16 %v976
      %v1075 = vunpack.c.h.b16 %v976
      %v1076 = vunpack.c.l.b16 %v977
      %v1077 = vunpack.c.h.b16 %v977
      %v1078 = vpack.c.b16 %v1048, %v1046
      %v1079 = vpack.c.b16 %v1049, %v1047
      %v1080 = vpack.c.b16 %v1052, %v1050
      %v1081 = vpack.c.b16 %v1053, %v1051
      %v1082 = vpack.c.b16 %v1056, %v1054
      %v1083 = vpack.c.b16 %v1057, %v1055
      %v1084 = vpack.c.b16 %v1060, %v1058
      %v1085 = vpack.c.b16 %v1061, %v1059
      %v1086 = vpack.c.b16 %v1064, %v1062
      %v1087 = vpack.c.b16 %v1065, %v1063
      %v1088 = vpack.c.b16 %v1068, %v1066
      %v1089 = vpack.c.b16 %v1069, %v1067
      %v1090 = vpack.c.b16 %v1072, %v1070
      %v1091 = vpack.c.b16 %v1073, %v1071
      %v1092 = vpack.c.b16 %v1076, %v1074
      %v1093 = vpack.c.b16 %v1077, %v1075
      %1110 = vmatpush.bf16.msra.mxu0 %v1092
      %1111 = vmatpush.bf16.msra.mxu0 %v1090
      %1112 = vmatpush.bf16.msra.mxu0 %v1088
      %1113 = vmatpush.bf16.msra.mxu0 %v1086
      %1114 = vmatpush.bf16.msra.mxu0 %v1084
      %1115 = vmatpush.bf16.msra.mxu0 %v1082
      %1116 = vmatpush.bf16.msra.mxu0 %v1080
      %1117 = vmatpush.bf16.msra.mxu0 %v1078
      %1118 = vmatmul.bf16.gmra.mxu0 %v1013
      %v1119 = vpop.f32.mrf.mxu0
      %v1120 = vadd.f32 0.0, %v1119
      %v1121 = vpop.f32.mrf.mxu0
      %v1122 = vadd.f32 0.0, %v1121
      %1123 = vmatmul.bf16.gmra.mxu0 %v1015
      %v1124 = vpop.f32.mrf.mxu0
      %v1125 = vadd.f32 0.0, %v1124
      %v1126 = vpop.f32.mrf.mxu0
      %v1127 = vadd.f32 0.0, %v1126
      %1128 = vmatmul.bf16.gmra.mxu0 %v1017
      %v1129 = vpop.f32.mrf.mxu0
      %v1130 = vadd.f32 0.0, %v1129
      %v1131 = vpop.f32.mrf.mxu0
      %v1132 = vadd.f32 0.0, %v1131
      %1133 = vmatmul.bf16.gmra.mxu0 %v1019
      %v1134 = vpop.f32.mrf.mxu0
      %v1135 = vadd.f32 0.0, %v1134
      %v1136 = vpop.f32.mrf.mxu0
      %v1137 = vadd.f32 0.0, %v1136
      %1138 = vmatmul.bf16.gmra.mxu0 %v1021
      %v1139 = vpop.f32.mrf.mxu0
      %v1140 = vadd.f32 0.0, %v1139
      %v1141 = vpop.f32.mrf.mxu0
      %v1142 = vadd.f32 0.0, %v1141
      %1143 = vmatmul.bf16.gmra.mxu0 %v1023
      %v1144 = vpop.f32.mrf.mxu0
      %v1145 = vadd.f32 0.0, %v1144
      %v1146 = vpop.f32.mrf.mxu0
      %v1147 = vadd.f32 0.0, %v1146
      %1148 = vdwg.mxu0
      %1149 = vmatpush.bf16.msra.mxu0 %v1093
      %1150 = vmatpush.bf16.msra.mxu0 %v1091
      %1151 = vmatpush.bf16.msra.mxu0 %v1089
      %1152 = vmatpush.bf16.msra.mxu0 %v1087
      %1153 = vmatpush.bf16.msra.mxu0 %v1085
      %1154 = vmatpush.bf16.msra.mxu0 %v1083
      %1155 = vmatpush.bf16.msra.mxu0 %v1081
      %1156 = vmatpush.bf16.msra.mxu0 %v1079
      %1157 = vmatmul.bf16.gmra.mxu0 %v1013
      %v1158 = vpop.f32.mrf.mxu0
      %v1159 = vadd.f32 0.0, %v1158
      %v1160 = vpop.f32.mrf.mxu0
      %v1161 = vadd.f32 0.0, %v1160
      %1162 = vmatmul.bf16.gmra.mxu0 %v1015
      %v1163 = vpop.f32.mrf.mxu0
      %v1164 = vadd.f32 0.0, %v1163
      %v1165 = vpop.f32.mrf.mxu0
      %v1166 = vadd.f32 0.0, %v1165
      %1167 = vmatmul.bf16.gmra.mxu0 %v1017
      %v1168 = vpop.f32.mrf.mxu0
      %v1169 = vadd.f32 0.0, %v1168
      %v1170 = vpop.f32.mrf.mxu0
      %v1171 = vadd.f32 0.0, %v1170
      %1172 = vmatmul.bf16.gmra.mxu0 %v1019
      %v1173 = vpop.f32.mrf.mxu0
      %v1174 = vadd.f32 0.0, %v1173
      %v1175 = vpop.f32.mrf.mxu0
      %v1176 = vadd.f32 0.0, %v1175
      %1177 = vmatmul.bf16.gmra.mxu0 %v1021
      %v1178 = vpop.f32.mrf.mxu0
      %v1179 = vadd.f32 0.0, %v1178
      %v1180 = vpop.f32.mrf.mxu0
      %v1181 = vadd.f32 0.0, %v1180
      %1182 = vmatmul.bf16.gmra.mxu0 %v1023
      %v1183 = vpop.f32.mrf.mxu0
      %v1184 = vadd.f32 0.0, %v1183
      %v1185 = vpop.f32.mrf.mxu0
      %v1186 = vadd.f32 0.0, %v1185
      %1187 = vdwg.mxu0
      %v1188 = vadd.f32 %v924, %v1120
      %v1189 = vadd.f32 %v925, %v1159
      %v1190 = vadd.f32 %v926, %v1122
      %v1191 = vadd.f32 %v927, %v1161
      %v1192 = vadd.f32 %v928, %v1125
      %v1193 = vadd.f32 %v929, %v1164
      %v1194 = vadd.f32 %v930, %v1127
      %v1195 = vadd.f32 %v931, %v1166
      %v1196 = vadd.f32 %v932, %v1130
      %v1197 = vadd.f32 %v933, %v1169
      %v1198 = vadd.f32 %v934, %v1132
      %v1199 = vadd.f32 %v935, %v1171
      %v1200 = vadd.f32 %v936, %v1135
      %v1201 = vadd.f32 %v937, %v1174
      %v1202 = vadd.f32 %v938, %v1137
      %v1203 = vadd.f32 %v939, %v1176
      %v1204 = vadd.f32 %v940, %v1140
      %v1205 = vadd.f32 %v941, %v1179
      %v1206 = vadd.f32 %v942, %v1142
      %v1207 = vadd.f32 %v943, %v1181
      %v1208 = vadd.f32 %v944, %v1145
      %v1209 = vadd.f32 %v945, %v1184
      %v1210 = vadd.f32 %v946, %v1147
      %v1211 = vadd.f32 %v947, %v1186
      %v1212 = vld [vmem:[%s246 + $0x38] sm:$0x3]
      %s1213 = scalar_lea.vmem %s1, 512
      %v1214 = vld [vmem:[%s1213] sm:$0xff]
      %v1215 = vld [vmem:[%s1213 + $0x8] sm:$0xff]
      %v1216 = vld [vmem:[%s1213 + $0x10] sm:$0xff]
      %v1217 = vld [vmem:[%s1213 + $0x18] sm:$0xff]
      %v1218 = vld [vmem:[%s1213 + $0x20] sm:$0xff]
      %v1219 = vld [vmem:[%s1213 + $0x28] sm:$0xff]
      %v1220 = vld [vmem:[%s1213 + $0x30] sm:$0xff]
      %v1221 = vld [vmem:[%s1213 + $0x38] sm:$0xff]
      %v1222 = vld [vmem:[%s1213 + $0x40] sm:$0xff]
      %v1223 = vld [vmem:[%s1213 + $0x48] sm:$0xff]
      %v1224 = vld [vmem:[%s1213 + $0x50] sm:$0xff]
      %v1225 = vld [vmem:[%s1213 + $0x58] sm:$0xff]
      %v1226 = vld [vmem:[%s1213 + $0x60] sm:$0xff]
      %v1227 = vld [vmem:[%s1213 + $0x68] sm:$0xff]
      %v1228 = vld [vmem:[%s1213 + $0x70] sm:$0xff]
      %v1229 = vld [vmem:[%s1213 + $0x78] sm:$0xff]
      %v1231 = vunpack.c.l.b16 %v1212
      %v1232 = vpack.c.b16 %v1231, %v1231
      %vm1233 = vsmask.f32 6400
      %v1235 = vshrl.u32 %v1004, 16
      %v1237 = vrot.slane %v1235, 1
      %v1238 = vshll.u32 %v1004, 16
      %v1240 = vrot.slane %v1238, 2
      %v1241 = vor.u32 %v1237, %v1240
      %v1243 = vshrl.u32 %v1005, 16
      %v1245 = vrot.slane %v1243, 1
      %v1246 = vshll.u32 %v1005, 16
      %v1248 = vrot.slane %v1246, 2
      %v1249 = vor.u32 %v1245, %v1248
      %v1250 = vsel %vm1233, %v1241, %v1249
      %v1252 = vshrl.u32 %v1006, 16
      %v1254 = vrot.slane %v1252, 1
      %v1255 = vshll.u32 %v1006, 16
      %v1257 = vrot.slane %v1255, 2
      %v1258 = vor.u32 %v1254, %v1257
      %v1259 = vsel %vm1233, %v1249, %v1258
      %v1261 = vshrl.u32 %v1007, 16
      %v1263 = vrot.slane %v1261, 1
      %v1264 = vshll.u32 %v1007, 16
      %v1266 = vrot.slane %v1264, 2
      %v1267 = vor.u32 %v1263, %v1266
      %v1268 = vsel %vm1233, %v1258, %v1267
      %v1270 = vshrl.u32 %v1008, 16
      %v1272 = vrot.slane %v1270, 1
      %v1273 = vshll.u32 %v1008, 16
      %v1275 = vrot.slane %v1273, 2
      %v1276 = vor.u32 %v1272, %v1275
      %v1277 = vsel %vm1233, %v1267, %v1276
      %v1279 = vshrl.u32 %v1009, 16
      %v1281 = vrot.slane %v1279, 1
      %v1282 = vshll.u32 %v1009, 16
      %v1284 = vrot.slane %v1282, 2
      %v1285 = vor.u32 %v1281, %v1284
      %v1286 = vsel %vm1233, %v1276, %v1285
      %v1288 = vshrl.u32 %v1232, 16
      %v1290 = vrot.slane %v1288, 1
      %v1291 = vshll.u32 %v1232, 16
      %v1293 = vrot.slane %v1291, 2
      %v1294 = vor.u32 %v1290, %v1293
      %v1295 = vsel %vm1233, %v1285, %v1294
      %v1318 = vunpack.c.l.b16 %v1214
      %v1319 = vunpack.c.h.b16 %v1214
      %v1320 = vunpack.c.l.b16 %v1215
      %v1321 = vunpack.c.h.b16 %v1215
      %v1322 = vunpack.c.l.b16 %v1216
      %v1323 = vunpack.c.h.b16 %v1216
      %v1324 = vunpack.c.l.b16 %v1217
      %v1325 = vunpack.c.h.b16 %v1217
      %v1326 = vunpack.c.l.b16 %v1218
      %v1327 = vunpack.c.h.b16 %v1218
      %v1328 = vunpack.c.l.b16 %v1219
      %v1329 = vunpack.c.h.b16 %v1219
      %v1330 = vunpack.c.l.b16 %v1220
      %v1331 = vunpack.c.h.b16 %v1220
      %v1332 = vunpack.c.l.b16 %v1221
      %v1333 = vunpack.c.h.b16 %v1221
      %v1334 = vunpack.c.l.b16 %v1222
      %v1335 = vunpack.c.h.b16 %v1222
      %v1336 = vunpack.c.l.b16 %v1223
      %v1337 = vunpack.c.h.b16 %v1223
      %v1338 = vunpack.c.l.b16 %v1224
      %v1339 = vunpack.c.h.b16 %v1224
      %v1340 = vunpack.c.l.b16 %v1225
      %v1341 = vunpack.c.h.b16 %v1225
      %v1342 = vunpack.c.l.b16 %v1226
      %v1343 = vunpack.c.h.b16 %v1226
      %v1344 = vunpack.c.l.b16 %v1227
      %v1345 = vunpack.c.h.b16 %v1227
      %v1346 = vunpack.c.l.b16 %v1228
      %v1347 = vunpack.c.h.b16 %v1228
      %v1348 = vunpack.c.l.b16 %v1229
      %v1349 = vunpack.c.h.b16 %v1229
      %v1350 = vpack.c.b16 %v1320, %v1318
      %v1351 = vpack.c.b16 %v1321, %v1319
      %v1352 = vpack.c.b16 %v1324, %v1322
      %v1353 = vpack.c.b16 %v1325, %v1323
      %v1354 = vpack.c.b16 %v1328, %v1326
      %v1355 = vpack.c.b16 %v1329, %v1327
      %v1356 = vpack.c.b16 %v1332, %v1330
      %v1357 = vpack.c.b16 %v1333, %v1331
      %v1358 = vpack.c.b16 %v1336, %v1334
      %v1359 = vpack.c.b16 %v1337, %v1335
      %v1360 = vpack.c.b16 %v1340, %v1338
      %v1361 = vpack.c.b16 %v1341, %v1339
      %v1362 = vpack.c.b16 %v1344, %v1342
      %v1363 = vpack.c.b16 %v1345, %v1343
      %v1364 = vpack.c.b16 %v1348, %v1346
      %v1365 = vpack.c.b16 %v1349, %v1347
      %1382 = vmatpush.bf16.msra.mxu0 %v1364
      %1383 = vmatpush.bf16.msra.mxu0 %v1362
      %1384 = vmatpush.bf16.msra.mxu0 %v1360
      %1385 = vmatpush.bf16.msra.mxu0 %v1358
      %1386 = vmatpush.bf16.msra.mxu0 %v1356
      %1387 = vmatpush.bf16.msra.mxu0 %v1354
      %1388 = vmatpush.bf16.msra.mxu0 %v1352
      %1389 = vmatpush.bf16.msra.mxu0 %v1350
      %1390 = vmatmul.bf16.gmra.mxu0 %v1250
      %v1391 = vpop.f32.mrf.mxu0
      %v1392 = vadd.f32 0.0, %v1391
      %v1393 = vpop.f32.mrf.mxu0
      %v1394 = vadd.f32 0.0, %v1393
      %1395 = vmatmul.bf16.gmra.mxu0 %v1259
      %v1396 = vpop.f32.mrf.mxu0
      %v1397 = vadd.f32 0.0, %v1396
      %v1398 = vpop.f32.mrf.mxu0
      %v1399 = vadd.f32 0.0, %v1398
      %1400 = vmatmul.bf16.gmra.mxu0 %v1268
      %v1401 = vpop.f32.mrf.mxu0
      %v1402 = vadd.f32 0.0, %v1401
      %v1403 = vpop.f32.mrf.mxu0
      %v1404 = vadd.f32 0.0, %v1403
      %1405 = vmatmul.bf16.gmra.mxu0 %v1277
      %v1406 = vpop.f32.mrf.mxu0
      %v1407 = vadd.f32 0.0, %v1406
      %v1408 = vpop.f32.mrf.mxu0
      %v1409 = vadd.f32 0.0, %v1408
      %1410 = vmatmul.bf16.gmra.mxu0 %v1286
      %v1411 = vpop.f32.mrf.mxu0
      %v1412 = vadd.f32 0.0, %v1411
      %v1413 = vpop.f32.mrf.mxu0
      %v1414 = vadd.f32 0.0, %v1413
      %1415 = vmatmul.bf16.gmra.mxu0 %v1295
      %v1416 = vpop.f32.mrf.mxu0
      %v1417 = vadd.f32 0.0, %v1416
      %v1418 = vpop.f32.mrf.mxu0
      %v1419 = vadd.f32 0.0, %v1418
      %1420 = vdwg.mxu0
      %1421 = vmatpush.bf16.msra.mxu0 %v1365
      %1422 = vmatpush.bf16.msra.mxu0 %v1363
      %1423 = vmatpush.bf16.msra.mxu0 %v1361
      %1424 = vmatpush.bf16.msra.mxu0 %v1359
      %1425 = vmatpush.bf16.msra.mxu0 %v1357
      %1426 = vmatpush.bf16.msra.mxu0 %v1355
      %1427 = vmatpush.bf16.msra.mxu0 %v1353
      %1428 = vmatpush.bf16.msra.mxu0 %v1351
      %1429 = vmatmul.bf16.gmra.mxu0 %v1250
      %v1430 = vpop.f32.mrf.mxu0
      %v1431 = vadd.f32 0.0, %v1430
      %v1432 = vpop.f32.mrf.mxu0
      %v1433 = vadd.f32 0.0, %v1432
      %1434 = vmatmul.bf16.gmra.mxu0 %v1259
      %v1435 = vpop.f32.mrf.mxu0
      %v1436 = vadd.f32 0.0, %v1435
      %v1437 = vpop.f32.mrf.mxu0
      %v1438 = vadd.f32 0.0, %v1437
      %1439 = vmatmul.bf16.gmra.mxu0 %v1268
      %v1440 = vpop.f32.mrf.mxu0
      %v1441 = vadd.f32 0.0, %v1440
      %v1442 = vpop.f32.mrf.mxu0
      %v1443 = vadd.f32 0.0, %v1442
      %1444 = vmatmul.bf16.gmra.mxu0 %v1277
      %v1445 = vpop.f32.mrf.mxu0
      %v1446 = vadd.f32 0.0, %v1445
      %v1447 = vpop.f32.mrf.mxu0
      %v1448 = vadd.f32 0.0, %v1447
      %1449 = vmatmul.bf16.gmra.mxu0 %v1286
      %v1450 = vpop.f32.mrf.mxu0
      %v1451 = vadd.f32 0.0, %v1450
      %v1452 = vpop.f32.mrf.mxu0
      %v1453 = vadd.f32 0.0, %v1452
      %1454 = vmatmul.bf16.gmra.mxu0 %v1295
      %v1455 = vpop.f32.mrf.mxu0
      %v1456 = vadd.f32 0.0, %v1455
      %v1457 = vpop.f32.mrf.mxu0
      %v1458 = vadd.f32 0.0, %v1457
      %1459 = vdwg.mxu0
      %v1460 = vadd.f32 %v1188, %v1392
      %v1461 = vadd.f32 %v1189, %v1431
      %v1462 = vadd.f32 %v1190, %v1394
      %v1463 = vadd.f32 %v1191, %v1433
      %v1464 = vadd.f32 %v1192, %v1397
      %v1465 = vadd.f32 %v1193, %v1436
      %v1466 = vadd.f32 %v1194, %v1399
      %v1467 = vadd.f32 %v1195, %v1438
      %v1468 = vadd.f32 %v1196, %v1402
      %v1469 = vadd.f32 %v1197, %v1441
      %v1470 = vadd.f32 %v1198, %v1404
      %v1471 = vadd.f32 %v1199, %v1443
      %v1472 = vadd.f32 %v1200, %v1407
      %v1473 = vadd.f32 %v1201, %v1446
      %v1474 = vadd.f32 %v1202, %v1409
      %v1475 = vadd.f32 %v1203, %v1448
      %v1476 = vadd.f32 %v1204, %v1412
      %v1477 = vadd.f32 %v1205, %v1451
      %v1478 = vadd.f32 %v1206, %v1414
      %v1479 = vadd.f32 %v1207, %v1453
      %v1480 = vadd.f32 %v1208, %v1417
      %v1481 = vadd.f32 %v1209, %v1456
      %v1482 = vadd.f32 %v1210, %v1419
      %v1483 = vadd.f32 %v1211, %v1458
      %v1484 = vld [vmem:[%s246 + $0x8] sm:$0xc]
      %s1485 = scalar_lea.vmem %s1, 640
      %v1486 = vld [vmem:[%s1485] sm:$0xff]
      %v1487 = vld [vmem:[%s1485 + $0x8] sm:$0xff]
      %v1488 = vld [vmem:[%s1485 + $0x10] sm:$0xff]
      %v1489 = vld [vmem:[%s1485 + $0x18] sm:$0xff]
      %v1490 = vld [vmem:[%s1485 + $0x20] sm:$0xff]
      %v1491 = vld [vmem:[%s1485 + $0x28] sm:$0xff]
      %v1492 = vld [vmem:[%s1485 + $0x30] sm:$0xff]
      %v1493 = vld [vmem:[%s1485 + $0x38] sm:$0xff]
      %v1494 = vld [vmem:[%s1485 + $0x40] sm:$0xff]
      %v1495 = vld [vmem:[%s1485 + $0x48] sm:$0xff]
      %v1496 = vld [vmem:[%s1485 + $0x50] sm:$0xff]
      %v1497 = vld [vmem:[%s1485 + $0x58] sm:$0xff]
      %v1498 = vld [vmem:[%s1485 + $0x60] sm:$0xff]
      %v1499 = vld [vmem:[%s1485 + $0x68] sm:$0xff]
      %v1500 = vld [vmem:[%s1485 + $0x70] sm:$0xff]
      %v1501 = vld [vmem:[%s1485 + $0x78] sm:$0xff]
      %v1503 = vunpack.c.l.b16 %v1484
      %v1504 = vpack.c.b16 %v992, %v1503
      %vm1505 = vcmask 1045504
      %v1506 = vrot.slane %v1504, 2
      %v1507 = vrot.slane %v1005, 2
      %v1508 = vsel %vm1505, %v1506, %v1507
      %v1509 = vrot.slane %v1006, 2
      %v1510 = vsel %vm1505, %v1507, %v1509
      %v1511 = vrot.slane %v1007, 2
      %v1512 = vsel %vm1505, %v1509, %v1511
      %v1513 = vrot.slane %v1008, 2
      %v1514 = vsel %vm1505, %v1511, %v1513
      %v1515 = vrot.slane %v1009, 2
      %v1516 = vsel %vm1505, %v1513, %v1515
      %v1517 = vrot.slane %v1232, 2
      %v1518 = vsel %vm1505, %v1515, %v1517
      %v1541 = vunpack.c.l.b16 %v1486
      %v1542 = vunpack.c.h.b16 %v1486
      %v1543 = vunpack.c.l.b16 %v1487
      %v1544 = vunpack.c.h.b16 %v1487
      %v1545 = vunpack.c.l.b16 %v1488
      %v1546 = vunpack.c.h.b16 %v1488
      %v1547 = vunpack.c.l.b16 %v1489
      %v1548 = vunpack.c.h.b16 %v1489
      %v1549 = vunpack.c.l.b16 %v1490
      %v1550 = vunpack.c.h.b16 %v1490
      %v1551 = vunpack.c.l.b16 %v1491
      %v1552 = vunpack.c.h.b16 %v1491
      %v1553 = vunpack.c.l.b16 %v1492
      %v1554 = vunpack.c.h.b16 %v1492
      %v1555 = vunpack.c.l.b16 %v1493
      %v1556 = vunpack.c.h.b16 %v1493
      %v1557 = vunpack.c.l.b16 %v1494
      %v1558 = vunpack.c.h.b16 %v1494
      %v1559 = vunpack.c.l.b16 %v1495
      %v1560 = vunpack.c.h.b16 %v1495
      %v1561 = vunpack.c.l.b16 %v1496
      %v1562 = vunpack.c.h.b16 %v1496
      %v1563 = vunpack.c.l.b16 %v1497
      %v1564 = vunpack.c.h.b16 %v1497
      %v1565 = vunpack.c.l.b16 %v1498
      %v1566 = vunpack.c.h.b16 %v1498
      %v1567 = vunpack.c.l.b16 %v1499
      %v1568 = vunpack.c.h.b16 %v1499
      %v1569 = vunpack.c.l.b16 %v1500
      %v1570 = vunpack.c.h.b16 %v1500
      %v1571 = vunpack.c.l.b16 %v1501
      %v1572 = vunpack.c.h.b16 %v1501
      %v1573 = vpack.c.b16 %v1543, %v1541
      %v1574 = vpack.c.b16 %v1544, %v1542
      %v1575 = vpack.c.b16 %v1547, %v1545
      %v1576 = vpack.c.b16 %v1548, %v1546
      %v1577 = vpack.c.b16 %v1551, %v1549
      %v1578 = vpack.c.b16 %v1552, %v1550
      %v1579 = vpack.c.b16 %v1555, %v1553
      %v1580 = vpack.c.b16 %v1556, %v1554
      %v1581 = vpack.c.b16 %v1559, %v1557
      %v1582 = vpack.c.b16 %v1560, %v1558
      %v1583 = vpack.c.b16 %v1563, %v1561
      %v1584 = vpack.c.b16 %v1564, %v1562
      %v1585 = vpack.c.b16 %v1567, %v1565
      %v1586 = vpack.c.b16 %v1568, %v1566
      %v1587 = vpack.c.b16 %v1571, %v1569
      %v1588 = vpack.c.b16 %v1572, %v1570
      %1605 = vmatpush.bf16.msra.mxu0 %v1587
      %1606 = vmatpush.bf16.msra.mxu0 %v1585
      %1607 = vmatpush.bf16.msra.mxu0 %v1583
      %1608 = vmatpush.bf16.msra.mxu0 %v1581
      %1609 = vmatpush.bf16.msra.mxu0 %v1579
      %1610 = vmatpush.bf16.msra.mxu0 %v1577
      %1611 = vmatpush.bf16.msra.mxu0 %v1575
      %1612 = vmatpush.bf16.msra.mxu0 %v1573
      %1613 = vmatmul.bf16.gmra.mxu0 %v1508
      %v1614 = vpop.f32.mrf.mxu0
      %v1615 = vadd.f32 0.0, %v1614
      %v1616 = vpop.f32.mrf.mxu0
      %v1617 = vadd.f32 0.0, %v1616
      %1618 = vmatmul.bf16.gmra.mxu0 %v1510
      %v1619 = vpop.f32.mrf.mxu0
      %v1620 = vadd.f32 0.0, %v1619
      %v1621 = vpop.f32.mrf.mxu0
      %v1622 = vadd.f32 0.0, %v1621
      %1623 = vmatmul.bf16.gmra.mxu0 %v1512
      %v1624 = vpop.f32.mrf.mxu0
      %v1625 = vadd.f32 0.0, %v1624
      %v1626 = vpop.f32.mrf.mxu0
      %v1627 = vadd.f32 0.0, %v1626
      %1628 = vmatmul.bf16.gmra.mxu0 %v1514
      %v1629 = vpop.f32.mrf.mxu0
      %v1630 = vadd.f32 0.0, %v1629
      %v1631 = vpop.f32.mrf.mxu0
      %v1632 = vadd.f32 0.0, %v1631
      %1633 = vmatmul.bf16.gmra.mxu0 %v1516
      %v1634 = vpop.f32.mrf.mxu0
      %v1635 = vadd.f32 0.0, %v1634
      %v1636 = vpop.f32.mrf.mxu0
      %v1637 = vadd.f32 0.0, %v1636
      %1638 = vmatmul.bf16.gmra.mxu0 %v1518
      %v1639 = vpop.f32.mrf.mxu0
      %v1640 = vadd.f32 0.0, %v1639
      %v1641 = vpop.f32.mrf.mxu0
      %v1642 = vadd.f32 0.0, %v1641
      %1643 = vdwg.mxu0
      %1644 = vmatpush.bf16.msra.mxu0 %v1588
      %1645 = vmatpush.bf16.msra.mxu0 %v1586
      %1646 = vmatpush.bf16.msra.mxu0 %v1584
      %1647 = vmatpush.bf16.msra.mxu0 %v1582
      %1648 = vmatpush.bf16.msra.mxu0 %v1580
      %1649 = vmatpush.bf16.msra.mxu0 %v1578
      %1650 = vmatpush.bf16.msra.mxu0 %v1576
      %1651 = vmatpush.bf16.msra.mxu0 %v1574
      %1652 = vmatmul.bf16.gmra.mxu0 %v1508
      %v1653 = vpop.f32.mrf.mxu0
      %v1654 = vadd.f32 0.0, %v1653
      %v1655 = vpop.f32.mrf.mxu0
      %v1656 = vadd.f32 0.0, %v1655
      %1657 = vmatmul.bf16.gmra.mxu0 %v1510
      %v1658 = vpop.f32.mrf.mxu0
      %v1659 = vadd.f32 0.0, %v1658
      %v1660 = vpop.f32.mrf.mxu0
      %v1661 = vadd.f32 0.0, %v1660
      %1662 = vmatmul.bf16.gmra.mxu0 %v1512
      %v1663 = vpop.f32.mrf.mxu0
      %v1664 = vadd.f32 0.0, %v1663
      %v1665 = vpop.f32.mrf.mxu0
      %v1666 = vadd.f32 0.0, %v1665
      %1667 = vmatmul.bf16.gmra.mxu0 %v1514
      %v1668 = vpop.f32.mrf.mxu0
      %v1669 = vadd.f32 0.0, %v1668
      %v1670 = vpop.f32.mrf.mxu0
      %v1671 = vadd.f32 0.0, %v1670
      %1672 = vmatmul.bf16.gmra.mxu0 %v1516
      %v1673 = vpop.f32.mrf.mxu0
      %v1674 = vadd.f32 0.0, %v1673
      %v1675 = vpop.f32.mrf.mxu0
      %v1676 = vadd.f32 0.0, %v1675
      %1677 = vmatmul.bf16.gmra.mxu0 %v1518
      %v1678 = vpop.f32.mrf.mxu0
      %v1679 = vadd.f32 0.0, %v1678
      %v1680 = vpop.f32.mrf.mxu0
      %v1681 = vadd.f32 0.0, %v1680
      %1682 = vdwg.mxu0
      %v1683 = vadd.f32 %v1460, %v1615
      %v1684 = vadd.f32 %v1461, %v1654
      %v1685 = vadd.f32 %v1462, %v1617
      %v1686 = vadd.f32 %v1463, %v1656
      %v1687 = vadd.f32 %v1464, %v1620
      %v1688 = vadd.f32 %v1465, %v1659
      %v1689 = vadd.f32 %v1466, %v1622
      %v1690 = vadd.f32 %v1467, %v1661
      %v1691 = vadd.f32 %v1468, %v1625
      %v1692 = vadd.f32 %v1469, %v1664
      %v1693 = vadd.f32 %v1470, %v1627
      %v1694 = vadd.f32 %v1471, %v1666
      %v1695 = vadd.f32 %v1472, %v1630
      %v1696 = vadd.f32 %v1473, %v1669
      %v1697 = vadd.f32 %v1474, %v1632
      %v1698 = vadd.f32 %v1475, %v1671
      %v1699 = vadd.f32 %v1476, %v1635
      %v1700 = vadd.f32 %v1477, %v1674
      %v1701 = vadd.f32 %v1478, %v1637
      %v1702 = vadd.f32 %v1479, %v1676
      %v1703 = vadd.f32 %v1480, %v1640
      %v1704 = vadd.f32 %v1481, %v1679
      %v1705 = vadd.f32 %v1482, %v1642
      %v1706 = vadd.f32 %v1483, %v1681
      %v1707 = vld [vmem:[%s246 + $0x10] sm:$0xc]
      %v1708 = vld [vmem:[%s246 + $0x14] sm:$0xf]
      %v1709 = vld [vmem:[%s246 + $0x18] sm:$0xf]
      %v1710 = vld [vmem:[%s246 + $0x1c] sm:$0xf]
      %v1711 = vld [vmem:[%s246 + $0x20] sm:$0xf]
      %v1712 = vld [vmem:[%s246 + $0x24] sm:$0xf]
      %v1713 = vld [vmem:[%s246 + $0x28] sm:$0xf]
      %v1714 = vld [vmem:[%s246 + $0x2c] sm:$0xf]
      %v1715 = vld [vmem:[%s246 + $0x30] sm:$0xf]
      %v1716 = vld [vmem:[%s246 + $0x34] sm:$0xf]
      %v1717 = vld [vmem:[%s246 + $0x38] sm:$0xf]
      %v1718 = vld [vmem:[%s246 + $0x3c] sm:$0xf]
      %v1719 = vld [vmem:[%s246 + $0x40] sm:$0x3]
      %s1720 = scalar_lea.vmem %s1, 768
      %v1721 = vld [vmem:[%s1720] sm:$0xff]
      %v1722 = vld [vmem:[%s1720 + $0x8] sm:$0xff]
      %v1723 = vld [vmem:[%s1720 + $0x10] sm:$0xff]
      %v1724 = vld [vmem:[%s1720 + $0x18] sm:$0xff]
      %v1725 = vld [vmem:[%s1720 + $0x20] sm:$0xff]
      %v1726 = vld [vmem:[%s1720 + $0x28] sm:$0xff]
      %v1727 = vld [vmem:[%s1720 + $0x30] sm:$0xff]
      %v1728 = vld [vmem:[%s1720 + $0x38] sm:$0xff]
      %v1729 = vld [vmem:[%s1720 + $0x40] sm:$0xff]
      %v1730 = vld [vmem:[%s1720 + $0x48] sm:$0xff]
      %v1731 = vld [vmem:[%s1720 + $0x50] sm:$0xff]
      %v1732 = vld [vmem:[%s1720 + $0x58] sm:$0xff]
      %v1733 = vld [vmem:[%s1720 + $0x60] sm:$0xff]
      %v1734 = vld [vmem:[%s1720 + $0x68] sm:$0xff]
      %v1735 = vld [vmem:[%s1720 + $0x70] sm:$0xff]
      %v1736 = vld [vmem:[%s1720 + $0x78] sm:$0xff]
      %v1750 = vunpack.c.l.b16 %v1707
      %v1751 = vunpack.c.l.b16 %v1708
      %v1752 = vunpack.c.l.b16 %v1709
      %v1753 = vunpack.c.l.b16 %v1710
      %v1754 = vunpack.c.l.b16 %v1711
      %v1755 = vunpack.c.l.b16 %v1712
      %v1756 = vunpack.c.l.b16 %v1713
      %v1757 = vunpack.c.l.b16 %v1714
      %v1758 = vunpack.c.l.b16 %v1715
      %v1759 = vunpack.c.l.b16 %v1716
      %v1760 = vunpack.c.l.b16 %v1717
      %v1761 = vunpack.c.l.b16 %v1718
      %v1762 = vunpack.c.l.b16 %v1719
      %v1763 = vpack.c.b16 %v1751, %v1750
      %v1764 = vpack.c.b16 %v1753, %v1752
      %v1765 = vpack.c.b16 %v1755, %v1754
      %v1766 = vpack.c.b16 %v1757, %v1756
      %v1767 = vpack.c.b16 %v1759, %v1758
      %v1768 = vpack.c.b16 %v1761, %v1760
      %v1769 = vpack.c.b16 %v1762, %v1762
      %v1770 = vrot.slane %v1763, 2
      %v1771 = vrot.slane %v1764, 2
      %v1772 = vsel %vm1505, %v1770, %v1771
      %v1773 = vrot.slane %v1765, 2
      %v1774 = vsel %vm1505, %v1771, %v1773
      %v1775 = vrot.slane %v1766, 2
      %v1776 = vsel %vm1505, %v1773, %v1775
      %v1777 = vrot.slane %v1767, 2
      %v1778 = vsel %vm1505, %v1775, %v1777
      %v1779 = vrot.slane %v1768, 2
      %v1780 = vsel %vm1505, %v1777, %v1779
      %v1781 = vrot.slane %v1769, 2
      %v1782 = vsel %vm1505, %v1779, %v1781
      %v1805 = vunpack.c.l.b16 %v1721
      %v1806 = vunpack.c.h.b16 %v1721
      %v1807 = vunpack.c.l.b16 %v1722
      %v1808 = vunpack.c.h.b16 %v1722
      %v1809 = vunpack.c.l.b16 %v1723
      %v1810 = vunpack.c.h.b16 %v1723
      %v1811 = vunpack.c.l.b16 %v1724
      %v1812 = vunpack.c.h.b16 %v1724
      %v1813 = vunpack.c.l.b16 %v1725
      %v1814 = vunpack.c.h.b16 %v1725
      %v1815 = vunpack.c.l.b16 %v1726
      %v1816 = vunpack.c.h.b16 %v1726
      %v1817 = vunpack.c.l.b16 %v1727
      %v1818 = vunpack.c.h.b16 %v1727
      %v1819 = vunpack.c.l.b16 %v1728
      %v1820 = vunpack.c.h.b16 %v1728
      %v1821 = vunpack.c.l.b16 %v1729
      %v1822 = vunpack.c.h.b16 %v1729
      %v1823 = vunpack.c.l.b16 %v1730
      %v1824 = vunpack.c.h.b16 %v1730
      %v1825 = vunpack.c.l.b16 %v1731
      %v1826 = vunpack.c.h.b16 %v1731
      %v1827 = vunpack.c.l.b16 %v1732
      %v1828 = vunpack.c.h.b16 %v1732
      %v1829 = vunpack.c.l.b16 %v1733
      %v1830 = vunpack.c.h.b16 %v1733
      %v1831 = vunpack.c.l.b16 %v1734
      %v1832 = vunpack.c.h.b16 %v1734
      %v1833 = vunpack.c.l.b16 %v1735
      %v1834 = vunpack.c.h.b16 %v1735
      %v1835 = vunpack.c.l.b16 %v1736
      %v1836 = vunpack.c.h.b16 %v1736
      %v1837 = vpack.c.b16 %v1807, %v1805
      %v1838 = vpack.c.b16 %v1808, %v1806
      %v1839 = vpack.c.b16 %v1811, %v1809
      %v1840 = vpack.c.b16 %v1812, %v1810
      %v1841 = vpack.c.b16 %v1815, %v1813
      %v1842 = vpack.c.b16 %v1816, %v1814
      %v1843 = vpack.c.b16 %v1819, %v1817
      %v1844 = vpack.c.b16 %v1820, %v1818
      %v1845 = vpack.c.b16 %v1823, %v1821
      %v1846 = vpack.c.b16 %v1824, %v1822
      %v1847 = vpack.c.b16 %v1827, %v1825
      %v1848 = vpack.c.b16 %v1828, %v1826
      %v1849 = vpack.c.b16 %v1831, %v1829
      %v1850 = vpack.c.b16 %v1832, %v1830
      %v1851 = vpack.c.b16 %v1835, %v1833
      %v1852 = vpack.c.b16 %v1836, %v1834
      %1869 = vmatpush.bf16.msra.mxu0 %v1851
      %1870 = vmatpush.bf16.msra.mxu0 %v1849
      %1871 = vmatpush.bf16.msra.mxu0 %v1847
      %1872 = vmatpush.bf16.msra.mxu0 %v1845
      %1873 = vmatpush.bf16.msra.mxu0 %v1843
      %1874 = vmatpush.bf16.msra.mxu0 %v1841
      %1875 = vmatpush.bf16.msra.mxu0 %v1839
      %1876 = vmatpush.bf16.msra.mxu0 %v1837
      %1877 = vmatmul.bf16.gmra.mxu0 %v1772
      %v1878 = vpop.f32.mrf.mxu0
      %v1879 = vadd.f32 0.0, %v1878
      %v1880 = vpop.f32.mrf.mxu0
      %v1881 = vadd.f32 0.0, %v1880
      %1882 = vmatmul.bf16.gmra.mxu0 %v1774
      %v1883 = vpop.f32.mrf.mxu0
      %v1884 = vadd.f32 0.0, %v1883
      %v1885 = vpop.f32.mrf.mxu0
      %v1886 = vadd.f32 0.0, %v1885
      %1887 = vmatmul.bf16.gmra.mxu0 %v1776
      %v1888 = vpop.f32.mrf.mxu0
      %v1889 = vadd.f32 0.0, %v1888
      %v1890 = vpop.f32.mrf.mxu0
      %v1891 = vadd.f32 0.0, %v1890
      %1892 = vmatmul.bf16.gmra.mxu0 %v1778
      %v1893 = vpop.f32.mrf.mxu0
      %v1894 = vadd.f32 0.0, %v1893
      %v1895 = vpop.f32.mrf.mxu0
      %v1896 = vadd.f32 0.0, %v1895
      %1897 = vmatmul.bf16.gmra.mxu0 %v1780
      %v1898 = vpop.f32.mrf.mxu0
      %v1899 = vadd.f32 0.0, %v1898
      %v1900 = vpop.f32.mrf.mxu0
      %v1901 = vadd.f32 0.0, %v1900
      %1902 = vmatmul.bf16.gmra.mxu0 %v1782
      %v1903 = vpop.f32.mrf.mxu0
      %v1904 = vadd.f32 0.0, %v1903
      %v1905 = vpop.f32.mrf.mxu0
      %v1906 = vadd.f32 0.0, %v1905
      %1907 = vdwg.mxu0
      %1908 = vmatpush.bf16.msra.mxu0 %v1852
      %1909 = vmatpush.bf16.msra.mxu0 %v1850
      %1910 = vmatpush.bf16.msra.mxu0 %v1848
      %1911 = vmatpush.bf16.msra.mxu0 %v1846
      %1912 = vmatpush.bf16.msra.mxu0 %v1844
      %1913 = vmatpush.bf16.msra.mxu0 %v1842
      %1914 = vmatpush.bf16.msra.mxu0 %v1840
      %1915 = vmatpush.bf16.msra.mxu0 %v1838
      %1916 = vmatmul.bf16.gmra.mxu0 %v1772
      %v1917 = vpop.f32.mrf.mxu0
      %v1918 = vadd.f32 0.0, %v1917
      %v1919 = vpop.f32.mrf.mxu0
      %v1920 = vadd.f32 0.0, %v1919
      %1921 = vmatmul.bf16.gmra.mxu0 %v1774
      %v1922 = vpop.f32.mrf.mxu0
      %v1923 = vadd.f32 0.0, %v1922
      %v1924 = vpop.f32.mrf.mxu0
      %v1925 = vadd.f32 0.0, %v1924
      %1926 = vmatmul.bf16.gmra.mxu0 %v1776
      %v1927 = vpop.f32.mrf.mxu0
      %v1928 = vadd.f32 0.0, %v1927
      %v1929 = vpop.f32.mrf.mxu0
      %v1930 = vadd.f32 0.0, %v1929
      %1931 = vmatmul.bf16.gmra.mxu0 %v1778
      %v1932 = vpop.f32.mrf.mxu0
      %v1933 = vadd.f32 0.0, %v1932
      %v1934 = vpop.f32.mrf.mxu0
      %v1935 = vadd.f32 0.0, %v1934
      %1936 = vmatmul.bf16.gmra.mxu0 %v1780
      %v1937 = vpop.f32.mrf.mxu0
      %v1938 = vadd.f32 0.0, %v1937
      %v1939 = vpop.f32.mrf.mxu0
      %v1940 = vadd.f32 0.0, %v1939
      %1941 = vmatmul.bf16.gmra.mxu0 %v1782
      %v1942 = vpop.f32.mrf.mxu0
      %v1943 = vadd.f32 0.0, %v1942
      %v1944 = vpop.f32.mrf.mxu0
      %v1945 = vadd.f32 0.0, %v1944
      %1946 = vdwg.mxu0
      %v1947 = vadd.f32 %v1683, %v1879
      %v1948 = vadd.f32 %v1684, %v1918
      %v1949 = vadd.f32 %v1685, %v1881
      %v1950 = vadd.f32 %v1686, %v1920
      %v1951 = vadd.f32 %v1687, %v1884
      %v1952 = vadd.f32 %v1688, %v1923
      %v1953 = vadd.f32 %v1689, %v1886
      %v1954 = vadd.f32 %v1690, %v1925
      %v1955 = vadd.f32 %v1691, %v1889
      %v1956 = vadd.f32 %v1692, %v1928
      %v1957 = vadd.f32 %v1693, %v1891
      %v1958 = vadd.f32 %v1694, %v1930
      %v1959 = vadd.f32 %v1695, %v1894
      %v1960 = vadd.f32 %v1696, %v1933
      %v1961 = vadd.f32 %v1697, %v1896
      %v1962 = vadd.f32 %v1698, %v1935
      %v1963 = vadd.f32 %v1699, %v1899
      %v1964 = vadd.f32 %v1700, %v1938
      %v1965 = vadd.f32 %v1701, %v1901
      %v1966 = vadd.f32 %v1702, %v1940
      %v1967 = vadd.f32 %v1703, %v1904
      %v1968 = vadd.f32 %v1704, %v1943
      %v1969 = vadd.f32 %v1705, %v1906
      %v1970 = vadd.f32 %v1706, %v1945
      %v1971 = vld [vmem:[%s246 + $0x40] sm:$0x7]
      %s1972 = scalar_lea.vmem %s1, 896
      %v1973 = vld [vmem:[%s1972] sm:$0xff]
      %v1974 = vld [vmem:[%s1972 + $0x8] sm:$0xff]
      %v1975 = vld [vmem:[%s1972 + $0x10] sm:$0xff]
      %v1976 = vld [vmem:[%s1972 + $0x18] sm:$0xff]
      %v1977 = vld [vmem:[%s1972 + $0x20] sm:$0xff]
      %v1978 = vld [vmem:[%s1972 + $0x28] sm:$0xff]
      %v1979 = vld [vmem:[%s1972 + $0x30] sm:$0xff]
      %v1980 = vld [vmem:[%s1972 + $0x38] sm:$0xff]
      %v1981 = vld [vmem:[%s1972 + $0x40] sm:$0xff]
      %v1982 = vld [vmem:[%s1972 + $0x48] sm:$0xff]
      %v1983 = vld [vmem:[%s1972 + $0x50] sm:$0xff]
      %v1984 = vld [vmem:[%s1972 + $0x58] sm:$0xff]
      %v1985 = vld [vmem:[%s1972 + $0x60] sm:$0xff]
      %v1986 = vld [vmem:[%s1972 + $0x68] sm:$0xff]
      %v1987 = vld [vmem:[%s1972 + $0x70] sm:$0xff]
      %v1988 = vld [vmem:[%s1972 + $0x78] sm:$0xff]
      %v1990 = vunpack.c.l.b16 %v1971
      %v1991 = vpack.c.b16 %v1990, %v1990
      %vm1992 = vsmask.f32 5376
      %v1994 = vshrl.u32 %v1763, 16
      %v1996 = vrot.slane %v1994, 2
      %v1997 = vshll.u32 %v1763, 16
      %v1999 = vrot.slane %v1997, 3
      %v2000 = vor.u32 %v1996, %v1999
      %v2002 = vshrl.u32 %v1764, 16
      %v2004 = vrot.slane %v2002, 2
      %v2005 = vshll.u32 %v1764, 16
      %v2007 = vrot.slane %v2005, 3
      %v2008 = vor.u32 %v2004, %v2007
      %v2009 = vsel %vm1992, %v2000, %v2008
      %v2011 = vshrl.u32 %v1765, 16
      %v2013 = vrot.slane %v2011, 2
      %v2014 = vshll.u32 %v1765, 16
      %v2016 = vrot.slane %v2014, 3
      %v2017 = vor.u32 %v2013, %v2016
      %v2018 = vsel %vm1992, %v2008, %v2017
      %v2020 = vshrl.u32 %v1766, 16
      %v2022 = vrot.slane %v2020, 2
      %v2023 = vshll.u32 %v1766, 16
      %v2025 = vrot.slane %v2023, 3
      %v2026 = vor.u32 %v2022, %v2025
      %v2027 = vsel %vm1992, %v2017, %v2026
      %v2029 = vshrl.u32 %v1767, 16
      %v2031 = vrot.slane %v2029, 2
      %v2032 = vshll.u32 %v1767, 16
      %v2034 = vrot.slane %v2032, 3
      %v2035 = vor.u32 %v2031, %v2034
      %v2036 = vsel %vm1992, %v2026, %v2035
      %v2038 = vshrl.u32 %v1768, 16
      %v2040 = vrot.slane %v2038, 2
      %v2041 = vshll.u32 %v1768, 16
      %v2043 = vrot.slane %v2041, 3
      %v2044 = vor.u32 %v2040, %v2043
      %v2045 = vsel %vm1992, %v2035, %v2044
      %v2047 = vshrl.u32 %v1991, 16
      %v2049 = vrot.slane %v2047, 2
      %v2050 = vshll.u32 %v1991, 16
      %v2052 = vrot.slane %v2050, 3
      %v2053 = vor.u32 %v2049, %v2052
      %v2054 = vsel %vm1992, %v2044, %v2053
      %v2077 = vunpack.c.l.b16 %v1973
      %v2078 = vunpack.c.h.b16 %v1973
      %v2079 = vunpack.c.l.b16 %v1974
      %v2080 = vunpack.c.h.b16 %v1974
      %v2081 = vunpack.c.l.b16 %v1975
      %v2082 = vunpack.c.h.b16 %v1975
      %v2083 = vunpack.c.l.b16 %v1976
      %v2084 = vunpack.c.h.b16 %v1976
      %v2085 = vunpack.c.l.b16 %v1977
      %v2086 = vunpack.c.h.b16 %v1977
      %v2087 = vunpack.c.l.b16 %v1978
      %v2088 = vunpack.c.h.b16 %v1978
      %v2089 = vunpack.c.l.b16 %v1979
      %v2090 = vunpack.c.h.b16 %v1979
      %v2091 = vunpack.c.l.b16 %v1980
      %v2092 = vunpack.c.h.b16 %v1980
      %v2093 = vunpack.c.l.b16 %v1981
      %v2094 = vunpack.c.h.b16 %v1981
      %v2095 = vunpack.c.l.b16 %v1982
      %v2096 = vunpack.c.h.b16 %v1982
      %v2097 = vunpack.c.l.b16 %v1983
      %v2098 = vunpack.c.h.b16 %v1983
      %v2099 = vunpack.c.l.b16 %v1984
      %v2100 = vunpack.c.h.b16 %v1984
      %v2101 = vunpack.c.l.b16 %v1985
      %v2102 = vunpack.c.h.b16 %v1985
      %v2103 = vunpack.c.l.b16 %v1986
      %v2104 = vunpack.c.h.b16 %v1986
      %v2105 = vunpack.c.l.b16 %v1987
      %v2106 = vunpack.c.h.b16 %v1987
      %v2107 = vunpack.c.l.b16 %v1988
      %v2108 = vunpack.c.h.b16 %v1988
      %v2109 = vpack.c.b16 %v2079, %v2077
      %v2110 = vpack.c.b16 %v2080, %v2078
      %v2111 = vpack.c.b16 %v2083, %v2081
      %v2112 = vpack.c.b16 %v2084, %v2082
      %v2113 = vpack.c.b16 %v2087, %v2085
      %v2114 = vpack.c.b16 %v2088, %v2086
      %v2115 = vpack.c.b16 %v2091, %v2089
      %v2116 = vpack.c.b16 %v2092, %v2090
      %v2117 = vpack.c.b16 %v2095, %v2093
      %v2118 = vpack.c.b16 %v2096, %v2094
      %v2119 = vpack.c.b16 %v2099, %v2097
      %v2120 = vpack.c.b16 %v2100, %v2098
      %v2121 = vpack.c.b16 %v2103, %v2101
      %v2122 = vpack.c.b16 %v2104, %v2102
      %v2123 = vpack.c.b16 %v2107, %v2105
      %v2124 = vpack.c.b16 %v2108, %v2106
      %2141 = vmatpush.bf16.msra.mxu0 %v2123
      %2142 = vmatpush.bf16.msra.mxu0 %v2121
      %2143 = vmatpush.bf16.msra.mxu0 %v2119
      %2144 = vmatpush.bf16.msra.mxu0 %v2117
      %2145 = vmatpush.bf16.msra.mxu0 %v2115
      %2146 = vmatpush.bf16.msra.mxu0 %v2113
      %2147 = vmatpush.bf16.msra.mxu0 %v2111
      %2148 = vmatpush.bf16.msra.mxu0 %v2109
      %2149 = vmatmul.bf16.gmra.mxu0 %v2009
      %v2150 = vpop.f32.mrf.mxu0
      %v2151 = vadd.f32 0.0, %v2150
      %v2152 = vpop.f32.mrf.mxu0
      %v2153 = vadd.f32 0.0, %v2152
      %2154 = vmatmul.bf16.gmra.mxu0 %v2018
      %v2155 = vpop.f32.mrf.mxu0
      %v2156 = vadd.f32 0.0, %v2155
      %v2157 = vpop.f32.mrf.mxu0
      %v2158 = vadd.f32 0.0, %v2157
      %2159 = vmatmul.bf16.gmra.mxu0 %v2027
      %v2160 = vpop.f32.mrf.mxu0
      %v2161 = vadd.f32 0.0, %v2160
      %v2162 = vpop.f32.mrf.mxu0
      %v2163 = vadd.f32 0.0, %v2162
      %2164 = vmatmul.bf16.gmra.mxu0 %v2036
      %v2165 = vpop.f32.mrf.mxu0
      %v2166 = vadd.f32 0.0, %v2165
      %v2167 = vpop.f32.mrf.mxu0
      %v2168 = vadd.f32 0.0, %v2167
      %2169 = vmatmul.bf16.gmra.mxu0 %v2045
      %v2170 = vpop.f32.mrf.mxu0
      %v2171 = vadd.f32 0.0, %v2170
      %v2172 = vpop.f32.mrf.mxu0
      %v2173 = vadd.f32 0.0, %v2172
      %2174 = vmatmul.bf16.gmra.mxu0 %v2054
      %v2175 = vpop.f32.mrf.mxu0
      %v2176 = vadd.f32 0.0, %v2175
      %v2177 = vpop.f32.mrf.mxu0
      %v2178 = vadd.f32 0.0, %v2177
      %2179 = vdwg.mxu0
      %2180 = vmatpush.bf16.msra.mxu0 %v2124
      %2181 = vmatpush.bf16.msra.mxu0 %v2122
      %2182 = vmatpush.bf16.msra.mxu0 %v2120
      %2183 = vmatpush.bf16.msra.mxu0 %v2118
      %2184 = vmatpush.bf16.msra.mxu0 %v2116
      %2185 = vmatpush.bf16.msra.mxu0 %v2114
      %2186 = vmatpush.bf16.msra.mxu0 %v2112
      %2187 = vmatpush.bf16.msra.mxu0 %v2110
      %2188 = vmatmul.bf16.gmra.mxu0 %v2009
      %v2189 = vpop.f32.mrf.mxu0
      %v2190 = vadd.f32 0.0, %v2189
      %v2191 = vpop.f32.mrf.mxu0
      %v2192 = vadd.f32 0.0, %v2191
      %2193 = vmatmul.bf16.gmra.mxu0 %v2018
      %v2194 = vpop.f32.mrf.mxu0
      %v2195 = vadd.f32 0.0, %v2194
      %v2196 = vpop.f32.mrf.mxu0
      %v2197 = vadd.f32 0.0, %v2196
      %2198 = vmatmul.bf16.gmra.mxu0 %v2027
      %v2199 = vpop.f32.mrf.mxu0
      %v2200 = vadd.f32 0.0, %v2199
      %v2201 = vpop.f32.mrf.mxu0
      %v2202 = vadd.f32 0.0, %v2201
      %2203 = vmatmul.bf16.gmra.mxu0 %v2036
      %v2204 = vpop.f32.mrf.mxu0
      %v2205 = vadd.f32 0.0, %v2204
      %v2206 = vpop.f32.mrf.mxu0
      %v2207 = vadd.f32 0.0, %v2206
      %2208 = vmatmul.bf16.gmra.mxu0 %v2045
      %v2209 = vpop.f32.mrf.mxu0
      %v2210 = vadd.f32 0.0, %v2209
      %v2211 = vpop.f32.mrf.mxu0
      %v2212 = vadd.f32 0.0, %v2211
      %2213 = vmatmul.bf16.gmra.mxu0 %v2054
      %v2214 = vpop.f32.mrf.mxu0
      %v2215 = vadd.f32 0.0, %v2214
      %v2216 = vpop.f32.mrf.mxu0
      %v2217 = vadd.f32 0.0, %v2216
      %2218 = vdwg.mxu0
      %v2219 = vadd.f32 %v1947, %v2151
      %v2220 = vadd.f32 %v1948, %v2190
      %v2221 = vadd.f32 %v1949, %v2153
      %v2222 = vadd.f32 %v1950, %v2192
      %v2223 = vadd.f32 %v1951, %v2156
      %v2224 = vadd.f32 %v1952, %v2195
      %v2225 = vadd.f32 %v1953, %v2158
      %v2226 = vadd.f32 %v1954, %v2197
      %v2227 = vadd.f32 %v1955, %v2161
      %v2228 = vadd.f32 %v1956, %v2200
      %v2229 = vadd.f32 %v1957, %v2163
      %v2230 = vadd.f32 %v1958, %v2202
      %v2231 = vadd.f32 %v1959, %v2166
      %v2232 = vadd.f32 %v1960, %v2205
      %v2233 = vadd.f32 %v1961, %v2168
      %v2234 = vadd.f32 %v1962, %v2207
      %v2235 = vadd.f32 %v1963, %v2171
      %v2236 = vadd.f32 %v1964, %v2210
      %v2237 = vadd.f32 %v1965, %v2173
      %v2238 = vadd.f32 %v1966, %v2212
      %v2239 = vadd.f32 %v1967, %v2176
      %v2240 = vadd.f32 %v1968, %v2215
      %v2241 = vadd.f32 %v1969, %v2178
      %v2242 = vadd.f32 %v1970, %v2217
      %v2243 = vld [vmem:[%s246 + $0x10] sm:$0x8]
      %s2244 = scalar_lea.vmem %s1, 1024
      %v2245 = vld [vmem:[%s2244] sm:$0xff]
      %v2246 = vld [vmem:[%s2244 + $0x8] sm:$0xff]
      %v2247 = vld [vmem:[%s2244 + $0x10] sm:$0xff]
      %v2248 = vld [vmem:[%s2244 + $0x18] sm:$0xff]
      %v2249 = vld [vmem:[%s2244 + $0x20] sm:$0xff]
      %v2250 = vld [vmem:[%s2244 + $0x28] sm:$0xff]
      %v2251 = vld [vmem:[%s2244 + $0x30] sm:$0xff]
      %v2252 = vld [vmem:[%s2244 + $0x38] sm:$0xff]
      %v2253 = vld [vmem:[%s2244 + $0x40] sm:$0xff]
      %v2254 = vld [vmem:[%s2244 + $0x48] sm:$0xff]
      %v2255 = vld [vmem:[%s2244 + $0x50] sm:$0xff]
      %v2256 = vld [vmem:[%s2244 + $0x58] sm:$0xff]
      %v2257 = vld [vmem:[%s2244 + $0x60] sm:$0xff]
      %v2258 = vld [vmem:[%s2244 + $0x68] sm:$0xff]
      %v2259 = vld [vmem:[%s2244 + $0x70] sm:$0xff]
      %v2260 = vld [vmem:[%s2244 + $0x78] sm:$0xff]
      %v2262 = vunpack.c.l.b16 %v2243
      %v2263 = vpack.c.b16 %v1751, %v2262
      %vm2264 = vcmask 1044480
      %v2265 = vrot.slane %v2263, 3
      %v2266 = vrot.slane %v1764, 3
      %v2267 = vsel %vm2264, %v2265, %v2266
      %v2268 = vrot.slane %v1765, 3
      %v2269 = vsel %vm2264, %v2266, %v2268
      %v2270 = vrot.slane %v1766, 3
      %v2271 = vsel %vm2264, %v2268, %v2270
      %v2272 = vrot.slane %v1767, 3
      %v2273 = vsel %vm2264, %v2270, %v2272
      %v2274 = vrot.slane %v1768, 3
      %v2275 = vsel %vm2264, %v2272, %v2274
      %v2276 = vrot.slane %v1991, 3
      %v2277 = vsel %vm2264, %v2274, %v2276
      %v2300 = vunpack.c.l.b16 %v2245
      %v2301 = vunpack.c.h.b16 %v2245
      %v2302 = vunpack.c.l.b16 %v2246
      %v2303 = vunpack.c.h.b16 %v2246
      %v2304 = vunpack.c.l.b16 %v2247
      %v2305 = vunpack.c.h.b16 %v2247
      %v2306 = vunpack.c.l.b16 %v2248
      %v2307 = vunpack.c.h.b16 %v2248
      %v2308 = vunpack.c.l.b16 %v2249
      %v2309 = vunpack.c.h.b16 %v2249
      %v2310 = vunpack.c.l.b16 %v2250
      %v2311 = vunpack.c.h.b16 %v2250
      %v2312 = vunpack.c.l.b16 %v2251
      %v2313 = vunpack.c.h.b16 %v2251
      %v2314 = vunpack.c.l.b16 %v2252
      %v2315 = vunpack.c.h.b16 %v2252
      %v2316 = vunpack.c.l.b16 %v2253
      %v2317 = vunpack.c.h.b16 %v2253
      %v2318 = vunpack.c.l.b16 %v2254
      %v2319 = vunpack.c.h.b16 %v2254
      %v2320 = vunpack.c.l.b16 %v2255
      %v2321 = vunpack.c.h.b16 %v2255
      %v2322 = vunpack.c.l.b16 %v2256
      %v2323 = vunpack.c.h.b16 %v2256
      %v2324 = vunpack.c.l.b16 %v2257
      %v2325 = vunpack.c.h.b16 %v2257
      %v2326 = vunpack.c.l.b16 %v2258
      %v2327 = vunpack.c.h.b16 %v2258
      %v2328 = vunpack.c.l.b16 %v2259
      %v2329 = vunpack.c.h.b16 %v2259
      %v2330 = vunpack.c.l.b16 %v2260
      %v2331 = vunpack.c.h.b16 %v2260
      %v2332 = vpack.c.b16 %v2302, %v2300
      %v2333 = vpack.c.b16 %v2303, %v2301
      %v2334 = vpack.c.b16 %v2306, %v2304
      %v2335 = vpack.c.b16 %v2307, %v2305
      %v2336 = vpack.c.b16 %v2310, %v2308
      %v2337 = vpack.c.b16 %v2311, %v2309
      %v2338 = vpack.c.b16 %v2314, %v2312
      %v2339 = vpack.c.b16 %v2315, %v2313
      %v2340 = vpack.c.b16 %v2318, %v2316
      %v2341 = vpack.c.b16 %v2319, %v2317
      %v2342 = vpack.c.b16 %v2322, %v2320
      %v2343 = vpack.c.b16 %v2323, %v2321
      %v2344 = vpack.c.b16 %v2326, %v2324
      %v2345 = vpack.c.b16 %v2327, %v2325
      %v2346 = vpack.c.b16 %v2330, %v2328
      %v2347 = vpack.c.b16 %v2331, %v2329
      %2364 = vmatpush.bf16.msra.mxu0 %v2346
      %2365 = vmatpush.bf16.msra.mxu0 %v2344
      %2366 = vmatpush.bf16.msra.mxu0 %v2342
      %2367 = vmatpush.bf16.msra.mxu0 %v2340
      %2368 = vmatpush.bf16.msra.mxu0 %v2338
      %2369 = vmatpush.bf16.msra.mxu0 %v2336
      %2370 = vmatpush.bf16.msra.mxu0 %v2334
      %2371 = vmatpush.bf16.msra.mxu0 %v2332
      %2372 = vmatmul.bf16.gmra.mxu0 %v2267
      %v2373 = vpop.f32.mrf.mxu0
      %v2374 = vadd.f32 0.0, %v2373
      %v2375 = vpop.f32.mrf.mxu0
      %v2376 = vadd.f32 0.0, %v2375
      %2377 = vmatmul.bf16.gmra.mxu0 %v2269
      %v2378 = vpop.f32.mrf.mxu0
      %v2379 = vadd.f32 0.0, %v2378
      %v2380 = vpop.f32.mrf.mxu0
      %v2381 = vadd.f32 0.0, %v2380
      %2382 = vmatmul.bf16.gmra.mxu0 %v2271
      %v2383 = vpop.f32.mrf.mxu0
      %v2384 = vadd.f32 0.0, %v2383
      %v2385 = vpop.f32.mrf.mxu0
      %v2386 = vadd.f32 0.0, %v2385
      %2387 = vmatmul.bf16.gmra.mxu0 %v2273
      %v2388 = vpop.f32.mrf.mxu0
      %v2389 = vadd.f32 0.0, %v2388
      %v2390 = vpop.f32.mrf.mxu0
      %v2391 = vadd.f32 0.0, %v2390
      %2392 = vmatmul.bf16.gmra.mxu0 %v2275
      %v2393 = vpop.f32.mrf.mxu0
      %v2394 = vadd.f32 0.0, %v2393
      %v2395 = vpop.f32.mrf.mxu0
      %v2396 = vadd.f32 0.0, %v2395
      %2397 = vmatmul.bf16.gmra.mxu0 %v2277
      %v2398 = vpop.f32.mrf.mxu0
      %v2399 = vadd.f32 0.0, %v2398
      %v2400 = vpop.f32.mrf.mxu0
      %v2401 = vadd.f32 0.0, %v2400
      %2402 = vdwg.mxu0
      %2403 = vmatpush.bf16.msra.mxu0 %v2347
      %2404 = vmatpush.bf16.msra.mxu0 %v2345
      %2405 = vmatpush.bf16.msra.mxu0 %v2343
      %2406 = vmatpush.bf16.msra.mxu0 %v2341
      %2407 = vmatpush.bf16.msra.mxu0 %v2339
      %2408 = vmatpush.bf16.msra.mxu0 %v2337
      %2409 = vmatpush.bf16.msra.mxu0 %v2335
      %2410 = vmatpush.bf16.msra.mxu0 %v2333
      %2411 = vmatmul.bf16.gmra.mxu0 %v2267
      %v2412 = vpop.f32.mrf.mxu0
      %v2413 = vadd.f32 0.0, %v2412
      %v2414 = vpop.f32.mrf.mxu0
      %v2415 = vadd.f32 0.0, %v2414
      %2416 = vmatmul.bf16.gmra.mxu0 %v2269
      %v2417 = vpop.f32.mrf.mxu0
      %v2418 = vadd.f32 0.0, %v2417
      %v2419 = vpop.f32.mrf.mxu0
      %v2420 = vadd.f32 0.0, %v2419
      %2421 = vmatmul.bf16.gmra.mxu0 %v2271
      %v2422 = vpop.f32.mrf.mxu0
      %v2423 = vadd.f32 0.0, %v2422
      %v2424 = vpop.f32.mrf.mxu0
      %v2425 = vadd.f32 0.0, %v2424
      %2426 = vmatmul.bf16.gmra.mxu0 %v2273
      %v2427 = vpop.f32.mrf.mxu0
      %v2428 = vadd.f32 0.0, %v2427
      %v2429 = vpop.f32.mrf.mxu0
      %v2430 = vadd.f32 0.0, %v2429
      %2431 = vmatmul.bf16.gmra.mxu0 %v2275
      %v2432 = vpop.f32.mrf.mxu0
      %v2433 = vadd.f32 0.0, %v2432
      %v2434 = vpop.f32.mrf.mxu0
      %v2435 = vadd.f32 0.0, %v2434
      %2436 = vmatmul.bf16.gmra.mxu0 %v2277
      %v2437 = vpop.f32.mrf.mxu0
      %v2438 = vadd.f32 0.0, %v2437
      %v2439 = vpop.f32.mrf.mxu0
      %v2440 = vadd.f32 0.0, %v2439
      %2441 = vdwg.mxu0
      %v2442 = vadd.f32 %v2219, %v2374
      %v2443 = vadd.f32 %v2220, %v2413
      %v2444 = vadd.f32 %v2221, %v2376
      %v2445 = vadd.f32 %v2222, %v2415
      %v2446 = vadd.f32 %v2223, %v2379
      %v2447 = vadd.f32 %v2224, %v2418
      %v2448 = vadd.f32 %v2225, %v2381
      %v2449 = vadd.f32 %v2226, %v2420
      %v2450 = vadd.f32 %v2227, %v2384
      %v2451 = vadd.f32 %v2228, %v2423
      %v2452 = vadd.f32 %v2229, %v2386
      %v2453 = vadd.f32 %v2230, %v2425
      %v2454 = vadd.f32 %v2231, %v2389
      %v2455 = vadd.f32 %v2232, %v2428
      %v2456 = vadd.f32 %v2233, %v2391
      %v2457 = vadd.f32 %v2234, %v2430
      %v2458 = vadd.f32 %v2235, %v2394
      %v2459 = vadd.f32 %v2236, %v2433
      %v2460 = vadd.f32 %v2237, %v2396
      %v2461 = vadd.f32 %v2238, %v2435
      %v2462 = vadd.f32 %v2239, %v2399
      %v2463 = vadd.f32 %v2240, %v2438
      %v2464 = vadd.f32 %v2241, %v2401
      %v2465 = vadd.f32 %v2242, %v2440
      %v2466 = vld [vmem:[%s2] sm:$0x3]
      %v2468 = vperm.slane %v2466, 0
      %v2469 = vperm.slane %v2466, 1
      %v2472 = vadd.f32 %v2442, %v2468
      %v2473 = vadd.f32 %v2443, %v2469
      %v2474 = vadd.f32 %v2444, %v2468
      %v2475 = vadd.f32 %v2445, %v2469
      %v2476 = vadd.f32 %v2446, %v2468
      %v2477 = vadd.f32 %v2447, %v2469
      %v2478 = vadd.f32 %v2448, %v2468
      %v2479 = vadd.f32 %v2449, %v2469
      %v2480 = vadd.f32 %v2450, %v2468
      %v2481 = vadd.f32 %v2451, %v2469
      %v2482 = vadd.f32 %v2452, %v2468
      %v2483 = vadd.f32 %v2453, %v2469
      %v2484 = vadd.f32 %v2454, %v2468
      %v2485 = vadd.f32 %v2455, %v2469
      %v2486 = vadd.f32 %v2456, %v2468
      %v2487 = vadd.f32 %v2457, %v2469
      %v2488 = vadd.f32 %v2458, %v2468
      %v2489 = vadd.f32 %v2459, %v2469
      %v2490 = vadd.f32 %v2460, %v2468
      %v2491 = vadd.f32 %v2461, %v2469
      %v2492 = vadd.f32 %v2462, %v2468
      %v2493 = vadd.f32 %v2463, %v2469
      %v2494 = vadd.f32 %v2464, %v2468
      %v2495 = vadd.f32 %v2465, %v2469
      %v2496 = vmax.f32 %v2472, 0.0
      %v2497 = vmax.f32 %v2473, 0.0
      %v2498 = vmax.f32 %v2474, 0.0
      %v2499 = vmax.f32 %v2475, 0.0
      %v2500 = vmax.f32 %v2476, 0.0
      %v2501 = vmax.f32 %v2477, 0.0
      %v2502 = vmax.f32 %v2478, 0.0
      %v2503 = vmax.f32 %v2479, 0.0
      %v2504 = vmax.f32 %v2480, 0.0
      %v2505 = vmax.f32 %v2481, 0.0
      %v2506 = vmax.f32 %v2482, 0.0
      %v2507 = vmax.f32 %v2483, 0.0
      %v2508 = vmax.f32 %v2484, 0.0
      %v2509 = vmax.f32 %v2485, 0.0
      %v2510 = vmax.f32 %v2486, 0.0
      %v2511 = vmax.f32 %v2487, 0.0
      %v2512 = vmax.f32 %v2488, 0.0
      %v2513 = vmax.f32 %v2489, 0.0
      %v2514 = vmax.f32 %v2490, 0.0
      %v2515 = vmax.f32 %v2491, 0.0
      %v2516 = vmax.f32 %v2492, 0.0
      %v2517 = vmax.f32 %v2493, 0.0
      %v2518 = vmax.f32 %v2494, 0.0
      %v2519 = vmax.f32 %v2495, 0.0
      %v2520 = vld [vmem:[%s5] sm:$0xff]
      %v2521 = vld [vmem:[%s5 + $0x8] sm:$0xff]
      %v2522 = vld [vmem:[%s5 + $0x10] sm:$0xff]
      %v2523 = vld [vmem:[%s5 + $0x18] sm:$0xff]
      %v2524 = vld [vmem:[%s5 + $0x20] sm:$0xff]
      %v2525 = vld [vmem:[%s5 + $0x28] sm:$0xff]
      %v2526 = vld [vmem:[%s5 + $0x30] sm:$0xff]
      %v2527 = vld [vmem:[%s5 + $0x38] sm:$0xff]
      %v2528 = vld [vmem:[%s5 + $0x40] sm:$0xff]
      %v2529 = vld [vmem:[%s5 + $0x48] sm:$0xff]
      %v2530 = vld [vmem:[%s5 + $0x50] sm:$0xff]
      %v2531 = vld [vmem:[%s5 + $0x58] sm:$0xff]
      %vm2532 = vcmp.gt.f32.partialorder %v2520, 0.0
      %vm2533 = vcmp.gt.f32.partialorder %v2521, 0.0
      %vm2534 = vcmp.gt.f32.partialorder %v2522, 0.0
      %vm2535 = vcmp.gt.f32.partialorder %v2523, 0.0
      %vm2536 = vcmp.gt.f32.partialorder %v2524, 0.0
      %vm2537 = vcmp.gt.f32.partialorder %v2525, 0.0
      %vm2538 = vcmp.gt.f32.partialorder %v2526, 0.0
      %vm2539 = vcmp.gt.f32.partialorder %v2527, 0.0
      %vm2540 = vcmp.gt.f32.partialorder %v2528, 0.0
      %vm2541 = vcmp.gt.f32.partialorder %v2529, 0.0
      %vm2542 = vcmp.gt.f32.partialorder %v2530, 0.0
      %vm2543 = vcmp.gt.f32.partialorder %v2531, 0.0
      %v2544 = vsel %vm2532, 1, 0
      %v2545 = vsel %vm2533, 1, 0
      %v2546 = vsel %vm2534, 1, 0
      %v2547 = vsel %vm2535, 1, 0
      %v2548 = vsel %vm2536, 1, 0
      %v2549 = vsel %vm2537, 1, 0
      %v2550 = vsel %vm2538, 1, 0
      %v2551 = vsel %vm2539, 1, 0
      %v2552 = vsel %vm2540, 1, 0
      %v2553 = vsel %vm2541, 1, 0
      %v2554 = vsel %vm2542, 1, 0
      %v2555 = vsel %vm2543, 1, 0
      %2556 = vset.pattern.permute.xlu0 0
      %2557 = vperm.xlu0 %2556, %v2544
      %v2558 = vpop.permute.xlu0 %2557
      %2559 = vset.pattern.permute.xlu0 0
      %2560 = vperm.xlu0 %2559, %v2545
      %v2561 = vpop.permute.xlu0 %2560
      %2562 = vset.pattern.permute.xlu0 0
      %2563 = vperm.xlu0 %2562, %v2546
      %v2564 = vpop.permute.xlu0 %2563
      %2565 = vset.pattern.permute.xlu0 0
      %2566 = vperm.xlu0 %2565, %v2547
      %v2567 = vpop.permute.xlu0 %2566
      %2568 = vset.pattern.permute.xlu0 0
      %2569 = vperm.xlu0 %2568, %v2548
      %v2570 = vpop.permute.xlu0 %2569
      %2571 = vset.pattern.permute.xlu0 0
      %2572 = vperm.xlu0 %2571, %v2549
      %v2573 = vpop.permute.xlu0 %2572
      %2574 = vset.pattern.permute.xlu0 0
      %2575 = vperm.xlu0 %2574, %v2550
      %v2576 = vpop.permute.xlu0 %2575
      %2577 = vset.pattern.permute.xlu0 0
      %2578 = vperm.xlu0 %2577, %v2551
      %v2579 = vpop.permute.xlu0 %2578
      %2580 = vset.pattern.permute.xlu0 0
      %2581 = vperm.xlu0 %2580, %v2552
      %v2582 = vpop.permute.xlu0 %2581
      %2583 = vset.pattern.permute.xlu0 0
      %2584 = vperm.xlu0 %2583, %v2553
      %v2585 = vpop.permute.xlu0 %2584
      %2586 = vset.pattern.permute.xlu0 0
      %2587 = vperm.xlu0 %2586, %v2554
      %v2588 = vpop.permute.xlu0 %2587
      %2589 = vset.pattern.permute.xlu0 0
      %2590 = vperm.xlu0 %2589, %v2555
      %v2591 = vpop.permute.xlu0 %2590
      %vm2592 = vcmp.eq.s32.totalorder %v2558, 1
      %vm2593 = vcmp.eq.s32.totalorder %v2561, 1
      %vm2594 = vcmp.eq.s32.totalorder %v2564, 1
      %vm2595 = vcmp.eq.s32.totalorder %v2567, 1
      %vm2596 = vcmp.eq.s32.totalorder %v2570, 1
      %vm2597 = vcmp.eq.s32.totalorder %v2573, 1
      %vm2598 = vcmp.eq.s32.totalorder %v2576, 1
      %vm2599 = vcmp.eq.s32.totalorder %v2579, 1
      %vm2600 = vcmp.eq.s32.totalorder %v2582, 1
      %vm2601 = vcmp.eq.s32.totalorder %v2585, 1
      %vm2602 = vcmp.eq.s32.totalorder %v2588, 1
      %vm2603 = vcmp.eq.s32.totalorder %v2591, 1
      %v2604 = vsel %vm2592, %v2496, 0.0
      %v2605 = vsel %vm2592, %v2497, 0.0
      %v2606 = vsel %vm2593, %v2498, 0.0
      %v2607 = vsel %vm2593, %v2499, 0.0
      %v2608 = vsel %vm2594, %v2500, 0.0
      %v2609 = vsel %vm2594, %v2501, 0.0
      %v2610 = vsel %vm2595, %v2502, 0.0
      %v2611 = vsel %vm2595, %v2503, 0.0
      %v2612 = vsel %vm2596, %v2504, 0.0
      %v2613 = vsel %vm2596, %v2505, 0.0
      %v2614 = vsel %vm2597, %v2506, 0.0
      %v2615 = vsel %vm2597, %v2507, 0.0
      %v2616 = vsel %vm2598, %v2508, 0.0
      %v2617 = vsel %vm2598, %v2509, 0.0
      %v2618 = vsel %vm2599, %v2510, 0.0
      %v2619 = vsel %vm2599, %v2511, 0.0
      %v2620 = vsel %vm2600, %v2512, 0.0
      %v2621 = vsel %vm2600, %v2513, 0.0
      %v2622 = vsel %vm2601, %v2514, 0.0
      %v2623 = vsel %vm2601, %v2515, 0.0
      %v2624 = vsel %vm2602, %v2516, 0.0
      %v2625 = vsel %vm2602, %v2517, 0.0
      %v2626 = vsel %vm2603, %v2518, 0.0
      %v2627 = vsel %vm2603, %v2519, 0.0
      %vm2652 = vcmask 1042432
      %v2653 = vrot.slane %v2604, 5
      %v2654 = vrot.slane %v2605, 5
      %v2655 = vrot.slane %v2606, 5
      %v2656 = vsel %vm2652, %v2653, %v2655
      %v2657 = vrot.slane %v2607, 5
      %v2658 = vsel %vm2652, %v2654, %v2657
      %v2659 = vrot.slane %v2608, 5
      %v2660 = vsel %vm2652, %v2655, %v2659
      %v2661 = vrot.slane %v2609, 5
      %v2662 = vsel %vm2652, %v2657, %v2661
      %v2663 = vrot.slane %v2610, 5
      %v2664 = vsel %vm2652, %v2659, %v2663
      %v2665 = vrot.slane %v2611, 5
      %v2666 = vsel %vm2652, %v2661, %v2665
      %v2667 = vrot.slane %v2612, 5
      %v2668 = vsel %vm2652, %v2663, %v2667
      %v2669 = vrot.slane %v2613, 5
      %v2670 = vsel %vm2652, %v2665, %v2669
      %v2671 = vrot.slane %v2614, 5
      %v2672 = vsel %vm2652, %v2667, %v2671
      %v2673 = vrot.slane %v2615, 5
      %v2674 = vsel %vm2652, %v2669, %v2673
      %v2675 = vrot.slane %v2616, 5
      %v2676 = vsel %vm2652, %v2671, %v2675
      %v2677 = vrot.slane %v2617, 5
      %v2678 = vsel %vm2652, %v2673, %v2677
      %v2679 = vrot.slane %v2618, 5
      %v2680 = vsel %vm2652, %v2675, %v2679
      %v2681 = vrot.slane %v2619, 5
      %v2682 = vsel %vm2652, %v2677, %v2681
      %v2683 = vrot.slane %v2620, 5
      %v2684 = vsel %vm2652, %v2679, %v2683
      %v2685 = vrot.slane %v2621, 5
      %v2686 = vsel %vm2652, %v2681, %v2685
      %v2687 = vrot.slane %v2622, 5
      %v2688 = vsel %vm2652, %v2683, %v2687
      %v2689 = vrot.slane %v2623, 5
      %v2690 = vsel %vm2652, %v2685, %v2689
      %v2691 = vrot.slane %v2624, 5
      %v2692 = vsel %vm2652, %v2687, %v2691
      %v2693 = vrot.slane %v2625, 5
      %v2694 = vsel %vm2652, %v2689, %v2693
      %v2695 = vrot.slane %v2626, 5
      %v2696 = vsel %vm2652, %v2691, %v2695
      %v2697 = vrot.slane %v2627, 5
      %v2698 = vsel %vm2652, %v2693, %v2697
      %2725 = vst [vmem:[#allocation2 + $0x20] sm:$0xf8] %v2653
      %2726 = vst [vmem:[#allocation2 + $0x28] sm:$0xf8] %v2654
      %2727 = vst [vmem:[#allocation2 + $0x30] sm:$0xff] %v2656
      %2728 = vst [vmem:[#allocation2 + $0x38] sm:$0xff] %v2658
      %2729 = vst [vmem:[#allocation2 + $0x40] sm:$0xff] %v2660
      %2730 = vst [vmem:[#allocation2 + $0x48] sm:$0xff] %v2662
      %2731 = vst [vmem:[#allocation2 + $0x50] sm:$0xff] %v2664
      %2732 = vst [vmem:[#allocation2 + $0x58] sm:$0xff] %v2666
      %2733 = vst [vmem:[#allocation2 + $0x60] sm:$0xff] %v2668
      %2734 = vst [vmem:[#allocation2 + $0x68] sm:$0xff] %v2670
      %2735 = vst [vmem:[#allocation2 + $0x70] sm:$0xff] %v2672
      %2736 = vst [vmem:[#allocation2 + $0x78] sm:$0xff] %v2674
      %2737 = vst [vmem:[#allocation2 + $0x80] sm:$0xff] %v2676
      %2738 = vst [vmem:[#allocation2 + $0x88] sm:$0xff] %v2678
      %2739 = vst [vmem:[#allocation2 + $0x90] sm:$0xff] %v2680
      %2740 = vst [vmem:[#allocation2 + $0x98] sm:$0xff] %v2682
      %2741 = vst [vmem:[#allocation2 + $0xa0] sm:$0xff] %v2684
      %2742 = vst [vmem:[#allocation2 + $0xa8] sm:$0xff] %v2686
      %2743 = vst [vmem:[#allocation2 + $0xb0] sm:$0xff] %v2688
      %2744 = vst [vmem:[#allocation2 + $0xb8] sm:$0xff] %v2690
      %2745 = vst [vmem:[#allocation2 + $0xc0] sm:$0xff] %v2692
      %2746 = vst [vmem:[#allocation2 + $0xc8] sm:$0xff] %v2694
      %2747 = vst [vmem:[#allocation2 + $0xd0] sm:$0xff] %v2696
      %2748 = vst [vmem:[#allocation2 + $0xd8] sm:$0xff] %v2698
      %2749 = vst [vmem:[#allocation2 + $0xe0] sm:$0x7] %v2695
      %2750 = vst [vmem:[#allocation2 + $0xe8] sm:$0x7] %v2697
      %v2751 = vld [vmem:[%s246 + $0x30] sm:$0xf]
      %v2752 = vld [vmem:[%s246 + $0x34] sm:$0xf]
      %v2753 = vld [vmem:[%s246 + $0x38] sm:$0xf]
      %v2754 = vld [vmem:[%s246 + $0x3c] sm:$0xf]
      %v2755 = vld [vmem:[%s246 + $0x40] sm:$0xf]
      %v2756 = vld [vmem:[%s246 + $0x44] sm:$0xf]
      %v2757 = vld [vmem:[%s246 + $0x48] sm:$0xf]
      %v2758 = vld [vmem:[%s246 + $0x4c] sm:$0xf]
      %v2759 = vld [vmem:[%s246 + $0x50] sm:$0xf]
      %v2760 = vld [vmem:[%s246 + $0x54] sm:$0xf]
      %v2761 = vld [vmem:[%s246 + $0x58] sm:$0xf]
      %v2762 = vld [vmem:[%s246 + $0x5c] sm:$0xf]
      %v2763 = vld [vmem:[%s1] sm:$0xff]
      %v2764 = vld [vmem:[%s1 + $0x8] sm:$0xff]
      %v2765 = vld [vmem:[%s1 + $0x10] sm:$0xff]
      %v2766 = vld [vmem:[%s1 + $0x18] sm:$0xff]
      %v2767 = vld [vmem:[%s1 + $0x20] sm:$0xff]
      %v2768 = vld [vmem:[%s1 + $0x28] sm:$0xff]
      %v2769 = vld [vmem:[%s1 + $0x30] sm:$0xff]
      %v2770 = vld [vmem:[%s1 + $0x38] sm:$0xff]
      %v2771 = vld [vmem:[%s1 + $0x40] sm:$0xff]
      %v2772 = vld [vmem:[%s1 + $0x48] sm:$0xff]
      %v2773 = vld [vmem:[%s1 + $0x50] sm:$0xff]
      %v2774 = vld [vmem:[%s1 + $0x58] sm:$0xff]
      %v2775 = vld [vmem:[%s1 + $0x60] sm:$0xff]
      %v2776 = vld [vmem:[%s1 + $0x68] sm:$0xff]
      %v2777 = vld [vmem:[%s1 + $0x70] sm:$0xff]
      %v2778 = vld [vmem:[%s1 + $0x78] sm:$0xff]
      %v2779 = vld [vmem:[%s246 + $0x60] sm:$0x1]
      %v2780 = vld [vmem:[%s294] sm:$0xff]
      %v2781 = vld [vmem:[%s294 + $0x8] sm:$0xff]
      %v2782 = vld [vmem:[%s294 + $0x10] sm:$0xff]
      %v2783 = vld [vmem:[%s294 + $0x18] sm:$0xff]
      %v2784 = vld [vmem:[%s294 + $0x20] sm:$0xff]
      %v2785 = vld [vmem:[%s294 + $0x28] sm:$0xff]
      %v2786 = vld [vmem:[%s294 + $0x30] sm:$0xff]
      %v2787 = vld [vmem:[%s294 + $0x38] sm:$0xff]
      %v2788 = vld [vmem:[%s294 + $0x40] sm:$0xff]
      %v2789 = vld [vmem:[%s294 + $0x48] sm:$0xff]
      %v2790 = vld [vmem:[%s294 + $0x50] sm:$0xff]
      %v2791 = vld [vmem:[%s294 + $0x58] sm:$0xff]
      %v2792 = vld [vmem:[%s294 + $0x60] sm:$0xff]
      %v2793 = vld [vmem:[%s294 + $0x68] sm:$0xff]
      %v2794 = vld [vmem:[%s294 + $0x70] sm:$0xff]
      %v2795 = vld [vmem:[%s294 + $0x78] sm:$0xff]
      %v2809 = vunpack.c.l.b16 %v2751
      %v2810 = vunpack.c.l.b16 %v2752
      %v2811 = vunpack.c.l.b16 %v2753
      %v2812 = vunpack.c.l.b16 %v2754
      %v2813 = vunpack.c.l.b16 %v2755
      %v2814 = vunpack.c.l.b16 %v2756
      %v2815 = vunpack.c.l.b16 %v2757
      %v2816 = vunpack.c.l.b16 %v2758
      %v2817 = vunpack.c.l.b16 %v2759
      %v2818 = vunpack.c.l.b16 %v2760
      %v2819 = vunpack.c.l.b16 %v2761
      %v2820 = vunpack.c.l.b16 %v2762
      %v2821 = vunpack.c.l.b16 %v2779
      %v2822 = vpack.c.b16 %v2810, %v2809
      %v2823 = vpack.c.b16 %v2812, %v2811
      %v2824 = vpack.c.b16 %v2814, %v2813
      %v2825 = vpack.c.b16 %v2816, %v2815
      %v2826 = vpack.c.b16 %v2818, %v2817
      %v2827 = vpack.c.b16 %v2820, %v2819
      %v2828 = vpack.c.b16 %v2821, %v2821
      %v2830 = vshrl.u32 %v2822, 16
      %v2832 = vshll.u32 %v2822, 16
      %v2834 = vrot.slane %v2832, 1
      %v2835 = vor.u32 %v2830, %v2834
      %v2837 = vshll.u32 %v2823, 16
      %v2839 = vrot.slane %v2837, 1
      %v2840 = vsel %vm344, %v2835, %v2839
      %v2841 = vshrl.u32 %v2823, 16
      %v2843 = vor.u32 %v2841, %v2839
      %v2845 = vshll.u32 %v2824, 16
      %v2847 = vrot.slane %v2845, 1
      %v2848 = vsel %vm344, %v2843, %v2847
      %v2849 = vshrl.u32 %v2824, 16
      %v2851 = vor.u32 %v2849, %v2847
      %v2853 = vshll.u32 %v2825, 16
      %v2855 = vrot.slane %v2853, 1
      %v2856 = vsel %vm344, %v2851, %v2855
      %v2857 = vshrl.u32 %v2825, 16
      %v2859 = vor.u32 %v2857, %v2855
      %v2861 = vshll.u32 %v2826, 16
      %v2863 = vrot.slane %v2861, 1
      %v2864 = vsel %vm344, %v2859, %v2863
      %v2865 = vshrl.u32 %v2826, 16
      %v2867 = vor.u32 %v2865, %v2863
      %v2869 = vshll.u32 %v2827, 16
      %v2871 = vrot.slane %v2869, 1
      %v2872 = vsel %vm344, %v2867, %v2871
      %v2873 = vshrl.u32 %v2827, 16
      %v2875 = vor.u32 %v2873, %v2871
      %v2877 = vshll.u32 %v2828, 16
      %v2879 = vrot.slane %v2877, 1
      %v2880 = vsel %vm344, %v2875, %v2879
      %v2903 = vunpack.c.l.b16 %v2780
      %v2904 = vunpack.c.h.b16 %v2780
      %v2905 = vunpack.c.l.b16 %v2781
      %v2906 = vunpack.c.h.b16 %v2781
      %v2907 = vunpack.c.l.b16 %v2782
      %v2908 = vunpack.c.h.b16 %v2782
      %v2909 = vunpack.c.l.b16 %v2783
      %v2910 = vunpack.c.h.b16 %v2783
      %v2911 = vunpack.c.l.b16 %v2784
      %v2912 = vunpack.c.h.b16 %v2784
      %v2913 = vunpack.c.l.b16 %v2785
      %v2914 = vunpack.c.h.b16 %v2785
      %v2915 = vunpack.c.l.b16 %v2786
      %v2916 = vunpack.c.h.b16 %v2786
      %v2917 = vunpack.c.l.b16 %v2787
      %v2918 = vunpack.c.h.b16 %v2787
      %v2919 = vunpack.c.l.b16 %v2788
      %v2920 = vunpack.c.h.b16 %v2788
      %v2921 = vunpack.c.l.b16 %v2789
      %v2922 = vunpack.c.h.b16 %v2789
      %v2923 = vunpack.c.l.b16 %v2790
      %v2924 = vunpack.c.h.b16 %v2790
      %v2925 = vunpack.c.l.b16 %v2791
      %v2926 = vunpack.c.h.b16 %v2791
      %v2927 = vunpack.c.l.b16 %v2792
      %v2928 = vunpack.c.h.b16 %v2792
      %v2929 = vunpack.c.l.b16 %v2793
      %v2930 = vunpack.c.h.b16 %v2793
      %v2931 = vunpack.c.l.b16 %v2794
      %v2932 = vunpack.c.h.b16 %v2794
      %v2933 = vunpack.c.l.b16 %v2795
      %v2934 = vunpack.c.h.b16 %v2795
      %v2935 = vpack.c.b16 %v2905, %v2903
      %v2936 = vpack.c.b16 %v2906, %v2904
      %v2937 = vpack.c.b16 %v2909, %v2907
      %v2938 = vpack.c.b16 %v2910, %v2908
      %v2939 = vpack.c.b16 %v2913, %v2911
      %v2940 = vpack.c.b16 %v2914, %v2912
      %v2941 = vpack.c.b16 %v2917, %v2915
      %v2942 = vpack.c.b16 %v2918, %v2916
      %v2943 = vpack.c.b16 %v2921, %v2919
      %v2944 = vpack.c.b16 %v2922, %v2920
      %v2945 = vpack.c.b16 %v2925, %v2923
      %v2946 = vpack.c.b16 %v2926, %v2924
      %v2947 = vpack.c.b16 %v2929, %v2927
      %v2948 = vpack.c.b16 %v2930, %v2928
      %v2949 = vpack.c.b16 %v2933, %v2931
      %v2950 = vpack.c.b16 %v2934, %v2932
      %2967 = vmatpush.bf16.msra.mxu0 %v2949
      %2968 = vmatpush.bf16.msra.mxu0 %v2947
      %2969 = vmatpush.bf16.msra.mxu0 %v2945
      %2970 = vmatpush.bf16.msra.mxu0 %v2943
      %2971 = vmatpush.bf16.msra.mxu0 %v2941
      %2972 = vmatpush.bf16.msra.mxu0 %v2939
      %2973 = vmatpush.bf16.msra.mxu0 %v2937
      %2974 = vmatpush.bf16.msra.mxu0 %v2935
      %2975 = vmatmul.bf16.gmra.mxu0 %v2840
      %v2976 = vpop.f32.mrf.mxu0
      %v2977 = vadd.f32 0.0, %v2976
      %v2978 = vpop.f32.mrf.mxu0
      %v2979 = vadd.f32 0.0, %v2978
      %2980 = vmatmul.bf16.gmra.mxu0 %v2848
      %v2981 = vpop.f32.mrf.mxu0
      %v2982 = vadd.f32 0.0, %v2981
      %v2983 = vpop.f32.mrf.mxu0
      %v2984 = vadd.f32 0.0, %v2983
      %2985 = vmatmul.bf16.gmra.mxu0 %v2856
      %v2986 = vpop.f32.mrf.mxu0
      %v2987 = vadd.f32 0.0, %v2986
      %v2988 = vpop.f32.mrf.mxu0
      %v2989 = vadd.f32 0.0, %v2988
      %2990 = vmatmul.bf16.gmra.mxu0 %v2864
      %v2991 = vpop.f32.mrf.mxu0
      %v2992 = vadd.f32 0.0, %v2991
      %v2993 = vpop.f32.mrf.mxu0
      %v2994 = vadd.f32 0.0, %v2993
      %2995 = vmatmul.bf16.gmra.mxu0 %v2872
      %v2996 = vpop.f32.mrf.mxu0
      %v2997 = vadd.f32 0.0, %v2996
      %v2998 = vpop.f32.mrf.mxu0
      %v2999 = vadd.f32 0.0, %v2998
      %3000 = vmatmul.bf16.gmra.mxu0 %v2880
      %v3001 = vpop.f32.mrf.mxu0
      %v3002 = vadd.f32 0.0, %v3001
      %v3003 = vpop.f32.mrf.mxu0
      %v3004 = vadd.f32 0.0, %v3003
      %3005 = vdwg.mxu0
      %3006 = vmatpush.bf16.msra.mxu0 %v2950
      %3007 = vmatpush.bf16.msra.mxu0 %v2948
      %3008 = vmatpush.bf16.msra.mxu0 %v2946
      %3009 = vmatpush.bf16.msra.mxu0 %v2944
      %3010 = vmatpush.bf16.msra.mxu0 %v2942
      %3011 = vmatpush.bf16.msra.mxu0 %v2940
      %3012 = vmatpush.bf16.msra.mxu0 %v2938
      %3013 = vmatpush.bf16.msra.mxu0 %v2936
      %3014 = vmatmul.bf16.gmra.mxu0 %v2840
      %v3015 = vpop.f32.mrf.mxu0
      %v3016 = vadd.f32 0.0, %v3015
      %v3017 = vpop.f32.mrf.mxu0
      %v3018 = vadd.f32 0.0, %v3017
      %3019 = vmatmul.bf16.gmra.mxu0 %v2848
      %v3020 = vpop.f32.mrf.mxu0
      %v3021 = vadd.f32 0.0, %v3020
      %v3022 = vpop.f32.mrf.mxu0
      %v3023 = vadd.f32 0.0, %v3022
      %3024 = vmatmul.bf16.gmra.mxu0 %v2856
      %v3025 = vpop.f32.mrf.mxu0
      %v3026 = vadd.f32 0.0, %v3025
      %v3027 = vpop.f32.mrf.mxu0
      %v3028 = vadd.f32 0.0, %v3027
      %3029 = vmatmul.bf16.gmra.mxu0 %v2864
      %v3030 = vpop.f32.mrf.mxu0
      %v3031 = vadd.f32 0.0, %v3030
      %v3032 = vpop.f32.mrf.mxu0
      %v3033 = vadd.f32 0.0, %v3032
      %3034 = vmatmul.bf16.gmra.mxu0 %v2872
      %v3035 = vpop.f32.mrf.mxu0
      %v3036 = vadd.f32 0.0, %v3035
      %v3037 = vpop.f32.mrf.mxu0
      %v3038 = vadd.f32 0.0, %v3037
      %3039 = vmatmul.bf16.gmra.mxu0 %v2880
      %v3040 = vpop.f32.mrf.mxu0
      %v3041 = vadd.f32 0.0, %v3040
      %v3042 = vpop.f32.mrf.mxu0
      %v3043 = vadd.f32 0.0, %v3042
      %3044 = vdwg.mxu0
      %v3067 = vunpack.c.l.b16 %v2763
      %v3068 = vunpack.c.h.b16 %v2763
      %v3069 = vunpack.c.l.b16 %v2764
      %v3070 = vunpack.c.h.b16 %v2764
      %v3071 = vunpack.c.l.b16 %v2765
      %v3072 = vunpack.c.h.b16 %v2765
      %v3073 = vunpack.c.l.b16 %v2766
      %v3074 = vunpack.c.h.b16 %v2766
      %v3075 = vunpack.c.l.b16 %v2767
      %v3076 = vunpack.c.h.b16 %v2767
      %v3077 = vunpack.c.l.b16 %v2768
      %v3078 = vunpack.c.h.b16 %v2768
      %v3079 = vunpack.c.l.b16 %v2769
      %v3080 = vunpack.c.h.b16 %v2769
      %v3081 = vunpack.c.l.b16 %v2770
      %v3082 = vunpack.c.h.b16 %v2770
      %v3083 = vunpack.c.l.b16 %v2771
      %v3084 = vunpack.c.h.b16 %v2771
      %v3085 = vunpack.c.l.b16 %v2772
      %v3086 = vunpack.c.h.b16 %v2772
      %v3087 = vunpack.c.l.b16 %v2773
      %v3088 = vunpack.c.h.b16 %v2773
      %v3089 = vunpack.c.l.b16 %v2774
      %v3090 = vunpack.c.h.b16 %v2774
      %v3091 = vunpack.c.l.b16 %v2775
      %v3092 = vunpack.c.h.b16 %v2775
      %v3093 = vunpack.c.l.b16 %v2776
      %v3094 = vunpack.c.h.b16 %v2776
      %v3095 = vunpack.c.l.b16 %v2777
      %v3096 = vunpack.c.h.b16 %v2777
      %v3097 = vunpack.c.l.b16 %v2778
      %v3098 = vunpack.c.h.b16 %v2778
      %v3099 = vpack.c.b16 %v3069, %v3067
      %v3100 = vpack.c.b16 %v3070, %v3068
      %v3101 = vpack.c.b16 %v3073, %v3071
      %v3102 = vpack.c.b16 %v3074, %v3072
      %v3103 = vpack.c.b16 %v3077, %v3075
      %v3104 = vpack.c.b16 %v3078, %v3076
      %v3105 = vpack.c.b16 %v3081, %v3079
      %v3106 = vpack.c.b16 %v3082, %v3080
      %v3107 = vpack.c.b16 %v3085, %v3083
      %v3108 = vpack.c.b16 %v3086, %v3084
      %v3109 = vpack.c.b16 %v3089, %v3087
      %v3110 = vpack.c.b16 %v3090, %v3088
      %v3111 = vpack.c.b16 %v3093, %v3091
      %v3112 = vpack.c.b16 %v3094, %v3092
      %v3113 = vpack.c.b16 %v3097, %v3095
      %v3114 = vpack.c.b16 %v3098, %v3096
      %3131 = vmatpush.bf16.msra.mxu0 %v3113
      %3132 = vmatpush.bf16.msra.mxu0 %v3111
      %3133 = vmatpush.bf16.msra.mxu0 %v3109
      %3134 = vmatpush.bf16.msra.mxu0 %v3107
      %3135 = vmatpush.bf16.msra.mxu0 %v3105
      %3136 = vmatpush.bf16.msra.mxu0 %v3103
      %3137 = vmatpush.bf16.msra.mxu0 %v3101
      %3138 = vmatpush.bf16.msra.mxu0 %v3099
      %3139 = vmatmul.bf16.gmra.mxu0 %v2822
      %v3140 = vpop.f32.mrf.mxu0
      %v3141 = vadd.f32 %v2977, %v3140
      %v3142 = vpop.f32.mrf.mxu0
      %v3143 = vadd.f32 %v2979, %v3142
      %3144 = vmatmul.bf16.gmra.mxu0 %v2823
      %v3145 = vpop.f32.mrf.mxu0
      %v3146 = vadd.f32 %v2982, %v3145
      %v3147 = vpop.f32.mrf.mxu0
      %v3148 = vadd.f32 %v2984, %v3147
      %3149 = vmatmul.bf16.gmra.mxu0 %v2824
      %v3150 = vpop.f32.mrf.mxu0
      %v3151 = vadd.f32 %v2987, %v3150
      %v3152 = vpop.f32.mrf.mxu0
      %v3153 = vadd.f32 %v2989, %v3152
      %3154 = vmatmul.bf16.gmra.mxu0 %v2825
      %v3155 = vpop.f32.mrf.mxu0
      %v3156 = vadd.f32 %v2992, %v3155
      %v3157 = vpop.f32.mrf.mxu0
      %v3158 = vadd.f32 %v2994, %v3157
      %3159 = vmatmul.bf16.gmra.mxu0 %v2826
      %v3160 = vpop.f32.mrf.mxu0
      %v3161 = vadd.f32 %v2997, %v3160
      %v3162 = vpop.f32.mrf.mxu0
      %v3163 = vadd.f32 %v2999, %v3162
      %3164 = vmatmul.bf16.gmra.mxu0 %v2827
      %v3165 = vpop.f32.mrf.mxu0
      %v3166 = vadd.f32 %v3002, %v3165
      %v3167 = vpop.f32.mrf.mxu0
      %v3168 = vadd.f32 %v3004, %v3167
      %3169 = vdwg.mxu0
      %3170 = vmatpush.bf16.msra.mxu0 %v3114
      %3171 = vmatpush.bf16.msra.mxu0 %v3112
      %3172 = vmatpush.bf16.msra.mxu0 %v3110
      %3173 = vmatpush.bf16.msra.mxu0 %v3108
      %3174 = vmatpush.bf16.msra.mxu0 %v3106
      %3175 = vmatpush.bf16.msra.mxu0 %v3104
      %3176 = vmatpush.bf16.msra.mxu0 %v3102
      %3177 = vmatpush.bf16.msra.mxu0 %v3100
      %3178 = vmatmul.bf16.gmra.mxu0 %v2822
      %v3179 = vpop.f32.mrf.mxu0
      %v3180 = vadd.f32 %v3016, %v3179
      %v3181 = vpop.f32.mrf.mxu0
      %v3182 = vadd.f32 %v3018, %v3181
      %3183 = vmatmul.bf16.gmra.mxu0 %v2823
      %v3184 = vpop.f32.mrf.mxu0
      %v3185 = vadd.f32 %v3021, %v3184
      %v3186 = vpop.f32.mrf.mxu0
      %v3187 = vadd.f32 %v3023, %v3186
      %3188 = vmatmul.bf16.gmra.mxu0 %v2824
      %v3189 = vpop.f32.mrf.mxu0
      %v3190 = vadd.f32 %v3026, %v3189
      %v3191 = vpop.f32.mrf.mxu0
      %v3192 = vadd.f32 %v3028, %v3191
      %3193 = vmatmul.bf16.gmra.mxu0 %v2825
      %v3194 = vpop.f32.mrf.mxu0
      %v3195 = vadd.f32 %v3031, %v3194
      %v3196 = vpop.f32.mrf.mxu0
      %v3197 = vadd.f32 %v3033, %v3196
      %3198 = vmatmul.bf16.gmra.mxu0 %v2826
      %v3199 = vpop.f32.mrf.mxu0
      %v3200 = vadd.f32 %v3036, %v3199
      %v3201 = vpop.f32.mrf.mxu0
      %v3202 = vadd.f32 %v3038, %v3201
      %3203 = vmatmul.bf16.gmra.mxu0 %v2827
      %v3204 = vpop.f32.mrf.mxu0
      %v3205 = vadd.f32 %v3041, %v3204
      %v3206 = vpop.f32.mrf.mxu0
      %v3207 = vadd.f32 %v3043, %v3206
      %3208 = vdwg.mxu0
      %v3209 = vld [vmem:[%s246 + $0x30] sm:$0xe]
      %v3210 = vld [vmem:[%s726] sm:$0xff]
      %v3211 = vld [vmem:[%s726 + $0x8] sm:$0xff]
      %v3212 = vld [vmem:[%s726 + $0x10] sm:$0xff]
      %v3213 = vld [vmem:[%s726 + $0x18] sm:$0xff]
      %v3214 = vld [vmem:[%s726 + $0x20] sm:$0xff]
      %v3215 = vld [vmem:[%s726 + $0x28] sm:$0xff]
      %v3216 = vld [vmem:[%s726 + $0x30] sm:$0xff]
      %v3217 = vld [vmem:[%s726 + $0x38] sm:$0xff]
      %v3218 = vld [vmem:[%s726 + $0x40] sm:$0xff]
      %v3219 = vld [vmem:[%s726 + $0x48] sm:$0xff]
      %v3220 = vld [vmem:[%s726 + $0x50] sm:$0xff]
      %v3221 = vld [vmem:[%s726 + $0x58] sm:$0xff]
      %v3222 = vld [vmem:[%s726 + $0x60] sm:$0xff]
      %v3223 = vld [vmem:[%s726 + $0x68] sm:$0xff]
      %v3224 = vld [vmem:[%s726 + $0x70] sm:$0xff]
      %v3225 = vld [vmem:[%s726 + $0x78] sm:$0xff]
      %v3227 = vunpack.c.l.b16 %v3209
      %v3228 = vpack.c.b16 %v2810, %v3227
      %v3229 = vrot.slane %v3228, 1
      %v3230 = vrot.slane %v2823, 1
      %v3231 = vsel %vm746, %v3229, %v3230
      %v3232 = vrot.slane %v2824, 1
      %v3233 = vsel %vm746, %v3230, %v3232
      %v3234 = vrot.slane %v2825, 1
      %v3235 = vsel %vm746, %v3232, %v3234
      %v3236 = vrot.slane %v2826, 1
      %v3237 = vsel %vm746, %v3234, %v3236
      %v3238 = vrot.slane %v2827, 1
      %v3239 = vsel %vm746, %v3236, %v3238
      %v3240 = vrot.slane %v2828, 1
      %v3241 = vsel %vm746, %v3238, %v3240
      %v3264 = vunpack.c.l.b16 %v3210
      %v3265 = vunpack.c.h.b16 %v3210
      %v3266 = vunpack.c.l.b16 %v3211
      %v3267 = vunpack.c.h.b16 %v3211
      %v3268 = vunpack.c.l.b16 %v3212
      %v3269 = vunpack.c.h.b16 %v3212
      %v3270 = vunpack.c.l.b16 %v3213
      %v3271 = vunpack.c.h.b16 %v3213
      %v3272 = vunpack.c.l.b16 %v3214
      %v3273 = vunpack.c.h.b16 %v3214
      %v3274 = vunpack.c.l.b16 %v3215
      %v3275 = vunpack.c.h.b16 %v3215
      %v3276 = vunpack.c.l.b16 %v3216
      %v3277 = vunpack.c.h.b16 %v3216
      %v3278 = vunpack.c.l.b16 %v3217
      %v3279 = vunpack.c.h.b16 %v3217
      %v3280 = vunpack.c.l.b16 %v3218
      %v3281 = vunpack.c.h.b16 %v3218
      %v3282 = vunpack.c.l.b16 %v3219
      %v3283 = vunpack.c.h.b16 %v3219
      %v3284 = vunpack.c.l.b16 %v3220
      %v3285 = vunpack.c.h.b16 %v3220
      %v3286 = vunpack.c.l.b16 %v3221
      %v3287 = vunpack.c.h.b16 %v3221
      %v3288 = vunpack.c.l.b16 %v3222
      %v3289 = vunpack.c.h.b16 %v3222
      %v3290 = vunpack.c.l.b16 %v3223
      %v3291 = vunpack.c.h.b16 %v3223
      %v3292 = vunpack.c.l.b16 %v3224
      %v3293 = vunpack.c.h.b16 %v3224
      %v3294 = vunpack.c.l.b16 %v3225
      %v3295 = vunpack.c.h.b16 %v3225
      %v3296 = vpack.c.b16 %v3266, %v3264
      %v3297 = vpack.c.b16 %v3267, %v3265
      %v3298 = vpack.c.b16 %v3270, %v3268
      %v3299 = vpack.c.b16 %v3271, %v3269
      %v3300 = vpack.c.b16 %v3274, %v3272
      %v3301 = vpack.c.b16 %v3275, %v3273
      %v3302 = vpack.c.b16 %v3278, %v3276
      %v3303 = vpack.c.b16 %v3279, %v3277
      %v3304 = vpack.c.b16 %v3282, %v3280
      %v3305 = vpack.c.b16 %v3283, %v3281
      %v3306 = vpack.c.b16 %v3286, %v3284
      %v3307 = vpack.c.b16 %v3287, %v3285
      %v3308 = vpack.c.b16 %v3290, %v3288
      %v3309 = vpack.c.b16 %v3291, %v3289
      %v3310 = vpack.c.b16 %v3294, %v3292
      %v3311 = vpack.c.b16 %v3295, %v3293
      %3328 = vmatpush.bf16.msra.mxu0 %v3310
      %3329 = vmatpush.bf16.msra.mxu0 %v3308
      %3330 = vmatpush.bf16.msra.mxu0 %v3306
      %3331 = vmatpush.bf16.msra.mxu0 %v3304
      %3332 = vmatpush.bf16.msra.mxu0 %v3302
      %3333 = vmatpush.bf16.msra.mxu0 %v3300
      %3334 = vmatpush.bf16.msra.mxu0 %v3298
      %3335 = vmatpush.bf16.msra.mxu0 %v3296
      %3336 = vmatmul.bf16.gmra.mxu0 %v3231
      %v3337 = vpop.f32.mrf.mxu0
      %v3338 = vadd.f32 0.0, %v3337
      %v3339 = vpop.f32.mrf.mxu0
      %v3340 = vadd.f32 0.0, %v3339
      %3341 = vmatmul.bf16.gmra.mxu0 %v3233
      %v3342 = vpop.f32.mrf.mxu0
      %v3343 = vadd.f32 0.0, %v3342
      %v3344 = vpop.f32.mrf.mxu0
      %v3345 = vadd.f32 0.0, %v3344
      %3346 = vmatmul.bf16.gmra.mxu0 %v3235
      %v3347 = vpop.f32.mrf.mxu0
      %v3348 = vadd.f32 0.0, %v3347
      %v3349 = vpop.f32.mrf.mxu0
      %v3350 = vadd.f32 0.0, %v3349
      %3351 = vmatmul.bf16.gmra.mxu0 %v3237
      %v3352 = vpop.f32.mrf.mxu0
      %v3353 = vadd.f32 0.0, %v3352
      %v3354 = vpop.f32.mrf.mxu0
      %v3355 = vadd.f32 0.0, %v3354
      %3356 = vmatmul.bf16.gmra.mxu0 %v3239
      %v3357 = vpop.f32.mrf.mxu0
      %v3358 = vadd.f32 0.0, %v3357
      %v3359 = vpop.f32.mrf.mxu0
      %v3360 = vadd.f32 0.0, %v3359
      %3361 = vmatmul.bf16.gmra.mxu0 %v3241
      %v3362 = vpop.f32.mrf.mxu0
      %v3363 = vadd.f32 0.0, %v3362
      %v3364 = vpop.f32.mrf.mxu0
      %v3365 = vadd.f32 0.0, %v3364
      %3366 = vdwg.mxu0
      %3367 = vmatpush.bf16.msra.mxu0 %v3311
      %3368 = vmatpush.bf16.msra.mxu0 %v3309
      %3369 = vmatpush.bf16.msra.mxu0 %v3307
      %3370 = vmatpush.bf16.msra.mxu0 %v3305
      %3371 = vmatpush.bf16.msra.mxu0 %v3303
      %3372 = vmatpush.bf16.msra.mxu0 %v3301
      %3373 = vmatpush.bf16.msra.mxu0 %v3299
      %3374 = vmatpush.bf16.msra.mxu0 %v3297
      %3375 = vmatmul.bf16.gmra.mxu0 %v3231
      %v3376 = vpop.f32.mrf.mxu0
      %v3377 = vadd.f32 0.0, %v3376
      %v3378 = vpop.f32.mrf.mxu0
      %v3379 = vadd.f32 0.0, %v3378
      %3380 = vmatmul.bf16.gmra.mxu0 %v3233
      %v3381 = vpop.f32.mrf.mxu0
      %v3382 = vadd.f32 0.0, %v3381
      %v3383 = vpop.f32.mrf.mxu0
      %v3384 = vadd.f32 0.0, %v3383
      %3385 = vmatmul.bf16.gmra.mxu0 %v3235
      %v3386 = vpop.f32.mrf.mxu0
      %v3387 = vadd.f32 0.0, %v3386
      %v3388 = vpop.f32.mrf.mxu0
      %v3389 = vadd.f32 0.0, %v3388
      %3390 = vmatmul.bf16.gmra.mxu0 %v3237
      %v3391 = vpop.f32.mrf.mxu0
      %v3392 = vadd.f32 0.0, %v3391
      %v3393 = vpop.f32.mrf.mxu0
      %v3394 = vadd.f32 0.0, %v3393
      %3395 = vmatmul.bf16.gmra.mxu0 %v3239
      %v3396 = vpop.f32.mrf.mxu0
      %v3397 = vadd.f32 0.0, %v3396
      %v3398 = vpop.f32.mrf.mxu0
      %v3399 = vadd.f32 0.0, %v3398
      %3400 = vmatmul.bf16.gmra.mxu0 %v3241
      %v3401 = vpop.f32.mrf.mxu0
      %v3402 = vadd.f32 0.0, %v3401
      %v3403 = vpop.f32.mrf.mxu0
      %v3404 = vadd.f32 0.0, %v3403
      %3405 = vdwg.mxu0
      %v3406 = vadd.f32 %v3141, %v3338
      %v3407 = vadd.f32 %v3180, %v3377
      %v3408 = vadd.f32 %v3143, %v3340
      %v3409 = vadd.f32 %v3182, %v3379
      %v3410 = vadd.f32 %v3146, %v3343
      %v3411 = vadd.f32 %v3185, %v3382
      %v3412 = vadd.f32 %v3148, %v3345
      %v3413 = vadd.f32 %v3187, %v3384
      %v3414 = vadd.f32 %v3151, %v3348
      %v3415 = vadd.f32 %v3190, %v3387
      %v3416 = vadd.f32 %v3153, %v3350
      %v3417 = vadd.f32 %v3192, %v3389
      %v3418 = vadd.f32 %v3156, %v3353
      %v3419 = vadd.f32 %v3195, %v3392
      %v3420 = vadd.f32 %v3158, %v3355
      %v3421 = vadd.f32 %v3197, %v3394
      %v3422 = vadd.f32 %v3161, %v3358
      %v3423 = vadd.f32 %v3200, %v3397
      %v3424 = vadd.f32 %v3163, %v3360
      %v3425 = vadd.f32 %v3202, %v3399
      %v3426 = vadd.f32 %v3166, %v3363
      %v3427 = vadd.f32 %v3205, %v3402
      %v3428 = vadd.f32 %v3168, %v3365
      %v3429 = vadd.f32 %v3207, %v3404
      %v3430 = vld [vmem:[%s246 + $0x38] sm:$0xe]
      %v3431 = vld [vmem:[%s246 + $0x3c] sm:$0xf]
      %v3432 = vld [vmem:[%s246 + $0x40] sm:$0xf]
      %v3433 = vld [vmem:[%s246 + $0x44] sm:$0xf]
      %v3434 = vld [vmem:[%s246 + $0x48] sm:$0xf]
      %v3435 = vld [vmem:[%s246 + $0x4c] sm:$0xf]
      %v3436 = vld [vmem:[%s246 + $0x50] sm:$0xf]
      %v3437 = vld [vmem:[%s246 + $0x54] sm:$0xf]
      %v3438 = vld [vmem:[%s246 + $0x58] sm:$0xf]
      %v3439 = vld [vmem:[%s246 + $0x5c] sm:$0xf]
      %v3440 = vld [vmem:[%s246 + $0x60] sm:$0xf]
      %v3441 = vld [vmem:[%s246 + $0x64] sm:$0xf]
      %v3442 = vld [vmem:[%s246 + $0x68] sm:$0x1]
      %v3443 = vld [vmem:[%s961] sm:$0xff]
      %v3444 = vld [vmem:[%s961 + $0x8] sm:$0xff]
      %v3445 = vld [vmem:[%s961 + $0x10] sm:$0xff]
      %v3446 = vld [vmem:[%s961 + $0x18] sm:$0xff]
      %v3447 = vld [vmem:[%s961 + $0x20] sm:$0xff]
      %v3448 = vld [vmem:[%s961 + $0x28] sm:$0xff]
      %v3449 = vld [vmem:[%s961 + $0x30] sm:$0xff]
      %v3450 = vld [vmem:[%s961 + $0x38] sm:$0xff]
      %v3451 = vld [vmem:[%s961 + $0x40] sm:$0xff]
      %v3452 = vld [vmem:[%s961 + $0x48] sm:$0xff]
      %v3453 = vld [vmem:[%s961 + $0x50] sm:$0xff]
      %v3454 = vld [vmem:[%s961 + $0x58] sm:$0xff]
      %v3455 = vld [vmem:[%s961 + $0x60] sm:$0xff]
      %v3456 = vld [vmem:[%s961 + $0x68] sm:$0xff]
      %v3457 = vld [vmem:[%s961 + $0x70] sm:$0xff]
      %v3458 = vld [vmem:[%s961 + $0x78] sm:$0xff]
      %v3472 = vunpack.c.l.b16 %v3430
      %v3473 = vunpack.c.l.b16 %v3431
      %v3474 = vunpack.c.l.b16 %v3432
      %v3475 = vunpack.c.l.b16 %v3433
      %v3476 = vunpack.c.l.b16 %v3434
      %v3477 = vunpack.c.l.b16 %v3435
      %v3478 = vunpack.c.l.b16 %v3436
      %v3479 = vunpack.c.l.b16 %v3437
      %v3480 = vunpack.c.l.b16 %v3438
      %v3481 = vunpack.c.l.b16 %v3439
      %v3482 = vunpack.c.l.b16 %v3440
      %v3483 = vunpack.c.l.b16 %v3441
      %v3484 = vunpack.c.l.b16 %v3442
      %v3485 = vpack.c.b16 %v3473, %v3472
      %v3486 = vpack.c.b16 %v3475, %v3474
      %v3487 = vpack.c.b16 %v3477, %v3476
      %v3488 = vpack.c.b16 %v3479, %v3478
      %v3489 = vpack.c.b16 %v3481, %v3480
      %v3490 = vpack.c.b16 %v3483, %v3482
      %v3491 = vpack.c.b16 %v3484, %v3484
      %v3492 = vrot.slane %v3485, 1
      %v3493 = vrot.slane %v3486, 1
      %v3494 = vsel %vm746, %v3492, %v3493
      %v3495 = vrot.slane %v3487, 1
      %v3496 = vsel %vm746, %v3493, %v3495
      %v3497 = vrot.slane %v3488, 1
      %v3498 = vsel %vm746, %v3495, %v3497
      %v3499 = vrot.slane %v3489, 1
      %v3500 = vsel %vm746, %v3497, %v3499
      %v3501 = vrot.slane %v3490, 1
      %v3502 = vsel %vm746, %v3499, %v3501
      %v3503 = vrot.slane %v3491, 1
      %v3504 = vsel %vm746, %v3501, %v3503
      %v3527 = vunpack.c.l.b16 %v3443
      %v3528 = vunpack.c.h.b16 %v3443
      %v3529 = vunpack.c.l.b16 %v3444
      %v3530 = vunpack.c.h.b16 %v3444
      %v3531 = vunpack.c.l.b16 %v3445
      %v3532 = vunpack.c.h.b16 %v3445
      %v3533 = vunpack.c.l.b16 %v3446
      %v3534 = vunpack.c.h.b16 %v3446
      %v3535 = vunpack.c.l.b16 %v3447
      %v3536 = vunpack.c.h.b16 %v3447
      %v3537 = vunpack.c.l.b16 %v3448
      %v3538 = vunpack.c.h.b16 %v3448
      %v3539 = vunpack.c.l.b16 %v3449
      %v3540 = vunpack.c.h.b16 %v3449
      %v3541 = vunpack.c.l.b16 %v3450
      %v3542 = vunpack.c.h.b16 %v3450
      %v3543 = vunpack.c.l.b16 %v3451
      %v3544 = vunpack.c.h.b16 %v3451
      %v3545 = vunpack.c.l.b16 %v3452
      %v3546 = vunpack.c.h.b16 %v3452
      %v3547 = vunpack.c.l.b16 %v3453
      %v3548 = vunpack.c.h.b16 %v3453
      %v3549 = vunpack.c.l.b16 %v3454
      %v3550 = vunpack.c.h.b16 %v3454
      %v3551 = vunpack.c.l.b16 %v3455
      %v3552 = vunpack.c.h.b16 %v3455
      %v3553 = vunpack.c.l.b16 %v3456
      %v3554 = vunpack.c.h.b16 %v3456
      %v3555 = vunpack.c.l.b16 %v3457
      %v3556 = vunpack.c.h.b16 %v3457
      %v3557 = vunpack.c.l.b16 %v3458
      %v3558 = vunpack.c.h.b16 %v3458
      %v3559 = vpack.c.b16 %v3529, %v3527
      %v3560 = vpack.c.b16 %v3530, %v3528
      %v3561 = vpack.c.b16 %v3533, %v3531
      %v3562 = vpack.c.b16 %v3534, %v3532
      %v3563 = vpack.c.b16 %v3537, %v3535
      %v3564 = vpack.c.b16 %v3538, %v3536
      %v3565 = vpack.c.b16 %v3541, %v3539
      %v3566 = vpack.c.b16 %v3542, %v3540
      %v3567 = vpack.c.b16 %v3545, %v3543
      %v3568 = vpack.c.b16 %v3546, %v3544
      %v3569 = vpack.c.b16 %v3549, %v3547
      %v3570 = vpack.c.b16 %v3550, %v3548
      %v3571 = vpack.c.b16 %v3553, %v3551
      %v3572 = vpack.c.b16 %v3554, %v3552
      %v3573 = vpack.c.b16 %v3557, %v3555
      %v3574 = vpack.c.b16 %v3558, %v3556
      %3591 = vmatpush.bf16.msra.mxu0 %v3573
      %3592 = vmatpush.bf16.msra.mxu0 %v3571
      %3593 = vmatpush.bf16.msra.mxu0 %v3569
      %3594 = vmatpush.bf16.msra.mxu0 %v3567
      %3595 = vmatpush.bf16.msra.mxu0 %v3565
      %3596 = vmatpush.bf16.msra.mxu0 %v3563
      %3597 = vmatpush.bf16.msra.mxu0 %v3561
      %3598 = vmatpush.bf16.msra.mxu0 %v3559
      %3599 = vmatmul.bf16.gmra.mxu0 %v3494
      %v3600 = vpop.f32.mrf.mxu0
      %v3601 = vadd.f32 0.0, %v3600
      %v3602 = vpop.f32.mrf.mxu0
      %v3603 = vadd.f32 0.0, %v3602
      %3604 = vmatmul.bf16.gmra.mxu0 %v3496
      %v3605 = vpop.f32.mrf.mxu0
      %v3606 = vadd.f32 0.0, %v3605
      %v3607 = vpop.f32.mrf.mxu0
      %v3608 = vadd.f32 0.0, %v3607
      %3609 = vmatmul.bf16.gmra.mxu0 %v3498
      %v3610 = vpop.f32.mrf.mxu0
      %v3611 = vadd.f32 0.0, %v3610
      %v3612 = vpop.f32.mrf.mxu0
      %v3613 = vadd.f32 0.0, %v3612
      %3614 = vmatmul.bf16.gmra.mxu0 %v3500
      %v3615 = vpop.f32.mrf.mxu0
      %v3616 = vadd.f32 0.0, %v3615
      %v3617 = vpop.f32.mrf.mxu0
      %v3618 = vadd.f32 0.0, %v3617
      %3619 = vmatmul.bf16.gmra.mxu0 %v3502
      %v3620 = vpop.f32.mrf.mxu0
      %v3621 = vadd.f32 0.0, %v3620
      %v3622 = vpop.f32.mrf.mxu0
      %v3623 = vadd.f32 0.0, %v3622
      %3624 = vmatmul.bf16.gmra.mxu0 %v3504
      %v3625 = vpop.f32.mrf.mxu0
      %v3626 = vadd.f32 0.0, %v3625
      %v3627 = vpop.f32.mrf.mxu0
      %v3628 = vadd.f32 0.0, %v3627
      %3629 = vdwg.mxu0
      %3630 = vmatpush.bf16.msra.mxu0 %v3574
      %3631 = vmatpush.bf16.msra.mxu0 %v3572
      %3632 = vmatpush.bf16.msra.mxu0 %v3570
      %3633 = vmatpush.bf16.msra.mxu0 %v3568
      %3634 = vmatpush.bf16.msra.mxu0 %v3566
      %3635 = vmatpush.bf16.msra.mxu0 %v3564
      %3636 = vmatpush.bf16.msra.mxu0 %v3562
      %3637 = vmatpush.bf16.msra.mxu0 %v3560
      %3638 = vmatmul.bf16.gmra.mxu0 %v3494
      %v3639 = vpop.f32.mrf.mxu0
      %v3640 = vadd.f32 0.0, %v3639
      %v3641 = vpop.f32.mrf.mxu0
      %v3642 = vadd.f32 0.0, %v3641
      %3643 = vmatmul.bf16.gmra.mxu0 %v3496
      %v3644 = vpop.f32.mrf.mxu0
      %v3645 = vadd.f32 0.0, %v3644
      %v3646 = vpop.f32.mrf.mxu0
      %v3647 = vadd.f32 0.0, %v3646
      %3648 = vmatmul.bf16.gmra.mxu0 %v3498
      %v3649 = vpop.f32.mrf.mxu0
      %v3650 = vadd.f32 0.0, %v3649
      %v3651 = vpop.f32.mrf.mxu0
      %v3652 = vadd.f32 0.0, %v3651
      %3653 = vmatmul.bf16.gmra.mxu0 %v3500
      %v3654 = vpop.f32.mrf.mxu0
      %v3655 = vadd.f32 0.0, %v3654
      %v3656 = vpop.f32.mrf.mxu0
      %v3657 = vadd.f32 0.0, %v3656
      %3658 = vmatmul.bf16.gmra.mxu0 %v3502
      %v3659 = vpop.f32.mrf.mxu0
      %v3660 = vadd.f32 0.0, %v3659
      %v3661 = vpop.f32.mrf.mxu0
      %v3662 = vadd.f32 0.0, %v3661
      %3663 = vmatmul.bf16.gmra.mxu0 %v3504
      %v3664 = vpop.f32.mrf.mxu0
      %v3665 = vadd.f32 0.0, %v3664
      %v3666 = vpop.f32.mrf.mxu0
      %v3667 = vadd.f32 0.0, %v3666
      %3668 = vdwg.mxu0
      %v3669 = vadd.f32 %v3406, %v3601
      %v3670 = vadd.f32 %v3407, %v3640
      %v3671 = vadd.f32 %v3408, %v3603
      %v3672 = vadd.f32 %v3409, %v3642
      %v3673 = vadd.f32 %v3410, %v3606
      %v3674 = vadd.f32 %v3411, %v3645
      %v3675 = vadd.f32 %v3412, %v3608
      %v3676 = vadd.f32 %v3413, %v3647
      %v3677 = vadd.f32 %v3414, %v3611
      %v3678 = vadd.f32 %v3415, %v3650
      %v3679 = vadd.f32 %v3416, %v3613
      %v3680 = vadd.f32 %v3417, %v3652
      %v3681 = vadd.f32 %v3418, %v3616
      %v3682 = vadd.f32 %v3419, %v3655
      %v3683 = vadd.f32 %v3420, %v3618
      %v3684 = vadd.f32 %v3421, %v3657
      %v3685 = vadd.f32 %v3422, %v3621
      %v3686 = vadd.f32 %v3423, %v3660
      %v3687 = vadd.f32 %v3424, %v3623
      %v3688 = vadd.f32 %v3425, %v3662
      %v3689 = vadd.f32 %v3426, %v3626
      %v3690 = vadd.f32 %v3427, %v3665
      %v3691 = vadd.f32 %v3428, %v3628
      %v3692 = vadd.f32 %v3429, %v3667
      %v3693 = vld [vmem:[%s246 + $0x68] sm:$0x3]
      %v3694 = vld [vmem:[%s1213] sm:$0xff]
      %v3695 = vld [vmem:[%s1213 + $0x8] sm:$0xff]
      %v3696 = vld [vmem:[%s1213 + $0x10] sm:$0xff]
      %v3697 = vld [vmem:[%s1213 + $0x18] sm:$0xff]
      %v3698 = vld [vmem:[%s1213 + $0x20] sm:$0xff]
      %v3699 = vld [vmem:[%s1213 + $0x28] sm:$0xff]
      %v3700 = vld [vmem:[%s1213 + $0x30] sm:$0xff]
      %v3701 = vld [vmem:[%s1213 + $0x38] sm:$0xff]
      %v3702 = vld [vmem:[%s1213 + $0x40] sm:$0xff]
      %v3703 = vld [vmem:[%s1213 + $0x48] sm:$0xff]
      %v3704 = vld [vmem:[%s1213 + $0x50] sm:$0xff]
      %v3705 = vld [vmem:[%s1213 + $0x58] sm:$0xff]
      %v3706 = vld [vmem:[%s1213 + $0x60] sm:$0xff]
      %v3707 = vld [vmem:[%s1213 + $0x68] sm:$0xff]
      %v3708 = vld [vmem:[%s1213 + $0x70] sm:$0xff]
      %v3709 = vld [vmem:[%s1213 + $0x78] sm:$0xff]
      %v3711 = vunpack.c.l.b16 %v3693
      %v3712 = vpack.c.b16 %v3711, %v3711
      %v3714 = vshrl.u32 %v3485, 16
      %v3716 = vrot.slane %v3714, 1
      %v3717 = vshll.u32 %v3485, 16
      %v3719 = vrot.slane %v3717, 2
      %v3720 = vor.u32 %v3716, %v3719
      %v3722 = vshrl.u32 %v3486, 16
      %v3724 = vrot.slane %v3722, 1
      %v3725 = vshll.u32 %v3486, 16
      %v3727 = vrot.slane %v3725, 2
      %v3728 = vor.u32 %v3724, %v3727
      %v3729 = vsel %vm1233, %v3720, %v3728
      %v3731 = vshrl.u32 %v3487, 16
      %v3733 = vrot.slane %v3731, 1
      %v3734 = vshll.u32 %v3487, 16
      %v3736 = vrot.slane %v3734, 2
      %v3737 = vor.u32 %v3733, %v3736
      %v3738 = vsel %vm1233, %v3728, %v3737
      %v3740 = vshrl.u32 %v3488, 16
      %v3742 = vrot.slane %v3740, 1
      %v3743 = vshll.u32 %v3488, 16
      %v3745 = vrot.slane %v3743, 2
      %v3746 = vor.u32 %v3742, %v3745
      %v3747 = vsel %vm1233, %v3737, %v3746
      %v3749 = vshrl.u32 %v3489, 16
      %v3751 = vrot.slane %v3749, 1
      %v3752 = vshll.u32 %v3489, 16
      %v3754 = vrot.slane %v3752, 2
      %v3755 = vor.u32 %v3751, %v3754
      %v3756 = vsel %vm1233, %v3746, %v3755
      %v3758 = vshrl.u32 %v3490, 16
      %v3760 = vrot.slane %v3758, 1
      %v3761 = vshll.u32 %v3490, 16
      %v3763 = vrot.slane %v3761, 2
      %v3764 = vor.u32 %v3760, %v3763
      %v3765 = vsel %vm1233, %v3755, %v3764
      %v3767 = vshrl.u32 %v3712, 16
      %v3769 = vrot.slane %v3767, 1
      %v3770 = vshll.u32 %v3712, 16
      %v3772 = vrot.slane %v3770, 2
      %v3773 = vor.u32 %v3769, %v3772
      %v3774 = vsel %vm1233, %v3764, %v3773
      %v3797 = vunpack.c.l.b16 %v3694
      %v3798 = vunpack.c.h.b16 %v3694
      %v3799 = vunpack.c.l.b16 %v3695
      %v3800 = vunpack.c.h.b16 %v3695
      %v3801 = vunpack.c.l.b16 %v3696
      %v3802 = vunpack.c.h.b16 %v3696
      %v3803 = vunpack.c.l.b16 %v3697
      %v3804 = vunpack.c.h.b16 %v3697
      %v3805 = vunpack.c.l.b16 %v3698
      %v3806 = vunpack.c.h.b16 %v3698
      %v3807 = vunpack.c.l.b16 %v3699
      %v3808 = vunpack.c.h.b16 %v3699
      %v3809 = vunpack.c.l.b16 %v3700
      %v3810 = vunpack.c.h.b16 %v3700
      %v3811 = vunpack.c.l.b16 %v3701
      %v3812 = vunpack.c.h.b16 %v3701
      %v3813 = vunpack.c.l.b16 %v3702
      %v3814 = vunpack.c.h.b16 %v3702
      %v3815 = vunpack.c.l.b16 %v3703
      %v3816 = vunpack.c.h.b16 %v3703
      %v3817 = vunpack.c.l.b16 %v3704
      %v3818 = vunpack.c.h.b16 %v3704
      %v3819 = vunpack.c.l.b16 %v3705
      %v3820 = vunpack.c.h.b16 %v3705
      %v3821 = vunpack.c.l.b16 %v3706
      %v3822 = vunpack.c.h.b16 %v3706
      %v3823 = vunpack.c.l.b16 %v3707
      %v3824 = vunpack.c.h.b16 %v3707
      %v3825 = vunpack.c.l.b16 %v3708
      %v3826 = vunpack.c.h.b16 %v3708
      %v3827 = vunpack.c.l.b16 %v3709
      %v3828 = vunpack.c.h.b16 %v3709
      %v3829 = vpack.c.b16 %v3799, %v3797
      %v3830 = vpack.c.b16 %v3800, %v3798
      %v3831 = vpack.c.b16 %v3803, %v3801
      %v3832 = vpack.c.b16 %v3804, %v3802
      %v3833 = vpack.c.b16 %v3807, %v3805
      %v3834 = vpack.c.b16 %v3808, %v3806
      %v3835 = vpack.c.b16 %v3811, %v3809
      %v3836 = vpack.c.b16 %v3812, %v3810
      %v3837 = vpack.c.b16 %v3815, %v3813
      %v3838 = vpack.c.b16 %v3816, %v3814
      %v3839 = vpack.c.b16 %v3819, %v3817
      %v3840 = vpack.c.b16 %v3820, %v3818
      %v3841 = vpack.c.b16 %v3823, %v3821
      %v3842 = vpack.c.b16 %v3824, %v3822
      %v3843 = vpack.c.b16 %v3827, %v3825
      %v3844 = vpack.c.b16 %v3828, %v3826
      %3861 = vmatpush.bf16.msra.mxu0 %v3843
      %3862 = vmatpush.bf16.msra.mxu0 %v3841
      %3863 = vmatpush.bf16.msra.mxu0 %v3839
      %3864 = vmatpush.bf16.msra.mxu0 %v3837
      %3865 = vmatpush.bf16.msra.mxu0 %v3835
      %3866 = vmatpush.bf16.msra.mxu0 %v3833
      %3867 = vmatpush.bf16.msra.mxu0 %v3831
      %3868 = vmatpush.bf16.msra.mxu0 %v3829
      %3869 = vmatmul.bf16.gmra.mxu0 %v3729
      %v3870 = vpop.f32.mrf.mxu0
      %v3871 = vadd.f32 0.0, %v3870
      %v3872 = vpop.f32.mrf.mxu0
      %v3873 = vadd.f32 0.0, %v3872
      %3874 = vmatmul.bf16.gmra.mxu0 %v3738
      %v3875 = vpop.f32.mrf.mxu0
      %v3876 = vadd.f32 0.0, %v3875
      %v3877 = vpop.f32.mrf.mxu0
      %v3878 = vadd.f32 0.0, %v3877
      %3879 = vmatmul.bf16.gmra.mxu0 %v3747
      %v3880 = vpop.f32.mrf.mxu0
      %v3881 = vadd.f32 0.0, %v3880
      %v3882 = vpop.f32.mrf.mxu0
      %v3883 = vadd.f32 0.0, %v3882
      %3884 = vmatmul.bf16.gmra.mxu0 %v3756
      %v3885 = vpop.f32.mrf.mxu0
      %v3886 = vadd.f32 0.0, %v3885
      %v3887 = vpop.f32.mrf.mxu0
      %v3888 = vadd.f32 0.0, %v3887
      %3889 = vmatmul.bf16.gmra.mxu0 %v3765
      %v3890 = vpop.f32.mrf.mxu0
      %v3891 = vadd.f32 0.0, %v3890
      %v3892 = vpop.f32.mrf.mxu0
      %v3893 = vadd.f32 0.0, %v3892
      %3894 = vmatmul.bf16.gmra.mxu0 %v3774
      %v3895 = vpop.f32.mrf.mxu0
      %v3896 = vadd.f32 0.0, %v3895
      %v3897 = vpop.f32.mrf.mxu0
      %v3898 = vadd.f32 0.0, %v3897
      %3899 = vdwg.mxu0
      %3900 = vmatpush.bf16.msra.mxu0 %v3844
      %3901 = vmatpush.bf16.msra.mxu0 %v3842
      %3902 = vmatpush.bf16.msra.mxu0 %v3840
      %3903 = vmatpush.bf16.msra.mxu0 %v3838
      %3904 = vmatpush.bf16.msra.mxu0 %v3836
      %3905 = vmatpush.bf16.msra.mxu0 %v3834
      %3906 = vmatpush.bf16.msra.mxu0 %v3832
      %3907 = vmatpush.bf16.msra.mxu0 %v3830
      %3908 = vmatmul.bf16.gmra.mxu0 %v3729
      %v3909 = vpop.f32.mrf.mxu0
      %v3910 = vadd.f32 0.0, %v3909
      %v3911 = vpop.f32.mrf.mxu0
      %v3912 = vadd.f32 0.0, %v3911
      %3913 = vmatmul.bf16.gmra.mxu0 %v3738
      %v3914 = vpop.f32.mrf.mxu0
      %v3915 = vadd.f32 0.0, %v3914
      %v3916 = vpop.f32.mrf.mxu0
      %v3917 = vadd.f32 0.0, %v3916
      %3918 = vmatmul.bf16.gmra.mxu0 %v3747
      %v3919 = vpop.f32.mrf.mxu0
      %v3920 = vadd.f32 0.0, %v3919
      %v3921 = vpop.f32.mrf.mxu0
      %v3922 = vadd.f32 0.0, %v3921
      %3923 = vmatmul.bf16.gmra.mxu0 %v3756
      %v3924 = vpop.f32.mrf.mxu0
      %v3925 = vadd.f32 0.0, %v3924
      %v3926 = vpop.f32.mrf.mxu0
      %v3927 = vadd.f32 0.0, %v3926
      %3928 = vmatmul.bf16.gmra.mxu0 %v3765
      %v3929 = vpop.f32.mrf.mxu0
      %v3930 = vadd.f32 0.0, %v3929
      %v3931 = vpop.f32.mrf.mxu0
      %v3932 = vadd.f32 0.0, %v3931
      %3933 = vmatmul.bf16.gmra.mxu0 %v3774
      %v3934 = vpop.f32.mrf.mxu0
      %v3935 = vadd.f32 0.0, %v3934
      %v3936 = vpop.f32.mrf.mxu0
      %v3937 = vadd.f32 0.0, %v3936
      %3938 = vdwg.mxu0
      %v3939 = vadd.f32 %v3669, %v3871
      %v3940 = vadd.f32 %v3670, %v3910
      %v3941 = vadd.f32 %v3671, %v3873
      %v3942 = vadd.f32 %v3672, %v3912
      %v3943 = vadd.f32 %v3673, %v3876
      %v3944 = vadd.f32 %v3674, %v3915
      %v3945 = vadd.f32 %v3675, %v3878
      %v3946 = vadd.f32 %v3676, %v3917
      %v3947 = vadd.f32 %v3677, %v3881
      %v3948 = vadd.f32 %v3678, %v3920
      %v3949 = vadd.f32 %v3679, %v3883
      %v3950 = vadd.f32 %v3680, %v3922
      %v3951 = vadd.f32 %v3681, %v3886
      %v3952 = vadd.f32 %v3682, %v3925
      %v3953 = vadd.f32 %v3683, %v3888
      %v3954 = vadd.f32 %v3684, %v3927
      %v3955 = vadd.f32 %v3685, %v3891
      %v3956 = vadd.f32 %v3686, %v3930
      %v3957 = vadd.f32 %v3687, %v3893
      %v3958 = vadd.f32 %v3688, %v3932
      %v3959 = vadd.f32 %v3689, %v3896
      %v3960 = vadd.f32 %v3690, %v3935
      %v3961 = vadd.f32 %v3691, %v3898
      %v3962 = vadd.f32 %v3692, %v3937
      %v3963 = vld [vmem:[%s246 + $0x38] sm:$0xc]
      %v3964 = vld [vmem:[%s1485] sm:$0xff]
      %v3965 = vld [vmem:[%s1485 + $0x8] sm:$0xff]
      %v3966 = vld [vmem:[%s1485 + $0x10] sm:$0xff]
      %v3967 = vld [vmem:[%s1485 + $0x18] sm:$0xff]
      %v3968 = vld [vmem:[%s1485 + $0x20] sm:$0xff]
      %v3969 = vld [vmem:[%s1485 + $0x28] sm:$0xff]
      %v3970 = vld [vmem:[%s1485 + $0x30] sm:$0xff]
      %v3971 = vld [vmem:[%s1485 + $0x38] sm:$0xff]
      %v3972 = vld [vmem:[%s1485 + $0x40] sm:$0xff]
      %v3973 = vld [vmem:[%s1485 + $0x48] sm:$0xff]
      %v3974 = vld [vmem:[%s1485 + $0x50] sm:$0xff]
      %v3975 = vld [vmem:[%s1485 + $0x58] sm:$0xff]
      %v3976 = vld [vmem:[%s1485 + $0x60] sm:$0xff]
      %v3977 = vld [vmem:[%s1485 + $0x68] sm:$0xff]
      %v3978 = vld [vmem:[%s1485 + $0x70] sm:$0xff]
      %v3979 = vld [vmem:[%s1485 + $0x78] sm:$0xff]
      %v3981 = vunpack.c.l.b16 %v3963
      %v3982 = vpack.c.b16 %v3473, %v3981
      %v3983 = vrot.slane %v3982, 2
      %v3984 = vrot.slane %v3486, 2
      %v3985 = vsel %vm1505, %v3983, %v3984
      %v3986 = vrot.slane %v3487, 2
      %v3987 = vsel %vm1505, %v3984, %v3986
      %v3988 = vrot.slane %v3488, 2
      %v3989 = vsel %vm1505, %v3986, %v3988
      %v3990 = vrot.slane %v3489, 2
      %v3991 = vsel %vm1505, %v3988, %v3990
      %v3992 = vrot.slane %v3490, 2
      %v3993 = vsel %vm1505, %v3990, %v3992
      %v3994 = vrot.slane %v3712, 2
      %v3995 = vsel %vm1505, %v3992, %v3994
      %v4018 = vunpack.c.l.b16 %v3964
      %v4019 = vunpack.c.h.b16 %v3964
      %v4020 = vunpack.c.l.b16 %v3965
      %v4021 = vunpack.c.h.b16 %v3965
      %v4022 = vunpack.c.l.b16 %v3966
      %v4023 = vunpack.c.h.b16 %v3966
      %v4024 = vunpack.c.l.b16 %v3967
      %v4025 = vunpack.c.h.b16 %v3967
      %v4026 = vunpack.c.l.b16 %v3968
      %v4027 = vunpack.c.h.b16 %v3968
      %v4028 = vunpack.c.l.b16 %v3969
      %v4029 = vunpack.c.h.b16 %v3969
      %v4030 = vunpack.c.l.b16 %v3970
      %v4031 = vunpack.c.h.b16 %v3970
      %v4032 = vunpack.c.l.b16 %v3971
      %v4033 = vunpack.c.h.b16 %v3971
      %v4034 = vunpack.c.l.b16 %v3972
      %v4035 = vunpack.c.h.b16 %v3972
      %v4036 = vunpack.c.l.b16 %v3973
      %v4037 = vunpack.c.h.b16 %v3973
      %v4038 = vunpack.c.l.b16 %v3974
      %v4039 = vunpack.c.h.b16 %v3974
      %v4040 = vunpack.c.l.b16 %v3975
      %v4041 = vunpack.c.h.b16 %v3975
      %v4042 = vunpack.c.l.b16 %v3976
      %v4043 = vunpack.c.h.b16 %v3976
      %v4044 = vunpack.c.l.b16 %v3977
      %v4045 = vunpack.c.h.b16 %v3977
      %v4046 = vunpack.c.l.b16 %v3978
      %v4047 = vunpack.c.h.b16 %v3978
      %v4048 = vunpack.c.l.b16 %v3979
      %v4049 = vunpack.c.h.b16 %v3979
      %v4050 = vpack.c.b16 %v4020, %v4018
      %v4051 = vpack.c.b16 %v4021, %v4019
      %v4052 = vpack.c.b16 %v4024, %v4022
      %v4053 = vpack.c.b16 %v4025, %v4023
      %v4054 = vpack.c.b16 %v4028, %v4026
      %v4055 = vpack.c.b16 %v4029, %v4027
      %v4056 = vpack.c.b16 %v4032, %v4030
      %v4057 = vpack.c.b16 %v4033, %v4031
      %v4058 = vpack.c.b16 %v4036, %v4034
      %v4059 = vpack.c.b16 %v4037, %v4035
      %v4060 = vpack.c.b16 %v4040, %v4038
      %v4061 = vpack.c.b16 %v4041, %v4039
      %v4062 = vpack.c.b16 %v4044, %v4042
      %v4063 = vpack.c.b16 %v4045, %v4043
      %v4064 = vpack.c.b16 %v4048, %v4046
      %v4065 = vpack.c.b16 %v4049, %v4047
      %4082 = vmatpush.bf16.msra.mxu0 %v4064
      %4083 = vmatpush.bf16.msra.mxu0 %v4062
      %4084 = vmatpush.bf16.msra.mxu0 %v4060
      %4085 = vmatpush.bf16.msra.mxu0 %v4058
      %4086 = vmatpush.bf16.msra.mxu0 %v4056
      %4087 = vmatpush.bf16.msra.mxu0 %v4054
      %4088 = vmatpush.bf16.msra.mxu0 %v4052
      %4089 = vmatpush.bf16.msra.mxu0 %v4050
      %4090 = vmatmul.bf16.gmra.mxu0 %v3985
      %v4091 = vpop.f32.mrf.mxu0
      %v4092 = vadd.f32 0.0, %v4091
      %v4093 = vpop.f32.mrf.mxu0
      %v4094 = vadd.f32 0.0, %v4093
      %4095 = vmatmul.bf16.gmra.mxu0 %v3987
      %v4096 = vpop.f32.mrf.mxu0
      %v4097 = vadd.f32 0.0, %v4096
      %v4098 = vpop.f32.mrf.mxu0
      %v4099 = vadd.f32 0.0, %v4098
      %4100 = vmatmul.bf16.gmra.mxu0 %v3989
      %v4101 = vpop.f32.mrf.mxu0
      %v4102 = vadd.f32 0.0, %v4101
      %v4103 = vpop.f32.mrf.mxu0
      %v4104 = vadd.f32 0.0, %v4103
      %4105 = vmatmul.bf16.gmra.mxu0 %v3991
      %v4106 = vpop.f32.mrf.mxu0
      %v4107 = vadd.f32 0.0, %v4106
      %v4108 = vpop.f32.mrf.mxu0
      %v4109 = vadd.f32 0.0, %v4108
      %4110 = vmatmul.bf16.gmra.mxu0 %v3993
      %v4111 = vpop.f32.mrf.mxu0
      %v4112 = vadd.f32 0.0, %v4111
      %v4113 = vpop.f32.mrf.mxu0
      %v4114 = vadd.f32 0.0, %v4113
      %4115 = vmatmul.bf16.gmra.mxu0 %v3995
      %v4116 = vpop.f32.mrf.mxu0
      %v4117 = vadd.f32 0.0, %v4116
      %v4118 = vpop.f32.mrf.mxu0
      %v4119 = vadd.f32 0.0, %v4118
      %4120 = vdwg.mxu0
      %4121 = vmatpush.bf16.msra.mxu0 %v4065
      %4122 = vmatpush.bf16.msra.mxu0 %v4063
      %4123 = vmatpush.bf16.msra.mxu0 %v4061
      %4124 = vmatpush.bf16.msra.mxu0 %v4059
      %4125 = vmatpush.bf16.msra.mxu0 %v4057
      %4126 = vmatpush.bf16.msra.mxu0 %v4055
      %4127 = vmatpush.bf16.msra.mxu0 %v4053
      %4128 = vmatpush.bf16.msra.mxu0 %v4051
      %4129 = vmatmul.bf16.gmra.mxu0 %v3985
      %v4130 = vpop.f32.mrf.mxu0
      %v4131 = vadd.f32 0.0, %v4130
      %v4132 = vpop.f32.mrf.mxu0
      %v4133 = vadd.f32 0.0, %v4132
      %4134 = vmatmul.bf16.gmra.mxu0 %v3987
      %v4135 = vpop.f32.mrf.mxu0
      %v4136 = vadd.f32 0.0, %v4135
      %v4137 = vpop.f32.mrf.mxu0
      %v4138 = vadd.f32 0.0, %v4137
      %4139 = vmatmul.bf16.gmra.mxu0 %v3989
      %v4140 = vpop.f32.mrf.mxu0
      %v4141 = vadd.f32 0.0, %v4140
      %v4142 = vpop.f32.mrf.mxu0
      %v4143 = vadd.f32 0.0, %v4142
      %4144 = vmatmul.bf16.gmra.mxu0 %v3991
      %v4145 = vpop.f32.mrf.mxu0
      %v4146 = vadd.f32 0.0, %v4145
      %v4147 = vpop.f32.mrf.mxu0
      %v4148 = vadd.f32 0.0, %v4147
      %4149 = vmatmul.bf16.gmra.mxu0 %v3993
      %v4150 = vpop.f32.mrf.mxu0
      %v4151 = vadd.f32 0.0, %v4150
      %v4152 = vpop.f32.mrf.mxu0
      %v4153 = vadd.f32 0.0, %v4152
      %4154 = vmatmul.bf16.gmra.mxu0 %v3995
      %v4155 = vpop.f32.mrf.mxu0
      %v4156 = vadd.f32 0.0, %v4155
      %v4157 = vpop.f32.mrf.mxu0
      %v4158 = vadd.f32 0.0, %v4157
      %4159 = vdwg.mxu0
      %v4160 = vadd.f32 %v3939, %v4092
      %v4161 = vadd.f32 %v3940, %v4131
      %v4162 = vadd.f32 %v3941, %v4094
      %v4163 = vadd.f32 %v3942, %v4133
      %v4164 = vadd.f32 %v3943, %v4097
      %v4165 = vadd.f32 %v3944, %v4136
      %v4166 = vadd.f32 %v3945, %v4099
      %v4167 = vadd.f32 %v3946, %v4138
      %v4168 = vadd.f32 %v3947, %v4102
      %v4169 = vadd.f32 %v3948, %v4141
      %v4170 = vadd.f32 %v3949, %v4104
      %v4171 = vadd.f32 %v3950, %v4143
      %v4172 = vadd.f32 %v3951, %v4107
      %v4173 = vadd.f32 %v3952, %v4146
      %v4174 = vadd.f32 %v3953, %v4109
      %v4175 = vadd.f32 %v3954, %v4148
      %v4176 = vadd.f32 %v3955, %v4112
      %v4177 = vadd.f32 %v3956, %v4151
      %v4178 = vadd.f32 %v3957, %v4114
      %v4179 = vadd.f32 %v3958, %v4153
      %v4180 = vadd.f32 %v3959, %v4117
      %v4181 = vadd.f32 %v3960, %v4156
      %v4182 = vadd.f32 %v3961, %v4119
      %v4183 = vadd.f32 %v3962, %v4158
      %v4184 = vld [vmem:[%s246 + $0x40] sm:$0xc]
      %v4185 = vld [vmem:[%s246 + $0x44] sm:$0xf]
      %v4186 = vld [vmem:[%s246 + $0x48] sm:$0xf]
      %v4187 = vld [vmem:[%s246 + $0x4c] sm:$0xf]
      %v4188 = vld [vmem:[%s246 + $0x50] sm:$0xf]
      %v4189 = vld [vmem:[%s246 + $0x54] sm:$0xf]
      %v4190 = vld [vmem:[%s246 + $0x58] sm:$0xf]
      %v4191 = vld [vmem:[%s246 + $0x5c] sm:$0xf]
      %v4192 = vld [vmem:[%s246 + $0x60] sm:$0xf]
      %v4193 = vld [vmem:[%s246 + $0x64] sm:$0xf]
      %v4194 = vld [vmem:[%s246 + $0x68] sm:$0xf]
      %v4195 = vld [vmem:[%s246 + $0x6c] sm:$0xf]
      %v4196 = vld [vmem:[%s246 + $0x70] sm:$0x3]
      %v4197 = vld [vmem:[%s1720] sm:$0xff]
      %v4198 = vld [vmem:[%s1720 + $0x8] sm:$0xff]
      %v4199 = vld [vmem:[%s1720 + $0x10] sm:$0xff]
      %v4200 = vld [vmem:[%s1720 + $0x18] sm:$0xff]
      %v4201 = vld [vmem:[%s1720 + $0x20] sm:$0xff]
      %v4202 = vld [vmem:[%s1720 + $0x28] sm:$0xff]
      %v4203 = vld [vmem:[%s1720 + $0x30] sm:$0xff]
      %v4204 = vld [vmem:[%s1720 + $0x38] sm:$0xff]
      %v4205 = vld [vmem:[%s1720 + $0x40] sm:$0xff]
      %v4206 = vld [vmem:[%s1720 + $0x48] sm:$0xff]
      %v4207 = vld [vmem:[%s1720 + $0x50] sm:$0xff]
      %v4208 = vld [vmem:[%s1720 + $0x58] sm:$0xff]
      %v4209 = vld [vmem:[%s1720 + $0x60] sm:$0xff]
      %v4210 = vld [vmem:[%s1720 + $0x68] sm:$0xff]
      %v4211 = vld [vmem:[%s1720 + $0x70] sm:$0xff]
      %v4212 = vld [vmem:[%s1720 + $0x78] sm:$0xff]
      %v4226 = vunpack.c.l.b16 %v4184
      %v4227 = vunpack.c.l.b16 %v4185
      %v4228 = vunpack.c.l.b16 %v4186
      %v4229 = vunpack.c.l.b16 %v4187
      %v4230 = vunpack.c.l.b16 %v4188
      %v4231 = vunpack.c.l.b16 %v4189
      %v4232 = vunpack.c.l.b16 %v4190
      %v4233 = vunpack.c.l.b16 %v4191
      %v4234 = vunpack.c.l.b16 %v4192
      %v4235 = vunpack.c.l.b16 %v4193
      %v4236 = vunpack.c.l.b16 %v4194
      %v4237 = vunpack.c.l.b16 %v4195
      %v4238 = vunpack.c.l.b16 %v4196
      %v4239 = vpack.c.b16 %v4227, %v4226
      %v4240 = vpack.c.b16 %v4229, %v4228
      %v4241 = vpack.c.b16 %v4231, %v4230
      %v4242 = vpack.c.b16 %v4233, %v4232
      %v4243 = vpack.c.b16 %v4235, %v4234
      %v4244 = vpack.c.b16 %v4237, %v4236
      %v4245 = vpack.c.b16 %v4238, %v4238
      %v4246 = vrot.slane %v4239, 2
      %v4247 = vrot.slane %v4240, 2
      %v4248 = vsel %vm1505, %v4246, %v4247
      %v4249 = vrot.slane %v4241, 2
      %v4250 = vsel %vm1505, %v4247, %v4249
      %v4251 = vrot.slane %v4242, 2
      %v4252 = vsel %vm1505, %v4249, %v4251
      %v4253 = vrot.slane %v4243, 2
      %v4254 = vsel %vm1505, %v4251, %v4253
      %v4255 = vrot.slane %v4244, 2
      %v4256 = vsel %vm1505, %v4253, %v4255
      %v4257 = vrot.slane %v4245, 2
      %v4258 = vsel %vm1505, %v4255, %v4257
      %v4281 = vunpack.c.l.b16 %v4197
      %v4282 = vunpack.c.h.b16 %v4197
      %v4283 = vunpack.c.l.b16 %v4198
      %v4284 = vunpack.c.h.b16 %v4198
      %v4285 = vunpack.c.l.b16 %v4199
      %v4286 = vunpack.c.h.b16 %v4199
      %v4287 = vunpack.c.l.b16 %v4200
      %v4288 = vunpack.c.h.b16 %v4200
      %v4289 = vunpack.c.l.b16 %v4201
      %v4290 = vunpack.c.h.b16 %v4201
      %v4291 = vunpack.c.l.b16 %v4202
      %v4292 = vunpack.c.h.b16 %v4202
      %v4293 = vunpack.c.l.b16 %v4203
      %v4294 = vunpack.c.h.b16 %v4203
      %v4295 = vunpack.c.l.b16 %v4204
      %v4296 = vunpack.c.h.b16 %v4204
      %v4297 = vunpack.c.l.b16 %v4205
      %v4298 = vunpack.c.h.b16 %v4205
      %v4299 = vunpack.c.l.b16 %v4206
      %v4300 = vunpack.c.h.b16 %v4206
      %v4301 = vunpack.c.l.b16 %v4207
      %v4302 = vunpack.c.h.b16 %v4207
      %v4303 = vunpack.c.l.b16 %v4208
      %v4304 = vunpack.c.h.b16 %v4208
      %v4305 = vunpack.c.l.b16 %v4209
      %v4306 = vunpack.c.h.b16 %v4209
      %v4307 = vunpack.c.l.b16 %v4210
      %v4308 = vunpack.c.h.b16 %v4210
      %v4309 = vunpack.c.l.b16 %v4211
      %v4310 = vunpack.c.h.b16 %v4211
      %v4311 = vunpack.c.l.b16 %v4212
      %v4312 = vunpack.c.h.b16 %v4212
      %v4313 = vpack.c.b16 %v4283, %v4281
      %v4314 = vpack.c.b16 %v4284, %v4282
      %v4315 = vpack.c.b16 %v4287, %v4285
      %v4316 = vpack.c.b16 %v4288, %v4286
      %v4317 = vpack.c.b16 %v4291, %v4289
      %v4318 = vpack.c.b16 %v4292, %v4290
      %v4319 = vpack.c.b16 %v4295, %v4293
      %v4320 = vpack.c.b16 %v4296, %v4294
      %v4321 = vpack.c.b16 %v4299, %v4297
      %v4322 = vpack.c.b16 %v4300, %v4298
      %v4323 = vpack.c.b16 %v4303, %v4301
      %v4324 = vpack.c.b16 %v4304, %v4302
      %v4325 = vpack.c.b16 %v4307, %v4305
      %v4326 = vpack.c.b16 %v4308, %v4306
      %v4327 = vpack.c.b16 %v4311, %v4309
      %v4328 = vpack.c.b16 %v4312, %v4310
      %4345 = vmatpush.bf16.msra.mxu0 %v4327
      %4346 = vmatpush.bf16.msra.mxu0 %v4325
      %4347 = vmatpush.bf16.msra.mxu0 %v4323
      %4348 = vmatpush.bf16.msra.mxu0 %v4321
      %4349 = vmatpush.bf16.msra.mxu0 %v4319
      %4350 = vmatpush.bf16.msra.mxu0 %v4317
      %4351 = vmatpush.bf16.msra.mxu0 %v4315
      %4352 = vmatpush.bf16.msra.mxu0 %v4313
      %4353 = vmatmul.bf16.gmra.mxu0 %v4248
      %v4354 = vpop.f32.mrf.mxu0
      %v4355 = vadd.f32 0.0, %v4354
      %v4356 = vpop.f32.mrf.mxu0
      %v4357 = vadd.f32 0.0, %v4356
      %4358 = vmatmul.bf16.gmra.mxu0 %v4250
      %v4359 = vpop.f32.mrf.mxu0
      %v4360 = vadd.f32 0.0, %v4359
      %v4361 = vpop.f32.mrf.mxu0
      %v4362 = vadd.f32 0.0, %v4361
      %4363 = vmatmul.bf16.gmra.mxu0 %v4252
      %v4364 = vpop.f32.mrf.mxu0
      %v4365 = vadd.f32 0.0, %v4364
      %v4366 = vpop.f32.mrf.mxu0
      %v4367 = vadd.f32 0.0, %v4366
      %4368 = vmatmul.bf16.gmra.mxu0 %v4254
      %v4369 = vpop.f32.mrf.mxu0
      %v4370 = vadd.f32 0.0, %v4369
      %v4371 = vpop.f32.mrf.mxu0
      %v4372 = vadd.f32 0.0, %v4371
      %4373 = vmatmul.bf16.gmra.mxu0 %v4256
      %v4374 = vpop.f32.mrf.mxu0
      %v4375 = vadd.f32 0.0, %v4374
      %v4376 = vpop.f32.mrf.mxu0
      %v4377 = vadd.f32 0.0, %v4376
      %4378 = vmatmul.bf16.gmra.mxu0 %v4258
      %v4379 = vpop.f32.mrf.mxu0
      %v4380 = vadd.f32 0.0, %v4379
      %v4381 = vpop.f32.mrf.mxu0
      %v4382 = vadd.f32 0.0, %v4381
      %4383 = vdwg.mxu0
      %4384 = vmatpush.bf16.msra.mxu0 %v4328
      %4385 = vmatpush.bf16.msra.mxu0 %v4326
      %4386 = vmatpush.bf16.msra.mxu0 %v4324
      %4387 = vmatpush.bf16.msra.mxu0 %v4322
      %4388 = vmatpush.bf16.msra.mxu0 %v4320
      %4389 = vmatpush.bf16.msra.mxu0 %v4318
      %4390 = vmatpush.bf16.msra.mxu0 %v4316
      %4391 = vmatpush.bf16.msra.mxu0 %v4314
      %4392 = vmatmul.bf16.gmra.mxu0 %v4248
      %v4393 = vpop.f32.mrf.mxu0
      %v4394 = vadd.f32 0.0, %v4393
      %v4395 = vpop.f32.mrf.mxu0
      %v4396 = vadd.f32 0.0, %v4395
      %4397 = vmatmul.bf16.gmra.mxu0 %v4250
      %v4398 = vpop.f32.mrf.mxu0
      %v4399 = vadd.f32 0.0, %v4398
      %v4400 = vpop.f32.mrf.mxu0
      %v4401 = vadd.f32 0.0, %v4400
      %4402 = vmatmul.bf16.gmra.mxu0 %v4252
      %v4403 = vpop.f32.mrf.mxu0
      %v4404 = vadd.f32 0.0, %v4403
      %v4405 = vpop.f32.mrf.mxu0
      %v4406 = vadd.f32 0.0, %v4405
      %4407 = vmatmul.bf16.gmra.mxu0 %v4254
      %v4408 = vpop.f32.mrf.mxu0
      %v4409 = vadd.f32 0.0, %v4408
      %v4410 = vpop.f32.mrf.mxu0
      %v4411 = vadd.f32 0.0, %v4410
      %4412 = vmatmul.bf16.gmra.mxu0 %v4256
      %v4413 = vpop.f32.mrf.mxu0
      %v4414 = vadd.f32 0.0, %v4413
      %v4415 = vpop.f32.mrf.mxu0
      %v4416 = vadd.f32 0.0, %v4415
      %4417 = vmatmul.bf16.gmra.mxu0 %v4258
      %v4418 = vpop.f32.mrf.mxu0
      %v4419 = vadd.f32 0.0, %v4418
      %v4420 = vpop.f32.mrf.mxu0
      %v4421 = vadd.f32 0.0, %v4420
      %4422 = vdwg.mxu0
      %v4423 = vadd.f32 %v4160, %v4355
      %v4424 = vadd.f32 %v4161, %v4394
      %v4425 = vadd.f32 %v4162, %v4357
      %v4426 = vadd.f32 %v4163, %v4396
      %v4427 = vadd.f32 %v4164, %v4360
      %v4428 = vadd.f32 %v4165, %v4399
      %v4429 = vadd.f32 %v4166, %v4362
      %v4430 = vadd.f32 %v4167, %v4401
      %v4431 = vadd.f32 %v4168, %v4365
      %v4432 = vadd.f32 %v4169, %v4404
      %v4433 = vadd.f32 %v4170, %v4367
      %v4434 = vadd.f32 %v4171, %v4406
      %v4435 = vadd.f32 %v4172, %v4370
      %v4436 = vadd.f32 %v4173, %v4409
      %v4437 = vadd.f32 %v4174, %v4372
      %v4438 = vadd.f32 %v4175, %v4411
      %v4439 = vadd.f32 %v4176, %v4375
      %v4440 = vadd.f32 %v4177, %v4414
      %v4441 = vadd.f32 %v4178, %v4377
      %v4442 = vadd.f32 %v4179, %v4416
      %v4443 = vadd.f32 %v4180, %v4380
      %v4444 = vadd.f32 %v4181, %v4419
      %v4445 = vadd.f32 %v4182, %v4382
      %v4446 = vadd.f32 %v4183, %v4421
      %v4447 = vld [vmem:[%s246 + $0x70] sm:$0x7]
      %v4448 = vld [vmem:[%s1972] sm:$0xff]
      %v4449 = vld [vmem:[%s1972 + $0x8] sm:$0xff]
      %v4450 = vld [vmem:[%s1972 + $0x10] sm:$0xff]
      %v4451 = vld [vmem:[%s1972 + $0x18] sm:$0xff]
      %v4452 = vld [vmem:[%s1972 + $0x20] sm:$0xff]
      %v4453 = vld [vmem:[%s1972 + $0x28] sm:$0xff]
      %v4454 = vld [vmem:[%s1972 + $0x30] sm:$0xff]
      %v4455 = vld [vmem:[%s1972 + $0x38] sm:$0xff]
      %v4456 = vld [vmem:[%s1972 + $0x40] sm:$0xff]
      %v4457 = vld [vmem:[%s1972 + $0x48] sm:$0xff]
      %v4458 = vld [vmem:[%s1972 + $0x50] sm:$0xff]
      %v4459 = vld [vmem:[%s1972 + $0x58] sm:$0xff]
      %v4460 = vld [vmem:[%s1972 + $0x60] sm:$0xff]
      %v4461 = vld [vmem:[%s1972 + $0x68] sm:$0xff]
      %v4462 = vld [vmem:[%s1972 + $0x70] sm:$0xff]
      %v4463 = vld [vmem:[%s1972 + $0x78] sm:$0xff]
      %v4465 = vunpack.c.l.b16 %v4447
      %v4466 = vpack.c.b16 %v4465, %v4465
      %v4468 = vshrl.u32 %v4239, 16
      %v4470 = vrot.slane %v4468, 2
      %v4471 = vshll.u32 %v4239, 16
      %v4473 = vrot.slane %v4471, 3
      %v4474 = vor.u32 %v4470, %v4473
      %v4476 = vshrl.u32 %v4240, 16
      %v4478 = vrot.slane %v4476, 2
      %v4479 = vshll.u32 %v4240, 16
      %v4481 = vrot.slane %v4479, 3
      %v4482 = vor.u32 %v4478, %v4481
      %v4483 = vsel %vm1992, %v4474, %v4482
      %v4485 = vshrl.u32 %v4241, 16
      %v4487 = vrot.slane %v4485, 2
      %v4488 = vshll.u32 %v4241, 16
      %v4490 = vrot.slane %v4488, 3
      %v4491 = vor.u32 %v4487, %v4490
      %v4492 = vsel %vm1992, %v4482, %v4491
      %v4494 = vshrl.u32 %v4242, 16
      %v4496 = vrot.slane %v4494, 2
      %v4497 = vshll.u32 %v4242, 16
      %v4499 = vrot.slane %v4497, 3
      %v4500 = vor.u32 %v4496, %v4499
      %v4501 = vsel %vm1992, %v4491, %v4500
      %v4503 = vshrl.u32 %v4243, 16
      %v4505 = vrot.slane %v4503, 2
      %v4506 = vshll.u32 %v4243, 16
      %v4508 = vrot.slane %v4506, 3
      %v4509 = vor.u32 %v4505, %v4508
      %v4510 = vsel %vm1992, %v4500, %v4509
      %v4512 = vshrl.u32 %v4244, 16
      %v4514 = vrot.slane %v4512, 2
      %v4515 = vshll.u32 %v4244, 16
      %v4517 = vrot.slane %v4515, 3
      %v4518 = vor.u32 %v4514, %v4517
      %v4519 = vsel %vm1992, %v4509, %v4518
      %v4521 = vshrl.u32 %v4466, 16
      %v4523 = vrot.slane %v4521, 2
      %v4524 = vshll.u32 %v4466, 16
      %v4526 = vrot.slane %v4524, 3
      %v4527 = vor.u32 %v4523, %v4526
      %v4528 = vsel %vm1992, %v4518, %v4527
      %v4551 = vunpack.c.l.b16 %v4448
      %v4552 = vunpack.c.h.b16 %v4448
      %v4553 = vunpack.c.l.b16 %v4449
      %v4554 = vunpack.c.h.b16 %v4449
      %v4555 = vunpack.c.l.b16 %v4450
      %v4556 = vunpack.c.h.b16 %v4450
      %v4557 = vunpack.c.l.b16 %v4451
      %v4558 = vunpack.c.h.b16 %v4451
      %v4559 = vunpack.c.l.b16 %v4452
      %v4560 = vunpack.c.h.b16 %v4452
      %v4561 = vunpack.c.l.b16 %v4453
      %v4562 = vunpack.c.h.b16 %v4453
      %v4563 = vunpack.c.l.b16 %v4454
      %v4564 = vunpack.c.h.b16 %v4454
      %v4565 = vunpack.c.l.b16 %v4455
      %v4566 = vunpack.c.h.b16 %v4455
      %v4567 = vunpack.c.l.b16 %v4456
      %v4568 = vunpack.c.h.b16 %v4456
      %v4569 = vunpack.c.l.b16 %v4457
      %v4570 = vunpack.c.h.b16 %v4457
      %v4571 = vunpack.c.l.b16 %v4458
      %v4572 = vunpack.c.h.b16 %v4458
      %v4573 = vunpack.c.l.b16 %v4459
      %v4574 = vunpack.c.h.b16 %v4459
      %v4575 = vunpack.c.l.b16 %v4460
      %v4576 = vunpack.c.h.b16 %v4460
      %v4577 = vunpack.c.l.b16 %v4461
      %v4578 = vunpack.c.h.b16 %v4461
      %v4579 = vunpack.c.l.b16 %v4462
      %v4580 = vunpack.c.h.b16 %v4462
      %v4581 = vunpack.c.l.b16 %v4463
      %v4582 = vunpack.c.h.b16 %v4463
      %v4583 = vpack.c.b16 %v4553, %v4551
      %v4584 = vpack.c.b16 %v4554, %v4552
      %v4585 = vpack.c.b16 %v4557, %v4555
      %v4586 = vpack.c.b16 %v4558, %v4556
      %v4587 = vpack.c.b16 %v4561, %v4559
      %v4588 = vpack.c.b16 %v4562, %v4560
      %v4589 = vpack.c.b16 %v4565, %v4563
      %v4590 = vpack.c.b16 %v4566, %v4564
      %v4591 = vpack.c.b16 %v4569, %v4567
      %v4592 = vpack.c.b16 %v4570, %v4568
      %v4593 = vpack.c.b16 %v4573, %v4571
      %v4594 = vpack.c.b16 %v4574, %v4572
      %v4595 = vpack.c.b16 %v4577, %v4575
      %v4596 = vpack.c.b16 %v4578, %v4576
      %v4597 = vpack.c.b16 %v4581, %v4579
      %v4598 = vpack.c.b16 %v4582, %v4580
      %4615 = vmatpush.bf16.msra.mxu0 %v4597
      %4616 = vmatpush.bf16.msra.mxu0 %v4595
      %4617 = vmatpush.bf16.msra.mxu0 %v4593
      %4618 = vmatpush.bf16.msra.mxu0 %v4591
      %4619 = vmatpush.bf16.msra.mxu0 %v4589
      %4620 = vmatpush.bf16.msra.mxu0 %v4587
      %4621 = vmatpush.bf16.msra.mxu0 %v4585
      %4622 = vmatpush.bf16.msra.mxu0 %v4583
      %4623 = vmatmul.bf16.gmra.mxu0 %v4483
      %v4624 = vpop.f32.mrf.mxu0
      %v4625 = vadd.f32 0.0, %v4624
      %v4626 = vpop.f32.mrf.mxu0
      %v4627 = vadd.f32 0.0, %v4626
      %4628 = vmatmul.bf16.gmra.mxu0 %v4492
      %v4629 = vpop.f32.mrf.mxu0
      %v4630 = vadd.f32 0.0, %v4629
      %v4631 = vpop.f32.mrf.mxu0
      %v4632 = vadd.f32 0.0, %v4631
      %4633 = vmatmul.bf16.gmra.mxu0 %v4501
      %v4634 = vpop.f32.mrf.mxu0
      %v4635 = vadd.f32 0.0, %v4634
      %v4636 = vpop.f32.mrf.mxu0
      %v4637 = vadd.f32 0.0, %v4636
      %4638 = vmatmul.bf16.gmra.mxu0 %v4510
      %v4639 = vpop.f32.mrf.mxu0
      %v4640 = vadd.f32 0.0, %v4639
      %v4641 = vpop.f32.mrf.mxu0
      %v4642 = vadd.f32 0.0, %v4641
      %4643 = vmatmul.bf16.gmra.mxu0 %v4519
      %v4644 = vpop.f32.mrf.mxu0
      %v4645 = vadd.f32 0.0, %v4644
      %v4646 = vpop.f32.mrf.mxu0
      %v4647 = vadd.f32 0.0, %v4646
      %4648 = vmatmul.bf16.gmra.mxu0 %v4528
      %v4649 = vpop.f32.mrf.mxu0
      %v4650 = vadd.f32 0.0, %v4649
      %v4651 = vpop.f32.mrf.mxu0
      %v4652 = vadd.f32 0.0, %v4651
      %4653 = vdwg.mxu0
      %4654 = vmatpush.bf16.msra.mxu0 %v4598
      %4655 = vmatpush.bf16.msra.mxu0 %v4596
      %4656 = vmatpush.bf16.msra.mxu0 %v4594
      %4657 = vmatpush.bf16.msra.mxu0 %v4592
      %4658 = vmatpush.bf16.msra.mxu0 %v4590
      %4659 = vmatpush.bf16.msra.mxu0 %v4588
      %4660 = vmatpush.bf16.msra.mxu0 %v4586
      %4661 = vmatpush.bf16.msra.mxu0 %v4584
      %4662 = vmatmul.bf16.gmra.mxu0 %v4483
      %v4663 = vpop.f32.mrf.mxu0
      %v4664 = vadd.f32 0.0, %v4663
      %v4665 = vpop.f32.mrf.mxu0
      %v4666 = vadd.f32 0.0, %v4665
      %4667 = vmatmul.bf16.gmra.mxu0 %v4492
      %v4668 = vpop.f32.mrf.mxu0
      %v4669 = vadd.f32 0.0, %v4668
      %v4670 = vpop.f32.mrf.mxu0
      %v4671 = vadd.f32 0.0, %v4670
      %4672 = vmatmul.bf16.gmra.mxu0 %v4501
      %v4673 = vpop.f32.mrf.mxu0
      %v4674 = vadd.f32 0.0, %v4673
      %v4675 = vpop.f32.mrf.mxu0
      %v4676 = vadd.f32 0.0, %v4675
      %4677 = vmatmul.bf16.gmra.mxu0 %v4510
      %v4678 = vpop.f32.mrf.mxu0
      %v4679 = vadd.f32 0.0, %v4678
      %v4680 = vpop.f32.mrf.mxu0
      %v4681 = vadd.f32 0.0, %v4680
      %4682 = vmatmul.bf16.gmra.mxu0 %v4519
      %v4683 = vpop.f32.mrf.mxu0
      %v4684 = vadd.f32 0.0, %v4683
      %v4685 = vpop.f32.mrf.mxu0
      %v4686 = vadd.f32 0.0, %v4685
      %4687 = vmatmul.bf16.gmra.mxu0 %v4528
      %v4688 = vpop.f32.mrf.mxu0
      %v4689 = vadd.f32 0.0, %v4688
      %v4690 = vpop.f32.mrf.mxu0
      %v4691 = vadd.f32 0.0, %v4690
      %4692 = vdwg.mxu0
      %v4693 = vadd.f32 %v4423, %v4625
      %v4694 = vadd.f32 %v4424, %v4664
      %v4695 = vadd.f32 %v4425, %v4627
      %v4696 = vadd.f32 %v4426, %v4666
      %v4697 = vadd.f32 %v4427, %v4630
      %v4698 = vadd.f32 %v4428, %v4669
      %v4699 = vadd.f32 %v4429, %v4632
      %v4700 = vadd.f32 %v4430, %v4671
      %v4701 = vadd.f32 %v4431, %v4635
      %v4702 = vadd.f32 %v4432, %v4674
      %v4703 = vadd.f32 %v4433, %v4637
      %v4704 = vadd.f32 %v4434, %v4676
      %v4705 = vadd.f32 %v4435, %v4640
      %v4706 = vadd.f32 %v4436, %v4679
      %v4707 = vadd.f32 %v4437, %v4642
      %v4708 = vadd.f32 %v4438, %v4681
      %v4709 = vadd.f32 %v4439, %v4645
      %v4710 = vadd.f32 %v4440, %v4684
      %v4711 = vadd.f32 %v4441, %v4647
      %v4712 = vadd.f32 %v4442, %v4686
      %v4713 = vadd.f32 %v4443, %v4650
      %v4714 = vadd.f32 %v4444, %v4689
      %v4715 = vadd.f32 %v4445, %v4652
      %v4716 = vadd.f32 %v4446, %v4691
      %v4717 = vld [vmem:[%s246 + $0x40] sm:$0x8]
      %v4718 = vld [vmem:[%s2244] sm:$0xff]
      %v4719 = vld [vmem:[%s2244 + $0x8] sm:$0xff]
      %v4720 = vld [vmem:[%s2244 + $0x10] sm:$0xff]
      %v4721 = vld [vmem:[%s2244 + $0x18] sm:$0xff]
      %v4722 = vld [vmem:[%s2244 + $0x20] sm:$0xff]
      %v4723 = vld [vmem:[%s2244 + $0x28] sm:$0xff]
      %v4724 = vld [vmem:[%s2244 + $0x30] sm:$0xff]
      %v4725 = vld [vmem:[%s2244 + $0x38] sm:$0xff]
      %v4726 = vld [vmem:[%s2244 + $0x40] sm:$0xff]
      %v4727 = vld [vmem:[%s2244 + $0x48] sm:$0xff]
      %v4728 = vld [vmem:[%s2244 + $0x50] sm:$0xff]
      %v4729 = vld [vmem:[%s2244 + $0x58] sm:$0xff]
      %v4730 = vld [vmem:[%s2244 + $0x60] sm:$0xff]
      %v4731 = vld [vmem:[%s2244 + $0x68] sm:$0xff]
      %v4732 = vld [vmem:[%s2244 + $0x70] sm:$0xff]
      %v4733 = vld [vmem:[%s2244 + $0x78] sm:$0xff]
      %v4735 = vunpack.c.l.b16 %v4717
      %v4736 = vpack.c.b16 %v4227, %v4735
      %v4737 = vrot.slane %v4736, 3
      %v4738 = vrot.slane %v4240, 3
      %v4739 = vsel %vm2264, %v4737, %v4738
      %v4740 = vrot.slane %v4241, 3
      %v4741 = vsel %vm2264, %v4738, %v4740
      %v4742 = vrot.slane %v4242, 3
      %v4743 = vsel %vm2264, %v4740, %v4742
      %v4744 = vrot.slane %v4243, 3
      %v4745 = vsel %vm2264, %v4742, %v4744
      %v4746 = vrot.slane %v4244, 3
      %v4747 = vsel %vm2264, %v4744, %v4746
      %v4748 = vrot.slane %v4466, 3
      %v4749 = vsel %vm2264, %v4746, %v4748
      %v4772 = vunpack.c.l.b16 %v4718
      %v4773 = vunpack.c.h.b16 %v4718
      %v4774 = vunpack.c.l.b16 %v4719
      %v4775 = vunpack.c.h.b16 %v4719
      %v4776 = vunpack.c.l.b16 %v4720
      %v4777 = vunpack.c.h.b16 %v4720
      %v4778 = vunpack.c.l.b16 %v4721
      %v4779 = vunpack.c.h.b16 %v4721
      %v4780 = vunpack.c.l.b16 %v4722
      %v4781 = vunpack.c.h.b16 %v4722
      %v4782 = vunpack.c.l.b16 %v4723
      %v4783 = vunpack.c.h.b16 %v4723
      %v4784 = vunpack.c.l.b16 %v4724
      %v4785 = vunpack.c.h.b16 %v4724
      %v4786 = vunpack.c.l.b16 %v4725
      %v4787 = vunpack.c.h.b16 %v4725
      %v4788 = vunpack.c.l.b16 %v4726
      %v4789 = vunpack.c.h.b16 %v4726
      %v4790 = vunpack.c.l.b16 %v4727
      %v4791 = vunpack.c.h.b16 %v4727
      %v4792 = vunpack.c.l.b16 %v4728
      %v4793 = vunpack.c.h.b16 %v4728
      %v4794 = vunpack.c.l.b16 %v4729
      %v4795 = vunpack.c.h.b16 %v4729
      %v4796 = vunpack.c.l.b16 %v4730
      %v4797 = vunpack.c.h.b16 %v4730
      %v4798 = vunpack.c.l.b16 %v4731
      %v4799 = vunpack.c.h.b16 %v4731
      %v4800 = vunpack.c.l.b16 %v4732
      %v4801 = vunpack.c.h.b16 %v4732
      %v4802 = vunpack.c.l.b16 %v4733
      %v4803 = vunpack.c.h.b16 %v4733
      %v4804 = vpack.c.b16 %v4774, %v4772
      %v4805 = vpack.c.b16 %v4775, %v4773
      %v4806 = vpack.c.b16 %v4778, %v4776
      %v4807 = vpack.c.b16 %v4779, %v4777
      %v4808 = vpack.c.b16 %v4782, %v4780
      %v4809 = vpack.c.b16 %v4783, %v4781
      %v4810 = vpack.c.b16 %v4786, %v4784
      %v4811 = vpack.c.b16 %v4787, %v4785
      %v4812 = vpack.c.b16 %v4790, %v4788
      %v4813 = vpack.c.b16 %v4791, %v4789
      %v4814 = vpack.c.b16 %v4794, %v4792
      %v4815 = vpack.c.b16 %v4795, %v4793
      %v4816 = vpack.c.b16 %v4798, %v4796
      %v4817 = vpack.c.b16 %v4799, %v4797
      %v4818 = vpack.c.b16 %v4802, %v4800
      %v4819 = vpack.c.b16 %v4803, %v4801
      %4836 = vmatpush.bf16.msra.mxu0 %v4818
      %4837 = vmatpush.bf16.msra.mxu0 %v4816
      %4838 = vmatpush.bf16.msra.mxu0 %v4814
      %4839 = vmatpush.bf16.msra.mxu0 %v4812
      %4840 = vmatpush.bf16.msra.mxu0 %v4810
      %4841 = vmatpush.bf16.msra.mxu0 %v4808
      %4842 = vmatpush.bf16.msra.mxu0 %v4806
      %4843 = vmatpush.bf16.msra.mxu0 %v4804
      %4844 = vmatmul.bf16.gmra.mxu0 %v4739
      %v4845 = vpop.f32.mrf.mxu0
      %v4846 = vadd.f32 0.0, %v4845
      %v4847 = vpop.f32.mrf.mxu0
      %v4848 = vadd.f32 0.0, %v4847
      %4849 = vmatmul.bf16.gmra.mxu0 %v4741
      %v4850 = vpop.f32.mrf.mxu0
      %v4851 = vadd.f32 0.0, %v4850
      %v4852 = vpop.f32.mrf.mxu0
      %v4853 = vadd.f32 0.0, %v4852
      %4854 = vmatmul.bf16.gmra.mxu0 %v4743
      %v4855 = vpop.f32.mrf.mxu0
      %v4856 = vadd.f32 0.0, %v4855
      %v4857 = vpop.f32.mrf.mxu0
      %v4858 = vadd.f32 0.0, %v4857
      %4859 = vmatmul.bf16.gmra.mxu0 %v4745
      %v4860 = vpop.f32.mrf.mxu0
      %v4861 = vadd.f32 0.0, %v4860
      %v4862 = vpop.f32.mrf.mxu0
      %v4863 = vadd.f32 0.0, %v4862
      %4864 = vmatmul.bf16.gmra.mxu0 %v4747
      %v4865 = vpop.f32.mrf.mxu0
      %v4866 = vadd.f32 0.0, %v4865
      %v4867 = vpop.f32.mrf.mxu0
      %v4868 = vadd.f32 0.0, %v4867
      %4869 = vmatmul.bf16.gmra.mxu0 %v4749
      %v4870 = vpop.f32.mrf.mxu0
      %v4871 = vadd.f32 0.0, %v4870
      %v4872 = vpop.f32.mrf.mxu0
      %v4873 = vadd.f32 0.0, %v4872
      %4874 = vdwg.mxu0
      %4875 = vmatpush.bf16.msra.mxu0 %v4819
      %4876 = vmatpush.bf16.msra.mxu0 %v4817
      %4877 = vmatpush.bf16.msra.mxu0 %v4815
      %4878 = vmatpush.bf16.msra.mxu0 %v4813
      %4879 = vmatpush.bf16.msra.mxu0 %v4811
      %4880 = vmatpush.bf16.msra.mxu0 %v4809
      %4881 = vmatpush.bf16.msra.mxu0 %v4807
      %4882 = vmatpush.bf16.msra.mxu0 %v4805
      %4883 = vmatmul.bf16.gmra.mxu0 %v4739
      %v4884 = vpop.f32.mrf.mxu0
      %v4885 = vadd.f32 0.0, %v4884
      %v4886 = vpop.f32.mrf.mxu0
      %v4887 = vadd.f32 0.0, %v4886
      %4888 = vmatmul.bf16.gmra.mxu0 %v4741
      %v4889 = vpop.f32.mrf.mxu0
      %v4890 = vadd.f32 0.0, %v4889
      %v4891 = vpop.f32.mrf.mxu0
      %v4892 = vadd.f32 0.0, %v4891
      %4893 = vmatmul.bf16.gmra.mxu0 %v4743
      %v4894 = vpop.f32.mrf.mxu0
      %v4895 = vadd.f32 0.0, %v4894
      %v4896 = vpop.f32.mrf.mxu0
      %v4897 = vadd.f32 0.0, %v4896
      %4898 = vmatmul.bf16.gmra.mxu0 %v4745
      %v4899 = vpop.f32.mrf.mxu0
      %v4900 = vadd.f32 0.0, %v4899
      %v4901 = vpop.f32.mrf.mxu0
      %v4902 = vadd.f32 0.0, %v4901
      %4903 = vmatmul.bf16.gmra.mxu0 %v4747
      %v4904 = vpop.f32.mrf.mxu0
      %v4905 = vadd.f32 0.0, %v4904
      %v4906 = vpop.f32.mrf.mxu0
      %v4907 = vadd.f32 0.0, %v4906
      %4908 = vmatmul.bf16.gmra.mxu0 %v4749
      %v4909 = vpop.f32.mrf.mxu0
      %v4910 = vadd.f32 0.0, %v4909
      %v4911 = vpop.f32.mrf.mxu0
      %v4912 = vadd.f32 0.0, %v4911
      %4913 = vdwg.mxu0
      %v4914 = vadd.f32 %v4693, %v4846
      %v4915 = vadd.f32 %v4694, %v4885
      %v4916 = vadd.f32 %v4695, %v4848
      %v4917 = vadd.f32 %v4696, %v4887
      %v4918 = vadd.f32 %v4697, %v4851
      %v4919 = vadd.f32 %v4698, %v4890
      %v4920 = vadd.f32 %v4699, %v4853
      %v4921 = vadd.f32 %v4700, %v4892
      %v4922 = vadd.f32 %v4701, %v4856
      %v4923 = vadd.f32 %v4702, %v4895
      %v4924 = vadd.f32 %v4703, %v4858
      %v4925 = vadd.f32 %v4704, %v4897
      %v4926 = vadd.f32 %v4705, %v4861
      %v4927 = vadd.f32 %v4706, %v4900
      %v4928 = vadd.f32 %v4707, %v4863
      %v4929 = vadd.f32 %v4708, %v4902
      %v4930 = vadd.f32 %v4709, %v4866
      %v4931 = vadd.f32 %v4710, %v4905
      %v4932 = vadd.f32 %v4711, %v4868
      %v4933 = vadd.f32 %v4712, %v4907
      %v4934 = vadd.f32 %v4713, %v4871
      %v4935 = vadd.f32 %v4714, %v4910
      %v4936 = vadd.f32 %v4715, %v4873
      %v4937 = vadd.f32 %v4716, %v4912
      %v4938 = vld [vmem:[%s2] sm:$0x3]
      %v4940 = vperm.slane %v4938, 0
      %v4941 = vperm.slane %v4938, 1
      %v4944 = vadd.f32 %v4914, %v4940
      %v4945 = vadd.f32 %v4915, %v4941
      %v4946 = vadd.f32 %v4916, %v4940
      %v4947 = vadd.f32 %v4917, %v4941
      %v4948 = vadd.f32 %v4918, %v4940
      %v4949 = vadd.f32 %v4919, %v4941
      %v4950 = vadd.f32 %v4920, %v4940
      %v4951 = vadd.f32 %v4921, %v4941
      %v4952 = vadd.f32 %v4922, %v4940
      %v4953 = vadd.f32 %v4923, %v4941
      %v4954 = vadd.f32 %v4924, %v4940
      %v4955 = vadd.f32 %v4925, %v4941
      %v4956 = vadd.f32 %v4926, %v4940
      %v4957 = vadd.f32 %v4927, %v4941
      %v4958 = vadd.f32 %v4928, %v4940
      %v4959 = vadd.f32 %v4929, %v4941
      %v4960 = vadd.f32 %v4930, %v4940
      %v4961 = vadd.f32 %v4931, %v4941
      %v4962 = vadd.f32 %v4932, %v4940
      %v4963 = vadd.f32 %v4933, %v4941
      %v4964 = vadd.f32 %v4934, %v4940
      %v4965 = vadd.f32 %v4935, %v4941
      %v4966 = vadd.f32 %v4936, %v4940
      %v4967 = vadd.f32 %v4937, %v4941
      %v4968 = vmax.f32 %v4944, 0.0
      %v4969 = vmax.f32 %v4945, 0.0
      %v4970 = vmax.f32 %v4946, 0.0
      %v4971 = vmax.f32 %v4947, 0.0
      %v4972 = vmax.f32 %v4948, 0.0
      %v4973 = vmax.f32 %v4949, 0.0
      %v4974 = vmax.f32 %v4950, 0.0
      %v4975 = vmax.f32 %v4951, 0.0
      %v4976 = vmax.f32 %v4952, 0.0
      %v4977 = vmax.f32 %v4953, 0.0
      %v4978 = vmax.f32 %v4954, 0.0
      %v4979 = vmax.f32 %v4955, 0.0
      %v4980 = vmax.f32 %v4956, 0.0
      %v4981 = vmax.f32 %v4957, 0.0
      %v4982 = vmax.f32 %v4958, 0.0
      %v4983 = vmax.f32 %v4959, 0.0
      %v4984 = vmax.f32 %v4960, 0.0
      %v4985 = vmax.f32 %v4961, 0.0
      %v4986 = vmax.f32 %v4962, 0.0
      %v4987 = vmax.f32 %v4963, 0.0
      %v4988 = vmax.f32 %v4964, 0.0
      %v4989 = vmax.f32 %v4965, 0.0
      %v4990 = vmax.f32 %v4966, 0.0
      %v4991 = vmax.f32 %v4967, 0.0
      %v4992 = vld [vmem:[%s5 + $0x60] sm:$0xff]
      %v4993 = vld [vmem:[%s5 + $0x68] sm:$0xff]
      %v4994 = vld [vmem:[%s5 + $0x70] sm:$0xff]
      %v4995 = vld [vmem:[%s5 + $0x78] sm:$0xff]
      %v4996 = vld [vmem:[%s5 + $0x80] sm:$0xff]
      %v4997 = vld [vmem:[%s5 + $0x88] sm:$0xff]
      %v4998 = vld [vmem:[%s5 + $0x90] sm:$0xff]
      %v4999 = vld [vmem:[%s5 + $0x98] sm:$0xff]
      %v5000 = vld [vmem:[%s5 + $0xa0] sm:$0xff]
      %v5001 = vld [vmem:[%s5 + $0xa8] sm:$0xff]
      %v5002 = vld [vmem:[%s5 + $0xb0] sm:$0xff]
      %v5003 = vld [vmem:[%s5 + $0xb8] sm:$0xff]
      %vm5004 = vcmp.gt.f32.partialorder %v4992, 0.0
      %vm5005 = vcmp.gt.f32.partialorder %v4993, 0.0
      %vm5006 = vcmp.gt.f32.partialorder %v4994, 0.0
      %vm5007 = vcmp.gt.f32.partialorder %v4995, 0.0
      %vm5008 = vcmp.gt.f32.partialorder %v4996, 0.0
      %vm5009 = vcmp.gt.f32.partialorder %v4997, 0.0
      %vm5010 = vcmp.gt.f32.partialorder %v4998, 0.0
      %vm5011 = vcmp.gt.f32.partialorder %v4999, 0.0
      %vm5012 = vcmp.gt.f32.partialorder %v5000, 0.0
      %vm5013 = vcmp.gt.f32.partialorder %v5001, 0.0
      %vm5014 = vcmp.gt.f32.partialorder %v5002, 0.0
      %vm5015 = vcmp.gt.f32.partialorder %v5003, 0.0
      %v5016 = vsel %vm5004, 1, 0
      %v5017 = vsel %vm5005, 1, 0
      %v5018 = vsel %vm5006, 1, 0
      %v5019 = vsel %vm5007, 1, 0
      %v5020 = vsel %vm5008, 1, 0
      %v5021 = vsel %vm5009, 1, 0
      %v5022 = vsel %vm5010, 1, 0
      %v5023 = vsel %vm5011, 1, 0
      %v5024 = vsel %vm5012, 1, 0
      %v5025 = vsel %vm5013, 1, 0
      %v5026 = vsel %vm5014, 1, 0
      %v5027 = vsel %vm5015, 1, 0
      %5028 = vset.pattern.permute.xlu0 0
      %5029 = vperm.xlu0 %5028, %v5016
      %v5030 = vpop.permute.xlu0 %5029
      %5031 = vset.pattern.permute.xlu0 0
      %5032 = vperm.xlu0 %5031, %v5017
      %v5033 = vpop.permute.xlu0 %5032
      %5034 = vset.pattern.permute.xlu0 0
      %5035 = vperm.xlu0 %5034, %v5018
      %v5036 = vpop.permute.xlu0 %5035
      %5037 = vset.pattern.permute.xlu0 0
      %5038 = vperm.xlu0 %5037, %v5019
      %v5039 = vpop.permute.xlu0 %5038
      %5040 = vset.pattern.permute.xlu0 0
      %5041 = vperm.xlu0 %5040, %v5020
      %v5042 = vpop.permute.xlu0 %5041
      %5043 = vset.pattern.permute.xlu0 0
      %5044 = vperm.xlu0 %5043, %v5021
      %v5045 = vpop.permute.xlu0 %5044
      %5046 = vset.pattern.permute.xlu0 0
      %5047 = vperm.xlu0 %5046, %v5022
      %v5048 = vpop.permute.xlu0 %5047
      %5049 = vset.pattern.permute.xlu0 0
      %5050 = vperm.xlu0 %5049, %v5023
      %v5051 = vpop.permute.xlu0 %5050
      %5052 = vset.pattern.permute.xlu0 0
      %5053 = vperm.xlu0 %5052, %v5024
      %v5054 = vpop.permute.xlu0 %5053
      %5055 = vset.pattern.permute.xlu0 0
      %5056 = vperm.xlu0 %5055, %v5025
      %v5057 = vpop.permute.xlu0 %5056
      %5058 = vset.pattern.permute.xlu0 0
      %5059 = vperm.xlu0 %5058, %v5026
      %v5060 = vpop.permute.xlu0 %5059
      %5061 = vset.pattern.permute.xlu0 0
      %5062 = vperm.xlu0 %5061, %v5027
      %v5063 = vpop.permute.xlu0 %5062
      %vm5064 = vcmp.eq.s32.totalorder %v5030, 1
      %vm5065 = vcmp.eq.s32.totalorder %v5033, 1
      %vm5066 = vcmp.eq.s32.totalorder %v5036, 1
      %vm5067 = vcmp.eq.s32.totalorder %v5039, 1
      %vm5068 = vcmp.eq.s32.totalorder %v5042, 1
      %vm5069 = vcmp.eq.s32.totalorder %v5045, 1
      %vm5070 = vcmp.eq.s32.totalorder %v5048, 1
      %vm5071 = vcmp.eq.s32.totalorder %v5051, 1
      %vm5072 = vcmp.eq.s32.totalorder %v5054, 1
      %vm5073 = vcmp.eq.s32.totalorder %v5057, 1
      %vm5074 = vcmp.eq.s32.totalorder %v5060, 1
      %vm5075 = vcmp.eq.s32.totalorder %v5063, 1
      %v5076 = vsel %vm5064, %v4968, 0.0
      %v5077 = vsel %vm5064, %v4969, 0.0
      %v5078 = vsel %vm5065, %v4970, 0.0
      %v5079 = vsel %vm5065, %v4971, 0.0
      %v5080 = vsel %vm5066, %v4972, 0.0
      %v5081 = vsel %vm5066, %v4973, 0.0
      %v5082 = vsel %vm5067, %v4974, 0.0
      %v5083 = vsel %vm5067, %v4975, 0.0
      %v5084 = vsel %vm5068, %v4976, 0.0
      %v5085 = vsel %vm5068, %v4977, 0.0
      %v5086 = vsel %vm5069, %v4978, 0.0
      %v5087 = vsel %vm5069, %v4979, 0.0
      %v5088 = vsel %vm5070, %v4980, 0.0
      %v5089 = vsel %vm5070, %v4981, 0.0
      %v5090 = vsel %vm5071, %v4982, 0.0
      %v5091 = vsel %vm5071, %v4983, 0.0
      %v5092 = vsel %vm5072, %v4984, 0.0
      %v5093 = vsel %vm5072, %v4985, 0.0
      %v5094 = vsel %vm5073, %v4986, 0.0
      %v5095 = vsel %vm5073, %v4987, 0.0
      %v5096 = vsel %vm5074, %v4988, 0.0
      %v5097 = vsel %vm5074, %v4989, 0.0
      %v5098 = vsel %vm5075, %v4990, 0.0
      %v5099 = vsel %vm5075, %v4991, 0.0
      %v5124 = vrot.slane %v5076, 5
      %v5125 = vrot.slane %v5077, 5
      %v5126 = vrot.slane %v5078, 5
      %v5127 = vsel %vm2652, %v5124, %v5126
      %v5128 = vrot.slane %v5079, 5
      %v5129 = vsel %vm2652, %v5125, %v5128
      %v5130 = vrot.slane %v5080, 5
      %v5131 = vsel %vm2652, %v5126, %v5130
      %v5132 = vrot.slane %v5081, 5
      %v5133 = vsel %vm2652, %v5128, %v5132
      %v5134 = vrot.slane %v5082, 5
      %v5135 = vsel %vm2652, %v5130, %v5134
      %v5136 = vrot.slane %v5083, 5
      %v5137 = vsel %vm2652, %v5132, %v5136
      %v5138 = vrot.slane %v5084, 5
      %v5139 = vsel %vm2652, %v5134, %v5138
      %v5140 = vrot.slane %v5085, 5
      %v5141 = vsel %vm2652, %v5136, %v5140
      %v5142 = vrot.slane %v5086, 5
      %v5143 = vsel %vm2652, %v5138, %v5142
      %v5144 = vrot.slane %v5087, 5
      %v5145 = vsel %vm2652, %v5140, %v5144
      %v5146 = vrot.slane %v5088, 5
      %v5147 = vsel %vm2652, %v5142, %v5146
      %v5148 = vrot.slane %v5089, 5
      %v5149 = vsel %vm2652, %v5144, %v5148
      %v5150 = vrot.slane %v5090, 5
      %v5151 = vsel %vm2652, %v5146, %v5150
      %v5152 = vrot.slane %v5091, 5
      %v5153 = vsel %vm2652, %v5148, %v5152
      %v5154 = vrot.slane %v5092, 5
      %v5155 = vsel %vm2652, %v5150, %v5154
      %v5156 = vrot.slane %v5093, 5
      %v5157 = vsel %vm2652, %v5152, %v5156
      %v5158 = vrot.slane %v5094, 5
      %v5159 = vsel %vm2652, %v5154, %v5158
      %v5160 = vrot.slane %v5095, 5
      %v5161 = vsel %vm2652, %v5156, %v5160
      %v5162 = vrot.slane %v5096, 5
      %v5163 = vsel %vm2652, %v5158, %v5162
      %v5164 = vrot.slane %v5097, 5
      %v5165 = vsel %vm2652, %v5160, %v5164
      %v5166 = vrot.slane %v5098, 5
      %v5167 = vsel %vm2652, %v5162, %v5166
      %v5168 = vrot.slane %v5099, 5
      %v5169 = vsel %vm2652, %v5164, %v5168
      %5196 = vst [vmem:[#allocation2 + $0xe0] sm:$0xf8] %v5124
      %5197 = vst [vmem:[#allocation2 + $0xe8] sm:$0xf8] %v5125
      %5198 = vst [vmem:[#allocation2 + $0xf0] sm:$0xff] %v5127
      %5199 = vst [vmem:[#allocation2 + $0xf8] sm:$0xff] %v5129
      %5200 = vst [vmem:[#allocation2 + $0x100] sm:$0xff] %v5131
      %5201 = vst [vmem:[#allocation2 + $0x108] sm:$0xff] %v5133
      %5202 = vst [vmem:[#allocation2 + $0x110] sm:$0xff] %v5135
      %5203 = vst [vmem:[#allocation2 + $0x118] sm:$0xff] %v5137
      %5204 = vst [vmem:[#allocation2 + $0x120] sm:$0xff] %v5139
      %5205 = vst [vmem:[#allocation2 + $0x128] sm:$0xff] %v5141
      %5206 = vst [vmem:[#allocation2 + $0x130] sm:$0xff] %v5143
      %5207 = vst [vmem:[#allocation2 + $0x138] sm:$0xff] %v5145
      %5208 = vst [vmem:[#allocation2 + $0x140] sm:$0xff] %v5147
      %5209 = vst [vmem:[#allocation2 + $0x148] sm:$0xff] %v5149
      %5210 = vst [vmem:[#allocation2 + $0x150] sm:$0xff] %v5151
      %5211 = vst [vmem:[#allocation2 + $0x158] sm:$0xff] %v5153
      %5212 = vst [vmem:[#allocation2 + $0x160] sm:$0xff] %v5155
      %5213 = vst [vmem:[#allocation2 + $0x168] sm:$0xff] %v5157
      %5214 = vst [vmem:[#allocation2 + $0x170] sm:$0xff] %v5159
      %5215 = vst [vmem:[#allocation2 + $0x178] sm:$0xff] %v5161
      %5216 = vst [vmem:[#allocation2 + $0x180] sm:$0xff] %v5163
      %5217 = vst [vmem:[#allocation2 + $0x188] sm:$0xff] %v5165
      %5218 = vst [vmem:[#allocation2 + $0x190] sm:$0xff] %v5167
      %5219 = vst [vmem:[#allocation2 + $0x198] sm:$0xff] %v5169
      %5220 = vst [vmem:[#allocation2 + $0x1a0] sm:$0x7] %v5166
      %5221 = vst [vmem:[#allocation2 + $0x1a8] sm:$0x7] %v5168
      %v5222 = vld [vmem:[%s246 + $0x60] sm:$0xf]
      %v5223 = vld [vmem:[%s246 + $0x64] sm:$0xf]
      %v5224 = vld [vmem:[%s246 + $0x68] sm:$0xf]
      %v5225 = vld [vmem:[%s246 + $0x6c] sm:$0xf]
      %v5226 = vld [vmem:[%s246 + $0x70] sm:$0xf]
      %v5227 = vld [vmem:[%s246 + $0x74] sm:$0xf]
      %v5228 = vld [vmem:[%s246 + $0x78] sm:$0xf]
      %v5229 = vld [vmem:[%s246 + $0x7c] sm:$0xf]
      %v5230 = vld [vmem:[%s246 + $0x80] sm:$0xf]
      %v5231 = vld [vmem:[%s246 + $0x84] sm:$0xf]
      %v5232 = vld [vmem:[%s246 + $0x88] sm:$0xf]
      %v5233 = vld [vmem:[%s246 + $0x8c] sm:$0xf]
      %v5234 = vld [vmem:[%s1] sm:$0xff]
      %v5235 = vld [vmem:[%s1 + $0x8] sm:$0xff]
      %v5236 = vld [vmem:[%s1 + $0x10] sm:$0xff]
      %v5237 = vld [vmem:[%s1 + $0x18] sm:$0xff]
      %v5238 = vld [vmem:[%s1 + $0x20] sm:$0xff]
      %v5239 = vld [vmem:[%s1 + $0x28] sm:$0xff]
      %v5240 = vld [vmem:[%s1 + $0x30] sm:$0xff]
      %v5241 = vld [vmem:[%s1 + $0x38] sm:$0xff]
      %v5242 = vld [vmem:[%s1 + $0x40] sm:$0xff]
      %v5243 = vld [vmem:[%s1 + $0x48] sm:$0xff]
      %v5244 = vld [vmem:[%s1 + $0x50] sm:$0xff]
      %v5245 = vld [vmem:[%s1 + $0x58] sm:$0xff]
      %v5246 = vld [vmem:[%s1 + $0x60] sm:$0xff]
      %v5247 = vld [vmem:[%s1 + $0x68] sm:$0xff]
      %v5248 = vld [vmem:[%s1 + $0x70] sm:$0xff]
      %v5249 = vld [vmem:[%s1 + $0x78] sm:$0xff]
      %v5250 = vld [vmem:[%s246 + $0x90] sm:$0x1]
      %v5251 = vld [vmem:[%s294] sm:$0xff]
      %v5252 = vld [vmem:[%s294 + $0x8] sm:$0xff]
      %v5253 = vld [vmem:[%s294 + $0x10] sm:$0xff]
      %v5254 = vld [vmem:[%s294 + $0x18] sm:$0xff]
      %v5255 = vld [vmem:[%s294 + $0x20] sm:$0xff]
      %v5256 = vld [vmem:[%s294 + $0x28] sm:$0xff]
      %v5257 = vld [vmem:[%s294 + $0x30] sm:$0xff]
      %v5258 = vld [vmem:[%s294 + $0x38] sm:$0xff]
      %v5259 = vld [vmem:[%s294 + $0x40] sm:$0xff]
      %v5260 = vld [vmem:[%s294 + $0x48] sm:$0xff]
      %v5261 = vld [vmem:[%s294 + $0x50] sm:$0xff]
      %v5262 = vld [vmem:[%s294 + $0x58] sm:$0xff]
      %v5263 = vld [vmem:[%s294 + $0x60] sm:$0xff]
      %v5264 = vld [vmem:[%s294 + $0x68] sm:$0xff]
      %v5265 = vld [vmem:[%s294 + $0x70] sm:$0xff]
      %v5266 = vld [vmem:[%s294 + $0x78] sm:$0xff]
      %v5280 = vunpack.c.l.b16 %v5222
      %v5281 = vunpack.c.l.b16 %v5223
      %v5282 = vunpack.c.l.b16 %v5224
      %v5283 = vunpack.c.l.b16 %v5225
      %v5284 = vunpack.c.l.b16 %v5226
      %v5285 = vunpack.c.l.b16 %v5227
      %v5286 = vunpack.c.l.b16 %v5228
      %v5287 = vunpack.c.l.b16 %v5229
      %v5288 = vunpack.c.l.b16 %v5230
      %v5289 = vunpack.c.l.b16 %v5231
      %v5290 = vunpack.c.l.b16 %v5232
      %v5291 = vunpack.c.l.b16 %v5233
      %v5292 = vunpack.c.l.b16 %v5250
      %v5293 = vpack.c.b16 %v5281, %v5280
      %v5294 = vpack.c.b16 %v5283, %v5282
      %v5295 = vpack.c.b16 %v5285, %v5284
      %v5296 = vpack.c.b16 %v5287, %v5286
      %v5297 = vpack.c.b16 %v5289, %v5288
      %v5298 = vpack.c.b16 %v5291, %v5290
      %v5299 = vpack.c.b16 %v5292, %v5292
      %v5301 = vshrl.u32 %v5293, 16
      %v5303 = vshll.u32 %v5293, 16
      %v5305 = vrot.slane %v5303, 1
      %v5306 = vor.u32 %v5301, %v5305
      %v5308 = vshll.u32 %v5294, 16
      %v5310 = vrot.slane %v5308, 1
      %v5311 = vsel %vm344, %v5306, %v5310
      %v5312 = vshrl.u32 %v5294, 16
      %v5314 = vor.u32 %v5312, %v5310
      %v5316 = vshll.u32 %v5295, 16
      %v5318 = vrot.slane %v5316, 1
      %v5319 = vsel %vm344, %v5314, %v5318
      %v5320 = vshrl.u32 %v5295, 16
      %v5322 = vor.u32 %v5320, %v5318
      %v5324 = vshll.u32 %v5296, 16
      %v5326 = vrot.slane %v5324, 1
      %v5327 = vsel %vm344, %v5322, %v5326
      %v5328 = vshrl.u32 %v5296, 16
      %v5330 = vor.u32 %v5328, %v5326
      %v5332 = vshll.u32 %v5297, 16
      %v5334 = vrot.slane %v5332, 1
      %v5335 = vsel %vm344, %v5330, %v5334
      %v5336 = vshrl.u32 %v5297, 16
      %v5338 = vor.u32 %v5336, %v5334
      %v5340 = vshll.u32 %v5298, 16
      %v5342 = vrot.slane %v5340, 1
      %v5343 = vsel %vm344, %v5338, %v5342
      %v5344 = vshrl.u32 %v5298, 16
      %v5346 = vor.u32 %v5344, %v5342
      %v5348 = vshll.u32 %v5299, 16
      %v5350 = vrot.slane %v5348, 1
      %v5351 = vsel %vm344, %v5346, %v5350
      %v5374 = vunpack.c.l.b16 %v5251
      %v5375 = vunpack.c.h.b16 %v5251
      %v5376 = vunpack.c.l.b16 %v5252
      %v5377 = vunpack.c.h.b16 %v5252
      %v5378 = vunpack.c.l.b16 %v5253
      %v5379 = vunpack.c.h.b16 %v5253
      %v5380 = vunpack.c.l.b16 %v5254
      %v5381 = vunpack.c.h.b16 %v5254
      %v5382 = vunpack.c.l.b16 %v5255
      %v5383 = vunpack.c.h.b16 %v5255
      %v5384 = vunpack.c.l.b16 %v5256
      %v5385 = vunpack.c.h.b16 %v5256
      %v5386 = vunpack.c.l.b16 %v5257
      %v5387 = vunpack.c.h.b16 %v5257
      %v5388 = vunpack.c.l.b16 %v5258
      %v5389 = vunpack.c.h.b16 %v5258
      %v5390 = vunpack.c.l.b16 %v5259
      %v5391 = vunpack.c.h.b16 %v5259
      %v5392 = vunpack.c.l.b16 %v5260
      %v5393 = vunpack.c.h.b16 %v5260
      %v5394 = vunpack.c.l.b16 %v5261
      %v5395 = vunpack.c.h.b16 %v5261
      %v5396 = vunpack.c.l.b16 %v5262
      %v5397 = vunpack.c.h.b16 %v5262
      %v5398 = vunpack.c.l.b16 %v5263
      %v5399 = vunpack.c.h.b16 %v5263
      %v5400 = vunpack.c.l.b16 %v5264
      %v5401 = vunpack.c.h.b16 %v5264
      %v5402 = vunpack.c.l.b16 %v5265
      %v5403 = vunpack.c.h.b16 %v5265
      %v5404 = vunpack.c.l.b16 %v5266
      %v5405 = vunpack.c.h.b16 %v5266
      %v5406 = vpack.c.b16 %v5376, %v5374
      %v5407 = vpack.c.b16 %v5377, %v5375
      %v5408 = vpack.c.b16 %v5380, %v5378
      %v5409 = vpack.c.b16 %v5381, %v5379
      %v5410 = vpack.c.b16 %v5384, %v5382
      %v5411 = vpack.c.b16 %v5385, %v5383
      %v5412 = vpack.c.b16 %v5388, %v5386
      %v5413 = vpack.c.b16 %v5389, %v5387
      %v5414 = vpack.c.b16 %v5392, %v5390
      %v5415 = vpack.c.b16 %v5393, %v5391
      %v5416 = vpack.c.b16 %v5396, %v5394
      %v5417 = vpack.c.b16 %v5397, %v5395
      %v5418 = vpack.c.b16 %v5400, %v5398
      %v5419 = vpack.c.b16 %v5401, %v5399
      %v5420 = vpack.c.b16 %v5404, %v5402
      %v5421 = vpack.c.b16 %v5405, %v5403
      %5438 = vmatpush.bf16.msra.mxu0 %v5420
      %5439 = vmatpush.bf16.msra.mxu0 %v5418
      %5440 = vmatpush.bf16.msra.mxu0 %v5416
      %5441 = vmatpush.bf16.msra.mxu0 %v5414
      %5442 = vmatpush.bf16.msra.mxu0 %v5412
      %5443 = vmatpush.bf16.msra.mxu0 %v5410
      %5444 = vmatpush.bf16.msra.mxu0 %v5408
      %5445 = vmatpush.bf16.msra.mxu0 %v5406
      %5446 = vmatmul.bf16.gmra.mxu0 %v5311
      %v5447 = vpop.f32.mrf.mxu0
      %v5448 = vadd.f32 0.0, %v5447
      %v5449 = vpop.f32.mrf.mxu0
      %v5450 = vadd.f32 0.0, %v5449
      %5451 = vmatmul.bf16.gmra.mxu0 %v5319
      %v5452 = vpop.f32.mrf.mxu0
      %v5453 = vadd.f32 0.0, %v5452
      %v5454 = vpop.f32.mrf.mxu0
      %v5455 = vadd.f32 0.0, %v5454
      %5456 = vmatmul.bf16.gmra.mxu0 %v5327
      %v5457 = vpop.f32.mrf.mxu0
      %v5458 = vadd.f32 0.0, %v5457
      %v5459 = vpop.f32.mrf.mxu0
      %v5460 = vadd.f32 0.0, %v5459
      %5461 = vmatmul.bf16.gmra.mxu0 %v5335
      %v5462 = vpop.f32.mrf.mxu0
      %v5463 = vadd.f32 0.0, %v5462
      %v5464 = vpop.f32.mrf.mxu0
      %v5465 = vadd.f32 0.0, %v5464
      %5466 = vmatmul.bf16.gmra.mxu0 %v5343
      %v5467 = vpop.f32.mrf.mxu0
      %v5468 = vadd.f32 0.0, %v5467
      %v5469 = vpop.f32.mrf.mxu0
      %v5470 = vadd.f32 0.0, %v5469
      %5471 = vmatmul.bf16.gmra.mxu0 %v5351
      %v5472 = vpop.f32.mrf.mxu0
      %v5473 = vadd.f32 0.0, %v5472
      %v5474 = vpop.f32.mrf.mxu0
      %v5475 = vadd.f32 0.0, %v5474
      %5476 = vdwg.mxu0
      %5477 = vmatpush.bf16.msra.mxu0 %v5421
      %5478 = vmatpush.bf16.msra.mxu0 %v5419
      %5479 = vmatpush.bf16.msra.mxu0 %v5417
      %5480 = vmatpush.bf16.msra.mxu0 %v5415
      %5481 = vmatpush.bf16.msra.mxu0 %v5413
      %5482 = vmatpush.bf16.msra.mxu0 %v5411
      %5483 = vmatpush.bf16.msra.mxu0 %v5409
      %5484 = vmatpush.bf16.msra.mxu0 %v5407
      %5485 = vmatmul.bf16.gmra.mxu0 %v5311
      %v5486 = vpop.f32.mrf.mxu0
      %v5487 = vadd.f32 0.0, %v5486
      %v5488 = vpop.f32.mrf.mxu0
      %v5489 = vadd.f32 0.0, %v5488
      %5490 = vmatmul.bf16.gmra.mxu0 %v5319
      %v5491 = vpop.f32.mrf.mxu0
      %v5492 = vadd.f32 0.0, %v5491
      %v5493 = vpop.f32.mrf.mxu0
      %v5494 = vadd.f32 0.0, %v5493
      %5495 = vmatmul.bf16.gmra.mxu0 %v5327
      %v5496 = vpop.f32.mrf.mxu0
      %v5497 = vadd.f32 0.0, %v5496
      %v5498 = vpop.f32.mrf.mxu0
      %v5499 = vadd.f32 0.0, %v5498
      %5500 = vmatmul.bf16.gmra.mxu0 %v5335
      %v5501 = vpop.f32.mrf.mxu0
      %v5502 = vadd.f32 0.0, %v5501
      %v5503 = vpop.f32.mrf.mxu0
      %v5504 = vadd.f32 0.0, %v5503
      %5505 = vmatmul.bf16.gmra.mxu0 %v5343
      %v5506 = vpop.f32.mrf.mxu0
      %v5507 = vadd.f32 0.0, %v5506
      %v5508 = vpop.f32.mrf.mxu0
      %v5509 = vadd.f32 0.0, %v5508
      %5510 = vmatmul.bf16.gmra.mxu0 %v5351
      %v5511 = vpop.f32.mrf.mxu0
      %v5512 = vadd.f32 0.0, %v5511
      %v5513 = vpop.f32.mrf.mxu0
      %v5514 = vadd.f32 0.0, %v5513
      %5515 = vdwg.mxu0
      %v5538 = vunpack.c.l.b16 %v5234
      %v5539 = vunpack.c.h.b16 %v5234
      %v5540 = vunpack.c.l.b16 %v5235
      %v5541 = vunpack.c.h.b16 %v5235
      %v5542 = vunpack.c.l.b16 %v5236
      %v5543 = vunpack.c.h.b16 %v5236
      %v5544 = vunpack.c.l.b16 %v5237
      %v5545 = vunpack.c.h.b16 %v5237
      %v5546 = vunpack.c.l.b16 %v5238
      %v5547 = vunpack.c.h.b16 %v5238
      %v5548 = vunpack.c.l.b16 %v5239
      %v5549 = vunpack.c.h.b16 %v5239
      %v5550 = vunpack.c.l.b16 %v5240
      %v5551 = vunpack.c.h.b16 %v5240
      %v5552 = vunpack.c.l.b16 %v5241
      %v5553 = vunpack.c.h.b16 %v5241
      %v5554 = vunpack.c.l.b16 %v5242
      %v5555 = vunpack.c.h.b16 %v5242
      %v5556 = vunpack.c.l.b16 %v5243
      %v5557 = vunpack.c.h.b16 %v5243
      %v5558 = vunpack.c.l.b16 %v5244
      %v5559 = vunpack.c.h.b16 %v5244
      %v5560 = vunpack.c.l.b16 %v5245
      %v5561 = vunpack.c.h.b16 %v5245
      %v5562 = vunpack.c.l.b16 %v5246
      %v5563 = vunpack.c.h.b16 %v5246
      %v5564 = vunpack.c.l.b16 %v5247
      %v5565 = vunpack.c.h.b16 %v5247
      %v5566 = vunpack.c.l.b16 %v5248
      %v5567 = vunpack.c.h.b16 %v5248
      %v5568 = vunpack.c.l.b16 %v5249
      %v5569 = vunpack.c.h.b16 %v5249
      %v5570 = vpack.c.b16 %v5540, %v5538
      %v5571 = vpack.c.b16 %v5541, %v5539
      %v5572 = vpack.c.b16 %v5544, %v5542
      %v5573 = vpack.c.b16 %v5545, %v5543
      %v5574 = vpack.c.b16 %v5548, %v5546
      %v5575 = vpack.c.b16 %v5549, %v5547
      %v5576 = vpack.c.b16 %v5552, %v5550
      %v5577 = vpack.c.b16 %v5553, %v5551
      %v5578 = vpack.c.b16 %v5556, %v5554
      %v5579 = vpack.c.b16 %v5557, %v5555
      %v5580 = vpack.c.b16 %v5560, %v5558
      %v5581 = vpack.c.b16 %v5561, %v5559
      %v5582 = vpack.c.b16 %v5564, %v5562
      %v5583 = vpack.c.b16 %v5565, %v5563
      %v5584 = vpack.c.b16 %v5568, %v5566
      %v5585 = vpack.c.b16 %v5569, %v5567
      %5602 = vmatpush.bf16.msra.mxu0 %v5584
      %5603 = vmatpush.bf16.msra.mxu0 %v5582
      %5604 = vmatpush.bf16.msra.mxu0 %v5580
      %5605 = vmatpush.bf16.msra.mxu0 %v5578
      %5606 = vmatpush.bf16.msra.mxu0 %v5576
      %5607 = vmatpush.bf16.msra.mxu0 %v5574
      %5608 = vmatpush.bf16.msra.mxu0 %v5572
      %5609 = vmatpush.bf16.msra.mxu0 %v5570
      %5610 = vmatmul.bf16.gmra.mxu0 %v5293
      %v5611 = vpop.f32.mrf.mxu0
      %v5612 = vadd.f32 %v5448, %v5611
      %v5613 = vpop.f32.mrf.mxu0
      %v5614 = vadd.f32 %v5450, %v5613
      %5615 = vmatmul.bf16.gmra.mxu0 %v5294
      %v5616 = vpop.f32.mrf.mxu0
      %v5617 = vadd.f32 %v5453, %v5616
      %v5618 = vpop.f32.mrf.mxu0
      %v5619 = vadd.f32 %v5455, %v5618
      %5620 = vmatmul.bf16.gmra.mxu0 %v5295
      %v5621 = vpop.f32.mrf.mxu0
      %v5622 = vadd.f32 %v5458, %v5621
      %v5623 = vpop.f32.mrf.mxu0
      %v5624 = vadd.f32 %v5460, %v5623
      %5625 = vmatmul.bf16.gmra.mxu0 %v5296
      %v5626 = vpop.f32.mrf.mxu0
      %v5627 = vadd.f32 %v5463, %v5626
      %v5628 = vpop.f32.mrf.mxu0
      %v5629 = vadd.f32 %v5465, %v5628
      %5630 = vmatmul.bf16.gmra.mxu0 %v5297
      %v5631 = vpop.f32.mrf.mxu0
      %v5632 = vadd.f32 %v5468, %v5631
      %v5633 = vpop.f32.mrf.mxu0
      %v5634 = vadd.f32 %v5470, %v5633
      %5635 = vmatmul.bf16.gmra.mxu0 %v5298
      %v5636 = vpop.f32.mrf.mxu0
      %v5637 = vadd.f32 %v5473, %v5636
      %v5638 = vpop.f32.mrf.mxu0
      %v5639 = vadd.f32 %v5475, %v5638
      %5640 = vdwg.mxu0
      %5641 = vmatpush.bf16.msra.mxu0 %v5585
      %5642 = vmatpush.bf16.msra.mxu0 %v5583
      %5643 = vmatpush.bf16.msra.mxu0 %v5581
      %5644 = vmatpush.bf16.msra.mxu0 %v5579
      %5645 = vmatpush.bf16.msra.mxu0 %v5577
      %5646 = vmatpush.bf16.msra.mxu0 %v5575
      %5647 = vmatpush.bf16.msra.mxu0 %v5573
      %5648 = vmatpush.bf16.msra.mxu0 %v5571
      %5649 = vmatmul.bf16.gmra.mxu0 %v5293
      %v5650 = vpop.f32.mrf.mxu0
      %v5651 = vadd.f32 %v5487, %v5650
      %v5652 = vpop.f32.mrf.mxu0
      %v5653 = vadd.f32 %v5489, %v5652
      %5654 = vmatmul.bf16.gmra.mxu0 %v5294
      %v5655 = vpop.f32.mrf.mxu0
      %v5656 = vadd.f32 %v5492, %v5655
      %v5657 = vpop.f32.mrf.mxu0
      %v5658 = vadd.f32 %v5494, %v5657
      %5659 = vmatmul.bf16.gmra.mxu0 %v5295
      %v5660 = vpop.f32.mrf.mxu0
      %v5661 = vadd.f32 %v5497, %v5660
      %v5662 = vpop.f32.mrf.mxu0
      %v5663 = vadd.f32 %v5499, %v5662
      %5664 = vmatmul.bf16.gmra.mxu0 %v5296
      %v5665 = vpop.f32.mrf.mxu0
      %v5666 = vadd.f32 %v5502, %v5665
      %v5667 = vpop.f32.mrf.mxu0
      %v5668 = vadd.f32 %v5504, %v5667
      %5669 = vmatmul.bf16.gmra.mxu0 %v5297
      %v5670 = vpop.f32.mrf.mxu0
      %v5671 = vadd.f32 %v5507, %v5670
      %v5672 = vpop.f32.mrf.mxu0
      %v5673 = vadd.f32 %v5509, %v5672
      %5674 = vmatmul.bf16.gmra.mxu0 %v5298
      %v5675 = vpop.f32.mrf.mxu0
      %v5676 = vadd.f32 %v5512, %v5675
      %v5677 = vpop.f32.mrf.mxu0
      %v5678 = vadd.f32 %v5514, %v5677
      %5679 = vdwg.mxu0
      %v5680 = vld [vmem:[%s246 + $0x60] sm:$0xe]
      %v5681 = vld [vmem:[%s726] sm:$0xff]
      %v5682 = vld [vmem:[%s726 + $0x8] sm:$0xff]
      %v5683 = vld [vmem:[%s726 + $0x10] sm:$0xff]
      %v5684 = vld [vmem:[%s726 + $0x18] sm:$0xff]
      %v5685 = vld [vmem:[%s726 + $0x20] sm:$0xff]
      %v5686 = vld [vmem:[%s726 + $0x28] sm:$0xff]
      %v5687 = vld [vmem:[%s726 + $0x30] sm:$0xff]
      %v5688 = vld [vmem:[%s726 + $0x38] sm:$0xff]
      %v5689 = vld [vmem:[%s726 + $0x40] sm:$0xff]
      %v5690 = vld [vmem:[%s726 + $0x48] sm:$0xff]
      %v5691 = vld [vmem:[%s726 + $0x50] sm:$0xff]
      %v5692 = vld [vmem:[%s726 + $0x58] sm:$0xff]
      %v5693 = vld [vmem:[%s726 + $0x60] sm:$0xff]
      %v5694 = vld [vmem:[%s726 + $0x68] sm:$0xff]
      %v5695 = vld [vmem:[%s726 + $0x70] sm:$0xff]
      %v5696 = vld [vmem:[%s726 + $0x78] sm:$0xff]
      %v5698 = vunpack.c.l.b16 %v5680
      %v5699 = vpack.c.b16 %v5281, %v5698
      %v5700 = vrot.slane %v5699, 1
      %v5701 = vrot.slane %v5294, 1
      %v5702 = vsel %vm746, %v5700, %v5701
      %v5703 = vrot.slane %v5295, 1
      %v5704 = vsel %vm746, %v5701, %v5703
      %v5705 = vrot.slane %v5296, 1
      %v5706 = vsel %vm746, %v5703, %v5705
      %v5707 = vrot.slane %v5297, 1
      %v5708 = vsel %vm746, %v5705, %v5707
      %v5709 = vrot.slane %v5298, 1
      %v5710 = vsel %vm746, %v5707, %v5709
      %v5711 = vrot.slane %v5299, 1
      %v5712 = vsel %vm746, %v5709, %v5711
      %v5735 = vunpack.c.l.b16 %v5681
      %v5736 = vunpack.c.h.b16 %v5681
      %v5737 = vunpack.c.l.b16 %v5682
      %v5738 = vunpack.c.h.b16 %v5682
      %v5739 = vunpack.c.l.b16 %v5683
      %v5740 = vunpack.c.h.b16 %v5683
      %v5741 = vunpack.c.l.b16 %v5684
      %v5742 = vunpack.c.h.b16 %v5684
      %v5743 = vunpack.c.l.b16 %v5685
      %v5744 = vunpack.c.h.b16 %v5685
      %v5745 = vunpack.c.l.b16 %v5686
      %v5746 = vunpack.c.h.b16 %v5686
      %v5747 = vunpack.c.l.b16 %v5687
      %v5748 = vunpack.c.h.b16 %v5687
      %v5749 = vunpack.c.l.b16 %v5688
      %v5750 = vunpack.c.h.b16 %v5688
      %v5751 = vunpack.c.l.b16 %v5689
      %v5752 = vunpack.c.h.b16 %v5689
      %v5753 = vunpack.c.l.b16 %v5690
      %v5754 = vunpack.c.h.b16 %v5690
      %v5755 = vunpack.c.l.b16 %v5691
      %v5756 = vunpack.c.h.b16 %v5691
      %v5757 = vunpack.c.l.b16 %v5692
      %v5758 = vunpack.c.h.b16 %v5692
      %v5759 = vunpack.c.l.b16 %v5693
      %v5760 = vunpack.c.h.b16 %v5693
      %v5761 = vunpack.c.l.b16 %v5694
      %v5762 = vunpack.c.h.b16 %v5694
      %v5763 = vunpack.c.l.b16 %v5695
      %v5764 = vunpack.c.h.b16 %v5695
      %v5765 = vunpack.c.l.b16 %v5696
      %v5766 = vunpack.c.h.b16 %v5696
      %v5767 = vpack.c.b16 %v5737, %v5735
      %v5768 = vpack.c.b16 %v5738, %v5736
      %v5769 = vpack.c.b16 %v5741, %v5739
      %v5770 = vpack.c.b16 %v5742, %v5740
      %v5771 = vpack.c.b16 %v5745, %v5743
      %v5772 = vpack.c.b16 %v5746, %v5744
      %v5773 = vpack.c.b16 %v5749, %v5747
      %v5774 = vpack.c.b16 %v5750, %v5748
      %v5775 = vpack.c.b16 %v5753, %v5751
      %v5776 = vpack.c.b16 %v5754, %v5752
      %v5777 = vpack.c.b16 %v5757, %v5755
      %v5778 = vpack.c.b16 %v5758, %v5756
      %v5779 = vpack.c.b16 %v5761, %v5759
      %v5780 = vpack.c.b16 %v5762, %v5760
      %v5781 = vpack.c.b16 %v5765, %v5763
      %v5782 = vpack.c.b16 %v5766, %v5764
      %5799 = vmatpush.bf16.msra.mxu0 %v5781
      %5800 = vmatpush.bf16.msra.mxu0 %v5779
      %5801 = vmatpush.bf16.msra.mxu0 %v5777
      %5802 = vmatpush.bf16.msra.mxu0 %v5775
      %5803 = vmatpush.bf16.msra.mxu0 %v5773
      %5804 = vmatpush.bf16.msra.mxu0 %v5771
      %5805 = vmatpush.bf16.msra.mxu0 %v5769
      %5806 = vmatpush.bf16.msra.mxu0 %v5767
      %5807 = vmatmul.bf16.gmra.mxu0 %v5702
      %v5808 = vpop.f32.mrf.mxu0
      %v5809 = vadd.f32 0.0, %v5808
      %v5810 = vpop.f32.mrf.mxu0
      %v5811 = vadd.f32 0.0, %v5810
      %5812 = vmatmul.bf16.gmra.mxu0 %v5704
      %v5813 = vpop.f32.mrf.mxu0
      %v5814 = vadd.f32 0.0, %v5813
      %v5815 = vpop.f32.mrf.mxu0
      %v5816 = vadd.f32 0.0, %v5815
      %5817 = vmatmul.bf16.gmra.mxu0 %v5706
      %v5818 = vpop.f32.mrf.mxu0
      %v5819 = vadd.f32 0.0, %v5818
      %v5820 = vpop.f32.mrf.mxu0
      %v5821 = vadd.f32 0.0, %v5820
      %5822 = vmatmul.bf16.gmra.mxu0 %v5708
      %v5823 = vpop.f32.mrf.mxu0
      %v5824 = vadd.f32 0.0, %v5823
      %v5825 = vpop.f32.mrf.mxu0
      %v5826 = vadd.f32 0.0, %v5825
      %5827 = vmatmul.bf16.gmra.mxu0 %v5710
      %v5828 = vpop.f32.mrf.mxu0
      %v5829 = vadd.f32 0.0, %v5828
      %v5830 = vpop.f32.mrf.mxu0
      %v5831 = vadd.f32 0.0, %v5830
      %5832 = vmatmul.bf16.gmra.mxu0 %v5712
      %v5833 = vpop.f32.mrf.mxu0
      %v5834 = vadd.f32 0.0, %v5833
      %v5835 = vpop.f32.mrf.mxu0
      %v5836 = vadd.f32 0.0, %v5835
      %5837 = vdwg.mxu0
      %5838 = vmatpush.bf16.msra.mxu0 %v5782
      %5839 = vmatpush.bf16.msra.mxu0 %v5780
      %5840 = vmatpush.bf16.msra.mxu0 %v5778
      %5841 = vmatpush.bf16.msra.mxu0 %v5776
      %5842 = vmatpush.bf16.msra.mxu0 %v5774
      %5843 = vmatpush.bf16.msra.mxu0 %v5772
      %5844 = vmatpush.bf16.msra.mxu0 %v5770
      %5845 = vmatpush.bf16.msra.mxu0 %v5768
      %5846 = vmatmul.bf16.gmra.mxu0 %v5702
      %v5847 = vpop.f32.mrf.mxu0
      %v5848 = vadd.f32 0.0, %v5847
      %v5849 = vpop.f32.mrf.mxu0
      %v5850 = vadd.f32 0.0, %v5849
      %5851 = vmatmul.bf16.gmra.mxu0 %v5704
      %v5852 = vpop.f32.mrf.mxu0
      %v5853 = vadd.f32 0.0, %v5852
      %v5854 = vpop.f32.mrf.mxu0
      %v5855 = vadd.f32 0.0, %v5854
      %5856 = vmatmul.bf16.gmra.mxu0 %v5706
      %v5857 = vpop.f32.mrf.mxu0
      %v5858 = vadd.f32 0.0, %v5857
      %v5859 = vpop.f32.mrf.mxu0
      %v5860 = vadd.f32 0.0, %v5859
      %5861 = vmatmul.bf16.gmra.mxu0 %v5708
      %v5862 = vpop.f32.mrf.mxu0
      %v5863 = vadd.f32 0.0, %v5862
      %v5864 = vpop.f32.mrf.mxu0
      %v5865 = vadd.f32 0.0, %v5864
      %5866 = vmatmul.bf16.gmra.mxu0 %v5710
      %v5867 = vpop.f32.mrf.mxu0
      %v5868 = vadd.f32 0.0, %v5867
      %v5869 = vpop.f32.mrf.mxu0
      %v5870 = vadd.f32 0.0, %v5869
      %5871 = vmatmul.bf16.gmra.mxu0 %v5712
      %v5872 = vpop.f32.mrf.mxu0
      %v5873 = vadd.f32 0.0, %v5872
      %v5874 = vpop.f32.mrf.mxu0
      %v5875 = vadd.f32 0.0, %v5874
      %5876 = vdwg.mxu0
      %v5877 = vadd.f32 %v5612, %v5809
      %v5878 = vadd.f32 %v5651, %v5848
      %v5879 = vadd.f32 %v5614, %v5811
      %v5880 = vadd.f32 %v5653, %v5850
      %v5881 = vadd.f32 %v5617, %v5814
      %v5882 = vadd.f32 %v5656, %v5853
      %v5883 = vadd.f32 %v5619, %v5816
      %v5884 = vadd.f32 %v5658, %v5855
      %v5885 = vadd.f32 %v5622, %v5819
      %v5886 = vadd.f32 %v5661, %v5858
      %v5887 = vadd.f32 %v5624, %v5821
      %v5888 = vadd.f32 %v5663, %v5860
      %v5889 = vadd.f32 %v5627, %v5824
      %v5890 = vadd.f32 %v5666, %v5863
      %v5891 = vadd.f32 %v5629, %v5826
      %v5892 = vadd.f32 %v5668, %v5865
      %v5893 = vadd.f32 %v5632, %v5829
      %v5894 = vadd.f32 %v5671, %v5868
      %v5895 = vadd.f32 %v5634, %v5831
      %v5896 = vadd.f32 %v5673, %v5870
      %v5897 = vadd.f32 %v5637, %v5834
      %v5898 = vadd.f32 %v5676, %v5873
      %v5899 = vadd.f32 %v5639, %v5836
      %v5900 = vadd.f32 %v5678, %v5875
      %v5901 = vld [vmem:[%s246 + $0x68] sm:$0xe]
      %v5902 = vld [vmem:[%s246 + $0x6c] sm:$0xf]
      %v5903 = vld [vmem:[%s246 + $0x70] sm:$0xf]
      %v5904 = vld [vmem:[%s246 + $0x74] sm:$0xf]
      %v5905 = vld [vmem:[%s246 + $0x78] sm:$0xf]
      %v5906 = vld [vmem:[%s246 + $0x7c] sm:$0xf]
      %v5907 = vld [vmem:[%s246 + $0x80] sm:$0xf]
      %v5908 = vld [vmem:[%s246 + $0x84] sm:$0xf]
      %v5909 = vld [vmem:[%s246 + $0x88] sm:$0xf]
      %v5910 = vld [vmem:[%s246 + $0x8c] sm:$0xf]
      %v5911 = vld [vmem:[%s246 + $0x90] sm:$0xf]
      %v5912 = vld [vmem:[%s246 + $0x94] sm:$0xf]
      %v5913 = vld [vmem:[%s246 + $0x98] sm:$0x1]
      %v5914 = vld [vmem:[%s961] sm:$0xff]
      %v5915 = vld [vmem:[%s961 + $0x8] sm:$0xff]
      %v5916 = vld [vmem:[%s961 + $0x10] sm:$0xff]
      %v5917 = vld [vmem:[%s961 + $0x18] sm:$0xff]
      %v5918 = vld [vmem:[%s961 + $0x20] sm:$0xff]
      %v5919 = vld [vmem:[%s961 + $0x28] sm:$0xff]
      %v5920 = vld [vmem:[%s961 + $0x30] sm:$0xff]
      %v5921 = vld [vmem:[%s961 + $0x38] sm:$0xff]
      %v5922 = vld [vmem:[%s961 + $0x40] sm:$0xff]
      %v5923 = vld [vmem:[%s961 + $0x48] sm:$0xff]
      %v5924 = vld [vmem:[%s961 + $0x50] sm:$0xff]
      %v5925 = vld [vmem:[%s961 + $0x58] sm:$0xff]
      %v5926 = vld [vmem:[%s961 + $0x60] sm:$0xff]
      %v5927 = vld [vmem:[%s961 + $0x68] sm:$0xff]
      %v5928 = vld [vmem:[%s961 + $0x70] sm:$0xff]
      %v5929 = vld [vmem:[%s961 + $0x78] sm:$0xff]
      %v5943 = vunpack.c.l.b16 %v5901
      %v5944 = vunpack.c.l.b16 %v5902
      %v5945 = vunpack.c.l.b16 %v5903
      %v5946 = vunpack.c.l.b16 %v5904
      %v5947 = vunpack.c.l.b16 %v5905
      %v5948 = vunpack.c.l.b16 %v5906
      %v5949 = vunpack.c.l.b16 %v5907
      %v5950 = vunpack.c.l.b16 %v5908
      %v5951 = vunpack.c.l.b16 %v5909
      %v5952 = vunpack.c.l.b16 %v5910
      %v5953 = vunpack.c.l.b16 %v5911
      %v5954 = vunpack.c.l.b16 %v5912
      %v5955 = vunpack.c.l.b16 %v5913
      %v5956 = vpack.c.b16 %v5944, %v5943
      %v5957 = vpack.c.b16 %v5946, %v5945
      %v5958 = vpack.c.b16 %v5948, %v5947
      %v5959 = vpack.c.b16 %v5950, %v5949
      %v5960 = vpack.c.b16 %v5952, %v5951
      %v5961 = vpack.c.b16 %v5954, %v5953
      %v5962 = vpack.c.b16 %v5955, %v5955
      %v5963 = vrot.slane %v5956, 1
      %v5964 = vrot.slane %v5957, 1
      %v5965 = vsel %vm746, %v5963, %v5964
      %v5966 = vrot.slane %v5958, 1
      %v5967 = vsel %vm746, %v5964, %v5966
      %v5968 = vrot.slane %v5959, 1
      %v5969 = vsel %vm746, %v5966, %v5968
      %v5970 = vrot.slane %v5960, 1
      %v5971 = vsel %vm746, %v5968, %v5970
      %v5972 = vrot.slane %v5961, 1
      %v5973 = vsel %vm746, %v5970, %v5972
      %v5974 = vrot.slane %v5962, 1
      %v5975 = vsel %vm746, %v5972, %v5974
      %v5998 = vunpack.c.l.b16 %v5914
      %v5999 = vunpack.c.h.b16 %v5914
      %v6000 = vunpack.c.l.b16 %v5915
      %v6001 = vunpack.c.h.b16 %v5915
      %v6002 = vunpack.c.l.b16 %v5916
      %v6003 = vunpack.c.h.b16 %v5916
      %v6004 = vunpack.c.l.b16 %v5917
      %v6005 = vunpack.c.h.b16 %v5917
      %v6006 = vunpack.c.l.b16 %v5918
      %v6007 = vunpack.c.h.b16 %v5918
      %v6008 = vunpack.c.l.b16 %v5919
      %v6009 = vunpack.c.h.b16 %v5919
      %v6010 = vunpack.c.l.b16 %v5920
      %v6011 = vunpack.c.h.b16 %v5920
      %v6012 = vunpack.c.l.b16 %v5921
      %v6013 = vunpack.c.h.b16 %v5921
      %v6014 = vunpack.c.l.b16 %v5922
      %v6015 = vunpack.c.h.b16 %v5922
      %v6016 = vunpack.c.l.b16 %v5923
      %v6017 = vunpack.c.h.b16 %v5923
      %v6018 = vunpack.c.l.b16 %v5924
      %v6019 = vunpack.c.h.b16 %v5924
      %v6020 = vunpack.c.l.b16 %v5925
      %v6021 = vunpack.c.h.b16 %v5925
      %v6022 = vunpack.c.l.b16 %v5926
      %v6023 = vunpack.c.h.b16 %v5926
      %v6024 = vunpack.c.l.b16 %v5927
      %v6025 = vunpack.c.h.b16 %v5927
      %v6026 = vunpack.c.l.b16 %v5928
      %v6027 = vunpack.c.h.b16 %v5928
      %v6028 = vunpack.c.l.b16 %v5929
      %v6029 = vunpack.c.h.b16 %v5929
      %v6030 = vpack.c.b16 %v6000, %v5998
      %v6031 = vpack.c.b16 %v6001, %v5999
      %v6032 = vpack.c.b16 %v6004, %v6002
      %v6033 = vpack.c.b16 %v6005, %v6003
      %v6034 = vpack.c.b16 %v6008, %v6006
      %v6035 = vpack.c.b16 %v6009, %v6007
      %v6036 = vpack.c.b16 %v6012, %v6010
      %v6037 = vpack.c.b16 %v6013, %v6011
      %v6038 = vpack.c.b16 %v6016, %v6014
      %v6039 = vpack.c.b16 %v6017, %v6015
      %v6040 = vpack.c.b16 %v6020, %v6018
      %v6041 = vpack.c.b16 %v6021, %v6019
      %v6042 = vpack.c.b16 %v6024, %v6022
      %v6043 = vpack.c.b16 %v6025, %v6023
      %v6044 = vpack.c.b16 %v6028, %v6026
      %v6045 = vpack.c.b16 %v6029, %v6027
      %6062 = vmatpush.bf16.msra.mxu0 %v6044
      %6063 = vmatpush.bf16.msra.mxu0 %v6042
      %6064 = vmatpush.bf16.msra.mxu0 %v6040
      %6065 = vmatpush.bf16.msra.mxu0 %v6038
      %6066 = vmatpush.bf16.msra.mxu0 %v6036
      %6067 = vmatpush.bf16.msra.mxu0 %v6034
      %6068 = vmatpush.bf16.msra.mxu0 %v6032
      %6069 = vmatpush.bf16.msra.mxu0 %v6030
      %6070 = vmatmul.bf16.gmra.mxu0 %v5965
      %v6071 = vpop.f32.mrf.mxu0
      %v6072 = vadd.f32 0.0, %v6071
      %v6073 = vpop.f32.mrf.mxu0
      %v6074 = vadd.f32 0.0, %v6073
      %6075 = vmatmul.bf16.gmra.mxu0 %v5967
      %v6076 = vpop.f32.mrf.mxu0
      %v6077 = vadd.f32 0.0, %v6076
      %v6078 = vpop.f32.mrf.mxu0
      %v6079 = vadd.f32 0.0, %v6078
      %6080 = vmatmul.bf16.gmra.mxu0 %v5969
      %v6081 = vpop.f32.mrf.mxu0
      %v6082 = vadd.f32 0.0, %v6081
      %v6083 = vpop.f32.mrf.mxu0
      %v6084 = vadd.f32 0.0, %v6083
      %6085 = vmatmul.bf16.gmra.mxu0 %v5971
      %v6086 = vpop.f32.mrf.mxu0
      %v6087 = vadd.f32 0.0, %v6086
      %v6088 = vpop.f32.mrf.mxu0
      %v6089 = vadd.f32 0.0, %v6088
      %6090 = vmatmul.bf16.gmra.mxu0 %v5973
      %v6091 = vpop.f32.mrf.mxu0
      %v6092 = vadd.f32 0.0, %v6091
      %v6093 = vpop.f32.mrf.mxu0
      %v6094 = vadd.f32 0.0, %v6093
      %6095 = vmatmul.bf16.gmra.mxu0 %v5975
      %v6096 = vpop.f32.mrf.mxu0
      %v6097 = vadd.f32 0.0, %v6096
      %v6098 = vpop.f32.mrf.mxu0
      %v6099 = vadd.f32 0.0, %v6098
      %6100 = vdwg.mxu0
      %6101 = vmatpush.bf16.msra.mxu0 %v6045
      %6102 = vmatpush.bf16.msra.mxu0 %v6043
      %6103 = vmatpush.bf16.msra.mxu0 %v6041
      %6104 = vmatpush.bf16.msra.mxu0 %v6039
      %6105 = vmatpush.bf16.msra.mxu0 %v6037
      %6106 = vmatpush.bf16.msra.mxu0 %v6035
      %6107 = vmatpush.bf16.msra.mxu0 %v6033
      %6108 = vmatpush.bf16.msra.mxu0 %v6031
      %6109 = vmatmul.bf16.gmra.mxu0 %v5965
      %v6110 = vpop.f32.mrf.mxu0
      %v6111 = vadd.f32 0.0, %v6110
      %v6112 = vpop.f32.mrf.mxu0
      %v6113 = vadd.f32 0.0, %v6112
      %6114 = vmatmul.bf16.gmra.mxu0 %v5967
      %v6115 = vpop.f32.mrf.mxu0
      %v6116 = vadd.f32 0.0, %v6115
      %v6117 = vpop.f32.mrf.mxu0
      %v6118 = vadd.f32 0.0, %v6117
      %6119 = vmatmul.bf16.gmra.mxu0 %v5969
      %v6120 = vpop.f32.mrf.mxu0
      %v6121 = vadd.f32 0.0, %v6120
      %v6122 = vpop.f32.mrf.mxu0
      %v6123 = vadd.f32 0.0, %v6122
      %6124 = vmatmul.bf16.gmra.mxu0 %v5971
      %v6125 = vpop.f32.mrf.mxu0
      %v6126 = vadd.f32 0.0, %v6125
      %v6127 = vpop.f32.mrf.mxu0
      %v6128 = vadd.f32 0.0, %v6127
      %6129 = vmatmul.bf16.gmra.mxu0 %v5973
      %v6130 = vpop.f32.mrf.mxu0
      %v6131 = vadd.f32 0.0, %v6130
      %v6132 = vpop.f32.mrf.mxu0
      %v6133 = vadd.f32 0.0, %v6132
      %6134 = vmatmul.bf16.gmra.mxu0 %v5975
      %v6135 = vpop.f32.mrf.mxu0
      %v6136 = vadd.f32 0.0, %v6135
      %v6137 = vpop.f32.mrf.mxu0
      %v6138 = vadd.f32 0.0, %v6137
      %6139 = vdwg.mxu0
      %v6140 = vadd.f32 %v5877, %v6072
      %v6141 = vadd.f32 %v5878, %v6111
      %v6142 = vadd.f32 %v5879, %v6074
      %v6143 = vadd.f32 %v5880, %v6113
      %v6144 = vadd.f32 %v5881, %v6077
      %v6145 = vadd.f32 %v5882, %v6116
      %v6146 = vadd.f32 %v5883, %v6079
      %v6147 = vadd.f32 %v5884, %v6118
      %v6148 = vadd.f32 %v5885, %v6082
      %v6149 = vadd.f32 %v5886, %v6121
      %v6150 = vadd.f32 %v5887, %v6084
      %v6151 = vadd.f32 %v5888, %v6123
      %v6152 = vadd.f32 %v5889, %v6087
      %v6153 = vadd.f32 %v5890, %v6126
      %v6154 = vadd.f32 %v5891, %v6089
      %v6155 = vadd.f32 %v5892, %v6128
      %v6156 = vadd.f32 %v5893, %v6092
      %v6157 = vadd.f32 %v5894, %v6131
      %v6158 = vadd.f32 %v5895, %v6094
      %v6159 = vadd.f32 %v5896, %v6133
      %v6160 = vadd.f32 %v5897, %v6097
      %v6161 = vadd.f32 %v5898, %v6136
      %v6162 = vadd.f32 %v5899, %v6099
      %v6163 = vadd.f32 %v5900, %v6138
      %v6164 = vld [vmem:[%s246 + $0x98] sm:$0x3]
      %v6165 = vld [vmem:[%s1213] sm:$0xff]
      %v6166 = vld [vmem:[%s1213 + $0x8] sm:$0xff]
      %v6167 = vld [vmem:[%s1213 + $0x10] sm:$0xff]
      %v6168 = vld [vmem:[%s1213 + $0x18] sm:$0xff]
      %v6169 = vld [vmem:[%s1213 + $0x20] sm:$0xff]
      %v6170 = vld [vmem:[%s1213 + $0x28] sm:$0xff]
      %v6171 = vld [vmem:[%s1213 + $0x30] sm:$0xff]
      %v6172 = vld [vmem:[%s1213 + $0x38] sm:$0xff]
      %v6173 = vld [vmem:[%s1213 + $0x40] sm:$0xff]
      %v6174 = vld [vmem:[%s1213 + $0x48] sm:$0xff]
      %v6175 = vld [vmem:[%s1213 + $0x50] sm:$0xff]
      %v6176 = vld [vmem:[%s1213 + $0x58] sm:$0xff]
      %v6177 = vld [vmem:[%s1213 + $0x60] sm:$0xff]
      %v6178 = vld [vmem:[%s1213 + $0x68] sm:$0xff]
      %v6179 = vld [vmem:[%s1213 + $0x70] sm:$0xff]
      %v6180 = vld [vmem:[%s1213 + $0x78] sm:$0xff]
      %v6182 = vunpack.c.l.b16 %v6164
      %v6183 = vpack.c.b16 %v6182, %v6182
      %v6185 = vshrl.u32 %v5956, 16
      %v6187 = vrot.slane %v6185, 1
      %v6188 = vshll.u32 %v5956, 16
      %v6190 = vrot.slane %v6188, 2
      %v6191 = vor.u32 %v6187, %v6190
      %v6193 = vshrl.u32 %v5957, 16
      %v6195 = vrot.slane %v6193, 1
      %v6196 = vshll.u32 %v5957, 16
      %v6198 = vrot.slane %v6196, 2
      %v6199 = vor.u32 %v6195, %v6198
      %v6200 = vsel %vm1233, %v6191, %v6199
      %v6202 = vshrl.u32 %v5958, 16
      %v6204 = vrot.slane %v6202, 1
      %v6205 = vshll.u32 %v5958, 16
      %v6207 = vrot.slane %v6205, 2
      %v6208 = vor.u32 %v6204, %v6207
      %v6209 = vsel %vm1233, %v6199, %v6208
      %v6211 = vshrl.u32 %v5959, 16
      %v6213 = vrot.slane %v6211, 1
      %v6214 = vshll.u32 %v5959, 16
      %v6216 = vrot.slane %v6214, 2
      %v6217 = vor.u32 %v6213, %v6216
      %v6218 = vsel %vm1233, %v6208, %v6217
      %v6220 = vshrl.u32 %v5960, 16
      %v6222 = vrot.slane %v6220, 1
      %v6223 = vshll.u32 %v5960, 16
      %v6225 = vrot.slane %v6223, 2
      %v6226 = vor.u32 %v6222, %v6225
      %v6227 = vsel %vm1233, %v6217, %v6226
      %v6229 = vshrl.u32 %v5961, 16
      %v6231 = vrot.slane %v6229, 1
      %v6232 = vshll.u32 %v5961, 16
      %v6234 = vrot.slane %v6232, 2
      %v6235 = vor.u32 %v6231, %v6234
      %v6236 = vsel %vm1233, %v6226, %v6235
      %v6238 = vshrl.u32 %v6183, 16
      %v6240 = vrot.slane %v6238, 1
      %v6241 = vshll.u32 %v6183, 16
      %v6243 = vrot.slane %v6241, 2
      %v6244 = vor.u32 %v6240, %v6243
      %v6245 = vsel %vm1233, %v6235, %v6244
      %v6268 = vunpack.c.l.b16 %v6165
      %v6269 = vunpack.c.h.b16 %v6165
      %v6270 = vunpack.c.l.b16 %v6166
      %v6271 = vunpack.c.h.b16 %v6166
      %v6272 = vunpack.c.l.b16 %v6167
      %v6273 = vunpack.c.h.b16 %v6167
      %v6274 = vunpack.c.l.b16 %v6168
      %v6275 = vunpack.c.h.b16 %v6168
      %v6276 = vunpack.c.l.b16 %v6169
      %v6277 = vunpack.c.h.b16 %v6169
      %v6278 = vunpack.c.l.b16 %v6170
      %v6279 = vunpack.c.h.b16 %v6170
      %v6280 = vunpack.c.l.b16 %v6171
      %v6281 = vunpack.c.h.b16 %v6171
      %v6282 = vunpack.c.l.b16 %v6172
      %v6283 = vunpack.c.h.b16 %v6172
      %v6284 = vunpack.c.l.b16 %v6173
      %v6285 = vunpack.c.h.b16 %v6173
      %v6286 = vunpack.c.l.b16 %v6174
      %v6287 = vunpack.c.h.b16 %v6174
      %v6288 = vunpack.c.l.b16 %v6175
      %v6289 = vunpack.c.h.b16 %v6175
      %v6290 = vunpack.c.l.b16 %v6176
      %v6291 = vunpack.c.h.b16 %v6176
      %v6292 = vunpack.c.l.b16 %v6177
      %v6293 = vunpack.c.h.b16 %v6177
      %v6294 = vunpack.c.l.b16 %v6178
      %v6295 = vunpack.c.h.b16 %v6178
      %v6296 = vunpack.c.l.b16 %v6179
      %v6297 = vunpack.c.h.b16 %v6179
      %v6298 = vunpack.c.l.b16 %v6180
      %v6299 = vunpack.c.h.b16 %v6180
      %v6300 = vpack.c.b16 %v6270, %v6268
      %v6301 = vpack.c.b16 %v6271, %v6269
      %v6302 = vpack.c.b16 %v6274, %v6272
      %v6303 = vpack.c.b16 %v6275, %v6273
      %v6304 = vpack.c.b16 %v6278, %v6276
      %v6305 = vpack.c.b16 %v6279, %v6277
      %v6306 = vpack.c.b16 %v6282, %v6280
      %v6307 = vpack.c.b16 %v6283, %v6281
      %v6308 = vpack.c.b16 %v6286, %v6284
      %v6309 = vpack.c.b16 %v6287, %v6285
      %v6310 = vpack.c.b16 %v6290, %v6288
      %v6311 = vpack.c.b16 %v6291, %v6289
      %v6312 = vpack.c.b16 %v6294, %v6292
      %v6313 = vpack.c.b16 %v6295, %v6293
      %v6314 = vpack.c.b16 %v6298, %v6296
      %v6315 = vpack.c.b16 %v6299, %v6297
      %6332 = vmatpush.bf16.msra.mxu0 %v6314
      %6333 = vmatpush.bf16.msra.mxu0 %v6312
      %6334 = vmatpush.bf16.msra.mxu0 %v6310
      %6335 = vmatpush.bf16.msra.mxu0 %v6308
      %6336 = vmatpush.bf16.msra.mxu0 %v6306
      %6337 = vmatpush.bf16.msra.mxu0 %v6304
      %6338 = vmatpush.bf16.msra.mxu0 %v6302
      %6339 = vmatpush.bf16.msra.mxu0 %v6300
      %6340 = vmatmul.bf16.gmra.mxu0 %v6200
      %v6341 = vpop.f32.mrf.mxu0
      %v6342 = vadd.f32 0.0, %v6341
      %v6343 = vpop.f32.mrf.mxu0
      %v6344 = vadd.f32 0.0, %v6343
      %6345 = vmatmul.bf16.gmra.mxu0 %v6209
      %v6346 = vpop.f32.mrf.mxu0
      %v6347 = vadd.f32 0.0, %v6346
      %v6348 = vpop.f32.mrf.mxu0
      %v6349 = vadd.f32 0.0, %v6348
      %6350 = vmatmul.bf16.gmra.mxu0 %v6218
      %v6351 = vpop.f32.mrf.mxu0
      %v6352 = vadd.f32 0.0, %v6351
      %v6353 = vpop.f32.mrf.mxu0
      %v6354 = vadd.f32 0.0, %v6353
      %6355 = vmatmul.bf16.gmra.mxu0 %v6227
      %v6356 = vpop.f32.mrf.mxu0
      %v6357 = vadd.f32 0.0, %v6356
      %v6358 = vpop.f32.mrf.mxu0
      %v6359 = vadd.f32 0.0, %v6358
      %6360 = vmatmul.bf16.gmra.mxu0 %v6236
      %v6361 = vpop.f32.mrf.mxu0
      %v6362 = vadd.f32 0.0, %v6361
      %v6363 = vpop.f32.mrf.mxu0
      %v6364 = vadd.f32 0.0, %v6363
      %6365 = vmatmul.bf16.gmra.mxu0 %v6245
      %v6366 = vpop.f32.mrf.mxu0
      %v6367 = vadd.f32 0.0, %v6366
      %v6368 = vpop.f32.mrf.mxu0
      %v6369 = vadd.f32 0.0, %v6368
      %6370 = vdwg.mxu0
      %6371 = vmatpush.bf16.msra.mxu0 %v6315
      %6372 = vmatpush.bf16.msra.mxu0 %v6313
      %6373 = vmatpush.bf16.msra.mxu0 %v6311
      %6374 = vmatpush.bf16.msra.mxu0 %v6309
      %6375 = vmatpush.bf16.msra.mxu0 %v6307
      %6376 = vmatpush.bf16.msra.mxu0 %v6305
      %6377 = vmatpush.bf16.msra.mxu0 %v6303
      %6378 = vmatpush.bf16.msra.mxu0 %v6301
      %6379 = vmatmul.bf16.gmra.mxu0 %v6200
      %v6380 = vpop.f32.mrf.mxu0
      %v6381 = vadd.f32 0.0, %v6380
      %v6382 = vpop.f32.mrf.mxu0
      %v6383 = vadd.f32 0.0, %v6382
      %6384 = vmatmul.bf16.gmra.mxu0 %v6209
      %v6385 = vpop.f32.mrf.mxu0
      %v6386 = vadd.f32 0.0, %v6385
      %v6387 = vpop.f32.mrf.mxu0
      %v6388 = vadd.f32 0.0, %v6387
      %6389 = vmatmul.bf16.gmra.mxu0 %v6218
      %v6390 = vpop.f32.mrf.mxu0
      %v6391 = vadd.f32 0.0, %v6390
      %v6392 = vpop.f32.mrf.mxu0
      %v6393 = vadd.f32 0.0, %v6392
      %6394 = vmatmul.bf16.gmra.mxu0 %v6227
      %v6395 = vpop.f32.mrf.mxu0
      %v6396 = vadd.f32 0.0, %v6395
      %v6397 = vpop.f32.mrf.mxu0
      %v6398 = vadd.f32 0.0, %v6397
      %6399 = vmatmul.bf16.gmra.mxu0 %v6236
      %v6400 = vpop.f32.mrf.mxu0
      %v6401 = vadd.f32 0.0, %v6400
      %v6402 = vpop.f32.mrf.mxu0
      %v6403 = vadd.f32 0.0, %v6402
      %6404 = vmatmul.bf16.gmra.mxu0 %v6245
      %v6405 = vpop.f32.mrf.mxu0
      %v6406 = vadd.f32 0.0, %v6405
      %v6407 = vpop.f32.mrf.mxu0
      %v6408 = vadd.f32 0.0, %v6407
      %6409 = vdwg.mxu0
      %v6410 = vadd.f32 %v6140, %v6342
      %v6411 = vadd.f32 %v6141, %v6381
      %v6412 = vadd.f32 %v6142, %v6344
      %v6413 = vadd.f32 %v6143, %v6383
      %v6414 = vadd.f32 %v6144, %v6347
      %v6415 = vadd.f32 %v6145, %v6386
      %v6416 = vadd.f32 %v6146, %v6349
      %v6417 = vadd.f32 %v6147, %v6388
      %v6418 = vadd.f32 %v6148, %v6352
      %v6419 = vadd.f32 %v6149, %v6391
      %v6420 = vadd.f32 %v6150, %v6354
      %v6421 = vadd.f32 %v6151, %v6393
      %v6422 = vadd.f32 %v6152, %v6357
      %v6423 = vadd.f32 %v6153, %v6396
      %v6424 = vadd.f32 %v6154, %v6359
      %v6425 = vadd.f32 %v6155, %v6398
      %v6426 = vadd.f32 %v6156, %v6362
      %v6427 = vadd.f32 %v6157, %v6401
      %v6428 = vadd.f32 %v6158, %v6364
      %v6429 = vadd.f32 %v6159, %v6403
      %v6430 = vadd.f32 %v6160, %v6367
      %v6431 = vadd.f32 %v6161, %v6406
      %v6432 = vadd.f32 %v6162, %v6369
      %v6433 = vadd.f32 %v6163, %v6408
      %v6434 = vld [vmem:[%s246 + $0x68] sm:$0xc]
      %v6435 = vld [vmem:[%s1485] sm:$0xff]
      %v6436 = vld [vmem:[%s1485 + $0x8] sm:$0xff]
      %v6437 = vld [vmem:[%s1485 + $0x10] sm:$0xff]
      %v6438 = vld [vmem:[%s1485 + $0x18] sm:$0xff]
      %v6439 = vld [vmem:[%s1485 + $0x20] sm:$0xff]
      %v6440 = vld [vmem:[%s1485 + $0x28] sm:$0xff]
      %v6441 = vld [vmem:[%s1485 + $0x30] sm:$0xff]
      %v6442 = vld [vmem:[%s1485 + $0x38] sm:$0xff]
      %v6443 = vld [vmem:[%s1485 + $0x40] sm:$0xff]
      %v6444 = vld [vmem:[%s1485 + $0x48] sm:$0xff]
      %v6445 = vld [vmem:[%s1485 + $0x50] sm:$0xff]
      %v6446 = vld [vmem:[%s1485 + $0x58] sm:$0xff]
      %v6447 = vld [vmem:[%s1485 + $0x60] sm:$0xff]
      %v6448 = vld [vmem:[%s1485 + $0x68] sm:$0xff]
      %v6449 = vld [vmem:[%s1485 + $0x70] sm:$0xff]
      %v6450 = vld [vmem:[%s1485 + $0x78] sm:$0xff]
      %v6452 = vunpack.c.l.b16 %v6434
      %v6453 = vpack.c.b16 %v5944, %v6452
      %v6454 = vrot.slane %v6453, 2
      %v6455 = vrot.slane %v5957, 2
      %v6456 = vsel %vm1505, %v6454, %v6455
      %v6457 = vrot.slane %v5958, 2
      %v6458 = vsel %vm1505, %v6455, %v6457
      %v6459 = vrot.slane %v5959, 2
      %v6460 = vsel %vm1505, %v6457, %v6459
      %v6461 = vrot.slane %v5960, 2
      %v6462 = vsel %vm1505, %v6459, %v6461
      %v6463 = vrot.slane %v5961, 2
      %v6464 = vsel %vm1505, %v6461, %v6463
      %v6465 = vrot.slane %v6183, 2
      %v6466 = vsel %vm1505, %v6463, %v6465
      %v6489 = vunpack.c.l.b16 %v6435
      %v6490 = vunpack.c.h.b16 %v6435
      %v6491 = vunpack.c.l.b16 %v6436
      %v6492 = vunpack.c.h.b16 %v6436
      %v6493 = vunpack.c.l.b16 %v6437
      %v6494 = vunpack.c.h.b16 %v6437
      %v6495 = vunpack.c.l.b16 %v6438
      %v6496 = vunpack.c.h.b16 %v6438
      %v6497 = vunpack.c.l.b16 %v6439
      %v6498 = vunpack.c.h.b16 %v6439
      %v6499 = vunpack.c.l.b16 %v6440
      %v6500 = vunpack.c.h.b16 %v6440
      %v6501 = vunpack.c.l.b16 %v6441
      %v6502 = vunpack.c.h.b16 %v6441
      %v6503 = vunpack.c.l.b16 %v6442
      %v6504 = vunpack.c.h.b16 %v6442
      %v6505 = vunpack.c.l.b16 %v6443
      %v6506 = vunpack.c.h.b16 %v6443
      %v6507 = vunpack.c.l.b16 %v6444
      %v6508 = vunpack.c.h.b16 %v6444
      %v6509 = vunpack.c.l.b16 %v6445
      %v6510 = vunpack.c.h.b16 %v6445
      %v6511 = vunpack.c.l.b16 %v6446
      %v6512 = vunpack.c.h.b16 %v6446
      %v6513 = vunpack.c.l.b16 %v6447
      %v6514 = vunpack.c.h.b16 %v6447
      %v6515 = vunpack.c.l.b16 %v6448
      %v6516 = vunpack.c.h.b16 %v6448
      %v6517 = vunpack.c.l.b16 %v6449
      %v6518 = vunpack.c.h.b16 %v6449
      %v6519 = vunpack.c.l.b16 %v6450
      %v6520 = vunpack.c.h.b16 %v6450
      %v6521 = vpack.c.b16 %v6491, %v6489
      %v6522 = vpack.c.b16 %v6492, %v6490
      %v6523 = vpack.c.b16 %v6495, %v6493
      %v6524 = vpack.c.b16 %v6496, %v6494
      %v6525 = vpack.c.b16 %v6499, %v6497
      %v6526 = vpack.c.b16 %v6500, %v6498
      %v6527 = vpack.c.b16 %v6503, %v6501
      %v6528 = vpack.c.b16 %v6504, %v6502
      %v6529 = vpack.c.b16 %v6507, %v6505
      %v6530 = vpack.c.b16 %v6508, %v6506
      %v6531 = vpack.c.b16 %v6511, %v6509
      %v6532 = vpack.c.b16 %v6512, %v6510
      %v6533 = vpack.c.b16 %v6515, %v6513
      %v6534 = vpack.c.b16 %v6516, %v6514
      %v6535 = vpack.c.b16 %v6519, %v6517
      %v6536 = vpack.c.b16 %v6520, %v6518
      %6553 = vmatpush.bf16.msra.mxu0 %v6535
      %6554 = vmatpush.bf16.msra.mxu0 %v6533
      %6555 = vmatpush.bf16.msra.mxu0 %v6531
      %6556 = vmatpush.bf16.msra.mxu0 %v6529
      %6557 = vmatpush.bf16.msra.mxu0 %v6527
      %6558 = vmatpush.bf16.msra.mxu0 %v6525
      %6559 = vmatpush.bf16.msra.mxu0 %v6523
      %6560 = vmatpush.bf16.msra.mxu0 %v6521
      %6561 = vmatmul.bf16.gmra.mxu0 %v6456
      %v6562 = vpop.f32.mrf.mxu0
      %v6563 = vadd.f32 0.0, %v6562
      %v6564 = vpop.f32.mrf.mxu0
      %v6565 = vadd.f32 0.0, %v6564
      %6566 = vmatmul.bf16.gmra.mxu0 %v6458
      %v6567 = vpop.f32.mrf.mxu0
      %v6568 = vadd.f32 0.0, %v6567
      %v6569 = vpop.f32.mrf.mxu0
      %v6570 = vadd.f32 0.0, %v6569
      %6571 = vmatmul.bf16.gmra.mxu0 %v6460
      %v6572 = vpop.f32.mrf.mxu0
      %v6573 = vadd.f32 0.0, %v6572
      %v6574 = vpop.f32.mrf.mxu0
      %v6575 = vadd.f32 0.0, %v6574
      %6576 = vmatmul.bf16.gmra.mxu0 %v6462
      %v6577 = vpop.f32.mrf.mxu0
      %v6578 = vadd.f32 0.0, %v6577
      %v6579 = vpop.f32.mrf.mxu0
      %v6580 = vadd.f32 0.0, %v6579
      %6581 = vmatmul.bf16.gmra.mxu0 %v6464
      %v6582 = vpop.f32.mrf.mxu0
      %v6583 = vadd.f32 0.0, %v6582
      %v6584 = vpop.f32.mrf.mxu0
      %v6585 = vadd.f32 0.0, %v6584
      %6586 = vmatmul.bf16.gmra.mxu0 %v6466
      %v6587 = vpop.f32.mrf.mxu0
      %v6588 = vadd.f32 0.0, %v6587
      %v6589 = vpop.f32.mrf.mxu0
      %v6590 = vadd.f32 0.0, %v6589
      %6591 = vdwg.mxu0
      %6592 = vmatpush.bf16.msra.mxu0 %v6536
      %6593 = vmatpush.bf16.msra.mxu0 %v6534
      %6594 = vmatpush.bf16.msra.mxu0 %v6532
      %6595 = vmatpush.bf16.msra.mxu0 %v6530
      %6596 = vmatpush.bf16.msra.mxu0 %v6528
      %6597 = vmatpush.bf16.msra.mxu0 %v6526
      %6598 = vmatpush.bf16.msra.mxu0 %v6524
      %6599 = vmatpush.bf16.msra.mxu0 %v6522
      %6600 = vmatmul.bf16.gmra.mxu0 %v6456
      %v6601 = vpop.f32.mrf.mxu0
      %v6602 = vadd.f32 0.0, %v6601
      %v6603 = vpop.f32.mrf.mxu0
      %v6604 = vadd.f32 0.0, %v6603
      %6605 = vmatmul.bf16.gmra.mxu0 %v6458
      %v6606 = vpop.f32.mrf.mxu0
      %v6607 = vadd.f32 0.0, %v6606
      %v6608 = vpop.f32.mrf.mxu0
      %v6609 = vadd.f32 0.0, %v6608
      %6610 = vmatmul.bf16.gmra.mxu0 %v6460
      %v6611 = vpop.f32.mrf.mxu0
      %v6612 = vadd.f32 0.0, %v6611
      %v6613 = vpop.f32.mrf.mxu0
      %v6614 = vadd.f32 0.0, %v6613
      %6615 = vmatmul.bf16.gmra.mxu0 %v6462
      %v6616 = vpop.f32.mrf.mxu0
      %v6617 = vadd.f32 0.0, %v6616
      %v6618 = vpop.f32.mrf.mxu0
      %v6619 = vadd.f32 0.0, %v6618
      %6620 = vmatmul.bf16.gmra.mxu0 %v6464
      %v6621 = vpop.f32.mrf.mxu0
      %v6622 = vadd.f32 0.0, %v6621
      %v6623 = vpop.f32.mrf.mxu0
      %v6624 = vadd.f32 0.0, %v6623
      %6625 = vmatmul.bf16.gmra.mxu0 %v6466
      %v6626 = vpop.f32.mrf.mxu0
      %v6627 = vadd.f32 0.0, %v6626
      %v6628 = vpop.f32.mrf.mxu0
      %v6629 = vadd.f32 0.0, %v6628
      %6630 = vdwg.mxu0
      %v6631 = vadd.f32 %v6410, %v6563
      %v6632 = vadd.f32 %v6411, %v6602
      %v6633 = vadd.f32 %v6412, %v6565
      %v6634 = vadd.f32 %v6413, %v6604
      %v6635 = vadd.f32 %v6414, %v6568
      %v6636 = vadd.f32 %v6415, %v6607
      %v6637 = vadd.f32 %v6416, %v6570
      %v6638 = vadd.f32 %v6417, %v6609
      %v6639 = vadd.f32 %v6418, %v6573
      %v6640 = vadd.f32 %v6419, %v6612
      %v6641 = vadd.f32 %v6420, %v6575
      %v6642 = vadd.f32 %v6421, %v6614
      %v6643 = vadd.f32 %v6422, %v6578
      %v6644 = vadd.f32 %v6423, %v6617
      %v6645 = vadd.f32 %v6424, %v6580
      %v6646 = vadd.f32 %v6425, %v6619
      %v6647 = vadd.f32 %v6426, %v6583
      %v6648 = vadd.f32 %v6427, %v6622
      %v6649 = vadd.f32 %v6428, %v6585
      %v6650 = vadd.f32 %v6429, %v6624
      %v6651 = vadd.f32 %v6430, %v6588
      %v6652 = vadd.f32 %v6431, %v6627
      %v6653 = vadd.f32 %v6432, %v6590
      %v6654 = vadd.f32 %v6433, %v6629
      %v6655 = vld [vmem:[%s246 + $0x70] sm:$0xc]
      %v6656 = vld [vmem:[%s246 + $0x74] sm:$0xf]
      %v6657 = vld [vmem:[%s246 + $0x78] sm:$0xf]
      %v6658 = vld [vmem:[%s246 + $0x7c] sm:$0xf]
      %v6659 = vld [vmem:[%s246 + $0x80] sm:$0xf]
      %v6660 = vld [vmem:[%s246 + $0x84] sm:$0xf]
      %v6661 = vld [vmem:[%s246 + $0x88] sm:$0xf]
      %v6662 = vld [vmem:[%s246 + $0x8c] sm:$0xf]
      %v6663 = vld [vmem:[%s246 + $0x90] sm:$0xf]
      %v6664 = vld [vmem:[%s246 + $0x94] sm:$0xf]
      %v6665 = vld [vmem:[%s246 + $0x98] sm:$0xf]
      %v6666 = vld [vmem:[%s246 + $0x9c] sm:$0xf]
      %v6667 = vld [vmem:[%s246 + $0xa0] sm:$0x3]
      %v6668 = vld [vmem:[%s1720] sm:$0xff]
      %v6669 = vld [vmem:[%s1720 + $0x8] sm:$0xff]
      %v6670 = vld [vmem:[%s1720 + $0x10] sm:$0xff]
      %v6671 = vld [vmem:[%s1720 + $0x18] sm:$0xff]
      %v6672 = vld [vmem:[%s1720 + $0x20] sm:$0xff]
      %v6673 = vld [vmem:[%s1720 + $0x28] sm:$0xff]
      %v6674 = vld [vmem:[%s1720 + $0x30] sm:$0xff]
      %v6675 = vld [vmem:[%s1720 + $0x38] sm:$0xff]
      %v6676 = vld [vmem:[%s1720 + $0x40] sm:$0xff]
      %v6677 = vld [vmem:[%s1720 + $0x48] sm:$0xff]
      %v6678 = vld [vmem:[%s1720 + $0x50] sm:$0xff]
      %v6679 = vld [vmem:[%s1720 + $0x58] sm:$0xff]
      %v6680 = vld [vmem:[%s1720 + $0x60] sm:$0xff]
      %v6681 = vld [vmem:[%s1720 + $0x68] sm:$0xff]
      %v6682 = vld [vmem:[%s1720 + $0x70] sm:$0xff]
      %v6683 = vld [vmem:[%s1720 + $0x78] sm:$0xff]
      %v6697 = vunpack.c.l.b16 %v6655
      %v6698 = vunpack.c.l.b16 %v6656
      %v6699 = vunpack.c.l.b16 %v6657
      %v6700 = vunpack.c.l.b16 %v6658
      %v6701 = vunpack.c.l.b16 %v6659
      %v6702 = vunpack.c.l.b16 %v6660
      %v6703 = vunpack.c.l.b16 %v6661
      %v6704 = vunpack.c.l.b16 %v6662
      %v6705 = vunpack.c.l.b16 %v6663
      %v6706 = vunpack.c.l.b16 %v6664
      %v6707 = vunpack.c.l.b16 %v6665
      %v6708 = vunpack.c.l.b16 %v6666
      %v6709 = vunpack.c.l.b16 %v6667
      %v6710 = vpack.c.b16 %v6698, %v6697
      %v6711 = vpack.c.b16 %v6700, %v6699
      %v6712 = vpack.c.b16 %v6702, %v6701
      %v6713 = vpack.c.b16 %v6704, %v6703
      %v6714 = vpack.c.b16 %v6706, %v6705
      %v6715 = vpack.c.b16 %v6708, %v6707
      %v6716 = vpack.c.b16 %v6709, %v6709
      %v6717 = vrot.slane %v6710, 2
      %v6718 = vrot.slane %v6711, 2
      %v6719 = vsel %vm1505, %v6717, %v6718
      %v6720 = vrot.slane %v6712, 2
      %v6721 = vsel %vm1505, %v6718, %v6720
      %v6722 = vrot.slane %v6713, 2
      %v6723 = vsel %vm1505, %v6720, %v6722
      %v6724 = vrot.slane %v6714, 2
      %v6725 = vsel %vm1505, %v6722, %v6724
      %v6726 = vrot.slane %v6715, 2
      %v6727 = vsel %vm1505, %v6724, %v6726
      %v6728 = vrot.slane %v6716, 2
      %v6729 = vsel %vm1505, %v6726, %v6728
      %v6752 = vunpack.c.l.b16 %v6668
      %v6753 = vunpack.c.h.b16 %v6668
      %v6754 = vunpack.c.l.b16 %v6669
      %v6755 = vunpack.c.h.b16 %v6669
      %v6756 = vunpack.c.l.b16 %v6670
      %v6757 = vunpack.c.h.b16 %v6670
      %v6758 = vunpack.c.l.b16 %v6671
      %v6759 = vunpack.c.h.b16 %v6671
      %v6760 = vunpack.c.l.b16 %v6672
      %v6761 = vunpack.c.h.b16 %v6672
      %v6762 = vunpack.c.l.b16 %v6673
      %v6763 = vunpack.c.h.b16 %v6673
      %v6764 = vunpack.c.l.b16 %v6674
      %v6765 = vunpack.c.h.b16 %v6674
      %v6766 = vunpack.c.l.b16 %v6675
      %v6767 = vunpack.c.h.b16 %v6675
      %v6768 = vunpack.c.l.b16 %v6676
      %v6769 = vunpack.c.h.b16 %v6676
      %v6770 = vunpack.c.l.b16 %v6677
      %v6771 = vunpack.c.h.b16 %v6677
      %v6772 = vunpack.c.l.b16 %v6678
      %v6773 = vunpack.c.h.b16 %v6678
      %v6774 = vunpack.c.l.b16 %v6679
      %v6775 = vunpack.c.h.b16 %v6679
      %v6776 = vunpack.c.l.b16 %v6680
      %v6777 = vunpack.c.h.b16 %v6680
      %v6778 = vunpack.c.l.b16 %v6681
      %v6779 = vunpack.c.h.b16 %v6681
      %v6780 = vunpack.c.l.b16 %v6682
      %v6781 = vunpack.c.h.b16 %v6682
      %v6782 = vunpack.c.l.b16 %v6683
      %v6783 = vunpack.c.h.b16 %v6683
      %v6784 = vpack.c.b16 %v6754, %v6752
      %v6785 = vpack.c.b16 %v6755, %v6753
      %v6786 = vpack.c.b16 %v6758, %v6756
      %v6787 = vpack.c.b16 %v6759, %v6757
      %v6788 = vpack.c.b16 %v6762, %v6760
      %v6789 = vpack.c.b16 %v6763, %v6761
      %v6790 = vpack.c.b16 %v6766, %v6764
      %v6791 = vpack.c.b16 %v6767, %v6765
      %v6792 = vpack.c.b16 %v6770, %v6768
      %v6793 = vpack.c.b16 %v6771, %v6769
      %v6794 = vpack.c.b16 %v6774, %v6772
      %v6795 = vpack.c.b16 %v6775, %v6773
      %v6796 = vpack.c.b16 %v6778, %v6776
      %v6797 = vpack.c.b16 %v6779, %v6777
      %v6798 = vpack.c.b16 %v6782, %v6780
      %v6799 = vpack.c.b16 %v6783, %v6781
      %6816 = vmatpush.bf16.msra.mxu0 %v6798
      %6817 = vmatpush.bf16.msra.mxu0 %v6796
      %6818 = vmatpush.bf16.msra.mxu0 %v6794
      %6819 = vmatpush.bf16.msra.mxu0 %v6792
      %6820 = vmatpush.bf16.msra.mxu0 %v6790
      %6821 = vmatpush.bf16.msra.mxu0 %v6788
      %6822 = vmatpush.bf16.msra.mxu0 %v6786
      %6823 = vmatpush.bf16.msra.mxu0 %v6784
      %6824 = vmatmul.bf16.gmra.mxu0 %v6719
      %v6825 = vpop.f32.mrf.mxu0
      %v6826 = vadd.f32 0.0, %v6825
      %v6827 = vpop.f32.mrf.mxu0
      %v6828 = vadd.f32 0.0, %v6827
      %6829 = vmatmul.bf16.gmra.mxu0 %v6721
      %v6830 = vpop.f32.mrf.mxu0
      %v6831 = vadd.f32 0.0, %v6830
      %v6832 = vpop.f32.mrf.mxu0
      %v6833 = vadd.f32 0.0, %v6832
      %6834 = vmatmul.bf16.gmra.mxu0 %v6723
      %v6835 = vpop.f32.mrf.mxu0
      %v6836 = vadd.f32 0.0, %v6835
      %v6837 = vpop.f32.mrf.mxu0
      %v6838 = vadd.f32 0.0, %v6837
      %6839 = vmatmul.bf16.gmra.mxu0 %v6725
      %v6840 = vpop.f32.mrf.mxu0
      %v6841 = vadd.f32 0.0, %v6840
      %v6842 = vpop.f32.mrf.mxu0
      %v6843 = vadd.f32 0.0, %v6842
      %6844 = vmatmul.bf16.gmra.mxu0 %v6727
      %v6845 = vpop.f32.mrf.mxu0
      %v6846 = vadd.f32 0.0, %v6845
      %v6847 = vpop.f32.mrf.mxu0
      %v6848 = vadd.f32 0.0, %v6847
      %6849 = vmatmul.bf16.gmra.mxu0 %v6729
      %v6850 = vpop.f32.mrf.mxu0
      %v6851 = vadd.f32 0.0, %v6850
      %v6852 = vpop.f32.mrf.mxu0
      %v6853 = vadd.f32 0.0, %v6852
      %6854 = vdwg.mxu0
      %6855 = vmatpush.bf16.msra.mxu0 %v6799
      %6856 = vmatpush.bf16.msra.mxu0 %v6797
      %6857 = vmatpush.bf16.msra.mxu0 %v6795
      %6858 = vmatpush.bf16.msra.mxu0 %v6793
      %6859 = vmatpush.bf16.msra.mxu0 %v6791
      %6860 = vmatpush.bf16.msra.mxu0 %v6789
      %6861 = vmatpush.bf16.msra.mxu0 %v6787
      %6862 = vmatpush.bf16.msra.mxu0 %v6785
      %6863 = vmatmul.bf16.gmra.mxu0 %v6719
      %v6864 = vpop.f32.mrf.mxu0
      %v6865 = vadd.f32 0.0, %v6864
      %v6866 = vpop.f32.mrf.mxu0
      %v6867 = vadd.f32 0.0, %v6866
      %6868 = vmatmul.bf16.gmra.mxu0 %v6721
      %v6869 = vpop.f32.mrf.mxu0
      %v6870 = vadd.f32 0.0, %v6869
      %v6871 = vpop.f32.mrf.mxu0
      %v6872 = vadd.f32 0.0, %v6871
      %6873 = vmatmul.bf16.gmra.mxu0 %v6723
      %v6874 = vpop.f32.mrf.mxu0
      %v6875 = vadd.f32 0.0, %v6874
      %v6876 = vpop.f32.mrf.mxu0
      %v6877 = vadd.f32 0.0, %v6876
      %6878 = vmatmul.bf16.gmra.mxu0 %v6725
      %v6879 = vpop.f32.mrf.mxu0
      %v6880 = vadd.f32 0.0, %v6879
      %v6881 = vpop.f32.mrf.mxu0
      %v6882 = vadd.f32 0.0, %v6881
      %6883 = vmatmul.bf16.gmra.mxu0 %v6727
      %v6884 = vpop.f32.mrf.mxu0
      %v6885 = vadd.f32 0.0, %v6884
      %v6886 = vpop.f32.mrf.mxu0
      %v6887 = vadd.f32 0.0, %v6886
      %6888 = vmatmul.bf16.gmra.mxu0 %v6729
      %v6889 = vpop.f32.mrf.mxu0
      %v6890 = vadd.f32 0.0, %v6889
      %v6891 = vpop.f32.mrf.mxu0
      %v6892 = vadd.f32 0.0, %v6891
      %6893 = vdwg.mxu0
      %v6894 = vadd.f32 %v6631, %v6826
      %v6895 = vadd.f32 %v6632, %v6865
      %v6896 = vadd.f32 %v6633, %v6828
      %v6897 = vadd.f32 %v6634, %v6867
      %v6898 = vadd.f32 %v6635, %v6831
      %v6899 = vadd.f32 %v6636, %v6870
      %v6900 = vadd.f32 %v6637, %v6833
      %v6901 = vadd.f32 %v6638, %v6872
      %v6902 = vadd.f32 %v6639, %v6836
      %v6903 = vadd.f32 %v6640, %v6875
      %v6904 = vadd.f32 %v6641, %v6838
      %v6905 = vadd.f32 %v6642, %v6877
      %v6906 = vadd.f32 %v6643, %v6841
      %v6907 = vadd.f32 %v6644, %v6880
      %v6908 = vadd.f32 %v6645, %v6843
      %v6909 = vadd.f32 %v6646, %v6882
      %v6910 = vadd.f32 %v6647, %v6846
      %v6911 = vadd.f32 %v6648, %v6885
      %v6912 = vadd.f32 %v6649, %v6848
      %v6913 = vadd.f32 %v6650, %v6887
      %v6914 = vadd.f32 %v6651, %v6851
      %v6915 = vadd.f32 %v6652, %v6890
      %v6916 = vadd.f32 %v6653, %v6853
      %v6917 = vadd.f32 %v6654, %v6892
      %v6918 = vld [vmem:[%s246 + $0xa0] sm:$0x7]
      %v6919 = vld [vmem:[%s1972] sm:$0xff]
      %v6920 = vld [vmem:[%s1972 + $0x8] sm:$0xff]
      %v6921 = vld [vmem:[%s1972 + $0x10] sm:$0xff]
      %v6922 = vld [vmem:[%s1972 + $0x18] sm:$0xff]
      %v6923 = vld [vmem:[%s1972 + $0x20] sm:$0xff]
      %v6924 = vld [vmem:[%s1972 + $0x28] sm:$0xff]
      %v6925 = vld [vmem:[%s1972 + $0x30] sm:$0xff]
      %v6926 = vld [vmem:[%s1972 + $0x38] sm:$0xff]
      %v6927 = vld [vmem:[%s1972 + $0x40] sm:$0xff]
      %v6928 = vld [vmem:[%s1972 + $0x48] sm:$0xff]
      %v6929 = vld [vmem:[%s1972 + $0x50] sm:$0xff]
      %v6930 = vld [vmem:[%s1972 + $0x58] sm:$0xff]
      %v6931 = vld [vmem:[%s1972 + $0x60] sm:$0xff]
      %v6932 = vld [vmem:[%s1972 + $0x68] sm:$0xff]
      %v6933 = vld [vmem:[%s1972 + $0x70] sm:$0xff]
      %v6934 = vld [vmem:[%s1972 + $0x78] sm:$0xff]
      %v6936 = vunpack.c.l.b16 %v6918
      %v6937 = vpack.c.b16 %v6936, %v6936
      %v6939 = vshrl.u32 %v6710, 16
      %v6941 = vrot.slane %v6939, 2
      %v6942 = vshll.u32 %v6710, 16
      %v6944 = vrot.slane %v6942, 3
      %v6945 = vor.u32 %v6941, %v6944
      %v6947 = vshrl.u32 %v6711, 16
      %v6949 = vrot.slane %v6947, 2
      %v6950 = vshll.u32 %v6711, 16
      %v6952 = vrot.slane %v6950, 3
      %v6953 = vor.u32 %v6949, %v6952
      %v6954 = vsel %vm1992, %v6945, %v6953
      %v6956 = vshrl.u32 %v6712, 16
      %v6958 = vrot.slane %v6956, 2
      %v6959 = vshll.u32 %v6712, 16
      %v6961 = vrot.slane %v6959, 3
      %v6962 = vor.u32 %v6958, %v6961
      %v6963 = vsel %vm1992, %v6953, %v6962
      %v6965 = vshrl.u32 %v6713, 16
      %v6967 = vrot.slane %v6965, 2
      %v6968 = vshll.u32 %v6713, 16
      %v6970 = vrot.slane %v6968, 3
      %v6971 = vor.u32 %v6967, %v6970
      %v6972 = vsel %vm1992, %v6962, %v6971
      %v6974 = vshrl.u32 %v6714, 16
      %v6976 = vrot.slane %v6974, 2
      %v6977 = vshll.u32 %v6714, 16
      %v6979 = vrot.slane %v6977, 3
      %v6980 = vor.u32 %v6976, %v6979
      %v6981 = vsel %vm1992, %v6971, %v6980
      %v6983 = vshrl.u32 %v6715, 16
      %v6985 = vrot.slane %v6983, 2
      %v6986 = vshll.u32 %v6715, 16
      %v6988 = vrot.slane %v6986, 3
      %v6989 = vor.u32 %v6985, %v6988
      %v6990 = vsel %vm1992, %v6980, %v6989
      %v6992 = vshrl.u32 %v6937, 16
      %v6994 = vrot.slane %v6992, 2
      %v6995 = vshll.u32 %v6937, 16
      %v6997 = vrot.slane %v6995, 3
      %v6998 = vor.u32 %v6994, %v6997
      %v6999 = vsel %vm1992, %v6989, %v6998
      %v7022 = vunpack.c.l.b16 %v6919
      %v7023 = vunpack.c.h.b16 %v6919
      %v7024 = vunpack.c.l.b16 %v6920
      %v7025 = vunpack.c.h.b16 %v6920
      %v7026 = vunpack.c.l.b16 %v6921
      %v7027 = vunpack.c.h.b16 %v6921
      %v7028 = vunpack.c.l.b16 %v6922
      %v7029 = vunpack.c.h.b16 %v6922
      %v7030 = vunpack.c.l.b16 %v6923
      %v7031 = vunpack.c.h.b16 %v6923
      %v7032 = vunpack.c.l.b16 %v6924
      %v7033 = vunpack.c.h.b16 %v6924
      %v7034 = vunpack.c.l.b16 %v6925
      %v7035 = vunpack.c.h.b16 %v6925
      %v7036 = vunpack.c.l.b16 %v6926
      %v7037 = vunpack.c.h.b16 %v6926
      %v7038 = vunpack.c.l.b16 %v6927
      %v7039 = vunpack.c.h.b16 %v6927
      %v7040 = vunpack.c.l.b16 %v6928
      %v7041 = vunpack.c.h.b16 %v6928
      %v7042 = vunpack.c.l.b16 %v6929
      %v7043 = vunpack.c.h.b16 %v6929
      %v7044 = vunpack.c.l.b16 %v6930
      %v7045 = vunpack.c.h.b16 %v6930
      %v7046 = vunpack.c.l.b16 %v6931
      %v7047 = vunpack.c.h.b16 %v6931
      %v7048 = vunpack.c.l.b16 %v6932
      %v7049 = vunpack.c.h.b16 %v6932
      %v7050 = vunpack.c.l.b16 %v6933
      %v7051 = vunpack.c.h.b16 %v6933
      %v7052 = vunpack.c.l.b16 %v6934
      %v7053 = vunpack.c.h.b16 %v6934
      %v7054 = vpack.c.b16 %v7024, %v7022
      %v7055 = vpack.c.b16 %v7025, %v7023
      %v7056 = vpack.c.b16 %v7028, %v7026
      %v7057 = vpack.c.b16 %v7029, %v7027
      %v7058 = vpack.c.b16 %v7032, %v7030
      %v7059 = vpack.c.b16 %v7033, %v7031
      %v7060 = vpack.c.b16 %v7036, %v7034
      %v7061 = vpack.c.b16 %v7037, %v7035
      %v7062 = vpack.c.b16 %v7040, %v7038
      %v7063 = vpack.c.b16 %v7041, %v7039
      %v7064 = vpack.c.b16 %v7044, %v7042
      %v7065 = vpack.c.b16 %v7045, %v7043
      %v7066 = vpack.c.b16 %v7048, %v7046
      %v7067 = vpack.c.b16 %v7049, %v7047
      %v7068 = vpack.c.b16 %v7052, %v7050
      %v7069 = vpack.c.b16 %v7053, %v7051
      %7086 = vmatpush.bf16.msra.mxu0 %v7068
      %7087 = vmatpush.bf16.msra.mxu0 %v7066
      %7088 = vmatpush.bf16.msra.mxu0 %v7064
      %7089 = vmatpush.bf16.msra.mxu0 %v7062
      %7090 = vmatpush.bf16.msra.mxu0 %v7060
      %7091 = vmatpush.bf16.msra.mxu0 %v7058
      %7092 = vmatpush.bf16.msra.mxu0 %v7056
      %7093 = vmatpush.bf16.msra.mxu0 %v7054
      %7094 = vmatmul.bf16.gmra.mxu0 %v6954
      %v7095 = vpop.f32.mrf.mxu0
      %v7096 = vadd.f32 0.0, %v7095
      %v7097 = vpop.f32.mrf.mxu0
      %v7098 = vadd.f32 0.0, %v7097
      %7099 = vmatmul.bf16.gmra.mxu0 %v6963
      %v7100 = vpop.f32.mrf.mxu0
      %v7101 = vadd.f32 0.0, %v7100
      %v7102 = vpop.f32.mrf.mxu0
      %v7103 = vadd.f32 0.0, %v7102
      %7104 = vmatmul.bf16.gmra.mxu0 %v6972
      %v7105 = vpop.f32.mrf.mxu0
      %v7106 = vadd.f32 0.0, %v7105
      %v7107 = vpop.f32.mrf.mxu0
      %v7108 = vadd.f32 0.0, %v7107
      %7109 = vmatmul.bf16.gmra.mxu0 %v6981
      %v7110 = vpop.f32.mrf.mxu0
      %v7111 = vadd.f32 0.0, %v7110
      %v7112 = vpop.f32.mrf.mxu0
      %v7113 = vadd.f32 0.0, %v7112
      %7114 = vmatmul.bf16.gmra.mxu0 %v6990
      %v7115 = vpop.f32.mrf.mxu0
      %v7116 = vadd.f32 0.0, %v7115
      %v7117 = vpop.f32.mrf.mxu0
      %v7118 = vadd.f32 0.0, %v7117
      %7119 = vmatmul.bf16.gmra.mxu0 %v6999
      %v7120 = vpop.f32.mrf.mxu0
      %v7121 = vadd.f32 0.0, %v7120
      %v7122 = vpop.f32.mrf.mxu0
      %v7123 = vadd.f32 0.0, %v7122
      %7124 = vdwg.mxu0
      %7125 = vmatpush.bf16.msra.mxu0 %v7069
      %7126 = vmatpush.bf16.msra.mxu0 %v7067
      %7127 = vmatpush.bf16.msra.mxu0 %v7065
      %7128 = vmatpush.bf16.msra.mxu0 %v7063
      %7129 = vmatpush.bf16.msra.mxu0 %v7061
      %7130 = vmatpush.bf16.msra.mxu0 %v7059
      %7131 = vmatpush.bf16.msra.mxu0 %v7057
      %7132 = vmatpush.bf16.msra.mxu0 %v7055
      %7133 = vmatmul.bf16.gmra.mxu0 %v6954
      %v7134 = vpop.f32.mrf.mxu0
      %v7135 = vadd.f32 0.0, %v7134
      %v7136 = vpop.f32.mrf.mxu0
      %v7137 = vadd.f32 0.0, %v7136
      %7138 = vmatmul.bf16.gmra.mxu0 %v6963
      %v7139 = vpop.f32.mrf.mxu0
      %v7140 = vadd.f32 0.0, %v7139
      %v7141 = vpop.f32.mrf.mxu0
      %v7142 = vadd.f32 0.0, %v7141
      %7143 = vmatmul.bf16.gmra.mxu0 %v6972
      %v7144 = vpop.f32.mrf.mxu0
      %v7145 = vadd.f32 0.0, %v7144
      %v7146 = vpop.f32.mrf.mxu0
      %v7147 = vadd.f32 0.0, %v7146
      %7148 = vmatmul.bf16.gmra.mxu0 %v6981
      %v7149 = vpop.f32.mrf.mxu0
      %v7150 = vadd.f32 0.0, %v7149
      %v7151 = vpop.f32.mrf.mxu0
      %v7152 = vadd.f32 0.0, %v7151
      %7153 = vmatmul.bf16.gmra.mxu0 %v6990
      %v7154 = vpop.f32.mrf.mxu0
      %v7155 = vadd.f32 0.0, %v7154
      %v7156 = vpop.f32.mrf.mxu0
      %v7157 = vadd.f32 0.0, %v7156
      %7158 = vmatmul.bf16.gmra.mxu0 %v6999
      %v7159 = vpop.f32.mrf.mxu0
      %v7160 = vadd.f32 0.0, %v7159
      %v7161 = vpop.f32.mrf.mxu0
      %v7162 = vadd.f32 0.0, %v7161
      %7163 = vdwg.mxu0
      %v7164 = vadd.f32 %v6894, %v7096
      %v7165 = vadd.f32 %v6895, %v7135
      %v7166 = vadd.f32 %v6896, %v7098
      %v7167 = vadd.f32 %v6897, %v7137
      %v7168 = vadd.f32 %v6898, %v7101
      %v7169 = vadd.f32 %v6899, %v7140
      %v7170 = vadd.f32 %v6900, %v7103
      %v7171 = vadd.f32 %v6901, %v7142
      %v7172 = vadd.f32 %v6902, %v7106
      %v7173 = vadd.f32 %v6903, %v7145
      %v7174 = vadd.f32 %v6904, %v7108
      %v7175 = vadd.f32 %v6905, %v7147
      %v7176 = vadd.f32 %v6906, %v7111
      %v7177 = vadd.f32 %v6907, %v7150
      %v7178 = vadd.f32 %v6908, %v7113
      %v7179 = vadd.f32 %v6909, %v7152
      %v7180 = vadd.f32 %v6910, %v7116
      %v7181 = vadd.f32 %v6911, %v7155
      %v7182 = vadd.f32 %v6912, %v7118
      %v7183 = vadd.f32 %v6913, %v7157
      %v7184 = vadd.f32 %v6914, %v7121
      %v7185 = vadd.f32 %v6915, %v7160
      %v7186 = vadd.f32 %v6916, %v7123
      %v7187 = vadd.f32 %v6917, %v7162
      %v7188 = vld [vmem:[%s246 + $0x70] sm:$0x8]
      %v7189 = vld [vmem:[%s2244] sm:$0xff]
      %v7190 = vld [vmem:[%s2244 + $0x8] sm:$0xff]
      %v7191 = vld [vmem:[%s2244 + $0x10] sm:$0xff]
      %v7192 = vld [vmem:[%s2244 + $0x18] sm:$0xff]
      %v7193 = vld [vmem:[%s2244 + $0x20] sm:$0xff]
      %v7194 = vld [vmem:[%s2244 + $0x28] sm:$0xff]
      %v7195 = vld [vmem:[%s2244 + $0x30] sm:$0xff]
      %v7196 = vld [vmem:[%s2244 + $0x38] sm:$0xff]
      %v7197 = vld [vmem:[%s2244 + $0x40] sm:$0xff]
      %v7198 = vld [vmem:[%s2244 + $0x48] sm:$0xff]
      %v7199 = vld [vmem:[%s2244 + $0x50] sm:$0xff]
      %v7200 = vld [vmem:[%s2244 + $0x58] sm:$0xff]
      %v7201 = vld [vmem:[%s2244 + $0x60] sm:$0xff]
      %v7202 = vld [vmem:[%s2244 + $0x68] sm:$0xff]
      %v7203 = vld [vmem:[%s2244 + $0x70] sm:$0xff]
      %v7204 = vld [vmem:[%s2244 + $0x78] sm:$0xff]
      %v7206 = vunpack.c.l.b16 %v7188
      %v7207 = vpack.c.b16 %v6698, %v7206
      %v7208 = vrot.slane %v7207, 3
      %v7209 = vrot.slane %v6711, 3
      %v7210 = vsel %vm2264, %v7208, %v7209
      %v7211 = vrot.slane %v6712, 3
      %v7212 = vsel %vm2264, %v7209, %v7211
      %v7213 = vrot.slane %v6713, 3
      %v7214 = vsel %vm2264, %v7211, %v7213
      %v7215 = vrot.slane %v6714, 3
      %v7216 = vsel %vm2264, %v7213, %v7215
      %v7217 = vrot.slane %v6715, 3
      %v7218 = vsel %vm2264, %v7215, %v7217
      %v7219 = vrot.slane %v6937, 3
      %v7220 = vsel %vm2264, %v7217, %v7219
      %v7243 = vunpack.c.l.b16 %v7189
      %v7244 = vunpack.c.h.b16 %v7189
      %v7245 = vunpack.c.l.b16 %v7190
      %v7246 = vunpack.c.h.b16 %v7190
      %v7247 = vunpack.c.l.b16 %v7191
      %v7248 = vunpack.c.h.b16 %v7191
      %v7249 = vunpack.c.l.b16 %v7192
      %v7250 = vunpack.c.h.b16 %v7192
      %v7251 = vunpack.c.l.b16 %v7193
      %v7252 = vunpack.c.h.b16 %v7193
      %v7253 = vunpack.c.l.b16 %v7194
      %v7254 = vunpack.c.h.b16 %v7194
      %v7255 = vunpack.c.l.b16 %v7195
      %v7256 = vunpack.c.h.b16 %v7195
      %v7257 = vunpack.c.l.b16 %v7196
      %v7258 = vunpack.c.h.b16 %v7196
      %v7259 = vunpack.c.l.b16 %v7197
      %v7260 = vunpack.c.h.b16 %v7197
      %v7261 = vunpack.c.l.b16 %v7198
      %v7262 = vunpack.c.h.b16 %v7198
      %v7263 = vunpack.c.l.b16 %v7199
      %v7264 = vunpack.c.h.b16 %v7199
      %v7265 = vunpack.c.l.b16 %v7200
      %v7266 = vunpack.c.h.b16 %v7200
      %v7267 = vunpack.c.l.b16 %v7201
      %v7268 = vunpack.c.h.b16 %v7201
      %v7269 = vunpack.c.l.b16 %v7202
      %v7270 = vunpack.c.h.b16 %v7202
      %v7271 = vunpack.c.l.b16 %v7203
      %v7272 = vunpack.c.h.b16 %v7203
      %v7273 = vunpack.c.l.b16 %v7204
      %v7274 = vunpack.c.h.b16 %v7204
      %v7275 = vpack.c.b16 %v7245, %v7243
      %v7276 = vpack.c.b16 %v7246, %v7244
      %v7277 = vpack.c.b16 %v7249, %v7247
      %v7278 = vpack.c.b16 %v7250, %v7248
      %v7279 = vpack.c.b16 %v7253, %v7251
      %v7280 = vpack.c.b16 %v7254, %v7252
      %v7281 = vpack.c.b16 %v7257, %v7255
      %v7282 = vpack.c.b16 %v7258, %v7256
      %v7283 = vpack.c.b16 %v7261, %v7259
      %v7284 = vpack.c.b16 %v7262, %v7260
      %v7285 = vpack.c.b16 %v7265, %v7263
      %v7286 = vpack.c.b16 %v7266, %v7264
      %v7287 = vpack.c.b16 %v7269, %v7267
      %v7288 = vpack.c.b16 %v7270, %v7268
      %v7289 = vpack.c.b16 %v7273, %v7271
      %v7290 = vpack.c.b16 %v7274, %v7272
      %7307 = vmatpush.bf16.msra.mxu0 %v7289
      %7308 = vmatpush.bf16.msra.mxu0 %v7287
      %7309 = vmatpush.bf16.msra.mxu0 %v7285
      %7310 = vmatpush.bf16.msra.mxu0 %v7283
      %7311 = vmatpush.bf16.msra.mxu0 %v7281
      %7312 = vmatpush.bf16.msra.mxu0 %v7279
      %7313 = vmatpush.bf16.msra.mxu0 %v7277
      %7314 = vmatpush.bf16.msra.mxu0 %v7275
      %7315 = vmatmul.bf16.gmra.mxu0 %v7210
      %v7316 = vpop.f32.mrf.mxu0
      %v7317 = vadd.f32 0.0, %v7316
      %v7318 = vpop.f32.mrf.mxu0
      %v7319 = vadd.f32 0.0, %v7318
      %7320 = vmatmul.bf16.gmra.mxu0 %v7212
      %v7321 = vpop.f32.mrf.mxu0
      %v7322 = vadd.f32 0.0, %v7321
      %v7323 = vpop.f32.mrf.mxu0
      %v7324 = vadd.f32 0.0, %v7323
      %7325 = vmatmul.bf16.gmra.mxu0 %v7214
      %v7326 = vpop.f32.mrf.mxu0
      %v7327 = vadd.f32 0.0, %v7326
      %v7328 = vpop.f32.mrf.mxu0
      %v7329 = vadd.f32 0.0, %v7328
      %7330 = vmatmul.bf16.gmra.mxu0 %v7216
      %v7331 = vpop.f32.mrf.mxu0
      %v7332 = vadd.f32 0.0, %v7331
      %v7333 = vpop.f32.mrf.mxu0
      %v7334 = vadd.f32 0.0, %v7333
      %7335 = vmatmul.bf16.gmra.mxu0 %v7218
      %v7336 = vpop.f32.mrf.mxu0
      %v7337 = vadd.f32 0.0, %v7336
      %v7338 = vpop.f32.mrf.mxu0
      %v7339 = vadd.f32 0.0, %v7338
      %7340 = vmatmul.bf16.gmra.mxu0 %v7220
      %v7341 = vpop.f32.mrf.mxu0
      %v7342 = vadd.f32 0.0, %v7341
      %v7343 = vpop.f32.mrf.mxu0
      %v7344 = vadd.f32 0.0, %v7343
      %7345 = vdwg.mxu0
      %7346 = vmatpush.bf16.msra.mxu0 %v7290
      %7347 = vmatpush.bf16.msra.mxu0 %v7288
      %7348 = vmatpush.bf16.msra.mxu0 %v7286
      %7349 = vmatpush.bf16.msra.mxu0 %v7284
      %7350 = vmatpush.bf16.msra.mxu0 %v7282
      %7351 = vmatpush.bf16.msra.mxu0 %v7280
      %7352 = vmatpush.bf16.msra.mxu0 %v7278
      %7353 = vmatpush.bf16.msra.mxu0 %v7276
      %7354 = vmatmul.bf16.gmra.mxu0 %v7210
      %v7355 = vpop.f32.mrf.mxu0
      %v7356 = vadd.f32 0.0, %v7355
      %v7357 = vpop.f32.mrf.mxu0
      %v7358 = vadd.f32 0.0, %v7357
      %7359 = vmatmul.bf16.gmra.mxu0 %v7212
      %v7360 = vpop.f32.mrf.mxu0
      %v7361 = vadd.f32 0.0, %v7360
      %v7362 = vpop.f32.mrf.mxu0
      %v7363 = vadd.f32 0.0, %v7362
      %7364 = vmatmul.bf16.gmra.mxu0 %v7214
      %v7365 = vpop.f32.mrf.mxu0
      %v7366 = vadd.f32 0.0, %v7365
      %v7367 = vpop.f32.mrf.mxu0
      %v7368 = vadd.f32 0.0, %v7367
      %7369 = vmatmul.bf16.gmra.mxu0 %v7216
      %v7370 = vpop.f32.mrf.mxu0
      %v7371 = vadd.f32 0.0, %v7370
      %v7372 = vpop.f32.mrf.mxu0
      %v7373 = vadd.f32 0.0, %v7372
      %7374 = vmatmul.bf16.gmra.mxu0 %v7218
      %v7375 = vpop.f32.mrf.mxu0
      %v7376 = vadd.f32 0.0, %v7375
      %v7377 = vpop.f32.mrf.mxu0
      %v7378 = vadd.f32 0.0, %v7377
      %7379 = vmatmul.bf16.gmra.mxu0 %v7220
      %v7380 = vpop.f32.mrf.mxu0
      %v7381 = vadd.f32 0.0, %v7380
      %v7382 = vpop.f32.mrf.mxu0
      %v7383 = vadd.f32 0.0, %v7382
      %7384 = vdwg.mxu0
      %v7385 = vadd.f32 %v7164, %v7317
      %v7386 = vadd.f32 %v7165, %v7356
      %v7387 = vadd.f32 %v7166, %v7319
      %v7388 = vadd.f32 %v7167, %v7358
      %v7389 = vadd.f32 %v7168, %v7322
      %v7390 = vadd.f32 %v7169, %v7361
      %v7391 = vadd.f32 %v7170, %v7324
      %v7392 = vadd.f32 %v7171, %v7363
      %v7393 = vadd.f32 %v7172, %v7327
      %v7394 = vadd.f32 %v7173, %v7366
      %v7395 = vadd.f32 %v7174, %v7329
      %v7396 = vadd.f32 %v7175, %v7368
      %v7397 = vadd.f32 %v7176, %v7332
      %v7398 = vadd.f32 %v7177, %v7371
      %v7399 = vadd.f32 %v7178, %v7334
      %v7400 = vadd.f32 %v7179, %v7373
      %v7401 = vadd.f32 %v7180, %v7337
      %v7402 = vadd.f32 %v7181, %v7376
      %v7403 = vadd.f32 %v7182, %v7339
      %v7404 = vadd.f32 %v7183, %v7378
      %v7405 = vadd.f32 %v7184, %v7342
      %v7406 = vadd.f32 %v7185, %v7381
      %v7407 = vadd.f32 %v7186, %v7344
      %v7408 = vadd.f32 %v7187, %v7383
      %v7409 = vld [vmem:[%s2] sm:$0x3]
      %v7411 = vperm.slane %v7409, 0
      %v7412 = vperm.slane %v7409, 1
      %v7415 = vadd.f32 %v7385, %v7411
      %v7416 = vadd.f32 %v7386, %v7412
      %v7417 = vadd.f32 %v7387, %v7411
      %v7418 = vadd.f32 %v7388, %v7412
      %v7419 = vadd.f32 %v7389, %v7411
      %v7420 = vadd.f32 %v7390, %v7412
      %v7421 = vadd.f32 %v7391, %v7411
      %v7422 = vadd.f32 %v7392, %v7412
      %v7423 = vadd.f32 %v7393, %v7411
      %v7424 = vadd.f32 %v7394, %v7412
      %v7425 = vadd.f32 %v7395, %v7411
      %v7426 = vadd.f32 %v7396, %v7412
      %v7427 = vadd.f32 %v7397, %v7411
      %v7428 = vadd.f32 %v7398, %v7412
      %v7429 = vadd.f32 %v7399, %v7411
      %v7430 = vadd.f32 %v7400, %v7412
      %v7431 = vadd.f32 %v7401, %v7411
      %v7432 = vadd.f32 %v7402, %v7412
      %v7433 = vadd.f32 %v7403, %v7411
      %v7434 = vadd.f32 %v7404, %v7412
      %v7435 = vadd.f32 %v7405, %v7411
      %v7436 = vadd.f32 %v7406, %v7412
      %v7437 = vadd.f32 %v7407, %v7411
      %v7438 = vadd.f32 %v7408, %v7412
      %v7439 = vmax.f32 %v7415, 0.0
      %v7440 = vmax.f32 %v7416, 0.0
      %v7441 = vmax.f32 %v7417, 0.0
      %v7442 = vmax.f32 %v7418, 0.0
      %v7443 = vmax.f32 %v7419, 0.0
      %v7444 = vmax.f32 %v7420, 0.0
      %v7445 = vmax.f32 %v7421, 0.0
      %v7446 = vmax.f32 %v7422, 0.0
      %v7447 = vmax.f32 %v7423, 0.0
      %v7448 = vmax.f32 %v7424, 0.0
      %v7449 = vmax.f32 %v7425, 0.0
      %v7450 = vmax.f32 %v7426, 0.0
      %v7451 = vmax.f32 %v7427, 0.0
      %v7452 = vmax.f32 %v7428, 0.0
      %v7453 = vmax.f32 %v7429, 0.0
      %v7454 = vmax.f32 %v7430, 0.0
      %v7455 = vmax.f32 %v7431, 0.0
      %v7456 = vmax.f32 %v7432, 0.0
      %v7457 = vmax.f32 %v7433, 0.0
      %v7458 = vmax.f32 %v7434, 0.0
      %v7459 = vmax.f32 %v7435, 0.0
      %v7460 = vmax.f32 %v7436, 0.0
      %v7461 = vmax.f32 %v7437, 0.0
      %v7462 = vmax.f32 %v7438, 0.0
      %v7463 = vld [vmem:[%s5 + $0xc0] sm:$0xff]
      %v7464 = vld [vmem:[%s5 + $0xc8] sm:$0xff]
      %v7465 = vld [vmem:[%s5 + $0xd0] sm:$0xff]
      %v7466 = vld [vmem:[%s5 + $0xd8] sm:$0xff]
      %v7467 = vld [vmem:[%s5 + $0xe0] sm:$0xff]
      %v7468 = vld [vmem:[%s5 + $0xe8] sm:$0xff]
      %v7469 = vld [vmem:[%s5 + $0xf0] sm:$0xff]
      %v7470 = vld [vmem:[%s5 + $0xf8] sm:$0xff]
      %v7471 = vld [vmem:[%s5 + $0x100] sm:$0xff]
      %v7472 = vld [vmem:[%s5 + $0x108] sm:$0xff]
      %v7473 = vld [vmem:[%s5 + $0x110] sm:$0xff]
      %v7474 = vld [vmem:[%s5 + $0x118] sm:$0xff]
      %vm7475 = vcmp.gt.f32.partialorder %v7463, 0.0
      %vm7476 = vcmp.gt.f32.partialorder %v7464, 0.0
      %vm7477 = vcmp.gt.f32.partialorder %v7465, 0.0
      %vm7478 = vcmp.gt.f32.partialorder %v7466, 0.0
      %vm7479 = vcmp.gt.f32.partialorder %v7467, 0.0
      %vm7480 = vcmp.gt.f32.partialorder %v7468, 0.0
      %vm7481 = vcmp.gt.f32.partialorder %v7469, 0.0
      %vm7482 = vcmp.gt.f32.partialorder %v7470, 0.0
      %vm7483 = vcmp.gt.f32.partialorder %v7471, 0.0
      %vm7484 = vcmp.gt.f32.partialorder %v7472, 0.0
      %vm7485 = vcmp.gt.f32.partialorder %v7473, 0.0
      %vm7486 = vcmp.gt.f32.partialorder %v7474, 0.0
      %v7487 = vsel %vm7475, 1, 0
      %v7488 = vsel %vm7476, 1, 0
      %v7489 = vsel %vm7477, 1, 0
      %v7490 = vsel %vm7478, 1, 0
      %v7491 = vsel %vm7479, 1, 0
      %v7492 = vsel %vm7480, 1, 0
      %v7493 = vsel %vm7481, 1, 0
      %v7494 = vsel %vm7482, 1, 0
      %v7495 = vsel %vm7483, 1, 0
      %v7496 = vsel %vm7484, 1, 0
      %v7497 = vsel %vm7485, 1, 0
      %v7498 = vsel %vm7486, 1, 0
      %7499 = vset.pattern.permute.xlu0 0
      %7500 = vperm.xlu0 %7499, %v7487
      %v7501 = vpop.permute.xlu0 %7500
      %7502 = vset.pattern.permute.xlu0 0
      %7503 = vperm.xlu0 %7502, %v7488
      %v7504 = vpop.permute.xlu0 %7503
      %7505 = vset.pattern.permute.xlu0 0
      %7506 = vperm.xlu0 %7505, %v7489
      %v7507 = vpop.permute.xlu0 %7506
      %7508 = vset.pattern.permute.xlu0 0
      %7509 = vperm.xlu0 %7508, %v7490
      %v7510 = vpop.permute.xlu0 %7509
      %7511 = vset.pattern.permute.xlu0 0
      %7512 = vperm.xlu0 %7511, %v7491
      %v7513 = vpop.permute.xlu0 %7512
      %7514 = vset.pattern.permute.xlu0 0
      %7515 = vperm.xlu0 %7514, %v7492
      %v7516 = vpop.permute.xlu0 %7515
      %7517 = vset.pattern.permute.xlu0 0
      %7518 = vperm.xlu0 %7517, %v7493
      %v7519 = vpop.permute.xlu0 %7518
      %7520 = vset.pattern.permute.xlu0 0
      %7521 = vperm.xlu0 %7520, %v7494
      %v7522 = vpop.permute.xlu0 %7521
      %7523 = vset.pattern.permute.xlu0 0
      %7524 = vperm.xlu0 %7523, %v7495
      %v7525 = vpop.permute.xlu0 %7524
      %7526 = vset.pattern.permute.xlu0 0
      %7527 = vperm.xlu0 %7526, %v7496
      %v7528 = vpop.permute.xlu0 %7527
      %7529 = vset.pattern.permute.xlu0 0
      %7530 = vperm.xlu0 %7529, %v7497
      %v7531 = vpop.permute.xlu0 %7530
      %7532 = vset.pattern.permute.xlu0 0
      %7533 = vperm.xlu0 %7532, %v7498
      %v7534 = vpop.permute.xlu0 %7533
      %vm7535 = vcmp.eq.s32.totalorder %v7501, 1
      %vm7536 = vcmp.eq.s32.totalorder %v7504, 1
      %vm7537 = vcmp.eq.s32.totalorder %v7507, 1
      %vm7538 = vcmp.eq.s32.totalorder %v7510, 1
      %vm7539 = vcmp.eq.s32.totalorder %v7513, 1
      %vm7540 = vcmp.eq.s32.totalorder %v7516, 1
      %vm7541 = vcmp.eq.s32.totalorder %v7519, 1
      %vm7542 = vcmp.eq.s32.totalorder %v7522, 1
      %vm7543 = vcmp.eq.s32.totalorder %v7525, 1
      %vm7544 = vcmp.eq.s32.totalorder %v7528, 1
      %vm7545 = vcmp.eq.s32.totalorder %v7531, 1
      %vm7546 = vcmp.eq.s32.totalorder %v7534, 1
      %v7547 = vsel %vm7535, %v7439, 0.0
      %v7548 = vsel %vm7535, %v7440, 0.0
      %v7549 = vsel %vm7536, %v7441, 0.0
      %v7550 = vsel %vm7536, %v7442, 0.0
      %v7551 = vsel %vm7537, %v7443, 0.0
      %v7552 = vsel %vm7537, %v7444, 0.0
      %v7553 = vsel %vm7538, %v7445, 0.0
      %v7554 = vsel %vm7538, %v7446, 0.0
      %v7555 = vsel %vm7539, %v7447, 0.0
      %v7556 = vsel %vm7539, %v7448, 0.0
      %v7557 = vsel %vm7540, %v7449, 0.0
      %v7558 = vsel %vm7540, %v7450, 0.0
      %v7559 = vsel %vm7541, %v7451, 0.0
      %v7560 = vsel %vm7541, %v7452, 0.0
      %v7561 = vsel %vm7542, %v7453, 0.0
      %v7562 = vsel %vm7542, %v7454, 0.0
      %v7563 = vsel %vm7543, %v7455, 0.0
      %v7564 = vsel %vm7543, %v7456, 0.0
      %v7565 = vsel %vm7544, %v7457, 0.0
      %v7566 = vsel %vm7544, %v7458, 0.0
      %v7567 = vsel %vm7545, %v7459, 0.0
      %v7568 = vsel %vm7545, %v7460, 0.0
      %v7569 = vsel %vm7546, %v7461, 0.0
      %v7570 = vsel %vm7546, %v7462, 0.0
      %v7595 = vrot.slane %v7547, 5
      %v7596 = vrot.slane %v7548, 5
      %v7597 = vrot.slane %v7549, 5
      %v7598 = vsel %vm2652, %v7595, %v7597
      %v7599 = vrot.slane %v7550, 5
      %v7600 = vsel %vm2652, %v7596, %v7599
      %v7601 = vrot.slane %v7551, 5
      %v7602 = vsel %vm2652, %v7597, %v7601
      %v7603 = vrot.slane %v7552, 5
      %v7604 = vsel %vm2652, %v7599, %v7603
      %v7605 = vrot.slane %v7553, 5
      %v7606 = vsel %vm2652, %v7601, %v7605
      %v7607 = vrot.slane %v7554, 5
      %v7608 = vsel %vm2652, %v7603, %v7607
      %v7609 = vrot.slane %v7555, 5
      %v7610 = vsel %vm2652, %v7605, %v7609
      %v7611 = vrot.slane %v7556, 5
      %v7612 = vsel %vm2652, %v7607, %v7611
      %v7613 = vrot.slane %v7557, 5
      %v7614 = vsel %vm2652, %v7609, %v7613
      %v7615 = vrot.slane %v7558, 5
      %v7616 = vsel %vm2652, %v7611, %v7615
      %v7617 = vrot.slane %v7559, 5
      %v7618 = vsel %vm2652, %v7613, %v7617
      %v7619 = vrot.slane %v7560, 5
      %v7620 = vsel %vm2652, %v7615, %v7619
      %v7621 = vrot.slane %v7561, 5
      %v7622 = vsel %vm2652, %v7617, %v7621
      %v7623 = vrot.slane %v7562, 5
      %v7624 = vsel %vm2652, %v7619, %v7623
      %v7625 = vrot.slane %v7563, 5
      %v7626 = vsel %vm2652, %v7621, %v7625
      %v7627 = vrot.slane %v7564, 5
      %v7628 = vsel %vm2652, %v7623, %v7627
      %v7629 = vrot.slane %v7565, 5
      %v7630 = vsel %vm2652, %v7625, %v7629
      %v7631 = vrot.slane %v7566, 5
      %v7632 = vsel %vm2652, %v7627, %v7631
      %v7633 = vrot.slane %v7567, 5
      %v7634 = vsel %vm2652, %v7629, %v7633
      %v7635 = vrot.slane %v7568, 5
      %v7636 = vsel %vm2652, %v7631, %v7635
      %v7637 = vrot.slane %v7569, 5
      %v7638 = vsel %vm2652, %v7633, %v7637
      %v7639 = vrot.slane %v7570, 5
      %v7640 = vsel %vm2652, %v7635, %v7639
      %7667 = vst [vmem:[#allocation2 + $0x1a0] sm:$0xf8] %v7595
      %7668 = vst [vmem:[#allocation2 + $0x1a8] sm:$0xf8] %v7596
      %7669 = vst [vmem:[#allocation2 + $0x1b0] sm:$0xff] %v7598
      %7670 = vst [vmem:[#allocation2 + $0x1b8] sm:$0xff] %v7600
      %7671 = vst [vmem:[#allocation2 + $0x1c0] sm:$0xff] %v7602
      %7672 = vst [vmem:[#allocation2 + $0x1c8] sm:$0xff] %v7604
      %7673 = vst [vmem:[#allocation2 + $0x1d0] sm:$0xff] %v7606
      %7674 = vst [vmem:[#allocation2 + $0x1d8] sm:$0xff] %v7608
      %7675 = vst [vmem:[#allocation2 + $0x1e0] sm:$0xff] %v7610
      %7676 = vst [vmem:[#allocation2 + $0x1e8] sm:$0xff] %v7612
      %7677 = vst [vmem:[#allocation2 + $0x1f0] sm:$0xff] %v7614
      %7678 = vst [vmem:[#allocation2 + $0x1f8] sm:$0xff] %v7616
      %7679 = vst [vmem:[#allocation2 + $0x200] sm:$0xff] %v7618
      %7680 = vst [vmem:[#allocation2 + $0x208] sm:$0xff] %v7620
      %7681 = vst [vmem:[#allocation2 + $0x210] sm:$0xff] %v7622
      %7682 = vst [vmem:[#allocation2 + $0x218] sm:$0xff] %v7624
      %7683 = vst [vmem:[#allocation2 + $0x220] sm:$0xff] %v7626
      %7684 = vst [vmem:[#allocation2 + $0x228] sm:$0xff] %v7628
      %7685 = vst [vmem:[#allocation2 + $0x230] sm:$0xff] %v7630
      %7686 = vst [vmem:[#allocation2 + $0x238] sm:$0xff] %v7632
      %7687 = vst [vmem:[#allocation2 + $0x240] sm:$0xff] %v7634
      %7688 = vst [vmem:[#allocation2 + $0x248] sm:$0xff] %v7636
      %7689 = vst [vmem:[#allocation2 + $0x250] sm:$0xff] %v7638
      %7690 = vst [vmem:[#allocation2 + $0x258] sm:$0xff] %v7640
      %7691 = vst [vmem:[#allocation2 + $0x260] sm:$0x7] %v7637
      %7692 = vst [vmem:[#allocation2 + $0x268] sm:$0x7] %v7639
      %v7693 = vld [vmem:[#allocation2] sm:$0xff]
      %v7694 = vld [vmem:[#allocation2 + $0x8] sm:$0xff]
      %v7695 = vld [vmem:[#allocation2 + $0x10] sm:$0xff]
      %v7696 = vld [vmem:[#allocation2 + $0x18] sm:$0xff]
      %v7697 = vld [vmem:[#allocation2 + $0x20] sm:$0xff]
      %v7698 = vld [vmem:[#allocation2 + $0x28] sm:$0xff]
      %v7699 = vld [vmem:[#allocation2 + $0x30] sm:$0xff]
      %v7700 = vld [vmem:[#allocation2 + $0x38] sm:$0xff]
      %v7701 = vld [vmem:[#allocation2 + $0x40] sm:$0xff]
      %v7702 = vld [vmem:[#allocation2 + $0x48] sm:$0xff]
      %v7703 = vld [vmem:[#allocation2 + $0x50] sm:$0xff]
      %v7704 = vld [vmem:[#allocation2 + $0x58] sm:$0xff]
      %v7705 = vld [vmem:[#allocation2 + $0x60] sm:$0xff]
      %v7706 = vld [vmem:[#allocation2 + $0x68] sm:$0xff]
      %v7707 = vld [vmem:[#allocation2 + $0x70] sm:$0xff]
      %v7708 = vld [vmem:[#allocation2 + $0x78] sm:$0xff]
      %v7709 = vld [vmem:[#allocation2 + $0x80] sm:$0xff]
      %v7710 = vld [vmem:[#allocation2 + $0x88] sm:$0xff]
      %v7711 = vld [vmem:[#allocation2 + $0x90] sm:$0xff]
      %v7712 = vld [vmem:[#allocation2 + $0x98] sm:$0xff]
      %v7713 = vld [vmem:[#allocation2 + $0xa0] sm:$0xff]
      %v7714 = vld [vmem:[#allocation2 + $0xa8] sm:$0xff]
      %v7715 = vld [vmem:[#allocation2 + $0xb0] sm:$0xff]
      %v7716 = vld [vmem:[#allocation2 + $0xb8] sm:$0xff]
      %v7717 = vld [vmem:[#allocation2 + $0xc0] sm:$0xff]
      %v7718 = vld [vmem:[#allocation2 + $0xc8] sm:$0xff]
      %v7719 = vld [vmem:[#allocation2 + $0xd0] sm:$0xff]
      %v7720 = vld [vmem:[#allocation2 + $0xd8] sm:$0xff]
      %v7721 = vld [vmem:[#allocation2 + $0xe0] sm:$0xff]
      %v7722 = vld [vmem:[#allocation2 + $0xe8] sm:$0xff]
      %v7723 = vld [vmem:[#allocation2 + $0xf0] sm:$0xff]
      %v7724 = vld [vmem:[#allocation2 + $0xf8] sm:$0xff]
      %v7725 = vpack.c.bf16 %v7695, %v7693
      %v7726 = vpack.c.bf16 %v7696, %v7694
      %v7727 = vpack.c.bf16 %v7699, %v7697
      %v7728 = vpack.c.bf16 %v7700, %v7698
      %v7729 = vpack.c.bf16 %v7703, %v7701
      %v7730 = vpack.c.bf16 %v7704, %v7702
      %v7731 = vpack.c.bf16 %v7707, %v7705
      %v7732 = vpack.c.bf16 %v7708, %v7706
      %v7733 = vpack.c.bf16 %v7711, %v7709
      %v7734 = vpack.c.bf16 %v7712, %v7710
      %v7735 = vpack.c.bf16 %v7715, %v7713
      %v7736 = vpack.c.bf16 %v7716, %v7714
      %v7737 = vpack.c.bf16 %v7719, %v7717
      %v7738 = vpack.c.bf16 %v7720, %v7718
      %v7739 = vpack.c.bf16 %v7723, %v7721
      %v7740 = vpack.c.bf16 %v7724, %v7722
      %v7741 = vld [vmem:[%s3] sm:$0xf]
      %v7742 = vld [vmem:[%s3 + $0x4] sm:$0xf]
      %v7743 = vld [vmem:[%s3 + $0x8] sm:$0xf]
      %v7744 = vld [vmem:[%s3 + $0xc] sm:$0xf]
      %v7745 = vld [vmem:[%s3 + $0x10] sm:$0xf]
      %v7746 = vld [vmem:[%s3 + $0x14] sm:$0xf]
      %v7747 = vld [vmem:[%s3 + $0x18] sm:$0xf]
      %v7748 = vld [vmem:[%s3 + $0x1c] sm:$0xf]
      %v7749 = vld [vmem:[%s3 + $0x20] sm:$0xf]
      %v7750 = vld [vmem:[%s3 + $0x24] sm:$0xf]
      %v7751 = vld [vmem:[%s3 + $0x28] sm:$0xf]
      %v7752 = vld [vmem:[%s3 + $0x2c] sm:$0xf]
      %v7753 = vld [vmem:[%s3 + $0x30] sm:$0xf]
      %v7754 = vld [vmem:[%s3 + $0x34] sm:$0xf]
      %v7755 = vld [vmem:[%s3 + $0x38] sm:$0xf]
      %v7756 = vld [vmem:[%s3 + $0x3c] sm:$0xf]
      %v7757 = vld [vmem:[%s3 + $0x40] sm:$0xf]
      %v7758 = vld [vmem:[%s3 + $0x44] sm:$0xf]
      %v7759 = vld [vmem:[%s3 + $0x48] sm:$0xf]
      %v7760 = vld [vmem:[%s3 + $0x4c] sm:$0xf]
      %v7761 = vld [vmem:[%s3 + $0x50] sm:$0xf]
      %v7762 = vld [vmem:[%s3 + $0x54] sm:$0xf]
      %v7763 = vld [vmem:[%s3 + $0x58] sm:$0xf]
      %v7764 = vld [vmem:[%s3 + $0x5c] sm:$0xf]
      %v7765 = vld [vmem:[%s3 + $0x60] sm:$0xf]
      %v7766 = vld [vmem:[%s3 + $0x64] sm:$0xf]
      %v7767 = vld [vmem:[%s3 + $0x68] sm:$0xf]
      %v7768 = vld [vmem:[%s3 + $0x6c] sm:$0xf]
      %v7769 = vld [vmem:[%s3 + $0x70] sm:$0xf]
      %v7770 = vld [vmem:[%s3 + $0x74] sm:$0xf]
      %v7771 = vld [vmem:[%s3 + $0x78] sm:$0xf]
      %v7772 = vld [vmem:[%s3 + $0x7c] sm:$0xf]
      %v7805 = vunpack.c.l.b16 %v7741
      %v7806 = vunpack.c.l.b16 %v7742
      %v7807 = vunpack.c.l.b16 %v7743
      %v7808 = vunpack.c.l.b16 %v7744
      %v7809 = vunpack.c.l.b16 %v7745
      %v7810 = vunpack.c.l.b16 %v7746
      %v7811 = vunpack.c.l.b16 %v7747
      %v7812 = vunpack.c.l.b16 %v7748
      %v7813 = vunpack.c.l.b16 %v7749
      %v7814 = vunpack.c.l.b16 %v7750
      %v7815 = vunpack.c.l.b16 %v7751
      %v7816 = vunpack.c.l.b16 %v7752
      %v7817 = vunpack.c.l.b16 %v7753
      %v7818 = vunpack.c.l.b16 %v7754
      %v7819 = vunpack.c.l.b16 %v7755
      %v7820 = vunpack.c.l.b16 %v7756
      %v7821 = vunpack.c.l.b16 %v7757
      %v7822 = vunpack.c.l.b16 %v7758
      %v7823 = vunpack.c.l.b16 %v7759
      %v7824 = vunpack.c.l.b16 %v7760
      %v7825 = vunpack.c.l.b16 %v7761
      %v7826 = vunpack.c.l.b16 %v7762
      %v7827 = vunpack.c.l.b16 %v7763
      %v7828 = vunpack.c.l.b16 %v7764
      %v7829 = vunpack.c.l.b16 %v7765
      %v7830 = vunpack.c.l.b16 %v7766
      %v7831 = vunpack.c.l.b16 %v7767
      %v7832 = vunpack.c.l.b16 %v7768
      %v7833 = vunpack.c.l.b16 %v7769
      %v7834 = vunpack.c.l.b16 %v7770
      %v7835 = vunpack.c.l.b16 %v7771
      %v7836 = vunpack.c.l.b16 %v7772
      %v7837 = vpack.c.b16 %v7806, %v7805
      %v7838 = vpack.c.b16 %v7808, %v7807
      %v7839 = vpack.c.b16 %v7810, %v7809
      %v7840 = vpack.c.b16 %v7812, %v7811
      %v7841 = vpack.c.b16 %v7814, %v7813
      %v7842 = vpack.c.b16 %v7816, %v7815
      %v7843 = vpack.c.b16 %v7818, %v7817
      %v7844 = vpack.c.b16 %v7820, %v7819
      %v7845 = vpack.c.b16 %v7822, %v7821
      %v7846 = vpack.c.b16 %v7824, %v7823
      %v7847 = vpack.c.b16 %v7826, %v7825
      %v7848 = vpack.c.b16 %v7828, %v7827
      %v7849 = vpack.c.b16 %v7830, %v7829
      %v7850 = vpack.c.b16 %v7832, %v7831
      %v7851 = vpack.c.b16 %v7834, %v7833
      %v7852 = vpack.c.b16 %v7836, %v7835
      %7869 = vmatpush.bf16.msra.mxu0 %v7844
      %7870 = vmatpush.bf16.msra.mxu0 %v7843
      %7871 = vmatpush.bf16.msra.mxu0 %v7842
      %7872 = vmatpush.bf16.msra.mxu0 %v7841
      %7873 = vmatpush.bf16.msra.mxu0 %v7840
      %7874 = vmatpush.bf16.msra.mxu0 %v7839
      %7875 = vmatpush.bf16.msra.mxu0 %v7838
      %7876 = vmatpush.bf16.msra.mxu0 %v7837
      %7877 = vmatmul.bf16.gmra.mxu0 %v7725
      %v7878 = vpop.f32.mrf.mxu0
      %v7879 = vadd.f32 0.0, %v7878
      %v7880 = vpop.f32.mrf.mxu0
      %v7881 = vadd.f32 0.0, %v7880
      %7882 = vmatmul.bf16.gmra.mxu0 %v7727
      %v7883 = vpop.f32.mrf.mxu0
      %v7884 = vadd.f32 0.0, %v7883
      %v7885 = vpop.f32.mrf.mxu0
      %v7886 = vadd.f32 0.0, %v7885
      %7887 = vmatmul.bf16.gmra.mxu0 %v7729
      %v7888 = vpop.f32.mrf.mxu0
      %v7889 = vadd.f32 0.0, %v7888
      %v7890 = vpop.f32.mrf.mxu0
      %v7891 = vadd.f32 0.0, %v7890
      %7892 = vmatmul.bf16.gmra.mxu0 %v7731
      %v7893 = vpop.f32.mrf.mxu0
      %v7894 = vadd.f32 0.0, %v7893
      %v7895 = vpop.f32.mrf.mxu0
      %v7896 = vadd.f32 0.0, %v7895
      %7897 = vmatmul.bf16.gmra.mxu0 %v7733
      %v7898 = vpop.f32.mrf.mxu0
      %v7899 = vadd.f32 0.0, %v7898
      %v7900 = vpop.f32.mrf.mxu0
      %v7901 = vadd.f32 0.0, %v7900
      %7902 = vmatmul.bf16.gmra.mxu0 %v7735
      %v7903 = vpop.f32.mrf.mxu0
      %v7904 = vadd.f32 0.0, %v7903
      %v7905 = vpop.f32.mrf.mxu0
      %v7906 = vadd.f32 0.0, %v7905
      %7907 = vmatmul.bf16.gmra.mxu0 %v7737
      %v7908 = vpop.f32.mrf.mxu0
      %v7909 = vadd.f32 0.0, %v7908
      %v7910 = vpop.f32.mrf.mxu0
      %v7911 = vadd.f32 0.0, %v7910
      %7912 = vmatmul.bf16.gmra.mxu0 %v7739
      %v7913 = vpop.f32.mrf.mxu0
      %v7914 = vadd.f32 0.0, %v7913
      %v7915 = vpop.f32.mrf.mxu0
      %v7916 = vadd.f32 0.0, %v7915
      %7917 = vdwg.mxu0
      %7918 = vmatpush.bf16.msra.mxu0 %v7852
      %7919 = vmatpush.bf16.msra.mxu0 %v7851
      %7920 = vmatpush.bf16.msra.mxu0 %v7850
      %7921 = vmatpush.bf16.msra.mxu0 %v7849
      %7922 = vmatpush.bf16.msra.mxu0 %v7848
      %7923 = vmatpush.bf16.msra.mxu0 %v7847
      %7924 = vmatpush.bf16.msra.mxu0 %v7846
      %7925 = vmatpush.bf16.msra.mxu0 %v7845
      %7926 = vmatmul.bf16.gmra.mxu0 %v7726
      %v7927 = vpop.f32.mrf.mxu0
      %v7928 = vadd.f32 %v7879, %v7927
      %v7929 = vpop.f32.mrf.mxu0
      %v7930 = vadd.f32 %v7881, %v7929
      %7931 = vmatmul.bf16.gmra.mxu0 %v7728
      %v7932 = vpop.f32.mrf.mxu0
      %v7933 = vadd.f32 %v7884, %v7932
      %v7934 = vpop.f32.mrf.mxu0
      %v7935 = vadd.f32 %v7886, %v7934
      %7936 = vmatmul.bf16.gmra.mxu0 %v7730
      %v7937 = vpop.f32.mrf.mxu0
      %v7938 = vadd.f32 %v7889, %v7937
      %v7939 = vpop.f32.mrf.mxu0
      %v7940 = vadd.f32 %v7891, %v7939
      %7941 = vmatmul.bf16.gmra.mxu0 %v7732
      %v7942 = vpop.f32.mrf.mxu0
      %v7943 = vadd.f32 %v7894, %v7942
      %v7944 = vpop.f32.mrf.mxu0
      %v7945 = vadd.f32 %v7896, %v7944
      %7946 = vmatmul.bf16.gmra.mxu0 %v7734
      %v7947 = vpop.f32.mrf.mxu0
      %v7948 = vadd.f32 %v7899, %v7947
      %v7949 = vpop.f32.mrf.mxu0
      %v7950 = vadd.f32 %v7901, %v7949
      %7951 = vmatmul.bf16.gmra.mxu0 %v7736
      %v7952 = vpop.f32.mrf.mxu0
      %v7953 = vadd.f32 %v7904, %v7952
      %v7954 = vpop.f32.mrf.mxu0
      %v7955 = vadd.f32 %v7906, %v7954
      %7956 = vmatmul.bf16.gmra.mxu0 %v7738
      %v7957 = vpop.f32.mrf.mxu0
      %v7958 = vadd.f32 %v7909, %v7957
      %v7959 = vpop.f32.mrf.mxu0
      %v7960 = vadd.f32 %v7911, %v7959
      %7961 = vmatmul.bf16.gmra.mxu0 %v7740
      %v7962 = vpop.f32.mrf.mxu0
      %v7963 = vadd.f32 %v7914, %v7962
      %v7964 = vpop.f32.mrf.mxu0
      %v7965 = vadd.f32 %v7916, %v7964
      %7966 = vdwg.mxu0
      %7967 = vst [vmem:[#allocation3] sm:$0xff] %v7928
      %7968 = vst [vmem:[#allocation3 + $0x8] sm:$0xff] %v7930
      %7969 = vst [vmem:[#allocation3 + $0x10] sm:$0xff] %v7933
      %7970 = vst [vmem:[#allocation3 + $0x18] sm:$0xff] %v7935
      %7971 = vst [vmem:[#allocation3 + $0x20] sm:$0xff] %v7938
      %7972 = vst [vmem:[#allocation3 + $0x28] sm:$0xff] %v7940
      %7973 = vst [vmem:[#allocation3 + $0x30] sm:$0xff] %v7943
      %7974 = vst [vmem:[#allocation3 + $0x38] sm:$0xff] %v7945
      %7975 = vst [vmem:[#allocation3 + $0x40] sm:$0xff] %v7948
      %7976 = vst [vmem:[#allocation3 + $0x48] sm:$0xff] %v7950
      %7977 = vst [vmem:[#allocation3 + $0x50] sm:$0xff] %v7953
      %7978 = vst [vmem:[#allocation3 + $0x58] sm:$0xff] %v7955
      %7979 = vst [vmem:[#allocation3 + $0x60] sm:$0xff] %v7958
      %7980 = vst [vmem:[#allocation3 + $0x68] sm:$0xff] %v7960
      %7981 = vst [vmem:[#allocation3 + $0x70] sm:$0xff] %v7963
      %7982 = vst [vmem:[#allocation3 + $0x78] sm:$0xff] %v7965
      %v7983 = vld [vmem:[#allocation2 + $0x100] sm:$0xff]
      %v7984 = vld [vmem:[#allocation2 + $0x108] sm:$0xff]
      %v7985 = vld [vmem:[#allocation2 + $0x110] sm:$0xff]
      %v7986 = vld [vmem:[#allocation2 + $0x118] sm:$0xff]
      %v7987 = vld [vmem:[#allocation2 + $0x120] sm:$0xff]
      %v7988 = vld [vmem:[#allocation2 + $0x128] sm:$0xff]
      %v7989 = vld [vmem:[#allocation2 + $0x130] sm:$0xff]
      %v7990 = vld [vmem:[#allocation2 + $0x138] sm:$0xff]
      %v7991 = vld [vmem:[#allocation2 + $0x140] sm:$0xff]
      %v7992 = vld [vmem:[#allocation2 + $0x148] sm:$0xff]
      %v7993 = vld [vmem:[#allocation2 + $0x150] sm:$0xff]
      %v7994 = vld [vmem:[#allocation2 + $0x158] sm:$0xff]
      %v7995 = vld [vmem:[#allocation2 + $0x160] sm:$0xff]
      %v7996 = vld [vmem:[#allocation2 + $0x168] sm:$0xff]
      %v7997 = vld [vmem:[#allocation2 + $0x170] sm:$0xff]
      %v7998 = vld [vmem:[#allocation2 + $0x178] sm:$0xff]
      %v7999 = vld [vmem:[#allocation2 + $0x180] sm:$0xff]
      %v8000 = vld [vmem:[#allocation2 + $0x188] sm:$0xff]
      %v8001 = vld [vmem:[#allocation2 + $0x190] sm:$0xff]
      %v8002 = vld [vmem:[#allocation2 + $0x198] sm:$0xff]
      %v8003 = vld [vmem:[#allocation2 + $0x1a0] sm:$0xff]
      %v8004 = vld [vmem:[#allocation2 + $0x1a8] sm:$0xff]
      %v8005 = vld [vmem:[#allocation2 + $0x1b0] sm:$0xff]
      %v8006 = vld [vmem:[#allocation2 + $0x1b8] sm:$0xff]
      %v8007 = vld [vmem:[#allocation2 + $0x1c0] sm:$0xff]
      %v8008 = vld [vmem:[#allocation2 + $0x1c8] sm:$0xff]
      %v8009 = vld [vmem:[#allocation2 + $0x1d0] sm:$0xff]
      %v8010 = vld [vmem:[#allocation2 + $0x1d8] sm:$0xff]
      %v8011 = vld [vmem:[#allocation2 + $0x1e0] sm:$0xff]
      %v8012 = vld [vmem:[#allocation2 + $0x1e8] sm:$0xff]
      %v8013 = vld [vmem:[#allocation2 + $0x1f0] sm:$0xff]
      %v8014 = vld [vmem:[#allocation2 + $0x1f8] sm:$0xff]
      %v8015 = vpack.c.bf16 %v7985, %v7983
      %v8016 = vpack.c.bf16 %v7986, %v7984
      %v8017 = vpack.c.bf16 %v7989, %v7987
      %v8018 = vpack.c.bf16 %v7990, %v7988
      %v8019 = vpack.c.bf16 %v7993, %v7991
      %v8020 = vpack.c.bf16 %v7994, %v7992
      %v8021 = vpack.c.bf16 %v7997, %v7995
      %v8022 = vpack.c.bf16 %v7998, %v7996
      %v8023 = vpack.c.bf16 %v8001, %v7999
      %v8024 = vpack.c.bf16 %v8002, %v8000
      %v8025 = vpack.c.bf16 %v8005, %v8003
      %v8026 = vpack.c.bf16 %v8006, %v8004
      %v8027 = vpack.c.bf16 %v8009, %v8007
      %v8028 = vpack.c.bf16 %v8010, %v8008
      %v8029 = vpack.c.bf16 %v8013, %v8011
      %v8030 = vpack.c.bf16 %v8014, %v8012
      %v8031 = vld [vmem:[%s3] sm:$0xf]
      %v8032 = vld [vmem:[%s3 + $0x4] sm:$0xf]
      %v8033 = vld [vmem:[%s3 + $0x8] sm:$0xf]
      %v8034 = vld [vmem:[%s3 + $0xc] sm:$0xf]
      %v8035 = vld [vmem:[%s3 + $0x10] sm:$0xf]
      %v8036 = vld [vmem:[%s3 + $0x14] sm:$0xf]
      %v8037 = vld [vmem:[%s3 + $0x18] sm:$0xf]
      %v8038 = vld [vmem:[%s3 + $0x1c] sm:$0xf]
      %v8039 = vld [vmem:[%s3 + $0x20] sm:$0xf]
      %v8040 = vld [vmem:[%s3 + $0x24] sm:$0xf]
      %v8041 = vld [vmem:[%s3 + $0x28] sm:$0xf]
      %v8042 = vld [vmem:[%s3 + $0x2c] sm:$0xf]
      %v8043 = vld [vmem:[%s3 + $0x30] sm:$0xf]
      %v8044 = vld [vmem:[%s3 + $0x34] sm:$0xf]
      %v8045 = vld [vmem:[%s3 + $0x38] sm:$0xf]
      %v8046 = vld [vmem:[%s3 + $0x3c] sm:$0xf]
      %v8047 = vld [vmem:[%s3 + $0x40] sm:$0xf]
      %v8048 = vld [vmem:[%s3 + $0x44] sm:$0xf]
      %v8049 = vld [vmem:[%s3 + $0x48] sm:$0xf]
      %v8050 = vld [vmem:[%s3 + $0x4c] sm:$0xf]
      %v8051 = vld [vmem:[%s3 + $0x50] sm:$0xf]
      %v8052 = vld [vmem:[%s3 + $0x54] sm:$0xf]
      %v8053 = vld [vmem:[%s3 + $0x58] sm:$0xf]
      %v8054 = vld [vmem:[%s3 + $0x5c] sm:$0xf]
      %v8055 = vld [vmem:[%s3 + $0x60] sm:$0xf]
      %v8056 = vld [vmem:[%s3 + $0x64] sm:$0xf]
      %v8057 = vld [vmem:[%s3 + $0x68] sm:$0xf]
      %v8058 = vld [vmem:[%s3 + $0x6c] sm:$0xf]
      %v8059 = vld [vmem:[%s3 + $0x70] sm:$0xf]
      %v8060 = vld [vmem:[%s3 + $0x74] sm:$0xf]
      %v8061 = vld [vmem:[%s3 + $0x78] sm:$0xf]
      %v8062 = vld [vmem:[%s3 + $0x7c] sm:$0xf]
      %v8095 = vunpack.c.l.b16 %v8031
      %v8096 = vunpack.c.l.b16 %v8032
      %v8097 = vunpack.c.l.b16 %v8033
      %v8098 = vunpack.c.l.b16 %v8034
      %v8099 = vunpack.c.l.b16 %v8035
      %v8100 = vunpack.c.l.b16 %v8036
      %v8101 = vunpack.c.l.b16 %v8037
      %v8102 = vunpack.c.l.b16 %v8038
      %v8103 = vunpack.c.l.b16 %v8039
      %v8104 = vunpack.c.l.b16 %v8040
      %v8105 = vunpack.c.l.b16 %v8041
      %v8106 = vunpack.c.l.b16 %v8042
      %v8107 = vunpack.c.l.b16 %v8043
      %v8108 = vunpack.c.l.b16 %v8044
      %v8109 = vunpack.c.l.b16 %v8045
      %v8110 = vunpack.c.l.b16 %v8046
      %v8111 = vunpack.c.l.b16 %v8047
      %v8112 = vunpack.c.l.b16 %v8048
      %v8113 = vunpack.c.l.b16 %v8049
      %v8114 = vunpack.c.l.b16 %v8050
      %v8115 = vunpack.c.l.b16 %v8051
      %v8116 = vunpack.c.l.b16 %v8052
      %v8117 = vunpack.c.l.b16 %v8053
      %v8118 = vunpack.c.l.b16 %v8054
      %v8119 = vunpack.c.l.b16 %v8055
      %v8120 = vunpack.c.l.b16 %v8056
      %v8121 = vunpack.c.l.b16 %v8057
      %v8122 = vunpack.c.l.b16 %v8058
      %v8123 = vunpack.c.l.b16 %v8059
      %v8124 = vunpack.c.l.b16 %v8060
      %v8125 = vunpack.c.l.b16 %v8061
      %v8126 = vunpack.c.l.b16 %v8062
      %v8127 = vpack.c.b16 %v8096, %v8095
      %v8128 = vpack.c.b16 %v8098, %v8097
      %v8129 = vpack.c.b16 %v8100, %v8099
      %v8130 = vpack.c.b16 %v8102, %v8101
      %v8131 = vpack.c.b16 %v8104, %v8103
      %v8132 = vpack.c.b16 %v8106, %v8105
      %v8133 = vpack.c.b16 %v8108, %v8107
      %v8134 = vpack.c.b16 %v8110, %v8109
      %v8135 = vpack.c.b16 %v8112, %v8111
      %v8136 = vpack.c.b16 %v8114, %v8113
      %v8137 = vpack.c.b16 %v8116, %v8115
      %v8138 = vpack.c.b16 %v8118, %v8117
      %v8139 = vpack.c.b16 %v8120, %v8119
      %v8140 = vpack.c.b16 %v8122, %v8121
      %v8141 = vpack.c.b16 %v8124, %v8123
      %v8142 = vpack.c.b16 %v8126, %v8125
      %8159 = vmatpush.bf16.msra.mxu0 %v8134
      %8160 = vmatpush.bf16.msra.mxu0 %v8133
      %8161 = vmatpush.bf16.msra.mxu0 %v8132
      %8162 = vmatpush.bf16.msra.mxu0 %v8131
      %8163 = vmatpush.bf16.msra.mxu0 %v8130
      %8164 = vmatpush.bf16.msra.mxu0 %v8129
      %8165 = vmatpush.bf16.msra.mxu0 %v8128
      %8166 = vmatpush.bf16.msra.mxu0 %v8127
      %8167 = vmatmul.bf16.gmra.mxu0 %v8015
      %v8168 = vpop.f32.mrf.mxu0
      %v8169 = vadd.f32 0.0, %v8168
      %v8170 = vpop.f32.mrf.mxu0
      %v8171 = vadd.f32 0.0, %v8170
      %8172 = vmatmul.bf16.gmra.mxu0 %v8017
      %v8173 = vpop.f32.mrf.mxu0
      %v8174 = vadd.f32 0.0, %v8173
      %v8175 = vpop.f32.mrf.mxu0
      %v8176 = vadd.f32 0.0, %v8175
      %8177 = vmatmul.bf16.gmra.mxu0 %v8019
      %v8178 = vpop.f32.mrf.mxu0
      %v8179 = vadd.f32 0.0, %v8178
      %v8180 = vpop.f32.mrf.mxu0
      %v8181 = vadd.f32 0.0, %v8180
      %8182 = vmatmul.bf16.gmra.mxu0 %v8021
      %v8183 = vpop.f32.mrf.mxu0
      %v8184 = vadd.f32 0.0, %v8183
      %v8185 = vpop.f32.mrf.mxu0
      %v8186 = vadd.f32 0.0, %v8185
      %8187 = vmatmul.bf16.gmra.mxu0 %v8023
      %v8188 = vpop.f32.mrf.mxu0
      %v8189 = vadd.f32 0.0, %v8188
      %v8190 = vpop.f32.mrf.mxu0
      %v8191 = vadd.f32 0.0, %v8190
      %8192 = vmatmul.bf16.gmra.mxu0 %v8025
      %v8193 = vpop.f32.mrf.mxu0
      %v8194 = vadd.f32 0.0, %v8193
      %v8195 = vpop.f32.mrf.mxu0
      %v8196 = vadd.f32 0.0, %v8195
      %8197 = vmatmul.bf16.gmra.mxu0 %v8027
      %v8198 = vpop.f32.mrf.mxu0
      %v8199 = vadd.f32 0.0, %v8198
      %v8200 = vpop.f32.mrf.mxu0
      %v8201 = vadd.f32 0.0, %v8200
      %8202 = vmatmul.bf16.gmra.mxu0 %v8029
      %v8203 = vpop.f32.mrf.mxu0
      %v8204 = vadd.f32 0.0, %v8203
      %v8205 = vpop.f32.mrf.mxu0
      %v8206 = vadd.f32 0.0, %v8205
      %8207 = vdwg.mxu0
      %8208 = vmatpush.bf16.msra.mxu0 %v8142
      %8209 = vmatpush.bf16.msra.mxu0 %v8141
      %8210 = vmatpush.bf16.msra.mxu0 %v8140
      %8211 = vmatpush.bf16.msra.mxu0 %v8139
      %8212 = vmatpush.bf16.msra.mxu0 %v8138
      %8213 = vmatpush.bf16.msra.mxu0 %v8137
      %8214 = vmatpush.bf16.msra.mxu0 %v8136
      %8215 = vmatpush.bf16.msra.mxu0 %v8135
      %8216 = vmatmul.bf16.gmra.mxu0 %v8016
      %v8217 = vpop.f32.mrf.mxu0
      %v8218 = vadd.f32 %v8169, %v8217
      %v8219 = vpop.f32.mrf.mxu0
      %v8220 = vadd.f32 %v8171, %v8219
      %8221 = vmatmul.bf16.gmra.mxu0 %v8018
      %v8222 = vpop.f32.mrf.mxu0
      %v8223 = vadd.f32 %v8174, %v8222
      %v8224 = vpop.f32.mrf.mxu0
      %v8225 = vadd.f32 %v8176, %v8224
      %8226 = vmatmul.bf16.gmra.mxu0 %v8020
      %v8227 = vpop.f32.mrf.mxu0
      %v8228 = vadd.f32 %v8179, %v8227
      %v8229 = vpop.f32.mrf.mxu0
      %v8230 = vadd.f32 %v8181, %v8229
      %8231 = vmatmul.bf16.gmra.mxu0 %v8022
      %v8232 = vpop.f32.mrf.mxu0
      %v8233 = vadd.f32 %v8184, %v8232
      %v8234 = vpop.f32.mrf.mxu0
      %v8235 = vadd.f32 %v8186, %v8234
      %8236 = vmatmul.bf16.gmra.mxu0 %v8024
      %v8237 = vpop.f32.mrf.mxu0
      %v8238 = vadd.f32 %v8189, %v8237
      %v8239 = vpop.f32.mrf.mxu0
      %v8240 = vadd.f32 %v8191, %v8239
      %8241 = vmatmul.bf16.gmra.mxu0 %v8026
      %v8242 = vpop.f32.mrf.mxu0
      %v8243 = vadd.f32 %v8194, %v8242
      %v8244 = vpop.f32.mrf.mxu0
      %v8245 = vadd.f32 %v8196, %v8244
      %8246 = vmatmul.bf16.gmra.mxu0 %v8028
      %v8247 = vpop.f32.mrf.mxu0
      %v8248 = vadd.f32 %v8199, %v8247
      %v8249 = vpop.f32.mrf.mxu0
      %v8250 = vadd.f32 %v8201, %v8249
      %8251 = vmatmul.bf16.gmra.mxu0 %v8030
      %v8252 = vpop.f32.mrf.mxu0
      %v8253 = vadd.f32 %v8204, %v8252
      %v8254 = vpop.f32.mrf.mxu0
      %v8255 = vadd.f32 %v8206, %v8254
      %8256 = vdwg.mxu0
      %8257 = vst [vmem:[#allocation3 + $0x80] sm:$0xff] %v8218
      %8258 = vst [vmem:[#allocation3 + $0x88] sm:$0xff] %v8220
      %8259 = vst [vmem:[#allocation3 + $0x90] sm:$0xff] %v8223
      %8260 = vst [vmem:[#allocation3 + $0x98] sm:$0xff] %v8225
      %8261 = vst [vmem:[#allocation3 + $0xa0] sm:$0xff] %v8228
      %8262 = vst [vmem:[#allocation3 + $0xa8] sm:$0xff] %v8230
      %8263 = vst [vmem:[#allocation3 + $0xb0] sm:$0xff] %v8233
      %8264 = vst [vmem:[#allocation3 + $0xb8] sm:$0xff] %v8235
      %8265 = vst [vmem:[#allocation3 + $0xc0] sm:$0xff] %v8238
      %8266 = vst [vmem:[#allocation3 + $0xc8] sm:$0xff] %v8240
      %8267 = vst [vmem:[#allocation3 + $0xd0] sm:$0xff] %v8243
      %8268 = vst [vmem:[#allocation3 + $0xd8] sm:$0xff] %v8245
      %8269 = vst [vmem:[#allocation3 + $0xe0] sm:$0xff] %v8248
      %8270 = vst [vmem:[#allocation3 + $0xe8] sm:$0xff] %v8250
      %8271 = vst [vmem:[#allocation3 + $0xf0] sm:$0xff] %v8253
      %8272 = vst [vmem:[#allocation3 + $0xf8] sm:$0xff] %v8255
      %v8273 = vld [vmem:[#allocation2 + $0x200] sm:$0xff]
      %v8274 = vld [vmem:[#allocation2 + $0x208] sm:$0xff]
      %v8275 = vld [vmem:[#allocation2 + $0x210] sm:$0xff]
      %v8276 = vld [vmem:[#allocation2 + $0x218] sm:$0xff]
      %v8277 = vld [vmem:[#allocation2 + $0x220] sm:$0xff]
      %v8278 = vld [vmem:[#allocation2 + $0x228] sm:$0xff]
      %v8279 = vld [vmem:[#allocation2 + $0x230] sm:$0xff]
      %v8280 = vld [vmem:[#allocation2 + $0x238] sm:$0xff]
      %v8281 = vld [vmem:[#allocation2 + $0x240] sm:$0xff]
      %v8282 = vld [vmem:[#allocation2 + $0x248] sm:$0xff]
      %v8283 = vld [vmem:[#allocation2 + $0x250] sm:$0xff]
      %v8284 = vld [vmem:[#allocation2 + $0x258] sm:$0xff]
      %v8285 = vld [vmem:[#allocation2 + $0x260] sm:$0xff]
      %v8286 = vld [vmem:[#allocation2 + $0x268] sm:$0xff]
      %v8287 = vld [vmem:[#allocation2 + $0x270] sm:$0xff]
      %v8288 = vld [vmem:[#allocation2 + $0x278] sm:$0xff]
      %v8289 = vld [vmem:[#allocation2 + $0x280] sm:$0xf]
      %v8290 = vld [vmem:[#allocation2 + $0x288] sm:$0xf]
      %v8291 = vpack.c.bf16 %v8275, %v8273
      %v8292 = vpack.c.bf16 %v8276, %v8274
      %v8293 = vpack.c.bf16 %v8279, %v8277
      %v8294 = vpack.c.bf16 %v8280, %v8278
      %v8295 = vpack.c.bf16 %v8283, %v8281
      %v8296 = vpack.c.bf16 %v8284, %v8282
      %v8297 = vpack.c.bf16 %v8287, %v8285
      %v8298 = vpack.c.bf16 %v8288, %v8286
      %v8299 = vpack.c.bf16 %v8289, %v8289
      %v8300 = vpack.c.bf16 %v8290, %v8290
      %v8301 = vld [vmem:[%s3] sm:$0xf]
      %v8302 = vld [vmem:[%s3 + $0x4] sm:$0xf]
      %v8303 = vld [vmem:[%s3 + $0x8] sm:$0xf]
      %v8304 = vld [vmem:[%s3 + $0xc] sm:$0xf]
      %v8305 = vld [vmem:[%s3 + $0x10] sm:$0xf]
      %v8306 = vld [vmem:[%s3 + $0x14] sm:$0xf]
      %v8307 = vld [vmem:[%s3 + $0x18] sm:$0xf]
      %v8308 = vld [vmem:[%s3 + $0x1c] sm:$0xf]
      %v8309 = vld [vmem:[%s3 + $0x20] sm:$0xf]
      %v8310 = vld [vmem:[%s3 + $0x24] sm:$0xf]
      %v8311 = vld [vmem:[%s3 + $0x28] sm:$0xf]
      %v8312 = vld [vmem:[%s3 + $0x2c] sm:$0xf]
      %v8313 = vld [vmem:[%s3 + $0x30] sm:$0xf]
      %v8314 = vld [vmem:[%s3 + $0x34] sm:$0xf]
      %v8315 = vld [vmem:[%s3 + $0x38] sm:$0xf]
      %v8316 = vld [vmem:[%s3 + $0x3c] sm:$0xf]
      %v8317 = vld [vmem:[%s3 + $0x40] sm:$0xf]
      %v8318 = vld [vmem:[%s3 + $0x44] sm:$0xf]
      %v8319 = vld [vmem:[%s3 + $0x48] sm:$0xf]
      %v8320 = vld [vmem:[%s3 + $0x4c] sm:$0xf]
      %v8321 = vld [vmem:[%s3 + $0x50] sm:$0xf]
      %v8322 = vld [vmem:[%s3 + $0x54] sm:$0xf]
      %v8323 = vld [vmem:[%s3 + $0x58] sm:$0xf]
      %v8324 = vld [vmem:[%s3 + $0x5c] sm:$0xf]
      %v8325 = vld [vmem:[%s3 + $0x60] sm:$0xf]
      %v8326 = vld [vmem:[%s3 + $0x64] sm:$0xf]
      %v8327 = vld [vmem:[%s3 + $0x68] sm:$0xf]
      %v8328 = vld [vmem:[%s3 + $0x6c] sm:$0xf]
      %v8329 = vld [vmem:[%s3 + $0x70] sm:$0xf]
      %v8330 = vld [vmem:[%s3 + $0x74] sm:$0xf]
      %v8331 = vld [vmem:[%s3 + $0x78] sm:$0xf]
      %v8332 = vld [vmem:[%s3 + $0x7c] sm:$0xf]
      %v8365 = vunpack.c.l.b16 %v8301
      %v8366 = vunpack.c.l.b16 %v8302
      %v8367 = vunpack.c.l.b16 %v8303
      %v8368 = vunpack.c.l.b16 %v8304
      %v8369 = vunpack.c.l.b16 %v8305
      %v8370 = vunpack.c.l.b16 %v8306
      %v8371 = vunpack.c.l.b16 %v8307
      %v8372 = vunpack.c.l.b16 %v8308
      %v8373 = vunpack.c.l.b16 %v8309
      %v8374 = vunpack.c.l.b16 %v8310
      %v8375 = vunpack.c.l.b16 %v8311
      %v8376 = vunpack.c.l.b16 %v8312
      %v8377 = vunpack.c.l.b16 %v8313
      %v8378 = vunpack.c.l.b16 %v8314
      %v8379 = vunpack.c.l.b16 %v8315
      %v8380 = vunpack.c.l.b16 %v8316
      %v8381 = vunpack.c.l.b16 %v8317
      %v8382 = vunpack.c.l.b16 %v8318
      %v8383 = vunpack.c.l.b16 %v8319
      %v8384 = vunpack.c.l.b16 %v8320
      %v8385 = vunpack.c.l.b16 %v8321
      %v8386 = vunpack.c.l.b16 %v8322
      %v8387 = vunpack.c.l.b16 %v8323
      %v8388 = vunpack.c.l.b16 %v8324
      %v8389 = vunpack.c.l.b16 %v8325
      %v8390 = vunpack.c.l.b16 %v8326
      %v8391 = vunpack.c.l.b16 %v8327
      %v8392 = vunpack.c.l.b16 %v8328
      %v8393 = vunpack.c.l.b16 %v8329
      %v8394 = vunpack.c.l.b16 %v8330
      %v8395 = vunpack.c.l.b16 %v8331
      %v8396 = vunpack.c.l.b16 %v8332
      %v8397 = vpack.c.b16 %v8366, %v8365
      %v8398 = vpack.c.b16 %v8368, %v8367
      %v8399 = vpack.c.b16 %v8370, %v8369
      %v8400 = vpack.c.b16 %v8372, %v8371
      %v8401 = vpack.c.b16 %v8374, %v8373
      %v8402 = vpack.c.b16 %v8376, %v8375
      %v8403 = vpack.c.b16 %v8378, %v8377
      %v8404 = vpack.c.b16 %v8380, %v8379
      %v8405 = vpack.c.b16 %v8382, %v8381
      %v8406 = vpack.c.b16 %v8384, %v8383
      %v8407 = vpack.c.b16 %v8386, %v8385
      %v8408 = vpack.c.b16 %v8388, %v8387
      %v8409 = vpack.c.b16 %v8390, %v8389
      %v8410 = vpack.c.b16 %v8392, %v8391
      %v8411 = vpack.c.b16 %v8394, %v8393
      %v8412 = vpack.c.b16 %v8396, %v8395
      %8429 = vmatpush.bf16.msra.mxu0 %v8404
      %8430 = vmatpush.bf16.msra.mxu0 %v8403
      %8431 = vmatpush.bf16.msra.mxu0 %v8402
      %8432 = vmatpush.bf16.msra.mxu0 %v8401
      %8433 = vmatpush.bf16.msra.mxu0 %v8400
      %8434 = vmatpush.bf16.msra.mxu0 %v8399
      %8435 = vmatpush.bf16.msra.mxu0 %v8398
      %8436 = vmatpush.bf16.msra.mxu0 %v8397
      %8437 = vmatmul.bf16.gmra.mxu0 %v8291
      %v8438 = vpop.f32.mrf.mxu0
      %v8439 = vadd.f32 0.0, %v8438
      %v8440 = vpop.f32.mrf.mxu0
      %v8441 = vadd.f32 0.0, %v8440
      %8442 = vmatmul.bf16.gmra.mxu0 %v8293
      %v8443 = vpop.f32.mrf.mxu0
      %v8444 = vadd.f32 0.0, %v8443
      %v8445 = vpop.f32.mrf.mxu0
      %v8446 = vadd.f32 0.0, %v8445
      %8447 = vmatmul.bf16.gmra.mxu0 %v8295
      %v8448 = vpop.f32.mrf.mxu0
      %v8449 = vadd.f32 0.0, %v8448
      %v8450 = vpop.f32.mrf.mxu0
      %v8451 = vadd.f32 0.0, %v8450
      %8452 = vmatmul.bf16.gmra.mxu0 %v8297
      %v8453 = vpop.f32.mrf.mxu0
      %v8454 = vadd.f32 0.0, %v8453
      %v8455 = vpop.f32.mrf.mxu0
      %v8456 = vadd.f32 0.0, %v8455
      %8457 = vmatmul.bf16.gmra.mxu0 %v8299
      %v8458 = vpop.f32.mrf.mxu0
      %v8459 = vadd.f32 0.0, %v8458
      %v8460 = vpop.f32.mrf.mxu0
      %8461 = vdwg.mxu0
      %8462 = vmatpush.bf16.msra.mxu0 %v8412
      %8463 = vmatpush.bf16.msra.mxu0 %v8411
      %8464 = vmatpush.bf16.msra.mxu0 %v8410
      %8465 = vmatpush.bf16.msra.mxu0 %v8409
      %8466 = vmatpush.bf16.msra.mxu0 %v8408
      %8467 = vmatpush.bf16.msra.mxu0 %v8407
      %8468 = vmatpush.bf16.msra.mxu0 %v8406
      %8469 = vmatpush.bf16.msra.mxu0 %v8405
      %8470 = vmatmul.bf16.gmra.mxu0 %v8292
      %v8471 = vpop.f32.mrf.mxu0
      %v8472 = vadd.f32 %v8439, %v8471
      %v8473 = vpop.f32.mrf.mxu0
      %v8474 = vadd.f32 %v8441, %v8473
      %8475 = vmatmul.bf16.gmra.mxu0 %v8294
      %v8476 = vpop.f32.mrf.mxu0
      %v8477 = vadd.f32 %v8444, %v8476
      %v8478 = vpop.f32.mrf.mxu0
      %v8479 = vadd.f32 %v8446, %v8478
      %8480 = vmatmul.bf16.gmra.mxu0 %v8296
      %v8481 = vpop.f32.mrf.mxu0
      %v8482 = vadd.f32 %v8449, %v8481
      %v8483 = vpop.f32.mrf.mxu0
      %v8484 = vadd.f32 %v8451, %v8483
      %8485 = vmatmul.bf16.gmra.mxu0 %v8298
      %v8486 = vpop.f32.mrf.mxu0
      %v8487 = vadd.f32 %v8454, %v8486
      %v8488 = vpop.f32.mrf.mxu0
      %v8489 = vadd.f32 %v8456, %v8488
      %8490 = vmatmul.bf16.gmra.mxu0 %v8300
      %v8491 = vpop.f32.mrf.mxu0
      %v8492 = vadd.f32 %v8459, %v8491
      %v8493 = vpop.f32.mrf.mxu0
      %8494 = vdwg.mxu0
      %8495 = vst [vmem:[#allocation3 + $0x100] sm:$0xff] %v8472
      %8496 = vst [vmem:[#allocation3 + $0x108] sm:$0xff] %v8474
      %8497 = vst [vmem:[#allocation3 + $0x110] sm:$0xff] %v8477
      %8498 = vst [vmem:[#allocation3 + $0x118] sm:$0xff] %v8479
      %8499 = vst [vmem:[#allocation3 + $0x120] sm:$0xff] %v8482
      %8500 = vst [vmem:[#allocation3 + $0x128] sm:$0xff] %v8484
      %8501 = vst [vmem:[#allocation3 + $0x130] sm:$0xff] %v8487
      %8502 = vst [vmem:[#allocation3 + $0x138] sm:$0xff] %v8489
      %8503 = vst [vmem:[#allocation3 + $0x140] sm:$0xf] %v8492
      %v8504 = vld [vmem:[#allocation3] sm:$0xff]
      %v8505 = vld [vmem:[#allocation3 + $0x8] sm:$0xff]
      %v8506 = vld [vmem:[#allocation3 + $0x10] sm:$0xff]
      %v8507 = vld [vmem:[#allocation3 + $0x18] sm:$0xff]
      %v8508 = vld [vmem:[#allocation3 + $0x20] sm:$0xff]
      %v8509 = vld [vmem:[#allocation3 + $0x28] sm:$0xff]
      %v8510 = vld [vmem:[#allocation3 + $0x30] sm:$0xff]
      %v8511 = vld [vmem:[#allocation3 + $0x38] sm:$0xff]
      %v8512 = vld [vmem:[#allocation3 + $0x40] sm:$0xff]
      %v8513 = vld [vmem:[#allocation3 + $0x48] sm:$0xff]
      %v8514 = vld [vmem:[#allocation3 + $0x50] sm:$0xff]
      %v8515 = vld [vmem:[#allocation3 + $0x58] sm:$0xff]
      %v8516 = vld [vmem:[#allocation3 + $0x1] sm:$0xff]
      %v8517 = vld [vmem:[#allocation3 + $0x9] sm:$0xff]
      %v8518 = vld [vmem:[#allocation3 + $0x11] sm:$0xff]
      %v8519 = vld [vmem:[#allocation3 + $0x19] sm:$0xff]
      %v8520 = vld [vmem:[#allocation3 + $0x21] sm:$0xff]
      %v8521 = vld [vmem:[#allocation3 + $0x29] sm:$0xff]
      %v8522 = vld [vmem:[#allocation3 + $0x31] sm:$0xff]
      %v8523 = vld [vmem:[#allocation3 + $0x39] sm:$0xff]
      %v8524 = vld [vmem:[#allocation3 + $0x41] sm:$0xff]
      %v8525 = vld [vmem:[#allocation3 + $0x49] sm:$0xff]
      %v8526 = vld [vmem:[#allocation3 + $0x51] sm:$0xff]
      %v8527 = vld [vmem:[#allocation3 + $0x59] sm:$0xff]
      %8540 = vrot.lane.b32.xlu0 %v8516, 124
      %v8541 = vpop.permute.xlu0 %8540
      %8542 = vrot.lane.b32.xlu0 %v8517, 124
      %v8543 = vpop.permute.xlu0 %8542
      %8544 = vrot.lane.b32.xlu0 %v8518, 124
      %v8545 = vpop.permute.xlu0 %8544
      %8546 = vrot.lane.b32.xlu0 %v8519, 124
      %v8547 = vpop.permute.xlu0 %8546
      %8548 = vrot.lane.b32.xlu0 %v8520, 124
      %v8549 = vpop.permute.xlu0 %8548
      %8550 = vrot.lane.b32.xlu0 %v8521, 124
      %v8551 = vpop.permute.xlu0 %8550
      %8552 = vrot.lane.b32.xlu0 %v8522, 124
      %v8553 = vpop.permute.xlu0 %8552
      %8554 = vrot.lane.b32.xlu0 %v8523, 124
      %v8555 = vpop.permute.xlu0 %8554
      %8556 = vrot.lane.b32.xlu0 %v8524, 124
      %v8557 = vpop.permute.xlu0 %8556
      %8558 = vrot.lane.b32.xlu0 %v8525, 124
      %v8559 = vpop.permute.xlu0 %8558
      %8560 = vrot.lane.b32.xlu0 %v8526, 124
      %v8561 = vpop.permute.xlu0 %8560
      %8562 = vrot.lane.b32.xlu0 %v8527, 124
      %v8563 = vpop.permute.xlu0 %8562
      %v8576 = vadd.f32 %v8504, %v8541
      %v8577 = vadd.f32 %v8505, %v8543
      %v8578 = vadd.f32 %v8506, %v8545
      %v8579 = vadd.f32 %v8507, %v8547
      %v8580 = vadd.f32 %v8508, %v8549
      %v8581 = vadd.f32 %v8509, %v8551
      %v8582 = vadd.f32 %v8510, %v8553
      %v8583 = vadd.f32 %v8511, %v8555
      %v8584 = vadd.f32 %v8512, %v8557
      %v8585 = vadd.f32 %v8513, %v8559
      %v8586 = vadd.f32 %v8514, %v8561
      %v8587 = vadd.f32 %v8515, %v8563
      %v8588 = vld [vmem:[#allocation3 + $0x2] sm:$0xff]
      %v8589 = vld [vmem:[#allocation3 + $0xa] sm:$0xff]
      %v8590 = vld [vmem:[#allocation3 + $0x12] sm:$0xff]
      %v8591 = vld [vmem:[#allocation3 + $0x1a] sm:$0xff]
      %v8592 = vld [vmem:[#allocation3 + $0x22] sm:$0xff]
      %v8593 = vld [vmem:[#allocation3 + $0x2a] sm:$0xff]
      %v8594 = vld [vmem:[#allocation3 + $0x32] sm:$0xff]
      %v8595 = vld [vmem:[#allocation3 + $0x3a] sm:$0xff]
      %v8596 = vld [vmem:[#allocation3 + $0x42] sm:$0xff]
      %v8597 = vld [vmem:[#allocation3 + $0x4a] sm:$0xff]
      %v8598 = vld [vmem:[#allocation3 + $0x52] sm:$0xff]
      %v8599 = vld [vmem:[#allocation3 + $0x5a] sm:$0xff]
      %8612 = vrot.lane.b32.xlu0 %v8588, 120
      %v8613 = vpop.permute.xlu0 %8612
      %8614 = vrot.lane.b32.xlu0 %v8589, 120
      %v8615 = vpop.permute.xlu0 %8614
      %8616 = vrot.lane.b32.xlu0 %v8590, 120
      %v8617 = vpop.permute.xlu0 %8616
      %8618 = vrot.lane.b32.xlu0 %v8591, 120
      %v8619 = vpop.permute.xlu0 %8618
      %8620 = vrot.lane.b32.xlu0 %v8592, 120
      %v8621 = vpop.permute.xlu0 %8620
      %8622 = vrot.lane.b32.xlu0 %v8593, 120
      %v8623 = vpop.permute.xlu0 %8622
      %8624 = vrot.lane.b32.xlu0 %v8594, 120
      %v8625 = vpop.permute.xlu0 %8624
      %8626 = vrot.lane.b32.xlu0 %v8595, 120
      %v8627 = vpop.permute.xlu0 %8626
      %8628 = vrot.lane.b32.xlu0 %v8596, 120
      %v8629 = vpop.permute.xlu0 %8628
      %8630 = vrot.lane.b32.xlu0 %v8597, 120
      %v8631 = vpop.permute.xlu0 %8630
      %8632 = vrot.lane.b32.xlu0 %v8598, 120
      %v8633 = vpop.permute.xlu0 %8632
      %8634 = vrot.lane.b32.xlu0 %v8599, 120
      %v8635 = vpop.permute.xlu0 %8634
      %v8648 = vadd.f32 %v8576, %v8613
      %v8649 = vadd.f32 %v8577, %v8615
      %v8650 = vadd.f32 %v8578, %v8617
      %v8651 = vadd.f32 %v8579, %v8619
      %v8652 = vadd.f32 %v8580, %v8621
      %v8653 = vadd.f32 %v8581, %v8623
      %v8654 = vadd.f32 %v8582, %v8625
      %v8655 = vadd.f32 %v8583, %v8627
      %v8656 = vadd.f32 %v8584, %v8629
      %v8657 = vadd.f32 %v8585, %v8631
      %v8658 = vadd.f32 %v8586, %v8633
      %v8659 = vadd.f32 %v8587, %v8635
      %v8660 = vld [vmem:[#allocation3 + $0x62] sm:$0xff]
      %v8661 = vld [vmem:[#allocation3 + $0x6a] sm:$0xff]
      %8664 = vrot.lane.b32.xlu0 %v8590, 116
      %v8665 = vpop.permute.xlu0 %8664
      %8666 = vrot.lane.b32.xlu0 %v8591, 116
      %v8667 = vpop.permute.xlu0 %8666
      %8668 = vrot.lane.b32.xlu0 %v8592, 116
      %v8669 = vpop.permute.xlu0 %8668
      %8670 = vrot.lane.b32.xlu0 %v8593, 116
      %v8671 = vpop.permute.xlu0 %8670
      %8672 = vrot.lane.b32.xlu0 %v8594, 116
      %v8673 = vpop.permute.xlu0 %8672
      %8674 = vrot.lane.b32.xlu0 %v8595, 116
      %v8675 = vpop.permute.xlu0 %8674
      %8676 = vrot.lane.b32.xlu0 %v8596, 116
      %v8677 = vpop.permute.xlu0 %8676
      %8678 = vrot.lane.b32.xlu0 %v8597, 116
      %v8679 = vpop.permute.xlu0 %8678
      %8680 = vrot.lane.b32.xlu0 %v8598, 116
      %v8681 = vpop.permute.xlu0 %8680
      %8682 = vrot.lane.b32.xlu0 %v8599, 116
      %v8683 = vpop.permute.xlu0 %8682
      %8684 = vrot.lane.b32.xlu0 %v8660, 116
      %v8685 = vpop.permute.xlu0 %8684
      %8686 = vrot.lane.b32.xlu0 %v8661, 116
      %v8687 = vpop.permute.xlu0 %8686
      %v8700 = vadd.f32 %v8648, %v8665
      %v8701 = vadd.f32 %v8649, %v8667
      %v8702 = vadd.f32 %v8650, %v8669
      %v8703 = vadd.f32 %v8651, %v8671
      %v8704 = vadd.f32 %v8652, %v8673
      %v8705 = vadd.f32 %v8653, %v8675
      %v8706 = vadd.f32 %v8654, %v8677
      %v8707 = vadd.f32 %v8655, %v8679
      %v8708 = vadd.f32 %v8656, %v8681
      %v8709 = vadd.f32 %v8657, %v8683
      %v8710 = vadd.f32 %v8658, %v8685
      %v8711 = vadd.f32 %v8659, %v8687
      %v8712 = vld [vmem:[#allocation3 + $0x13] sm:$0xff]
      %v8713 = vld [vmem:[#allocation3 + $0x1b] sm:$0xff]
      %v8714 = vld [vmem:[#allocation3 + $0x23] sm:$0xff]
      %v8715 = vld [vmem:[#allocation3 + $0x2b] sm:$0xff]
      %v8716 = vld [vmem:[#allocation3 + $0x33] sm:$0xff]
      %v8717 = vld [vmem:[#allocation3 + $0x3b] sm:$0xff]
      %v8718 = vld [vmem:[#allocation3 + $0x43] sm:$0xff]
      %v8719 = vld [vmem:[#allocation3 + $0x4b] sm:$0xff]
      %v8720 = vld [vmem:[#allocation3 + $0x53] sm:$0xff]
      %v8721 = vld [vmem:[#allocation3 + $0x5b] sm:$0xff]
      %v8722 = vld [vmem:[#allocation3 + $0x63] sm:$0xff]
      %v8723 = vld [vmem:[#allocation3 + $0x6b] sm:$0xff]
      %8736 = vrot.lane.b32.xlu0 %v8712, 112
      %v8737 = vpop.permute.xlu0 %8736
      %8738 = vrot.lane.b32.xlu0 %v8713, 112
      %v8739 = vpop.permute.xlu0 %8738
      %8740 = vrot.lane.b32.xlu0 %v8714, 112
      %v8741 = vpop.permute.xlu0 %8740
      %8742 = vrot.lane.b32.xlu0 %v8715, 112
      %v8743 = vpop.permute.xlu0 %8742
      %8744 = vrot.lane.b32.xlu0 %v8716, 112
      %v8745 = vpop.permute.xlu0 %8744
      %8746 = vrot.lane.b32.xlu0 %v8717, 112
      %v8747 = vpop.permute.xlu0 %8746
      %8748 = vrot.lane.b32.xlu0 %v8718, 112
      %v8749 = vpop.permute.xlu0 %8748
      %8750 = vrot.lane.b32.xlu0 %v8719, 112
      %v8751 = vpop.permute.xlu0 %8750
      %8752 = vrot.lane.b32.xlu0 %v8720, 112
      %v8753 = vpop.permute.xlu0 %8752
      %8754 = vrot.lane.b32.xlu0 %v8721, 112
      %v8755 = vpop.permute.xlu0 %8754
      %8756 = vrot.lane.b32.xlu0 %v8722, 112
      %v8757 = vpop.permute.xlu0 %8756
      %8758 = vrot.lane.b32.xlu0 %v8723, 112
      %v8759 = vpop.permute.xlu0 %8758
      %v8772 = vadd.f32 %v8700, %v8737
      %v8773 = vadd.f32 %v8701, %v8739
      %v8774 = vadd.f32 %v8702, %v8741
      %v8775 = vadd.f32 %v8703, %v8743
      %v8776 = vadd.f32 %v8704, %v8745
      %v8777 = vadd.f32 %v8705, %v8747
      %v8778 = vadd.f32 %v8706, %v8749
      %v8779 = vadd.f32 %v8707, %v8751
      %v8780 = vadd.f32 %v8708, %v8753
      %v8781 = vadd.f32 %v8709, %v8755
      %v8782 = vadd.f32 %v8710, %v8757
      %v8783 = vadd.f32 %v8711, %v8759
      %v8784 = vld [vmem:[#allocation3 + $0x14] sm:$0xff]
      %v8785 = vld [vmem:[#allocation3 + $0x1c] sm:$0xff]
      %v8786 = vld [vmem:[#allocation3 + $0x24] sm:$0xff]
      %v8787 = vld [vmem:[#allocation3 + $0x2c] sm:$0xff]
      %v8788 = vld [vmem:[#allocation3 + $0x34] sm:$0xff]
      %v8789 = vld [vmem:[#allocation3 + $0x3c] sm:$0xff]
      %v8790 = vld [vmem:[#allocation3 + $0x44] sm:$0xff]
      %v8791 = vld [vmem:[#allocation3 + $0x4c] sm:$0xff]
      %v8792 = vld [vmem:[#allocation3 + $0x54] sm:$0xff]
      %v8793 = vld [vmem:[#allocation3 + $0x5c] sm:$0xff]
      %v8794 = vld [vmem:[#allocation3 + $0x64] sm:$0xff]
      %v8795 = vld [vmem:[#allocation3 + $0x6c] sm:$0xff]
      %8808 = vrot.lane.b32.xlu0 %v8784, 108
      %v8809 = vpop.permute.xlu0 %8808
      %8810 = vrot.lane.b32.xlu0 %v8785, 108
      %v8811 = vpop.permute.xlu0 %8810
      %8812 = vrot.lane.b32.xlu0 %v8786, 108
      %v8813 = vpop.permute.xlu0 %8812
      %8814 = vrot.lane.b32.xlu0 %v8787, 108
      %v8815 = vpop.permute.xlu0 %8814
      %8816 = vrot.lane.b32.xlu0 %v8788, 108
      %v8817 = vpop.permute.xlu0 %8816
      %8818 = vrot.lane.b32.xlu0 %v8789, 108
      %v8819 = vpop.permute.xlu0 %8818
      %8820 = vrot.lane.b32.xlu0 %v8790, 108
      %v8821 = vpop.permute.xlu0 %8820
      %8822 = vrot.lane.b32.xlu0 %v8791, 108
      %v8823 = vpop.permute.xlu0 %8822
      %8824 = vrot.lane.b32.xlu0 %v8792, 108
      %v8825 = vpop.permute.xlu0 %8824
      %8826 = vrot.lane.b32.xlu0 %v8793, 108
      %v8827 = vpop.permute.xlu0 %8826
      %8828 = vrot.lane.b32.xlu0 %v8794, 108
      %v8829 = vpop.permute.xlu0 %8828
      %8830 = vrot.lane.b32.xlu0 %v8795, 108
      %v8831 = vpop.permute.xlu0 %8830
      %v8844 = vadd.f32 %v8772, %v8809
      %v8845 = vadd.f32 %v8773, %v8811
      %v8846 = vadd.f32 %v8774, %v8813
      %v8847 = vadd.f32 %v8775, %v8815
      %v8848 = vadd.f32 %v8776, %v8817
      %v8849 = vadd.f32 %v8777, %v8819
      %v8850 = vadd.f32 %v8778, %v8821
      %v8851 = vadd.f32 %v8779, %v8823
      %v8852 = vadd.f32 %v8780, %v8825
      %v8853 = vadd.f32 %v8781, %v8827
      %v8854 = vadd.f32 %v8782, %v8829
      %v8855 = vadd.f32 %v8783, %v8831
      %v8856 = vld [vmem:[#allocation3 + $0x74] sm:$0xff]
      %v8857 = vld [vmem:[#allocation3 + $0x7c] sm:$0xff]
      %8860 = vrot.lane.b32.xlu0 %v8786, 104
      %v8861 = vpop.permute.xlu0 %8860
      %8862 = vrot.lane.b32.xlu0 %v8787, 104
      %v8863 = vpop.permute.xlu0 %8862
      %8864 = vrot.lane.b32.xlu0 %v8788, 104
      %v8865 = vpop.permute.xlu0 %8864
      %8866 = vrot.lane.b32.xlu0 %v8789, 104
      %v8867 = vpop.permute.xlu0 %8866
      %8868 = vrot.lane.b32.xlu0 %v8790, 104
      %v8869 = vpop.permute.xlu0 %8868
      %8870 = vrot.lane.b32.xlu0 %v8791, 104
      %v8871 = vpop.permute.xlu0 %8870
      %8872 = vrot.lane.b32.xlu0 %v8792, 104
      %v8873 = vpop.permute.xlu0 %8872
      %8874 = vrot.lane.b32.xlu0 %v8793, 104
      %v8875 = vpop.permute.xlu0 %8874
      %8876 = vrot.lane.b32.xlu0 %v8794, 104
      %v8877 = vpop.permute.xlu0 %8876
      %8878 = vrot.lane.b32.xlu0 %v8795, 104
      %v8879 = vpop.permute.xlu0 %8878
      %8880 = vrot.lane.b32.xlu0 %v8856, 104
      %v8881 = vpop.permute.xlu0 %8880
      %8882 = vrot.lane.b32.xlu0 %v8857, 104
      %v8883 = vpop.permute.xlu0 %8882
      %v8896 = vadd.f32 %v8844, %v8861
      %v8897 = vadd.f32 %v8845, %v8863
      %v8898 = vadd.f32 %v8846, %v8865
      %v8899 = vadd.f32 %v8847, %v8867
      %v8900 = vadd.f32 %v8848, %v8869
      %v8901 = vadd.f32 %v8849, %v8871
      %v8902 = vadd.f32 %v8850, %v8873
      %v8903 = vadd.f32 %v8851, %v8875
      %v8904 = vadd.f32 %v8852, %v8877
      %v8905 = vadd.f32 %v8853, %v8879
      %v8906 = vadd.f32 %v8854, %v8881
      %v8907 = vadd.f32 %v8855, %v8883
      %v8908 = vld [vmem:[#allocation3 + $0x25] sm:$0xff]
      %v8909 = vld [vmem:[#allocation3 + $0x2d] sm:$0xff]
      %v8910 = vld [vmem:[#allocation3 + $0x35] sm:$0xff]
      %v8911 = vld [vmem:[#allocation3 + $0x3d] sm:$0xff]
      %v8912 = vld [vmem:[#allocation3 + $0x45] sm:$0xff]
      %v8913 = vld [vmem:[#allocation3 + $0x4d] sm:$0xff]
      %v8914 = vld [vmem:[#allocation3 + $0x55] sm:$0xff]
      %v8915 = vld [vmem:[#allocation3 + $0x5d] sm:$0xff]
      %v8916 = vld [vmem:[#allocation3 + $0x65] sm:$0xff]
      %v8917 = vld [vmem:[#allocation3 + $0x6d] sm:$0xff]
      %v8918 = vld [vmem:[#allocation3 + $0x75] sm:$0xff]
      %v8919 = vld [vmem:[#allocation3 + $0x7d] sm:$0xff]
      %8932 = vrot.lane.b32.xlu0 %v8908, 100
      %v8933 = vpop.permute.xlu0 %8932
      %8934 = vrot.lane.b32.xlu0 %v8909, 100
      %v8935 = vpop.permute.xlu0 %8934
      %8936 = vrot.lane.b32.xlu0 %v8910, 100
      %v8937 = vpop.permute.xlu0 %8936
      %8938 = vrot.lane.b32.xlu0 %v8911, 100
      %v8939 = vpop.permute.xlu0 %8938
      %8940 = vrot.lane.b32.xlu0 %v8912, 100
      %v8941 = vpop.permute.xlu0 %8940
      %8942 = vrot.lane.b32.xlu0 %v8913, 100
      %v8943 = vpop.permute.xlu0 %8942
      %8944 = vrot.lane.b32.xlu0 %v8914, 100
      %v8945 = vpop.permute.xlu0 %8944
      %8946 = vrot.lane.b32.xlu0 %v8915, 100
      %v8947 = vpop.permute.xlu0 %8946
      %8948 = vrot.lane.b32.xlu0 %v8916, 100
      %v8949 = vpop.permute.xlu0 %8948
      %8950 = vrot.lane.b32.xlu0 %v8917, 100
      %v8951 = vpop.permute.xlu0 %8950
      %8952 = vrot.lane.b32.xlu0 %v8918, 100
      %v8953 = vpop.permute.xlu0 %8952
      %8954 = vrot.lane.b32.xlu0 %v8919, 100
      %v8955 = vpop.permute.xlu0 %8954
      %v8968 = vadd.f32 %v8896, %v8933
      %v8969 = vadd.f32 %v8897, %v8935
      %v8970 = vadd.f32 %v8898, %v8937
      %v8971 = vadd.f32 %v8899, %v8939
      %v8972 = vadd.f32 %v8900, %v8941
      %v8973 = vadd.f32 %v8901, %v8943
      %v8974 = vadd.f32 %v8902, %v8945
      %v8975 = vadd.f32 %v8903, %v8947
      %v8976 = vadd.f32 %v8904, %v8949
      %v8977 = vadd.f32 %v8905, %v8951
      %v8978 = vadd.f32 %v8906, %v8953
      %v8979 = vadd.f32 %v8907, %v8955
      %v8980 = vld [vmem:[#allocation3 + $0x26] sm:$0xff]
      %v8981 = vld [vmem:[#allocation3 + $0x2e] sm:$0xff]
      %v8982 = vld [vmem:[#allocation3 + $0x36] sm:$0xff]
      %v8983 = vld [vmem:[#allocation3 + $0x3e] sm:$0xff]
      %v8984 = vld [vmem:[#allocation3 + $0x46] sm:$0xff]
      %v8985 = vld [vmem:[#allocation3 + $0x4e] sm:$0xff]
      %v8986 = vld [vmem:[#allocation3 + $0x56] sm:$0xff]
      %v8987 = vld [vmem:[#allocation3 + $0x5e] sm:$0xff]
      %v8988 = vld [vmem:[#allocation3 + $0x66] sm:$0xff]
      %v8989 = vld [vmem:[#allocation3 + $0x6e] sm:$0xff]
      %v8990 = vld [vmem:[#allocation3 + $0x76] sm:$0xff]
      %v8991 = vld [vmem:[#allocation3 + $0x7e] sm:$0xff]
      %9004 = vrot.lane.b32.xlu0 %v8980, 96
      %v9005 = vpop.permute.xlu0 %9004
      %9006 = vrot.lane.b32.xlu0 %v8981, 96
      %v9007 = vpop.permute.xlu0 %9006
      %9008 = vrot.lane.b32.xlu0 %v8982, 96
      %v9009 = vpop.permute.xlu0 %9008
      %9010 = vrot.lane.b32.xlu0 %v8983, 96
      %v9011 = vpop.permute.xlu0 %9010
      %9012 = vrot.lane.b32.xlu0 %v8984, 96
      %v9013 = vpop.permute.xlu0 %9012
      %9014 = vrot.lane.b32.xlu0 %v8985, 96
      %v9015 = vpop.permute.xlu0 %9014
      %9016 = vrot.lane.b32.xlu0 %v8986, 96
      %v9017 = vpop.permute.xlu0 %9016
      %9018 = vrot.lane.b32.xlu0 %v8987, 96
      %v9019 = vpop.permute.xlu0 %9018
      %9020 = vrot.lane.b32.xlu0 %v8988, 96
      %v9021 = vpop.permute.xlu0 %9020
      %9022 = vrot.lane.b32.xlu0 %v8989, 96
      %v9023 = vpop.permute.xlu0 %9022
      %9024 = vrot.lane.b32.xlu0 %v8990, 96
      %v9025 = vpop.permute.xlu0 %9024
      %9026 = vrot.lane.b32.xlu0 %v8991, 96
      %v9027 = vpop.permute.xlu0 %9026
      %v9040 = vadd.f32 %v8968, %v9005
      %v9041 = vadd.f32 %v8969, %v9007
      %v9042 = vadd.f32 %v8970, %v9009
      %v9043 = vadd.f32 %v8971, %v9011
      %v9044 = vadd.f32 %v8972, %v9013
      %v9045 = vadd.f32 %v8973, %v9015
      %v9046 = vadd.f32 %v8974, %v9017
      %v9047 = vadd.f32 %v8975, %v9019
      %v9048 = vadd.f32 %v8976, %v9021
      %v9049 = vadd.f32 %v8977, %v9023
      %v9050 = vadd.f32 %v8978, %v9025
      %v9051 = vadd.f32 %v8979, %v9027
      %v9052 = vld [vmem:[%s4] sm:$0x1]
      %v9054 = vperm.slane %v9052, 0
      %v9056 = vadd.f32 %v9040, %v9054
      %v9057 = vadd.f32 %v9041, %v9054
      %v9058 = vadd.f32 %v9042, %v9054
      %v9059 = vadd.f32 %v9043, %v9054
      %v9060 = vadd.f32 %v9044, %v9054
      %v9061 = vadd.f32 %v9045, %v9054
      %v9062 = vadd.f32 %v9046, %v9054
      %v9063 = vadd.f32 %v9047, %v9054
      %v9064 = vadd.f32 %v9048, %v9054
      %v9065 = vadd.f32 %v9049, %v9054
      %v9066 = vadd.f32 %v9050, %v9054
      %v9067 = vadd.f32 %v9051, %v9054
      %vm9068 = vcmask 31744
      %9069 = vst.msk [vmem:[%s251] sm:$0xff] %vm9068, %v9056
      %9070 = vst.msk [vmem:[%s251 + $0x8] sm:$0xff] %vm9068, %v9057
      %9071 = vst.msk [vmem:[%s251 + $0x10] sm:$0xff] %vm9068, %v9058
      %9072 = vst.msk [vmem:[%s251 + $0x18] sm:$0xff] %vm9068, %v9059
      %9073 = vst.msk [vmem:[%s251 + $0x20] sm:$0xff] %vm9068, %v9060
      %9074 = vst.msk [vmem:[%s251 + $0x28] sm:$0xff] %vm9068, %v9061
      %9075 = vst.msk [vmem:[%s251 + $0x30] sm:$0xff] %vm9068, %v9062
      %9076 = vst.msk [vmem:[%s251 + $0x38] sm:$0xff] %vm9068, %v9063
      %9077 = vst.msk [vmem:[%s251 + $0x40] sm:$0xff] %vm9068, %v9064
      %9078 = vst.msk [vmem:[%s251 + $0x48] sm:$0xff] %vm9068, %v9065
      %9079 = vst.msk [vmem:[%s251 + $0x50] sm:$0xff] %vm9068, %v9066
      %9080 = vst.msk [vmem:[%s251 + $0x58] sm:$0xff] %vm9068, %v9067
      %v9081 = vld [vmem:[#allocation3 + $0x60] sm:$0xff]
      %v9082 = vld [vmem:[#allocation3 + $0x68] sm:$0xff]
      %v9083 = vld [vmem:[#allocation3 + $0x70] sm:$0xff]
      %v9084 = vld [vmem:[#allocation3 + $0x78] sm:$0xff]
      %v9085 = vld [vmem:[#allocation3 + $0x80] sm:$0xff]
      %v9086 = vld [vmem:[#allocation3 + $0x88] sm:$0xff]
      %v9087 = vld [vmem:[#allocation3 + $0x90] sm:$0xff]
      %v9088 = vld [vmem:[#allocation3 + $0x98] sm:$0xff]
      %v9089 = vld [vmem:[#allocation3 + $0xa0] sm:$0xff]
      %v9090 = vld [vmem:[#allocation3 + $0xa8] sm:$0xff]
      %v9091 = vld [vmem:[#allocation3 + $0xb0] sm:$0xff]
      %v9092 = vld [vmem:[#allocation3 + $0xb8] sm:$0xff]
      %v9093 = vld [vmem:[#allocation3 + $0x61] sm:$0xff]
      %v9094 = vld [vmem:[#allocation3 + $0x69] sm:$0xff]
      %v9095 = vld [vmem:[#allocation3 + $0x71] sm:$0xff]
      %v9096 = vld [vmem:[#allocation3 + $0x79] sm:$0xff]
      %v9097 = vld [vmem:[#allocation3 + $0x81] sm:$0xff]
      %v9098 = vld [vmem:[#allocation3 + $0x89] sm:$0xff]
      %v9099 = vld [vmem:[#allocation3 + $0x91] sm:$0xff]
      %v9100 = vld [vmem:[#allocation3 + $0x99] sm:$0xff]
      %v9101 = vld [vmem:[#allocation3 + $0xa1] sm:$0xff]
      %v9102 = vld [vmem:[#allocation3 + $0xa9] sm:$0xff]
      %v9103 = vld [vmem:[#allocation3 + $0xb1] sm:$0xff]
      %v9104 = vld [vmem:[#allocation3 + $0xb9] sm:$0xff]
      %9117 = vrot.lane.b32.xlu0 %v9093, 124
      %v9118 = vpop.permute.xlu0 %9117
      %9119 = vrot.lane.b32.xlu0 %v9094, 124
      %v9120 = vpop.permute.xlu0 %9119
      %9121 = vrot.lane.b32.xlu0 %v9095, 124
      %v9122 = vpop.permute.xlu0 %9121
      %9123 = vrot.lane.b32.xlu0 %v9096, 124
      %v9124 = vpop.permute.xlu0 %9123
      %9125 = vrot.lane.b32.xlu0 %v9097, 124
      %v9126 = vpop.permute.xlu0 %9125
      %9127 = vrot.lane.b32.xlu0 %v9098, 124
      %v9128 = vpop.permute.xlu0 %9127
      %9129 = vrot.lane.b32.xlu0 %v9099, 124
      %v9130 = vpop.permute.xlu0 %9129
      %9131 = vrot.lane.b32.xlu0 %v9100, 124
      %v9132 = vpop.permute.xlu0 %9131
      %9133 = vrot.lane.b32.xlu0 %v9101, 124
      %v9134 = vpop.permute.xlu0 %9133
      %9135 = vrot.lane.b32.xlu0 %v9102, 124
      %v9136 = vpop.permute.xlu0 %9135
      %9137 = vrot.lane.b32.xlu0 %v9103, 124
      %v9138 = vpop.permute.xlu0 %9137
      %9139 = vrot.lane.b32.xlu0 %v9104, 124
      %v9140 = vpop.permute.xlu0 %9139
      %v9153 = vadd.f32 %v9081, %v9118
      %v9154 = vadd.f32 %v9082, %v9120
      %v9155 = vadd.f32 %v9083, %v9122
      %v9156 = vadd.f32 %v9084, %v9124
      %v9157 = vadd.f32 %v9085, %v9126
      %v9158 = vadd.f32 %v9086, %v9128
      %v9159 = vadd.f32 %v9087, %v9130
      %v9160 = vadd.f32 %v9088, %v9132
      %v9161 = vadd.f32 %v9089, %v9134
      %v9162 = vadd.f32 %v9090, %v9136
      %v9163 = vadd.f32 %v9091, %v9138
      %v9164 = vadd.f32 %v9092, %v9140
      %v9165 = vld [vmem:[#allocation3 + $0x62] sm:$0xff]
      %v9166 = vld [vmem:[#allocation3 + $0x6a] sm:$0xff]
      %v9167 = vld [vmem:[#allocation3 + $0x72] sm:$0xff]
      %v9168 = vld [vmem:[#allocation3 + $0x7a] sm:$0xff]
      %v9169 = vld [vmem:[#allocation3 + $0x82] sm:$0xff]
      %v9170 = vld [vmem:[#allocation3 + $0x8a] sm:$0xff]
      %v9171 = vld [vmem:[#allocation3 + $0x92] sm:$0xff]
      %v9172 = vld [vmem:[#allocation3 + $0x9a] sm:$0xff]
      %v9173 = vld [vmem:[#allocation3 + $0xa2] sm:$0xff]
      %v9174 = vld [vmem:[#allocation3 + $0xaa] sm:$0xff]
      %v9175 = vld [vmem:[#allocation3 + $0xb2] sm:$0xff]
      %v9176 = vld [vmem:[#allocation3 + $0xba] sm:$0xff]
      %9189 = vrot.lane.b32.xlu0 %v9165, 120
      %v9190 = vpop.permute.xlu0 %9189
      %9191 = vrot.lane.b32.xlu0 %v9166, 120
      %v9192 = vpop.permute.xlu0 %9191
      %9193 = vrot.lane.b32.xlu0 %v9167, 120
      %v9194 = vpop.permute.xlu0 %9193
      %9195 = vrot.lane.b32.xlu0 %v9168, 120
      %v9196 = vpop.permute.xlu0 %9195
      %9197 = vrot.lane.b32.xlu0 %v9169, 120
      %v9198 = vpop.permute.xlu0 %9197
      %9199 = vrot.lane.b32.xlu0 %v9170, 120
      %v9200 = vpop.permute.xlu0 %9199
      %9201 = vrot.lane.b32.xlu0 %v9171, 120
      %v9202 = vpop.permute.xlu0 %9201
      %9203 = vrot.lane.b32.xlu0 %v9172, 120
      %v9204 = vpop.permute.xlu0 %9203
      %9205 = vrot.lane.b32.xlu0 %v9173, 120
      %v9206 = vpop.permute.xlu0 %9205
      %9207 = vrot.lane.b32.xlu0 %v9174, 120
      %v9208 = vpop.permute.xlu0 %9207
      %9209 = vrot.lane.b32.xlu0 %v9175, 120
      %v9210 = vpop.permute.xlu0 %9209
      %9211 = vrot.lane.b32.xlu0 %v9176, 120
      %v9212 = vpop.permute.xlu0 %9211
      %v9225 = vadd.f32 %v9153, %v9190
      %v9226 = vadd.f32 %v9154, %v9192
      %v9227 = vadd.f32 %v9155, %v9194
      %v9228 = vadd.f32 %v9156, %v9196
      %v9229 = vadd.f32 %v9157, %v9198
      %v9230 = vadd.f32 %v9158, %v9200
      %v9231 = vadd.f32 %v9159, %v9202
      %v9232 = vadd.f32 %v9160, %v9204
      %v9233 = vadd.f32 %v9161, %v9206
      %v9234 = vadd.f32 %v9162, %v9208
      %v9235 = vadd.f32 %v9163, %v9210
      %v9236 = vadd.f32 %v9164, %v9212
      %v9237 = vld [vmem:[#allocation3 + $0xc2] sm:$0xff]
      %v9238 = vld [vmem:[#allocation3 + $0xca] sm:$0xff]
      %9241 = vrot.lane.b32.xlu0 %v9167, 116
      %v9242 = vpop.permute.xlu0 %9241
      %9243 = vrot.lane.b32.xlu0 %v9168, 116
      %v9244 = vpop.permute.xlu0 %9243
      %9245 = vrot.lane.b32.xlu0 %v9169, 116
      %v9246 = vpop.permute.xlu0 %9245
      %9247 = vrot.lane.b32.xlu0 %v9170, 116
      %v9248 = vpop.permute.xlu0 %9247
      %9249 = vrot.lane.b32.xlu0 %v9171, 116
      %v9250 = vpop.permute.xlu0 %9249
      %9251 = vrot.lane.b32.xlu0 %v9172, 116
      %v9252 = vpop.permute.xlu0 %9251
      %9253 = vrot.lane.b32.xlu0 %v9173, 116
      %v9254 = vpop.permute.xlu0 %9253
      %9255 = vrot.lane.b32.xlu0 %v9174, 116
      %v9256 = vpop.permute.xlu0 %9255
      %9257 = vrot.lane.b32.xlu0 %v9175, 116
      %v9258 = vpop.permute.xlu0 %9257
      %9259 = vrot.lane.b32.xlu0 %v9176, 116
      %v9260 = vpop.permute.xlu0 %9259
      %9261 = vrot.lane.b32.xlu0 %v9237, 116
      %v9262 = vpop.permute.xlu0 %9261
      %9263 = vrot.lane.b32.xlu0 %v9238, 116
      %v9264 = vpop.permute.xlu0 %9263
      %v9277 = vadd.f32 %v9225, %v9242
      %v9278 = vadd.f32 %v9226, %v9244
      %v9279 = vadd.f32 %v9227, %v9246
      %v9280 = vadd.f32 %v9228, %v9248
      %v9281 = vadd.f32 %v9229, %v9250
      %v9282 = vadd.f32 %v9230, %v9252
      %v9283 = vadd.f32 %v9231, %v9254
      %v9284 = vadd.f32 %v9232, %v9256
      %v9285 = vadd.f32 %v9233, %v9258
      %v9286 = vadd.f32 %v9234, %v9260
      %v9287 = vadd.f32 %v9235, %v9262
      %v9288 = vadd.f32 %v9236, %v9264
      %v9289 = vld [vmem:[#allocation3 + $0x73] sm:$0xff]
      %v9290 = vld [vmem:[#allocation3 + $0x7b] sm:$0xff]
      %v9291 = vld [vmem:[#allocation3 + $0x83] sm:$0xff]
      %v9292 = vld [vmem:[#allocation3 + $0x8b] sm:$0xff]
      %v9293 = vld [vmem:[#allocation3 + $0x93] sm:$0xff]
      %v9294 = vld [vmem:[#allocation3 + $0x9b] sm:$0xff]
      %v9295 = vld [vmem:[#allocation3 + $0xa3] sm:$0xff]
      %v9296 = vld [vmem:[#allocation3 + $0xab] sm:$0xff]
      %v9297 = vld [vmem:[#allocation3 + $0xb3] sm:$0xff]
      %v9298 = vld [vmem:[#allocation3 + $0xbb] sm:$0xff]
      %v9299 = vld [vmem:[#allocation3 + $0xc3] sm:$0xff]
      %v9300 = vld [vmem:[#allocation3 + $0xcb] sm:$0xff]
      %9313 = vrot.lane.b32.xlu0 %v9289, 112
      %v9314 = vpop.permute.xlu0 %9313
      %9315 = vrot.lane.b32.xlu0 %v9290, 112
      %v9316 = vpop.permute.xlu0 %9315
      %9317 = vrot.lane.b32.xlu0 %v9291, 112
      %v9318 = vpop.permute.xlu0 %9317
      %9319 = vrot.lane.b32.xlu0 %v9292, 112
      %v9320 = vpop.permute.xlu0 %9319
      %9321 = vrot.lane.b32.xlu0 %v9293, 112
      %v9322 = vpop.permute.xlu0 %9321
      %9323 = vrot.lane.b32.xlu0 %v9294, 112
      %v9324 = vpop.permute.xlu0 %9323
      %9325 = vrot.lane.b32.xlu0 %v9295, 112
      %v9326 = vpop.permute.xlu0 %9325
      %9327 = vrot.lane.b32.xlu0 %v9296, 112
      %v9328 = vpop.permute.xlu0 %9327
      %9329 = vrot.lane.b32.xlu0 %v9297, 112
      %v9330 = vpop.permute.xlu0 %9329
      %9331 = vrot.lane.b32.xlu0 %v9298, 112
      %v9332 = vpop.permute.xlu0 %9331
      %9333 = vrot.lane.b32.xlu0 %v9299, 112
      %v9334 = vpop.permute.xlu0 %9333
      %9335 = vrot.lane.b32.xlu0 %v9300, 112
      %v9336 = vpop.permute.xlu0 %9335
      %v9349 = vadd.f32 %v9277, %v9314
      %v9350 = vadd.f32 %v9278, %v9316
      %v9351 = vadd.f32 %v9279, %v9318
      %v9352 = vadd.f32 %v9280, %v9320
      %v9353 = vadd.f32 %v9281, %v9322
      %v9354 = vadd.f32 %v9282, %v9324
      %v9355 = vadd.f32 %v9283, %v9326
      %v9356 = vadd.f32 %v9284, %v9328
      %v9357 = vadd.f32 %v9285, %v9330
      %v9358 = vadd.f32 %v9286, %v9332
      %v9359 = vadd.f32 %v9287, %v9334
      %v9360 = vadd.f32 %v9288, %v9336
      %v9361 = vld [vmem:[#allocation3 + $0x74] sm:$0xff]
      %v9362 = vld [vmem:[#allocation3 + $0x7c] sm:$0xff]
      %v9363 = vld [vmem:[#allocation3 + $0x84] sm:$0xff]
      %v9364 = vld [vmem:[#allocation3 + $0x8c] sm:$0xff]
      %v9365 = vld [vmem:[#allocation3 + $0x94] sm:$0xff]
      %v9366 = vld [vmem:[#allocation3 + $0x9c] sm:$0xff]
      %v9367 = vld [vmem:[#allocation3 + $0xa4] sm:$0xff]
      %v9368 = vld [vmem:[#allocation3 + $0xac] sm:$0xff]
      %v9369 = vld [vmem:[#allocation3 + $0xb4] sm:$0xff]
      %v9370 = vld [vmem:[#allocation3 + $0xbc] sm:$0xff]
      %v9371 = vld [vmem:[#allocation3 + $0xc4] sm:$0xff]
      %v9372 = vld [vmem:[#allocation3 + $0xcc] sm:$0xff]
      %9385 = vrot.lane.b32.xlu0 %v9361, 108
      %v9386 = vpop.permute.xlu0 %9385
      %9387 = vrot.lane.b32.xlu0 %v9362, 108
      %v9388 = vpop.permute.xlu0 %9387
      %9389 = vrot.lane.b32.xlu0 %v9363, 108
      %v9390 = vpop.permute.xlu0 %9389
      %9391 = vrot.lane.b32.xlu0 %v9364, 108
      %v9392 = vpop.permute.xlu0 %9391
      %9393 = vrot.lane.b32.xlu0 %v9365, 108
      %v9394 = vpop.permute.xlu0 %9393
      %9395 = vrot.lane.b32.xlu0 %v9366, 108
      %v9396 = vpop.permute.xlu0 %9395
      %9397 = vrot.lane.b32.xlu0 %v9367, 108
      %v9398 = vpop.permute.xlu0 %9397
      %9399 = vrot.lane.b32.xlu0 %v9368, 108
      %v9400 = vpop.permute.xlu0 %9399
      %9401 = vrot.lane.b32.xlu0 %v9369, 108
      %v9402 = vpop.permute.xlu0 %9401
      %9403 = vrot.lane.b32.xlu0 %v9370, 108
      %v9404 = vpop.permute.xlu0 %9403
      %9405 = vrot.lane.b32.xlu0 %v9371, 108
      %v9406 = vpop.permute.xlu0 %9405
      %9407 = vrot.lane.b32.xlu0 %v9372, 108
      %v9408 = vpop.permute.xlu0 %9407
      %v9421 = vadd.f32 %v9349, %v9386
      %v9422 = vadd.f32 %v9350, %v9388
      %v9423 = vadd.f32 %v9351, %v9390
      %v9424 = vadd.f32 %v9352, %v9392
      %v9425 = vadd.f32 %v9353, %v9394
      %v9426 = vadd.f32 %v9354, %v9396
      %v9427 = vadd.f32 %v9355, %v9398
      %v9428 = vadd.f32 %v9356, %v9400
      %v9429 = vadd.f32 %v9357, %v9402
      %v9430 = vadd.f32 %v9358, %v9404
      %v9431 = vadd.f32 %v9359, %v9406
      %v9432 = vadd.f32 %v9360, %v9408
      %v9433 = vld [vmem:[#allocation3 + $0xd4] sm:$0xff]
      %v9434 = vld [vmem:[#allocation3 + $0xdc] sm:$0xff]
      %9437 = vrot.lane.b32.xlu0 %v9363, 104
      %v9438 = vpop.permute.xlu0 %9437
      %9439 = vrot.lane.b32.xlu0 %v9364, 104
      %v9440 = vpop.permute.xlu0 %9439
      %9441 = vrot.lane.b32.xlu0 %v9365, 104
      %v9442 = vpop.permute.xlu0 %9441
      %9443 = vrot.lane.b32.xlu0 %v9366, 104
      %v9444 = vpop.permute.xlu0 %9443
      %9445 = vrot.lane.b32.xlu0 %v9367, 104
      %v9446 = vpop.permute.xlu0 %9445
      %9447 = vrot.lane.b32.xlu0 %v9368, 104
      %v9448 = vpop.permute.xlu0 %9447
      %9449 = vrot.lane.b32.xlu0 %v9369, 104
      %v9450 = vpop.permute.xlu0 %9449
      %9451 = vrot.lane.b32.xlu0 %v9370, 104
      %v9452 = vpop.permute.xlu0 %9451
      %9453 = vrot.lane.b32.xlu0 %v9371, 104
      %v9454 = vpop.permute.xlu0 %9453
      %9455 = vrot.lane.b32.xlu0 %v9372, 104
      %v9456 = vpop.permute.xlu0 %9455
      %9457 = vrot.lane.b32.xlu0 %v9433, 104
      %v9458 = vpop.permute.xlu0 %9457
      %9459 = vrot.lane.b32.xlu0 %v9434, 104
      %v9460 = vpop.permute.xlu0 %9459
      %v9473 = vadd.f32 %v9421, %v9438
      %v9474 = vadd.f32 %v9422, %v9440
      %v9475 = vadd.f32 %v9423, %v9442
      %v9476 = vadd.f32 %v9424, %v9444
      %v9477 = vadd.f32 %v9425, %v9446
      %v9478 = vadd.f32 %v9426, %v9448
      %v9479 = vadd.f32 %v9427, %v9450
      %v9480 = vadd.f32 %v9428, %v9452
      %v9481 = vadd.f32 %v9429, %v9454
      %v9482 = vadd.f32 %v9430, %v9456
      %v9483 = vadd.f32 %v9431, %v9458
      %v9484 = vadd.f32 %v9432, %v9460
      %v9485 = vld [vmem:[#allocation3 + $0x85] sm:$0xff]
      %v9486 = vld [vmem:[#allocation3 + $0x8d] sm:$0xff]
      %v9487 = vld [vmem:[#allocation3 + $0x95] sm:$0xff]
      %v9488 = vld [vmem:[#allocation3 + $0x9d] sm:$0xff]
      %v9489 = vld [vmem:[#allocation3 + $0xa5] sm:$0xff]
      %v9490 = vld [vmem:[#allocation3 + $0xad] sm:$0xff]
      %v9491 = vld [vmem:[#allocation3 + $0xb5] sm:$0xff]
      %v9492 = vld [vmem:[#allocation3 + $0xbd] sm:$0xff]
      %v9493 = vld [vmem:[#allocation3 + $0xc5] sm:$0xff]
      %v9494 = vld [vmem:[#allocation3 + $0xcd] sm:$0xff]
      %v9495 = vld [vmem:[#allocation3 + $0xd5] sm:$0xff]
      %v9496 = vld [vmem:[#allocation3 + $0xdd] sm:$0xff]
      %9509 = vrot.lane.b32.xlu0 %v9485, 100
      %v9510 = vpop.permute.xlu0 %9509
      %9511 = vrot.lane.b32.xlu0 %v9486, 100
      %v9512 = vpop.permute.xlu0 %9511
      %9513 = vrot.lane.b32.xlu0 %v9487, 100
      %v9514 = vpop.permute.xlu0 %9513
      %9515 = vrot.lane.b32.xlu0 %v9488, 100
      %v9516 = vpop.permute.xlu0 %9515
      %9517 = vrot.lane.b32.xlu0 %v9489, 100
      %v9518 = vpop.permute.xlu0 %9517
      %9519 = vrot.lane.b32.xlu0 %v9490, 100
      %v9520 = vpop.permute.xlu0 %9519
      %9521 = vrot.lane.b32.xlu0 %v9491, 100
      %v9522 = vpop.permute.xlu0 %9521
      %9523 = vrot.lane.b32.xlu0 %v9492, 100
      %v9524 = vpop.permute.xlu0 %9523
      %9525 = vrot.lane.b32.xlu0 %v9493, 100
      %v9526 = vpop.permute.xlu0 %9525
      %9527 = vrot.lane.b32.xlu0 %v9494, 100
      %v9528 = vpop.permute.xlu0 %9527
      %9529 = vrot.lane.b32.xlu0 %v9495, 100
      %v9530 = vpop.permute.xlu0 %9529
      %9531 = vrot.lane.b32.xlu0 %v9496, 100
      %v9532 = vpop.permute.xlu0 %9531
      %v9545 = vadd.f32 %v9473, %v9510
      %v9546 = vadd.f32 %v9474, %v9512
      %v9547 = vadd.f32 %v9475, %v9514
      %v9548 = vadd.f32 %v9476, %v9516
      %v9549 = vadd.f32 %v9477, %v9518
      %v9550 = vadd.f32 %v9478, %v9520
      %v9551 = vadd.f32 %v9479, %v9522
      %v9552 = vadd.f32 %v9480, %v9524
      %v9553 = vadd.f32 %v9481, %v9526
      %v9554 = vadd.f32 %v9482, %v9528
      %v9555 = vadd.f32 %v9483, %v9530
      %v9556 = vadd.f32 %v9484, %v9532
      %v9557 = vld [vmem:[#allocation3 + $0x86] sm:$0xff]
      %v9558 = vld [vmem:[#allocation3 + $0x8e] sm:$0xff]
      %v9559 = vld [vmem:[#allocation3 + $0x96] sm:$0xff]
      %v9560 = vld [vmem:[#allocation3 + $0x9e] sm:$0xff]
      %v9561 = vld [vmem:[#allocation3 + $0xa6] sm:$0xff]
      %v9562 = vld [vmem:[#allocation3 + $0xae] sm:$0xff]
      %v9563 = vld [vmem:[#allocation3 + $0xb6] sm:$0xff]
      %v9564 = vld [vmem:[#allocation3 + $0xbe] sm:$0xff]
      %v9565 = vld [vmem:[#allocation3 + $0xc6] sm:$0xff]
      %v9566 = vld [vmem:[#allocation3 + $0xce] sm:$0xff]
      %v9567 = vld [vmem:[#allocation3 + $0xd6] sm:$0xff]
      %v9568 = vld [vmem:[#allocation3 + $0xde] sm:$0xff]
      %9581 = vrot.lane.b32.xlu0 %v9557, 96
      %v9582 = vpop.permute.xlu0 %9581
      %9583 = vrot.lane.b32.xlu0 %v9558, 96
      %v9584 = vpop.permute.xlu0 %9583
      %9585 = vrot.lane.b32.xlu0 %v9559, 96
      %v9586 = vpop.permute.xlu0 %9585
      %9587 = vrot.lane.b32.xlu0 %v9560, 96
      %v9588 = vpop.permute.xlu0 %9587
      %9589 = vrot.lane.b32.xlu0 %v9561, 96
      %v9590 = vpop.permute.xlu0 %9589
      %9591 = vrot.lane.b32.xlu0 %v9562, 96
      %v9592 = vpop.permute.xlu0 %9591
      %9593 = vrot.lane.b32.xlu0 %v9563, 96
      %v9594 = vpop.permute.xlu0 %9593
      %9595 = vrot.lane.b32.xlu0 %v9564, 96
      %v9596 = vpop.permute.xlu0 %9595
      %9597 = vrot.lane.b32.xlu0 %v9565, 96
      %v9598 = vpop.permute.xlu0 %9597
      %9599 = vrot.lane.b32.xlu0 %v9566, 96
      %v9600 = vpop.permute.xlu0 %9599
      %9601 = vrot.lane.b32.xlu0 %v9567, 96
      %v9602 = vpop.permute.xlu0 %9601
      %9603 = vrot.lane.b32.xlu0 %v9568, 96
      %v9604 = vpop.permute.xlu0 %9603
      %v9617 = vadd.f32 %v9545, %v9582
      %v9618 = vadd.f32 %v9546, %v9584
      %v9619 = vadd.f32 %v9547, %v9586
      %v9620 = vadd.f32 %v9548, %v9588
      %v9621 = vadd.f32 %v9549, %v9590
      %v9622 = vadd.f32 %v9550, %v9592
      %v9623 = vadd.f32 %v9551, %v9594
      %v9624 = vadd.f32 %v9552, %v9596
      %v9625 = vadd.f32 %v9553, %v9598
      %v9626 = vadd.f32 %v9554, %v9600
      %v9627 = vadd.f32 %v9555, %v9602
      %v9628 = vadd.f32 %v9556, %v9604
      %v9629 = vld [vmem:[%s4] sm:$0x1]
      %v9631 = vperm.slane %v9629, 0
      %v9633 = vadd.f32 %v9617, %v9631
      %v9634 = vadd.f32 %v9618, %v9631
      %v9635 = vadd.f32 %v9619, %v9631
      %v9636 = vadd.f32 %v9620, %v9631
      %v9637 = vadd.f32 %v9621, %v9631
      %v9638 = vadd.f32 %v9622, %v9631
      %v9639 = vadd.f32 %v9623, %v9631
      %v9640 = vadd.f32 %v9624, %v9631
      %v9641 = vadd.f32 %v9625, %v9631
      %v9642 = vadd.f32 %v9626, %v9631
      %v9643 = vadd.f32 %v9627, %v9631
      %v9644 = vadd.f32 %v9628, %v9631
      %9645 = vst.msk [vmem:[%s251 + $0x60] sm:$0xff] %vm9068, %v9633
      %9646 = vst.msk [vmem:[%s251 + $0x68] sm:$0xff] %vm9068, %v9634
      %9647 = vst.msk [vmem:[%s251 + $0x70] sm:$0xff] %vm9068, %v9635
      %9648 = vst.msk [vmem:[%s251 + $0x78] sm:$0xff] %vm9068, %v9636
      %9649 = vst.msk [vmem:[%s251 + $0x80] sm:$0xff] %vm9068, %v9637
      %9650 = vst.msk [vmem:[%s251 + $0x88] sm:$0xff] %vm9068, %v9638
      %9651 = vst.msk [vmem:[%s251 + $0x90] sm:$0xff] %vm9068, %v9639
      %9652 = vst.msk [vmem:[%s251 + $0x98] sm:$0xff] %vm9068, %v9640
      %9653 = vst.msk [vmem:[%s251 + $0xa0] sm:$0xff] %vm9068, %v9641
      %9654 = vst.msk [vmem:[%s251 + $0xa8] sm:$0xff] %vm9068, %v9642
      %9655 = vst.msk [vmem:[%s251 + $0xb0] sm:$0xff] %vm9068, %v9643
      %9656 = vst.msk [vmem:[%s251 + $0xb8] sm:$0xff] %vm9068, %v9644
      %v9657 = vld [vmem:[#allocation3 + $0xc0] sm:$0xff]
      %v9658 = vld [vmem:[#allocation3 + $0xc8] sm:$0xff]
      %v9659 = vld [vmem:[#allocation3 + $0xd0] sm:$0xff]
      %v9660 = vld [vmem:[#allocation3 + $0xd8] sm:$0xff]
      %v9661 = vld [vmem:[#allocation3 + $0xe0] sm:$0xff]
      %v9662 = vld [vmem:[#allocation3 + $0xe8] sm:$0xff]
      %v9663 = vld [vmem:[#allocation3 + $0xf0] sm:$0xff]
      %v9664 = vld [vmem:[#allocation3 + $0xf8] sm:$0xff]
      %v9665 = vld [vmem:[#allocation3 + $0x100] sm:$0xff]
      %v9666 = vld [vmem:[#allocation3 + $0x108] sm:$0xff]
      %v9667 = vld [vmem:[#allocation3 + $0x110] sm:$0xff]
      %v9668 = vld [vmem:[#allocation3 + $0x118] sm:$0xff]
      %v9669 = vld [vmem:[#allocation3 + $0xc1] sm:$0xff]
      %v9670 = vld [vmem:[#allocation3 + $0xc9] sm:$0xff]
      %v9671 = vld [vmem:[#allocation3 + $0xd1] sm:$0xff]
      %v9672 = vld [vmem:[#allocation3 + $0xd9] sm:$0xff]
      %v9673 = vld [vmem:[#allocation3 + $0xe1] sm:$0xff]
      %v9674 = vld [vmem:[#allocation3 + $0xe9] sm:$0xff]
      %v9675 = vld [vmem:[#allocation3 + $0xf1] sm:$0xff]
      %v9676 = vld [vmem:[#allocation3 + $0xf9] sm:$0xff]
      %v9677 = vld [vmem:[#allocation3 + $0x101] sm:$0xff]
      %v9678 = vld [vmem:[#allocation3 + $0x109] sm:$0xff]
      %v9679 = vld [vmem:[#allocation3 + $0x111] sm:$0xff]
      %v9680 = vld [vmem:[#allocation3 + $0x119] sm:$0xff]
      %9693 = vrot.lane.b32.xlu0 %v9669, 124
      %v9694 = vpop.permute.xlu0 %9693
      %9695 = vrot.lane.b32.xlu0 %v9670, 124
      %v9696 = vpop.permute.xlu0 %9695
      %9697 = vrot.lane.b32.xlu0 %v9671, 124
      %v9698 = vpop.permute.xlu0 %9697
      %9699 = vrot.lane.b32.xlu0 %v9672, 124
      %v9700 = vpop.permute.xlu0 %9699
      %9701 = vrot.lane.b32.xlu0 %v9673, 124
      %v9702 = vpop.permute.xlu0 %9701
      %9703 = vrot.lane.b32.xlu0 %v9674, 124
      %v9704 = vpop.permute.xlu0 %9703
      %9705 = vrot.lane.b32.xlu0 %v9675, 124
      %v9706 = vpop.permute.xlu0 %9705
      %9707 = vrot.lane.b32.xlu0 %v9676, 124
      %v9708 = vpop.permute.xlu0 %9707
      %9709 = vrot.lane.b32.xlu0 %v9677, 124
      %v9710 = vpop.permute.xlu0 %9709
      %9711 = vrot.lane.b32.xlu0 %v9678, 124
      %v9712 = vpop.permute.xlu0 %9711
      %9713 = vrot.lane.b32.xlu0 %v9679, 124
      %v9714 = vpop.permute.xlu0 %9713
      %9715 = vrot.lane.b32.xlu0 %v9680, 124
      %v9716 = vpop.permute.xlu0 %9715
      %v9729 = vadd.f32 %v9657, %v9694
      %v9730 = vadd.f32 %v9658, %v9696
      %v9731 = vadd.f32 %v9659, %v9698
      %v9732 = vadd.f32 %v9660, %v9700
      %v9733 = vadd.f32 %v9661, %v9702
      %v9734 = vadd.f32 %v9662, %v9704
      %v9735 = vadd.f32 %v9663, %v9706
      %v9736 = vadd.f32 %v9664, %v9708
      %v9737 = vadd.f32 %v9665, %v9710
      %v9738 = vadd.f32 %v9666, %v9712
      %v9739 = vadd.f32 %v9667, %v9714
      %v9740 = vadd.f32 %v9668, %v9716
      %v9741 = vld [vmem:[#allocation3 + $0xc2] sm:$0xff]
      %v9742 = vld [vmem:[#allocation3 + $0xca] sm:$0xff]
      %v9743 = vld [vmem:[#allocation3 + $0xd2] sm:$0xff]
      %v9744 = vld [vmem:[#allocation3 + $0xda] sm:$0xff]
      %v9745 = vld [vmem:[#allocation3 + $0xe2] sm:$0xff]
      %v9746 = vld [vmem:[#allocation3 + $0xea] sm:$0xff]
      %v9747 = vld [vmem:[#allocation3 + $0xf2] sm:$0xff]
      %v9748 = vld [vmem:[#allocation3 + $0xfa] sm:$0xff]
      %v9749 = vld [vmem:[#allocation3 + $0x102] sm:$0xff]
      %v9750 = vld [vmem:[#allocation3 + $0x10a] sm:$0xff]
      %v9751 = vld [vmem:[#allocation3 + $0x112] sm:$0xff]
      %v9752 = vld [vmem:[#allocation3 + $0x11a] sm:$0xff]
      %9765 = vrot.lane.b32.xlu0 %v9741, 120
      %v9766 = vpop.permute.xlu0 %9765
      %9767 = vrot.lane.b32.xlu0 %v9742, 120
      %v9768 = vpop.permute.xlu0 %9767
      %9769 = vrot.lane.b32.xlu0 %v9743, 120
      %v9770 = vpop.permute.xlu0 %9769
      %9771 = vrot.lane.b32.xlu0 %v9744, 120
      %v9772 = vpop.permute.xlu0 %9771
      %9773 = vrot.lane.b32.xlu0 %v9745, 120
      %v9774 = vpop.permute.xlu0 %9773
      %9775 = vrot.lane.b32.xlu0 %v9746, 120
      %v9776 = vpop.permute.xlu0 %9775
      %9777 = vrot.lane.b32.xlu0 %v9747, 120
      %v9778 = vpop.permute.xlu0 %9777
      %9779 = vrot.lane.b32.xlu0 %v9748, 120
      %v9780 = vpop.permute.xlu0 %9779
      %9781 = vrot.lane.b32.xlu0 %v9749, 120
      %v9782 = vpop.permute.xlu0 %9781
      %9783 = vrot.lane.b32.xlu0 %v9750, 120
      %v9784 = vpop.permute.xlu0 %9783
      %9785 = vrot.lane.b32.xlu0 %v9751, 120
      %v9786 = vpop.permute.xlu0 %9785
      %9787 = vrot.lane.b32.xlu0 %v9752, 120
      %v9788 = vpop.permute.xlu0 %9787
      %v9801 = vadd.f32 %v9729, %v9766
      %v9802 = vadd.f32 %v9730, %v9768
      %v9803 = vadd.f32 %v9731, %v9770
      %v9804 = vadd.f32 %v9732, %v9772
      %v9805 = vadd.f32 %v9733, %v9774
      %v9806 = vadd.f32 %v9734, %v9776
      %v9807 = vadd.f32 %v9735, %v9778
      %v9808 = vadd.f32 %v9736, %v9780
      %v9809 = vadd.f32 %v9737, %v9782
      %v9810 = vadd.f32 %v9738, %v9784
      %v9811 = vadd.f32 %v9739, %v9786
      %v9812 = vadd.f32 %v9740, %v9788
      %v9813 = vld [vmem:[#allocation3 + $0x122] sm:$0xff]
      %v9814 = vld [vmem:[#allocation3 + $0x12a] sm:$0xff]
      %9817 = vrot.lane.b32.xlu0 %v9743, 116
      %v9818 = vpop.permute.xlu0 %9817
      %9819 = vrot.lane.b32.xlu0 %v9744, 116
      %v9820 = vpop.permute.xlu0 %9819
      %9821 = vrot.lane.b32.xlu0 %v9745, 116
      %v9822 = vpop.permute.xlu0 %9821
      %9823 = vrot.lane.b32.xlu0 %v9746, 116
      %v9824 = vpop.permute.xlu0 %9823
      %9825 = vrot.lane.b32.xlu0 %v9747, 116
      %v9826 = vpop.permute.xlu0 %9825
      %9827 = vrot.lane.b32.xlu0 %v9748, 116
      %v9828 = vpop.permute.xlu0 %9827
      %9829 = vrot.lane.b32.xlu0 %v9749, 116
      %v9830 = vpop.permute.xlu0 %9829
      %9831 = vrot.lane.b32.xlu0 %v9750, 116
      %v9832 = vpop.permute.xlu0 %9831
      %9833 = vrot.lane.b32.xlu0 %v9751, 116
      %v9834 = vpop.permute.xlu0 %9833
      %9835 = vrot.lane.b32.xlu0 %v9752, 116
      %v9836 = vpop.permute.xlu0 %9835
      %9837 = vrot.lane.b32.xlu0 %v9813, 116
      %v9838 = vpop.permute.xlu0 %9837
      %9839 = vrot.lane.b32.xlu0 %v9814, 116
      %v9840 = vpop.permute.xlu0 %9839
      %v9853 = vadd.f32 %v9801, %v9818
      %v9854 = vadd.f32 %v9802, %v9820
      %v9855 = vadd.f32 %v9803, %v9822
      %v9856 = vadd.f32 %v9804, %v9824
      %v9857 = vadd.f32 %v9805, %v9826
      %v9858 = vadd.f32 %v9806, %v9828
      %v9859 = vadd.f32 %v9807, %v9830
      %v9860 = vadd.f32 %v9808, %v9832
      %v9861 = vadd.f32 %v9809, %v9834
      %v9862 = vadd.f32 %v9810, %v9836
      %v9863 = vadd.f32 %v9811, %v9838
      %v9864 = vadd.f32 %v9812, %v9840
      %v9865 = vld [vmem:[#allocation3 + $0xd3] sm:$0xff]
      %v9866 = vld [vmem:[#allocation3 + $0xdb] sm:$0xff]
      %v9867 = vld [vmem:[#allocation3 + $0xe3] sm:$0xff]
      %v9868 = vld [vmem:[#allocation3 + $0xeb] sm:$0xff]
      %v9869 = vld [vmem:[#allocation3 + $0xf3] sm:$0xff]
      %v9870 = vld [vmem:[#allocation3 + $0xfb] sm:$0xff]
      %v9871 = vld [vmem:[#allocation3 + $0x103] sm:$0xff]
      %v9872 = vld [vmem:[#allocation3 + $0x10b] sm:$0xff]
      %v9873 = vld [vmem:[#allocation3 + $0x113] sm:$0xff]
      %v9874 = vld [vmem:[#allocation3 + $0x11b] sm:$0xff]
      %v9875 = vld [vmem:[#allocation3 + $0x123] sm:$0xff]
      %v9876 = vld [vmem:[#allocation3 + $0x12b] sm:$0xff]
      %9889 = vrot.lane.b32.xlu0 %v9865, 112
      %v9890 = vpop.permute.xlu0 %9889
      %9891 = vrot.lane.b32.xlu0 %v9866, 112
      %v9892 = vpop.permute.xlu0 %9891
      %9893 = vrot.lane.b32.xlu0 %v9867, 112
      %v9894 = vpop.permute.xlu0 %9893
      %9895 = vrot.lane.b32.xlu0 %v9868, 112
      %v9896 = vpop.permute.xlu0 %9895
      %9897 = vrot.lane.b32.xlu0 %v9869, 112
      %v9898 = vpop.permute.xlu0 %9897
      %9899 = vrot.lane.b32.xlu0 %v9870, 112
      %v9900 = vpop.permute.xlu0 %9899
      %9901 = vrot.lane.b32.xlu0 %v9871, 112
      %v9902 = vpop.permute.xlu0 %9901
      %9903 = vrot.lane.b32.xlu0 %v9872, 112
      %v9904 = vpop.permute.xlu0 %9903
      %9905 = vrot.lane.b32.xlu0 %v9873, 112
      %v9906 = vpop.permute.xlu0 %9905
      %9907 = vrot.lane.b32.xlu0 %v9874, 112
      %v9908 = vpop.permute.xlu0 %9907
      %9909 = vrot.lane.b32.xlu0 %v9875, 112
      %v9910 = vpop.permute.xlu0 %9909
      %9911 = vrot.lane.b32.xlu0 %v9876, 112
      %v9912 = vpop.permute.xlu0 %9911
      %v9925 = vadd.f32 %v9853, %v9890
      %v9926 = vadd.f32 %v9854, %v9892
      %v9927 = vadd.f32 %v9855, %v9894
      %v9928 = vadd.f32 %v9856, %v9896
      %v9929 = vadd.f32 %v9857, %v9898
      %v9930 = vadd.f32 %v9858, %v9900
      %v9931 = vadd.f32 %v9859, %v9902
      %v9932 = vadd.f32 %v9860, %v9904
      %v9933 = vadd.f32 %v9861, %v9906
      %v9934 = vadd.f32 %v9862, %v9908
      %v9935 = vadd.f32 %v9863, %v9910
      %v9936 = vadd.f32 %v9864, %v9912
      %v9937 = vld [vmem:[#allocation3 + $0xd4] sm:$0xff]
      %v9938 = vld [vmem:[#allocation3 + $0xdc] sm:$0xff]
      %v9939 = vld [vmem:[#allocation3 + $0xe4] sm:$0xff]
      %v9940 = vld [vmem:[#allocation3 + $0xec] sm:$0xff]
      %v9941 = vld [vmem:[#allocation3 + $0xf4] sm:$0xff]
      %v9942 = vld [vmem:[#allocation3 + $0xfc] sm:$0xff]
      %v9943 = vld [vmem:[#allocation3 + $0x104] sm:$0xff]
      %v9944 = vld [vmem:[#allocation3 + $0x10c] sm:$0xff]
      %v9945 = vld [vmem:[#allocation3 + $0x114] sm:$0xff]
      %v9946 = vld [vmem:[#allocation3 + $0x11c] sm:$0xff]
      %v9947 = vld [vmem:[#allocation3 + $0x124] sm:$0xff]
      %v9948 = vld [vmem:[#allocation3 + $0x12c] sm:$0xff]
      %9961 = vrot.lane.b32.xlu0 %v9937, 108
      %v9962 = vpop.permute.xlu0 %9961
      %9963 = vrot.lane.b32.xlu0 %v9938, 108
      %v9964 = vpop.permute.xlu0 %9963
      %9965 = vrot.lane.b32.xlu0 %v9939, 108
      %v9966 = vpop.permute.xlu0 %9965
      %9967 = vrot.lane.b32.xlu0 %v9940, 108
      %v9968 = vpop.permute.xlu0 %9967
      %9969 = vrot.lane.b32.xlu0 %v9941, 108
      %v9970 = vpop.permute.xlu0 %9969
      %9971 = vrot.lane.b32.xlu0 %v9942, 108
      %v9972 = vpop.permute.xlu0 %9971
      %9973 = vrot.lane.b32.xlu0 %v9943, 108
      %v9974 = vpop.permute.xlu0 %9973
      %9975 = vrot.lane.b32.xlu0 %v9944, 108
      %v9976 = vpop.permute.xlu0 %9975
      %9977 = vrot.lane.b32.xlu0 %v9945, 108
      %v9978 = vpop.permute.xlu0 %9977
      %9979 = vrot.lane.b32.xlu0 %v9946, 108
      %v9980 = vpop.permute.xlu0 %9979
      %9981 = vrot.lane.b32.xlu0 %v9947, 108
      %v9982 = vpop.permute.xlu0 %9981
      %9983 = vrot.lane.b32.xlu0 %v9948, 108
      %v9984 = vpop.permute.xlu0 %9983
      %v9997 = vadd.f32 %v9925, %v9962
      %v9998 = vadd.f32 %v9926, %v9964
      %v9999 = vadd.f32 %v9927, %v9966
      %v10000 = vadd.f32 %v9928, %v9968
      %v10001 = vadd.f32 %v9929, %v9970
      %v10002 = vadd.f32 %v9930, %v9972
      %v10003 = vadd.f32 %v9931, %v9974
      %v10004 = vadd.f32 %v9932, %v9976
      %v10005 = vadd.f32 %v9933, %v9978
      %v10006 = vadd.f32 %v9934, %v9980
      %v10007 = vadd.f32 %v9935, %v9982
      %v10008 = vadd.f32 %v9936, %v9984
      %v10009 = vld [vmem:[#allocation3 + $0x134] sm:$0xff]
      %v10010 = vld [vmem:[#allocation3 + $0x13c] sm:$0xff]
      %10013 = vrot.lane.b32.xlu0 %v9939, 104
      %v10014 = vpop.permute.xlu0 %10013
      %10015 = vrot.lane.b32.xlu0 %v9940, 104
      %v10016 = vpop.permute.xlu0 %10015
      %10017 = vrot.lane.b32.xlu0 %v9941, 104
      %v10018 = vpop.permute.xlu0 %10017
      %10019 = vrot.lane.b32.xlu0 %v9942, 104
      %v10020 = vpop.permute.xlu0 %10019
      %10021 = vrot.lane.b32.xlu0 %v9943, 104
      %v10022 = vpop.permute.xlu0 %10021
      %10023 = vrot.lane.b32.xlu0 %v9944, 104
      %v10024 = vpop.permute.xlu0 %10023
      %10025 = vrot.lane.b32.xlu0 %v9945, 104
      %v10026 = vpop.permute.xlu0 %10025
      %10027 = vrot.lane.b32.xlu0 %v9946, 104
      %v10028 = vpop.permute.xlu0 %10027
      %10029 = vrot.lane.b32.xlu0 %v9947, 104
      %v10030 = vpop.permute.xlu0 %10029
      %10031 = vrot.lane.b32.xlu0 %v9948, 104
      %v10032 = vpop.permute.xlu0 %10031
      %10033 = vrot.lane.b32.xlu0 %v10009, 104
      %v10034 = vpop.permute.xlu0 %10033
      %10035 = vrot.lane.b32.xlu0 %v10010, 104
      %v10036 = vpop.permute.xlu0 %10035
      %v10049 = vadd.f32 %v9997, %v10014
      %v10050 = vadd.f32 %v9998, %v10016
      %v10051 = vadd.f32 %v9999, %v10018
      %v10052 = vadd.f32 %v10000, %v10020
      %v10053 = vadd.f32 %v10001, %v10022
      %v10054 = vadd.f32 %v10002, %v10024
      %v10055 = vadd.f32 %v10003, %v10026
      %v10056 = vadd.f32 %v10004, %v10028
      %v10057 = vadd.f32 %v10005, %v10030
      %v10058 = vadd.f32 %v10006, %v10032
      %v10059 = vadd.f32 %v10007, %v10034
      %v10060 = vadd.f32 %v10008, %v10036
      %v10061 = vld [vmem:[#allocation3 + $0xe5] sm:$0xff]
      %v10062 = vld [vmem:[#allocation3 + $0xed] sm:$0xff]
      %v10063 = vld [vmem:[#allocation3 + $0xf5] sm:$0xff]
      %v10064 = vld [vmem:[#allocation3 + $0xfd] sm:$0xff]
      %v10065 = vld [vmem:[#allocation3 + $0x105] sm:$0xff]
      %v10066 = vld [vmem:[#allocation3 + $0x10d] sm:$0xff]
      %v10067 = vld [vmem:[#allocation3 + $0x115] sm:$0xff]
      %v10068 = vld [vmem:[#allocation3 + $0x11d] sm:$0xff]
      %v10069 = vld [vmem:[#allocation3 + $0x125] sm:$0xff]
      %v10070 = vld [vmem:[#allocation3 + $0x12d] sm:$0xff]
      %v10071 = vld [vmem:[#allocation3 + $0x135] sm:$0xff]
      %v10072 = vld [vmem:[#allocation3 + $0x13d] sm:$0xff]
      %10085 = vrot.lane.b32.xlu0 %v10061, 100
      %v10086 = vpop.permute.xlu0 %10085
      %10087 = vrot.lane.b32.xlu0 %v10062, 100
      %v10088 = vpop.permute.xlu0 %10087
      %10089 = vrot.lane.b32.xlu0 %v10063, 100
      %v10090 = vpop.permute.xlu0 %10089
      %10091 = vrot.lane.b32.xlu0 %v10064, 100
      %v10092 = vpop.permute.xlu0 %10091
      %10093 = vrot.lane.b32.xlu0 %v10065, 100
      %v10094 = vpop.permute.xlu0 %10093
      %10095 = vrot.lane.b32.xlu0 %v10066, 100
      %v10096 = vpop.permute.xlu0 %10095
      %10097 = vrot.lane.b32.xlu0 %v10067, 100
      %v10098 = vpop.permute.xlu0 %10097
      %10099 = vrot.lane.b32.xlu0 %v10068, 100
      %v10100 = vpop.permute.xlu0 %10099
      %10101 = vrot.lane.b32.xlu0 %v10069, 100
      %v10102 = vpop.permute.xlu0 %10101
      %10103 = vrot.lane.b32.xlu0 %v10070, 100
      %v10104 = vpop.permute.xlu0 %10103
      %10105 = vrot.lane.b32.xlu0 %v10071, 100
      %v10106 = vpop.permute.xlu0 %10105
      %10107 = vrot.lane.b32.xlu0 %v10072, 100
      %v10108 = vpop.permute.xlu0 %10107
      %v10121 = vadd.f32 %v10049, %v10086
      %v10122 = vadd.f32 %v10050, %v10088
      %v10123 = vadd.f32 %v10051, %v10090
      %v10124 = vadd.f32 %v10052, %v10092
      %v10125 = vadd.f32 %v10053, %v10094
      %v10126 = vadd.f32 %v10054, %v10096
      %v10127 = vadd.f32 %v10055, %v10098
      %v10128 = vadd.f32 %v10056, %v10100
      %v10129 = vadd.f32 %v10057, %v10102
      %v10130 = vadd.f32 %v10058, %v10104
      %v10131 = vadd.f32 %v10059, %v10106
      %v10132 = vadd.f32 %v10060, %v10108
      %v10133 = vld [vmem:[#allocation3 + $0xe6] sm:$0xff]
      %v10134 = vld [vmem:[#allocation3 + $0xee] sm:$0xff]
      %v10135 = vld [vmem:[#allocation3 + $0xf6] sm:$0xff]
      %v10136 = vld [vmem:[#allocation3 + $0xfe] sm:$0xff]
      %v10137 = vld [vmem:[#allocation3 + $0x106] sm:$0xff]
      %v10138 = vld [vmem:[#allocation3 + $0x10e] sm:$0xff]
      %v10139 = vld [vmem:[#allocation3 + $0x116] sm:$0xff]
      %v10140 = vld [vmem:[#allocation3 + $0x11e] sm:$0xff]
      %v10141 = vld [vmem:[#allocation3 + $0x126] sm:$0xff]
      %v10142 = vld [vmem:[#allocation3 + $0x12e] sm:$0xff]
      %v10143 = vld [vmem:[#allocation3 + $0x136] sm:$0xff]
      %v10144 = vld [vmem:[#allocation3 + $0x13e] sm:$0xff]
      %10157 = vrot.lane.b32.xlu0 %v10133, 96
      %v10158 = vpop.permute.xlu0 %10157
      %10159 = vrot.lane.b32.xlu0 %v10134, 96
      %v10160 = vpop.permute.xlu0 %10159
      %10161 = vrot.lane.b32.xlu0 %v10135, 96
      %v10162 = vpop.permute.xlu0 %10161
      %10163 = vrot.lane.b32.xlu0 %v10136, 96
      %v10164 = vpop.permute.xlu0 %10163
      %10165 = vrot.lane.b32.xlu0 %v10137, 96
      %v10166 = vpop.permute.xlu0 %10165
      %10167 = vrot.lane.b32.xlu0 %v10138, 96
      %v10168 = vpop.permute.xlu0 %10167
      %10169 = vrot.lane.b32.xlu0 %v10139, 96
      %v10170 = vpop.permute.xlu0 %10169
      %10171 = vrot.lane.b32.xlu0 %v10140, 96
      %v10172 = vpop.permute.xlu0 %10171
      %10173 = vrot.lane.b32.xlu0 %v10141, 96
      %v10174 = vpop.permute.xlu0 %10173
      %10175 = vrot.lane.b32.xlu0 %v10142, 96
      %v10176 = vpop.permute.xlu0 %10175
      %10177 = vrot.lane.b32.xlu0 %v10143, 96
      %v10178 = vpop.permute.xlu0 %10177
      %10179 = vrot.lane.b32.xlu0 %v10144, 96
      %v10180 = vpop.permute.xlu0 %10179
      %v10193 = vadd.f32 %v10121, %v10158
      %v10194 = vadd.f32 %v10122, %v10160
      %v10195 = vadd.f32 %v10123, %v10162
      %v10196 = vadd.f32 %v10124, %v10164
      %v10197 = vadd.f32 %v10125, %v10166
      %v10198 = vadd.f32 %v10126, %v10168
      %v10199 = vadd.f32 %v10127, %v10170
      %v10200 = vadd.f32 %v10128, %v10172
      %v10201 = vadd.f32 %v10129, %v10174
      %v10202 = vadd.f32 %v10130, %v10176
      %v10203 = vadd.f32 %v10131, %v10178
      %v10204 = vadd.f32 %v10132, %v10180
      %v10205 = vld [vmem:[%s4] sm:$0x1]
      %v10207 = vperm.slane %v10205, 0
      %v10209 = vadd.f32 %v10193, %v10207
      %v10210 = vadd.f32 %v10194, %v10207
      %v10211 = vadd.f32 %v10195, %v10207
      %v10212 = vadd.f32 %v10196, %v10207
      %v10213 = vadd.f32 %v10197, %v10207
      %v10214 = vadd.f32 %v10198, %v10207
      %v10215 = vadd.f32 %v10199, %v10207
      %v10216 = vadd.f32 %v10200, %v10207
      %v10217 = vadd.f32 %v10201, %v10207
      %v10218 = vadd.f32 %v10202, %v10207
      %v10219 = vadd.f32 %v10203, %v10207
      %v10220 = vadd.f32 %v10204, %v10207
      %10221 = vst.msk [vmem:[%s251 + $0xc0] sm:$0xff] %vm9068, %v10209
      %10222 = vst.msk [vmem:[%s251 + $0xc8] sm:$0xff] %vm9068, %v10210
      %10223 = vst.msk [vmem:[%s251 + $0xd0] sm:$0xff] %vm9068, %v10211
      %10224 = vst.msk [vmem:[%s251 + $0xd8] sm:$0xff] %vm9068, %v10212
      %10225 = vst.msk [vmem:[%s251 + $0xe0] sm:$0xff] %vm9068, %v10213
      %10226 = vst.msk [vmem:[%s251 + $0xe8] sm:$0xff] %vm9068, %v10214
      %10227 = vst.msk [vmem:[%s251 + $0xf0] sm:$0xff] %vm9068, %v10215
      %10228 = vst.msk [vmem:[%s251 + $0xf8] sm:$0xff] %vm9068, %v10216
      %10229 = vst.msk [vmem:[%s251 + $0x100] sm:$0xff] %vm9068, %v10217
      %10230 = vst.msk [vmem:[%s251 + $0x108] sm:$0xff] %vm9068, %v10218
      %10231 = vst.msk [vmem:[%s251 + $0x110] sm:$0xff] %vm9068, %v10219
      %10232 = vst.msk [vmem:[%s251 + $0x118] sm:$0xff] %vm9068, %v10220
      %p10233 = scmp.lt.s32.totalorder %s17, 1
      %s10234 = scalar_select %p10233, %s17, 1
      %s10235 = smul.addr %s10234, 36
      %s10236 = smul.addr %s10235, 8
      %s10237 = scalar_lea.vmem %s6, %s10236
      // Predicated region
      $region45: #{flow_head_pallas.1} parent=43 // pred_check
        %p10238 = pneg %p166
      $region46: #{flow_head_pallas.1} parent=43 // pred_check_branch
        %10240 = sbr.rel (%p10238) target = $region48
      $region47: #{flow_head_pallas.1} parent=43 // pred_region
        _
      $region48: #{flow_head_pallas.1} parent=43 // pred_fallthru
        _
    $region44: #{flow_head_pallas.1} parent=5 // pred_fallthru
      _
    %p10241 = scmp.le.s32.totalorder 2, %s12
    // Predicated region
    $region49: #{flow_head_pallas.1} parent=5 // pred_check
      %p10242 = pneg %p10241
    $region50: #{flow_head_pallas.1} parent=5 // pred_check_branch
      %10244 = sbr.rel (%p10242) target = $region52
    $region51: #{flow_head_pallas.1} parent=5 // pred_region
      %s10245 = ssub.s32 %s12, 2
      // Predicated region
      $region53: #{flow_head_pallas.1} parent=51 // pred_check
        %p10246 = pneg %p172
      $region54: #{flow_head_pallas.1} parent=51 // pred_check_branch
        %10248 = sbr.rel (%p10246) target = $region56
      $region55: #{flow_head_pallas.1} parent=51 // pred_region
        %p10249 = scmp.lt.s32.totalorder %s18, 1
        %s10250 = scalar_select %p10249, %s18, 1
        %s10251 = smul.addr %s10250, 36
        %s10252 = smul.addr %s10251, 8
        %s10253 = scalar_lea.vmem %s6, %s10252
      $region56: #{flow_head_pallas.1} parent=51 // pred_fallthru
        _
    $region52: #{flow_head_pallas.1} parent=5 // pred_fallthru
      _
  $region6: #{flow_head_pallas.1} parent=0 // loop_footer
    %s16 = sadd.s32 1, %s12
  $region7: #{flow_head_pallas.1} parent=0 // loop_footer_branch
    %11 = sbr.rel target = $region3
  $region8: #{flow_head_pallas.1} parent=0 // loop_exit
    _

</llo_original>
